<compile_context>
chip_gen: v6e
topology: v6e:2x2x1
jax: 0.10.0
libtpu: 0.0.40
codegen_flags: <defaults>
</compile_context>

<pallas_src>
import functools

import numpy as np
import jax
import jax.numpy as jnp
from jax.experimental import pallas as pl
from jax.experimental.pallas import tpu as pltpu


# ----------------------------- in-kernel helpers -----------------------------

def _layernorm(v, g, b, eps=1e-5):
    # PyTorch nn.LayerNorm: biased variance over last dim, eps inside sqrt.
    mu = jnp.mean(v, axis=-1, keepdims=True)
    var = jnp.mean((v - mu) ** 2, axis=-1, keepdims=True)
    return (v - mu) * jax.lax.rsqrt(var + eps) * g + b


# --------------------------------- the kernel --------------------------------

def _decoder_block_body(
        x_ref, k_ref, v_ref, sbias_ref, tbias_ref,
        wq1_ref, wk1_ref, wv1_ref, wfc1_ref, bfc1_ref, g1_ref, b1_ref,
        wq2_ref, wk2_ref, wv2_ref, wfc2_ref, bfc2_ref, g2_ref, b2_ref,
        wff1_ref, bff1_ref, wff2_ref, bff2_ref, g3_ref, b3_ref,
        out_ref, ctx_ref,
        *, heads, head_dim, embed, nb, lq, lk, compute_dtype, causal):
    E, D = embed, head_dim
    rq, rk = nb * lq, nb * lk
    approx_recip = (compute_dtype != jnp.float32)   # exact divide on f32-parity path

    def mm(a, w_ref):
        # Weights already stored in compute_dtype; f32 accumulation on the MXU.
        return jnp.dot(a.astype(compute_dtype), w_ref[...],
                       preferred_element_type=jnp.float32)

    def attention(q_all, k_all, v_all, bias, wfc_ref, bfc_ref, kv_len):
        # q_all: (rq, E) head-projected & pre-scaled; k_all/v_all: (nb*kv_len, E).
        # bias: additive mask bias, broadcastable to (nb, lq, kv_len).
        q_c = q_all.astype(compute_dtype)
        k_c = k_all.astype(compute_dtype)
        v_c = v_all.astype(compute_dtype)
        for h in range(heads):                       # static, small loop
            sl = slice(h * D, (h + 1) * D)
            qh = q_c[:, sl].reshape(nb, lq, D)
            kh = k_c[:, sl].reshape(nb, kv_len, D)
            vh = v_c[:, sl].reshape(nb, kv_len, D)
            s = jnp.einsum('nqd,nkd->nqk', qh, kh,
                           preferred_element_type=jnp.float32) + bias
            # softmax in f32; EUP reciprocal only when not chasing f32 parity.
            m = jnp.max(s, axis=-1, keepdims=True)
            e = jnp.exp(s - m)
            denom = jnp.sum(e, axis=-1, keepdims=True)
            p = e * pl.reciprocal(denom, approx=True) if approx_recip else e / denom
            ctx = jnp.einsum('nqk,nkd->nqd', p.astype(compute_dtype), vh,
                             preferred_element_type=jnp.float32)
            # Pack per-head context at its lane offset -> one K=E fc_out matmul.
            ctx_ref[:, sl] = ctx.reshape(rq, D).astype(ctx_ref.dtype)
        return mm(ctx_ref[...], wfc_ref) + bfc_ref[...]

    xf = x_ref[...].reshape(rq, E)
    kf = k_ref[...].reshape(rk, E)
    vf = v_ref[...].reshape(rk, E)

    if causal:
        # Generate the causal additive bias in-kernel (2-D iota compare) instead
        # of streaming an (N, Lq, Lq) f32 tensor from HBM.
        ri = jax.lax.broadcasted_iota(jnp.int32, (lq, lq), 0)
        ci = jax.lax.broadcasted_iota(jnp.int32, (lq, lq), 1)
        tbias = jnp.where(ci > ri, jnp.float32(-1e20), jnp.float32(0.0))
    else:
        tbias = tbias_ref[...]           # (nb, lq, lq)
    sbias = sbias_ref[...]               # (nb, 1, lk)

    # ---- masked self-attention + residual + LayerNorm (DecoderBlock.norm1) ----
    a1 = attention(mm(xf, wq1_ref), mm(xf, wk1_ref), mm(xf, wv1_ref),
                   tbias, wfc1_ref, bfc1_ref, lq)
    q = _layernorm(a1 + xf, g1_ref[...], b1_ref[...])     # dropout = identity

    # ---- cross-attention + residual + LayerNorm (TransformerBlock.norm1) ----
    a2 = attention(mm(q, wq2_ref), mm(kf, wk2_ref), mm(vf, wv2_ref),
                   sbias, wfc2_ref, bfc2_ref, lk)
    xc = _layernorm(a2 + q, g2_ref[...], b2_ref[...])

    # ---- feedforward (Linear -> ReLU -> Linear) + residual + LayerNorm ----
    h1 = jnp.maximum(mm(xc, wff1_ref) + bff1_ref[...], 0.0).astype(compute_dtype)
    ff = jnp.dot(h1, wff2_ref[...], preferred_element_type=jnp.float32) + bff2_ref[...]
    y = _layernorm(ff + xc, g3_ref[...], b3_ref[...])

    out_ref[...] = y.reshape(nb, lq, E).astype(out_ref.dtype)


def _make_kernel(causal, **static):
    body = functools.partial(_decoder_block_body, causal=causal, **static)
    if causal:
        def kernel(x_ref, k_ref, v_ref, sbias_ref, *rest):
            body(x_ref, k_ref, v_ref, sbias_ref, None, *rest)
    else:
        def kernel(x_ref, k_ref, v_ref, sbias_ref, tbias_ref, *rest):
            body(x_ref, k_ref, v_ref, sbias_ref, tbias_ref, *rest)
    return kernel


# ------------------------------ host-side helpers -----------------------------

def _prepare_weights(params, heads, embed, compute_dtype):
    """One-time weight prep: block-diag q/k/v fusion, transposes, scale fold."""
    E = embed
    scale = 1.0 / (float(E) ** 0.5)

    def bd(w):   # (D,D) shared per-head weight -> (E,E) block-diagonal of W^T
        # NOTE: fine at toy sizes; for heads>=8 / E>=512 the zero blocks waste
        # VMEM and MXU flops -> keep a per-head projection path instead.
        return jnp.kron(jnp.eye(heads, dtype=w.dtype), w.T)

    def mat(w):  # matmul operand, cast once to compute dtype (bf16 by default)
        return jnp.asarray(w, compute_dtype)

    def row(v):  # biases / LayerNorm params stay f32, kept 2-D for clean tiles
        return jnp.asarray(v, jnp.float32).reshape(1, -1)

    return [
        mat(bd(params['wq1']) * scale), mat(bd(params['wk1'])), mat(bd(params['wv1'])),
        mat(params['wfc1'].T), row(params['bfc1']), row(params['g1']), row(params['b1']),
        mat(bd(params['wq2']) * scale), mat(bd(params['wk2'])), mat(bd(params['wv2'])),
        mat(params['wfc2'].T), row(params['bfc2']), row(params['g2']), row(params['b2']),
        mat(params['wff1'].T), row(params['bff1']),
        mat(params['wff2'].T), row(params['bff2']),
        row(params['g3']), row(params['b3']),
    ]


def _num_tensorcores():
    # Best effort: v7x has 2 TensorCores per chip; keeping the grid length >= the
    # core count lets dimension_semantics=("parallel",) shard it.  Defaults to 1.
    try:
        return max(1, int(getattr(jax.devices()[0], "num_cores", 1)))
    except Exception:
        return 1


def _is_causal_mask(trg_mask, n, lq):
    """True iff trg_mask is exactly the standard lower-triangular causal mask."""
    try:
        m = np.asarray(jax.device_get(trg_mask)).reshape(n, lq, lq)
    except Exception:
        return False   # traced / unexpected shape -> stream the mask instead
    tril = np.tril(np.ones((lq, lq), dtype=bool))
    return bool(np.array_equal(m != 0, np.broadcast_to(tril, (n, lq, lq))))


def _pick_batch_block(n, lq, lk, embed, ffn, *, min_grid=1, act_budget=8 << 20):
    """Largest batch block (divisor of n) whose streamed blocks + live
    intermediates fit an activation VMEM budget, while keeping the grid length
    >= min_grid (so v7x's two TensorCores both get work)."""
    best = 1
    for nb in range(1, n + 1):
        if n % nb or (n // nb) < min_grid:
            continue
        rq, rk = nb * lq, nb * lk
        streamed = 2 * 4 * (rq * embed * 2 + rk * embed * 2 + nb * lk)  # 2 buffers
        interm = 4 * (nb * lq * max(lq, lk) + rq * ffn + 4 * rq * embed)
        if streamed + interm <= act_budget:
            best = nb
    return best


def _vmem_limit_bytes(wargs, nb, lq, lk, embed, ffn, causal):
    weights = sum(int(np.prod(w.shape)) * w.dtype.itemsize for w in wargs)
    rq, rk = nb * lq, nb * lk
    streamed = 2 * 4 * (rq * embed * 2 + rk * embed * 2 + nb * lk
                        + (0 if causal else nb * lq * lq))
    interm = 4 * (nb * lq * max(lq, lk) + rq * ffn + 4 * rq * embed)
    est = weights + streamed + interm
    # 2x headroom, floored at 32 MiB (>= every generation's default scoped VMEM),
    # capped below physical VMEM.  On v7x (64 MiB/TC) cap tighter if est grows.
    return int(min(max(2 * est, 32 << 20), 96 << 20))


# --------------------------------- wrapper ------------------------------------

def decoder_block(x, keys, values, src_mask, trg_mask, params, heads, *,
                  compute_dtype=jnp.bfloat16, batch_block=None,
                  causal_trg=None, min_grid_steps=None):
    """DecoderBlock forward.  x:(N,Lq,E), keys/values:(N,Lk,E),
    src_mask:(N,1,1,Lk), trg_mask:(N,1,Lq,Lq); mask==0 means masked."""
    N, Lq, E = x.shape
    Lk = keys.shape[1]
    D = E // heads
    assert D * heads == E
    FE = params['wff1'].shape[0]

    if causal_trg is None:
        causal_trg = _is_causal_mask(trg_mask, N, Lq)
    if min_grid_steps is None:
        min_grid_steps = _num_tensorcores()

    nb = batch_block or _pick_batch_block(N, Lq, Lk, E, FE, min_grid=min_grid_steps)
    assert N % nb == 0
    grid = (N // nb,)

    # Source-padding mask -> additive bias (tiny (N,1,Lk) tensor, streamed).
    sbias = jnp.where(src_mask == 0, jnp.float32(-1e20),
                      jnp.float32(0.0)).reshape(N, 1, Lk)
    wargs = _prepare_weights(params, heads, E, compute_dtype)

    stream_specs = [
        pl.BlockSpec((nb, Lq, E), lambda n: (n, 0, 0)),      # x
        pl.BlockSpec((nb, Lk, E), lambda n: (n, 0, 0)),      # keys
        pl.BlockSpec((nb, Lk, E), lambda n: (n, 0, 0)),      # values
        pl.BlockSpec((nb, 1, Lk), lambda n: (n, 0, 0)),      # src additive bias
    ]
    args = [x, keys, values, sbias]
    if not causal_trg:
        # Arbitrary target mask: stream it as an additive bias.
        tbias = jnp.where(trg_mask == 0, jnp.float32(-1e20),
                          jnp.float32(0.0)).reshape(N, Lq, Lq)
        stream_specs.append(pl.BlockSpec((nb, Lq, Lq), lambda n: (n, 0, 0)))
        args.append(tbias)
    args += wargs

    kernel = _make_kernel(causal_trg, heads=heads, head_dim=D, embed=E,
                          nb=nb, lq=Lq, lk=Lk, compute_dtype=compute_dtype)

    out_shape = jax.ShapeDtypeStruct((N, Lq, E), x.dtype)
    out_spec = pl.BlockSpec((nb, Lq, E), lambda n: (n, 0, 0))
    scratch = [pltpu.VMEM((nb * Lq, E), compute_dtype)]       # packed head contexts
    vmem_limit = _vmem_limit_bytes(wargs, nb, Lq, Lk, E, FE, causal_trg)

    last_err = None
    for resident in (True, False):
        if resident:
            # Single resident VMEM copy of every weight (no double-buffering of
            # constant operands) -- the v7x 64 MiB VMEM fix.
            wspecs = [pl.BlockSpec(memory_space=pltpu.MemorySpace.VMEM)
                      for _ in wargs]
        else:
            # Fallback: constant-index-map full-shape blocks (previous proven path).
            wspecs = [pl.BlockSpec(w.shape, lambda n: (0, 0)) for w in wargs]
        call = pl.pallas_call(
            kernel,
            out_shape=out_shape,
            grid_spec=pltpu.PrefetchScalarGridSpec(
                num_scalar_prefetch=0,
                grid=grid,
                in_specs=stream_specs + wspecs,
                out_specs=out_spec,
                scratch_shapes=scratch),
            compiler_params=pltpu.CompilerParams(
                dimension_semantics=("parallel",),
                vmem_limit_bytes=vmem_limit),
        )
        try:
            return jax.block_until_ready(call(*args))
        except Exception as e:      # resident-weight path unsupported -> fall back
            last_err = e
    raise last_err


# ------------------------------ pure-JAX reference ----------------------------

def decoder_block_reference(x, keys, values, src_mask, trg_mask, p, heads):
    E = x.shape[-1]
    D = E // heads

    def mha(q_in, k_in, v_in, mask, wq, wk, wv, wfc, bfc):
        N, Lq, _ = q_in.shape
        Lk = k_in.shape[1]
        qh = q_in.reshape(N, Lq, heads, D) @ wq.T
        kh = k_in.reshape(N, Lk, heads, D) @ wk.T
        vh = v_in.reshape(N, Lk, heads, D) @ wv.T
        s = jnp.einsum('nqhd,nkhd->nhqk', qh, kh)
        s = jnp.where(mask == 0, -1e20, s)
        a = jax.nn.softmax(s / (E ** 0.5), axis=3)
        o = jnp.einsum('nhql,nlhd->nqhd', a, vh).reshape(N, Lq, E)
        return o @ wfc.T + bfc

    def ln(v, g, b):
        mu = v.mean(-1, keepdims=True)
        var = ((v - mu) ** 2).mean(-1, keepdims=True)
        return (v - mu) / jnp.sqrt(var + 1e-5) * g + b

    attn = mha(x, x, x, trg_mask, p['wq1'], p['wk1'], p['wv1'], p['wfc1'], p['bfc1'])
    q = ln(attn + x, p['g1'], p['b1'])
    attn2 = mha(q, keys, values, src_mask, p['wq2'], p['wk2'], p['wv2'], p['wfc2'], p['bfc2'])
    xc = ln(attn2 + q, p['g2'], p['b2'])
    ff = jnp.maximum(xc @ p['wff1'].T + p['bff1'], 0.0) @ p['wff2'].T + p['bff2']
    return ln(ff + xc, p['g3'], p['b3'])


# ----------------------------------- main --------------------------------------

if __name__ == "__main__":
    N, Lq, Lk = 2, 8, 8
    E, heads, fwd_exp = 32, 4, 4
    D = E // heads
    FE = fwd_exp * E

    key = jax.random.PRNGKey(0)
    ks = iter(jax.random.split(key, 40))

    def rnd(shape, scale=0.1):
        return jax.random.normal(next(ks), shape, jnp.float32) * scale

    params = {
        # DecoderBlock.attention (self-attention) + DecoderBlock.norm1
        'wq1': rnd((D, D)), 'wk1': rnd((D, D)), 'wv1': rnd((D, D)),
        'wfc1': rnd((E, E)), 'bfc1': rnd((E,)),
        'g1': 1.0 + rnd((E,)), 'b1': rnd((E,)),
        # TransformerBlock.attention (cross-attention) + TransformerBlock.norm1
        'wq2': rnd((D, D)), 'wk2': rnd((D, D)), 'wv2': rnd((D, D)),
        'wfc2': rnd((E, E)), 'bfc2': rnd((E,)),
        'g2': 1.0 + rnd((E,)), 'b2': rnd((E,)),
        # TransformerBlock.feedforward + TransformerBlock.norm2
        'wff1': rnd((FE, E)), 'bff1': rnd((FE,)),
        'wff2': rnd((E, FE)), 'bff2': rnd((E,)),
        'g3': 1.0 + rnd((E,)), 'b3': rnd((E,)),
    }

    x = rnd((N, Lq, E), 1.0)
    keys_enc = rnd((N, Lk, E), 1.0)
    values_enc = rnd((N, Lk, E), 1.0)

    # causal target mask (N,1,Lq,Lq); source mask (N,1,1,Lk) with some padding
    trg_mask = jnp.broadcast_to(jnp.tril(jnp.ones((Lq, Lq), jnp.float32)),
                                (N, 1, Lq, Lq))
    src_mask = jnp.ones((N, 1, 1, Lk), jnp.float32)
    src_mask = src_mask.at[1, :, :, -2:].set(0.0)

    ref = decoder_block_reference(x, keys_enc, values_enc, src_mask, trg_mask,
                                  params, heads)

    # Default path: bf16 MXU operands, f32 accumulation/softmax/LayerNorm.
    out = decoder_block(x, keys_enc, values_enc, src_mask, trg_mask, params, heads)
    out = jax.block_until_ready(out)
    np.testing.assert_allclose(np.asarray(out), np.asarray(ref),
                               rtol=5e-2, atol=5e-2)

    # f32-parity path (exact softmax reciprocal), tight tolerance.
    out_f32 = decoder_block(x, keys_enc, values_enc, src_mask, trg_mask, params,
                            heads, compute_dtype=jnp.float32)
    out_f32 = jax.block_until_ready(out_f32)
    np.testing.assert_allclose(np.asarray(out_f32), np.asarray(ref),
                               rtol=2e-3, atol=2e-3)

    print("KERNEL_OK")
</pallas_src>

<mosaic_0001>
module attributes {stable_mosaic.version = 11 : i64} {
  func.func @kernel(%arg0: i32, %arg1: memref<2x8x32xf32, #tpu.memory_space<vmem>>, %arg2: memref<2x8x32xf32, #tpu.memory_space<vmem>>, %arg3: memref<2x8x32xf32, #tpu.memory_space<vmem>>, %arg4: memref<2x1x8xf32, #tpu.memory_space<vmem>>, %arg5: memref<32x32xbf16, #tpu.memory_space<vmem>>, %arg6: memref<32x32xbf16, #tpu.memory_space<vmem>>, %arg7: memref<32x32xbf16, #tpu.memory_space<vmem>>, %arg8: memref<32x32xbf16, #tpu.memory_space<vmem>>, %arg9: memref<1x32xf32, #tpu.memory_space<vmem>>, %arg10: memref<1x32xf32, #tpu.memory_space<vmem>>, %arg11: memref<1x32xf32, #tpu.memory_space<vmem>>, %arg12: memref<32x32xbf16, #tpu.memory_space<vmem>>, %arg13: memref<32x32xbf16, #tpu.memory_space<vmem>>, %arg14: memref<32x32xbf16, #tpu.memory_space<vmem>>, %arg15: memref<32x32xbf16, #tpu.memory_space<vmem>>, %arg16: memref<1x32xf32, #tpu.memory_space<vmem>>, %arg17: memref<1x32xf32, #tpu.memory_space<vmem>>, %arg18: memref<1x32xf32, #tpu.memory_space<vmem>>, %arg19: memref<32x128xbf16, #tpu.memory_space<vmem>>, %arg20: memref<1x128xf32, #tpu.memory_space<vmem>>, %arg21: memref<128x32xbf16, #tpu.memory_space<vmem>>, %arg22: memref<1x32xf32, #tpu.memory_space<vmem>>, %arg23: memref<1x32xf32, #tpu.memory_space<vmem>>, %arg24: memref<1x32xf32, #tpu.memory_space<vmem>>, %arg25: memref<2x8x32xf32, #tpu.memory_space<vmem>>, %arg26: memref<16x32xbf16, #tpu.memory_space<vmem>>) attributes {dimension_semantics = [#tpu.dimension_semantics<parallel>], iteration_bounds = array<i64: 1>, scalar_prefetch = 0 : i64, scratch_operands = 1 : i64, tpu.core_type = #tpu.core_type<tc>, window_params = [{transform_indices = @transform_0, window_bounds = array<i64: 2, 8, 32>}, {transform_indices = @transform_1, window_bounds = array<i64: 2, 8, 32>}, {transform_indices = @transform_2, window_bounds = array<i64: 2, 8, 32>}, {transform_indices = @transform_3, window_bounds = array<i64: 2, 1, 8>}, {pipeline_mode = #tpu.pipeline_mode<synchronous>, transform_indices = @transform_4, window_bounds = array<i64: 32, 32>}, {pipeline_mode = #tpu.pipeline_mode<synchronous>, transform_indices = @transform_5, window_bounds = array<i64: 32, 32>}, {pipeline_mode = #tpu.pipeline_mode<synchronous>, transform_indices = @transform_6, window_bounds = array<i64: 32, 32>}, {pipeline_mode = #tpu.pipeline_mode<synchronous>, transform_indices = @transform_7, window_bounds = array<i64: 32, 32>}, {pipeline_mode = #tpu.pipeline_mode<synchronous>, transform_indices = @transform_8, window_bounds = array<i64: 1, 32>}, {pipeline_mode = #tpu.pipeline_mode<synchronous>, transform_indices = @transform_9, window_bounds = array<i64: 1, 32>}, {pipeline_mode = #tpu.pipeline_mode<synchronous>, transform_indices = @transform_10, window_bounds = array<i64: 1, 32>}, {pipeline_mode = #tpu.pipeline_mode<synchronous>, transform_indices = @transform_11, window_bounds = array<i64: 32, 32>}, {pipeline_mode = #tpu.pipeline_mode<synchronous>, transform_indices = @transform_12, window_bounds = array<i64: 32, 32>}, {pipeline_mode = #tpu.pipeline_mode<synchronous>, transform_indices = @transform_13, window_bounds = array<i64: 32, 32>}, {pipeline_mode = #tpu.pipeline_mode<synchronous>, transform_indices = @transform_14, window_bounds = array<i64: 32, 32>}, {pipeline_mode = #tpu.pipeline_mode<synchronous>, transform_indices = @transform_15, window_bounds = array<i64: 1, 32>}, {pipeline_mode = #tpu.pipeline_mode<synchronous>, transform_indices = @transform_16, window_bounds = array<i64: 1, 32>}, {pipeline_mode = #tpu.pipeline_mode<synchronous>, transform_indices = @transform_17, window_bounds = array<i64: 1, 32>}, {pipeline_mode = #tpu.pipeline_mode<synchronous>, transform_indices = @transform_18, window_bounds = array<i64: 32, 128>}, {pipeline_mode = #tpu.pipeline_mode<synchronous>, transform_indices = @transform_19, window_bounds = array<i64: 1, 128>}, {pipeline_mode = #tpu.pipeline_mode<synchronous>, transform_indices = @transform_20, window_bounds = array<i64: 128, 32>}, {pipeline_mode = #tpu.pipeline_mode<synchronous>, transform_indices = @transform_21, window_bounds = array<i64: 1, 32>}, {pipeline_mode = #tpu.pipeline_mode<synchronous>, transform_indices = @transform_22, window_bounds = array<i64: 1, 32>}, {pipeline_mode = #tpu.pipeline_mode<synchronous>, transform_indices = @transform_23, window_bounds = array<i64: 1, 32>}, {transform_indices = @transform_24, window_bounds = array<i64: 2, 8, 32>}]} {
    %c0 = arith.constant 0 : index
    %c0_0 = arith.constant 0 : index
    %c0_1 = arith.constant 0 : index
    %0 = vector.load %arg1[%c0, %c0_0, %c0_1] : memref<2x8x32xf32, #tpu.memory_space<vmem>>, vector<2x8x32xf32>
    %1 = vector.shape_cast %0 : vector<2x8x32xf32> to vector<16x32xf32>
    %c0_2 = arith.constant 0 : index
    %c0_3 = arith.constant 0 : index
    %c0_4 = arith.constant 0 : index
    %2 = vector.load %arg2[%c0_2, %c0_3, %c0_4] : memref<2x8x32xf32, #tpu.memory_space<vmem>>, vector<2x8x32xf32>
    %3 = vector.shape_cast %2 : vector<2x8x32xf32> to vector<16x32xf32>
    %c0_5 = arith.constant 0 : index
    %c0_6 = arith.constant 0 : index
    %c0_7 = arith.constant 0 : index
    %4 = vector.load %arg3[%c0_5, %c0_6, %c0_7] : memref<2x8x32xf32, #tpu.memory_space<vmem>>, vector<2x8x32xf32>
    %5 = vector.shape_cast %4 : vector<2x8x32xf32> to vector<16x32xf32>
    %6 = tpu.iota {dimensions = array<i32: 0>} : vector<8x8xi32>
    %7 = tpu.iota {dimensions = array<i32: 1>} : vector<8x8xi32>
    %8 = arith.cmpi sgt, %7, %6 : vector<8x8xi32>
    %cst = arith.constant -1.000000e+20 : f32
    %cst_8 = arith.constant 0.000000e+00 : f32
    %9 = vector.broadcast %cst : f32 to vector<8x8xf32>
    %10 = vector.broadcast %cst_8 : f32 to vector<8x8xf32>
    %11 = arith.select %8, %9, %10 : vector<8x8xi1>, vector<8x8xf32>
    %c0_9 = arith.constant 0 : index
    %c0_10 = arith.constant 0 : index
    %c0_11 = arith.constant 0 : index
    %12 = vector.load %arg4[%c0_9, %c0_10, %c0_11] : memref<2x1x8xf32, #tpu.memory_space<vmem>>, vector<2x1x8xf32>
    %13 = arith.truncf %1 : vector<16x32xf32> to vector<16x32xbf16>
    %c0_12 = arith.constant 0 : index
    %c0_13 = arith.constant 0 : index
    %14 = vector.load %arg5[%c0_12, %c0_13] : memref<32x32xbf16, #tpu.memory_space<vmem>>, vector<32x32xbf16>
    %cst_14 = arith.constant dense<0.000000e+00> : vector<16x32xf32>
    %15 = tpu.matmul %13, %14, %cst_14 {dimension_numbers = #tpu.dot_dimension_numbers<[1], [0], [0], [1], [0, 0, 1, 1], [], []>} : vector<16x32xbf16>, vector<32x32xbf16>, vector<16x32xf32> -> vector<16x32xf32>
    %16 = arith.truncf %1 : vector<16x32xf32> to vector<16x32xbf16>
    %c0_15 = arith.constant 0 : index
    %c0_16 = arith.constant 0 : index
    %17 = vector.load %arg6[%c0_15, %c0_16] : memref<32x32xbf16, #tpu.memory_space<vmem>>, vector<32x32xbf16>
    %cst_17 = arith.constant dense<0.000000e+00> : vector<16x32xf32>
    %18 = tpu.matmul %16, %17, %cst_17 {dimension_numbers = #tpu.dot_dimension_numbers<[1], [0], [0], [1], [0, 0, 1, 1], [], []>} : vector<16x32xbf16>, vector<32x32xbf16>, vector<16x32xf32> -> vector<16x32xf32>
    %19 = arith.truncf %1 : vector<16x32xf32> to vector<16x32xbf16>
    %c0_18 = arith.constant 0 : index
    %c0_19 = arith.constant 0 : index
    %20 = vector.load %arg7[%c0_18, %c0_19] : memref<32x32xbf16, #tpu.memory_space<vmem>>, vector<32x32xbf16>
    %cst_20 = arith.constant dense<0.000000e+00> : vector<16x32xf32>
    %21 = tpu.matmul %19, %20, %cst_20 {dimension_numbers = #tpu.dot_dimension_numbers<[1], [0], [0], [1], [0, 0, 1, 1], [], []>} : vector<16x32xbf16>, vector<32x32xbf16>, vector<16x32xf32> -> vector<16x32xf32>
    %22 = arith.truncf %15 : vector<16x32xf32> to vector<16x32xbf16>
    %23 = arith.truncf %18 : vector<16x32xf32> to vector<16x32xbf16>
    %24 = arith.truncf %21 : vector<16x32xf32> to vector<16x32xbf16>
    %25 = vector.extract_strided_slice %22 {offsets = [0, 0], sizes = [16, 8], strides = [1, 1]} : vector<16x32xbf16> to vector<16x8xbf16>
    %26 = vector.shape_cast %25 : vector<16x8xbf16> to vector<2x8x8xbf16>
    %27 = vector.extract_strided_slice %23 {offsets = [0, 0], sizes = [16, 8], strides = [1, 1]} : vector<16x32xbf16> to vector<16x8xbf16>
    %28 = vector.shape_cast %27 : vector<16x8xbf16> to vector<2x8x8xbf16>
    %29 = vector.extract_strided_slice %24 {offsets = [0, 0], sizes = [16, 8], strides = [1, 1]} : vector<16x32xbf16> to vector<16x8xbf16>
    %30 = vector.shape_cast %29 : vector<16x8xbf16> to vector<2x8x8xbf16>
    "tpu.trace_start"() <{level = 10 : i32, message = "nqd,nkd->nqk"}> : () -> ()
    %cst_21 = arith.constant dense<0.000000e+00> : vector<2x8x8xf32>
    %31 = tpu.matmul %26, %28, %cst_21 {dimension_numbers = #tpu.dot_dimension_numbers<[2], [2], [1], [1], [0, 0, 0, 1, 1, 1], [0], [0]>} : vector<2x8x8xbf16>, vector<2x8x8xbf16>, vector<2x8x8xf32> -> vector<2x8x8xf32>
    "tpu.trace_stop"() : () -> ()
    %32 = vector.shape_cast %11 : vector<8x8xf32> to vector<1x8x8xf32>
    %33 = vector.broadcast %32 : vector<1x8x8xf32> to vector<2x8x8xf32>
    %34 = arith.addf %31, %33 : vector<2x8x8xf32>
    %cst_22 = arith.constant dense<0xFF800000> : vector<2x8xf32>
    %35 = vector.multi_reduction <maximumf>, %34, %cst_22 [2] : vector<2x8x8xf32> to vector<2x8xf32>
    %36 = vector.shape_cast %35 : vector<2x8xf32> to vector<2x8x1xf32>
    %37 = vector.broadcast %36 : vector<2x8x1xf32> to vector<2x8x8xf32>
    %38 = arith.subf %34, %37 : vector<2x8x8xf32>
    %39 = math.exp %38 : vector<2x8x8xf32>
    %cst_23 = arith.constant dense<0.000000e+00> : vector<2x8xf32>
    %40 = vector.multi_reduction <add>, %39, %cst_23 [2] : vector<2x8x8xf32> to vector<2x8xf32>
    %41 = vector.shape_cast %40 : vector<2x8xf32> to vector<2x8x1xf32>
    %42 = tpu.reciprocal %41 {approx = true} : vector<2x8x1xf32> -> vector<2x8x1xf32>
    %43 = vector.broadcast %42 : vector<2x8x1xf32> to vector<2x8x8xf32>
    %44 = arith.mulf %39, %43 : vector<2x8x8xf32>
    %45 = arith.truncf %44 : vector<2x8x8xf32> to vector<2x8x8xbf16>
    "tpu.trace_start"() <{level = 10 : i32, message = "nqk,nkd->nqd"}> : () -> ()
    %cst_24 = arith.constant dense<0.000000e+00> : vector<2x8x8xf32>
    %46 = tpu.matmul %45, %30, %cst_24 {dimension_numbers = #tpu.dot_dimension_numbers<[2], [1], [1], [2], [0, 0, 0, 1, 1, 2], [0], [0]>} : vector<2x8x8xbf16>, vector<2x8x8xbf16>, vector<2x8x8xf32> -> vector<2x8x8xf32>
    "tpu.trace_stop"() : () -> ()
    %47 = vector.shape_cast %46 : vector<2x8x8xf32> to vector<16x8xf32>
    %48 = arith.truncf %47 : vector<16x8xf32> to vector<16x8xbf16>
    %c0_25 = arith.constant 0 : index
    %c0_26 = arith.constant 0 : index
    %49 = vector.load %arg26[%c0_25, %c0_26] : memref<16x32xbf16, #tpu.memory_space<vmem>>, vector<16x8xbf16>
    tpu.vector_store %arg26[%c0_25, %c0_26], %48 {strides = array<i32>} : memref<16x32xbf16, #tpu.memory_space<vmem>>, vector<16x8xbf16>,
    %50 = vector.extract_strided_slice %22 {offsets = [0, 8], sizes = [16, 8], strides = [1, 1]} : vector<16x32xbf16> to vector<16x8xbf16>
    %51 = vector.shape_cast %50 : vector<16x8xbf16> to vector<2x8x8xbf16>
    %52 = vector.extract_strided_slice %23 {offsets = [0, 8], sizes = [16, 8], strides = [1, 1]} : vector<16x32xbf16> to vector<16x8xbf16>
    %53 = vector.shape_cast %52 : vector<16x8xbf16> to vector<2x8x8xbf16>
    %54 = vector.extract_strided_slice %24 {offsets = [0, 8], sizes = [16, 8], strides = [1, 1]} : vector<16x32xbf16> to vector<16x8xbf16>
    %55 = vector.shape_cast %54 : vector<16x8xbf16> to vector<2x8x8xbf16>
    "tpu.trace_start"() <{level = 10 : i32, message = "nqd,nkd->nqk"}> : () -> ()
    %cst_27 = arith.constant dense<0.000000e+00> : vector<2x8x8xf32>
    %56 = tpu.matmul %51, %53, %cst_27 {dimension_numbers = #tpu.dot_dimension_numbers<[2], [2], [1], [1], [0, 0, 0, 1, 1, 1], [0], [0]>} : vector<2x8x8xbf16>, vector<2x8x8xbf16>, vector<2x8x8xf32> -> vector<2x8x8xf32>
    "tpu.trace_stop"() : () -> ()
    %57 = vector.shape_cast %11 : vector<8x8xf32> to vector<1x8x8xf32>
    %58 = vector.broadcast %57 : vector<1x8x8xf32> to vector<2x8x8xf32>
    %59 = arith.addf %56, %58 : vector<2x8x8xf32>
    %cst_28 = arith.constant dense<0xFF800000> : vector<2x8xf32>
    %60 = vector.multi_reduction <maximumf>, %59, %cst_28 [2] : vector<2x8x8xf32> to vector<2x8xf32>
    %61 = vector.shape_cast %60 : vector<2x8xf32> to vector<2x8x1xf32>
    %62 = vector.broadcast %61 : vector<2x8x1xf32> to vector<2x8x8xf32>
    %63 = arith.subf %59, %62 : vector<2x8x8xf32>
    %64 = math.exp %63 : vector<2x8x8xf32>
    %cst_29 = arith.constant dense<0.000000e+00> : vector<2x8xf32>
    %65 = vector.multi_reduction <add>, %64, %cst_29 [2] : vector<2x8x8xf32> to vector<2x8xf32>
    %66 = vector.shape_cast %65 : vector<2x8xf32> to vector<2x8x1xf32>
    %67 = tpu.reciprocal %66 {approx = true} : vector<2x8x1xf32> -> vector<2x8x1xf32>
    %68 = vector.broadcast %67 : vector<2x8x1xf32> to vector<2x8x8xf32>
    %69 = arith.mulf %64, %68 : vector<2x8x8xf32>
    %70 = arith.truncf %69 : vector<2x8x8xf32> to vector<2x8x8xbf16>
    "tpu.trace_start"() <{level = 10 : i32, message = "nqk,nkd->nqd"}> : () -> ()
    %cst_30 = arith.constant dense<0.000000e+00> : vector<2x8x8xf32>
    %71 = tpu.matmul %70, %55, %cst_30 {dimension_numbers = #tpu.dot_dimension_numbers<[2], [1], [1], [2], [0, 0, 0, 1, 1, 2], [0], [0]>} : vector<2x8x8xbf16>, vector<2x8x8xbf16>, vector<2x8x8xf32> -> vector<2x8x8xf32>
    "tpu.trace_stop"() : () -> ()
    %72 = vector.shape_cast %71 : vector<2x8x8xf32> to vector<16x8xf32>
    %73 = arith.truncf %72 : vector<16x8xf32> to vector<16x8xbf16>
    %c0_31 = arith.constant 0 : index
    %c8 = arith.constant 8 : index
    %74 = vector.load %arg26[%c0_31, %c8] : memref<16x32xbf16, #tpu.memory_space<vmem>>, vector<16x8xbf16>
    tpu.vector_store %arg26[%c0_31, %c8], %73 {strides = array<i32>} : memref<16x32xbf16, #tpu.memory_space<vmem>>, vector<16x8xbf16>,
    %75 = vector.extract_strided_slice %22 {offsets = [0, 16], sizes = [16, 8], strides = [1, 1]} : vector<16x32xbf16> to vector<16x8xbf16>
    %76 = vector.shape_cast %75 : vector<16x8xbf16> to vector<2x8x8xbf16>
    %77 = vector.extract_strided_slice %23 {offsets = [0, 16], sizes = [16, 8], strides = [1, 1]} : vector<16x32xbf16> to vector<16x8xbf16>
    %78 = vector.shape_cast %77 : vector<16x8xbf16> to vector<2x8x8xbf16>
    %79 = vector.extract_strided_slice %24 {offsets = [0, 16], sizes = [16, 8], strides = [1, 1]} : vector<16x32xbf16> to vector<16x8xbf16>
    %80 = vector.shape_cast %79 : vector<16x8xbf16> to vector<2x8x8xbf16>
    "tpu.trace_start"() <{level = 10 : i32, message = "nqd,nkd->nqk"}> : () -> ()
    %cst_32 = arith.constant dense<0.000000e+00> : vector<2x8x8xf32>
    %81 = tpu.matmul %76, %78, %cst_32 {dimension_numbers = #tpu.dot_dimension_numbers<[2], [2], [1], [1], [0, 0, 0, 1, 1, 1], [0], [0]>} : vector<2x8x8xbf16>, vector<2x8x8xbf16>, vector<2x8x8xf32> -> vector<2x8x8xf32>
    "tpu.trace_stop"() : () -> ()
    %82 = vector.shape_cast %11 : vector<8x8xf32> to vector<1x8x8xf32>
    %83 = vector.broadcast %82 : vector<1x8x8xf32> to vector<2x8x8xf32>
    %84 = arith.addf %81, %83 : vector<2x8x8xf32>
    %cst_33 = arith.constant dense<0xFF800000> : vector<2x8xf32>
    %85 = vector.multi_reduction <maximumf>, %84, %cst_33 [2] : vector<2x8x8xf32> to vector<2x8xf32>
    %86 = vector.shape_cast %85 : vector<2x8xf32> to vector<2x8x1xf32>
    %87 = vector.broadcast %86 : vector<2x8x1xf32> to vector<2x8x8xf32>
    %88 = arith.subf %84, %87 : vector<2x8x8xf32>
    %89 = math.exp %88 : vector<2x8x8xf32>
    %cst_34 = arith.constant dense<0.000000e+00> : vector<2x8xf32>
    %90 = vector.multi_reduction <add>, %89, %cst_34 [2] : vector<2x8x8xf32> to vector<2x8xf32>
    %91 = vector.shape_cast %90 : vector<2x8xf32> to vector<2x8x1xf32>
    %92 = tpu.reciprocal %91 {approx = true} : vector<2x8x1xf32> -> vector<2x8x1xf32>
    %93 = vector.broadcast %92 : vector<2x8x1xf32> to vector<2x8x8xf32>
    %94 = arith.mulf %89, %93 : vector<2x8x8xf32>
    %95 = arith.truncf %94 : vector<2x8x8xf32> to vector<2x8x8xbf16>
    "tpu.trace_start"() <{level = 10 : i32, message = "nqk,nkd->nqd"}> : () -> ()
    %cst_35 = arith.constant dense<0.000000e+00> : vector<2x8x8xf32>
    %96 = tpu.matmul %95, %80, %cst_35 {dimension_numbers = #tpu.dot_dimension_numbers<[2], [1], [1], [2], [0, 0, 0, 1, 1, 2], [0], [0]>} : vector<2x8x8xbf16>, vector<2x8x8xbf16>, vector<2x8x8xf32> -> vector<2x8x8xf32>
    "tpu.trace_stop"() : () -> ()
    %97 = vector.shape_cast %96 : vector<2x8x8xf32> to vector<16x8xf32>
    %98 = arith.truncf %97 : vector<16x8xf32> to vector<16x8xbf16>
    %c0_36 = arith.constant 0 : index
    %c16 = arith.constant 16 : index
    %99 = vector.load %arg26[%c0_36, %c16] : memref<16x32xbf16, #tpu.memory_space<vmem>>, vector<16x8xbf16>
    tpu.vector_store %arg26[%c0_36, %c16], %98 {strides = array<i32>} : memref<16x32xbf16, #tpu.memory_space<vmem>>, vector<16x8xbf16>,
    %100 = vector.extract_strided_slice %22 {offsets = [0, 24], sizes = [16, 8], strides = [1, 1]} : vector<16x32xbf16> to vector<16x8xbf16>
    %101 = vector.shape_cast %100 : vector<16x8xbf16> to vector<2x8x8xbf16>
    %102 = vector.extract_strided_slice %23 {offsets = [0, 24], sizes = [16, 8], strides = [1, 1]} : vector<16x32xbf16> to vector<16x8xbf16>
    %103 = vector.shape_cast %102 : vector<16x8xbf16> to vector<2x8x8xbf16>
    %104 = vector.extract_strided_slice %24 {offsets = [0, 24], sizes = [16, 8], strides = [1, 1]} : vector<16x32xbf16> to vector<16x8xbf16>
    %105 = vector.shape_cast %104 : vector<16x8xbf16> to vector<2x8x8xbf16>
    "tpu.trace_start"() <{level = 10 : i32, message = "nqd,nkd->nqk"}> : () -> ()
    %cst_37 = arith.constant dense<0.000000e+00> : vector<2x8x8xf32>
    %106 = tpu.matmul %101, %103, %cst_37 {dimension_numbers = #tpu.dot_dimension_numbers<[2], [2], [1], [1], [0, 0, 0, 1, 1, 1], [0], [0]>} : vector<2x8x8xbf16>, vector<2x8x8xbf16>, vector<2x8x8xf32> -> vector<2x8x8xf32>
    "tpu.trace_stop"() : () -> ()
    %107 = vector.shape_cast %11 : vector<8x8xf32> to vector<1x8x8xf32>
    %108 = vector.broadcast %107 : vector<1x8x8xf32> to vector<2x8x8xf32>
    %109 = arith.addf %106, %108 : vector<2x8x8xf32>
    %cst_38 = arith.constant dense<0xFF800000> : vector<2x8xf32>
    %110 = vector.multi_reduction <maximumf>, %109, %cst_38 [2] : vector<2x8x8xf32> to vector<2x8xf32>
    %111 = vector.shape_cast %110 : vector<2x8xf32> to vector<2x8x1xf32>
    %112 = vector.broadcast %111 : vector<2x8x1xf32> to vector<2x8x8xf32>
    %113 = arith.subf %109, %112 : vector<2x8x8xf32>
    %114 = math.exp %113 : vector<2x8x8xf32>
    %cst_39 = arith.constant dense<0.000000e+00> : vector<2x8xf32>
    %115 = vector.multi_reduction <add>, %114, %cst_39 [2] : vector<2x8x8xf32> to vector<2x8xf32>
    %116 = vector.shape_cast %115 : vector<2x8xf32> to vector<2x8x1xf32>
    %117 = tpu.reciprocal %116 {approx = true} : vector<2x8x1xf32> -> vector<2x8x1xf32>
    %118 = vector.broadcast %117 : vector<2x8x1xf32> to vector<2x8x8xf32>
    %119 = arith.mulf %114, %118 : vector<2x8x8xf32>
    %120 = arith.truncf %119 : vector<2x8x8xf32> to vector<2x8x8xbf16>
    "tpu.trace_start"() <{level = 10 : i32, message = "nqk,nkd->nqd"}> : () -> ()
    %cst_40 = arith.constant dense<0.000000e+00> : vector<2x8x8xf32>
    %121 = tpu.matmul %120, %105, %cst_40 {dimension_numbers = #tpu.dot_dimension_numbers<[2], [1], [1], [2], [0, 0, 0, 1, 1, 2], [0], [0]>} : vector<2x8x8xbf16>, vector<2x8x8xbf16>, vector<2x8x8xf32> -> vector<2x8x8xf32>
    "tpu.trace_stop"() : () -> ()
    %122 = vector.shape_cast %121 : vector<2x8x8xf32> to vector<16x8xf32>
    %123 = arith.truncf %122 : vector<16x8xf32> to vector<16x8xbf16>
    %c0_41 = arith.constant 0 : index
    %c24 = arith.constant 24 : index
    %124 = vector.load %arg26[%c0_41, %c24] : memref<16x32xbf16, #tpu.memory_space<vmem>>, vector<16x8xbf16>
    tpu.vector_store %arg26[%c0_41, %c24], %123 {strides = array<i32>} : memref<16x32xbf16, #tpu.memory_space<vmem>>, vector<16x8xbf16>,
    %c0_42 = arith.constant 0 : index
    %c0_43 = arith.constant 0 : index
    %125 = vector.load %arg26[%c0_42, %c0_43] : memref<16x32xbf16, #tpu.memory_space<vmem>>, vector<16x32xbf16>
    %c0_44 = arith.constant 0 : index
    %c0_45 = arith.constant 0 : index
    %126 = vector.load %arg8[%c0_44, %c0_45] : memref<32x32xbf16, #tpu.memory_space<vmem>>, vector<32x32xbf16>
    %cst_46 = arith.constant dense<0.000000e+00> : vector<16x32xf32>
    %127 = tpu.matmul %125, %126, %cst_46 {dimension_numbers = #tpu.dot_dimension_numbers<[1], [0], [0], [1], [0, 0, 1, 1], [], []>} : vector<16x32xbf16>, vector<32x32xbf16>, vector<16x32xf32> -> vector<16x32xf32>
    %c0_47 = arith.constant 0 : index
    %c0_48 = arith.constant 0 : index
    %128 = vector.load %arg9[%c0_47, %c0_48] : memref<1x32xf32, #tpu.memory_space<vmem>>, vector<1x32xf32>
    %129 = vector.broadcast %128 : vector<1x32xf32> to vector<16x32xf32>
    %130 = arith.addf %127, %129 : vector<16x32xf32>
    %131 = arith.addf %130, %1 : vector<16x32xf32>
    %c0_49 = arith.constant 0 : index
    %c0_50 = arith.constant 0 : index
    %132 = vector.load %arg10[%c0_49, %c0_50] : memref<1x32xf32, #tpu.memory_space<vmem>>, vector<1x32xf32>
    %c0_51 = arith.constant 0 : index
    %c0_52 = arith.constant 0 : index
    %133 = vector.load %arg11[%c0_51, %c0_52] : memref<1x32xf32, #tpu.memory_space<vmem>>, vector<1x32xf32>
    %cst_53 = arith.constant dense<0.000000e+00> : vector<16xf32>
    %134 = vector.multi_reduction <add>, %131, %cst_53 [1] : vector<16x32xf32> to vector<16xf32>
    %135 = vector.shape_cast %134 : vector<16xf32> to vector<16x1xf32>
    %cst_54 = arith.constant 3.200000e+01 : f32
    %136 = vector.broadcast %cst_54 : f32 to vector<16x1xf32>
    %137 = arith.divf %135, %136 : vector<16x1xf32>
    %138 = vector.broadcast %137 : vector<16x1xf32> to vector<16x32xf32>
    %139 = arith.subf %131, %138 : vector<16x32xf32>
    %140 = arith.mulf %139, %139 : vector<16x32xf32>
    %cst_55 = arith.constant dense<0.000000e+00> : vector<16xf32>
    %141 = vector.multi_reduction <add>, %140, %cst_55 [1] : vector<16x32xf32> to vector<16xf32>
    %142 = vector.shape_cast %141 : vector<16xf32> to vector<16x1xf32>
    %cst_56 = arith.constant 3.200000e+01 : f32
    %143 = vector.broadcast %cst_56 : f32 to vector<16x1xf32>
    %144 = arith.divf %142, %143 : vector<16x1xf32>
    %145 = vector.broadcast %137 : vector<16x1xf32> to vector<16x32xf32>
    %146 = arith.subf %131, %145 : vector<16x32xf32>
    %cst_57 = arith.constant 9.99999974E-6 : f32
    %147 = vector.broadcast %cst_57 : f32 to vector<16x1xf32>
    %148 = arith.addf %144, %147 : vector<16x1xf32>
    %149 = math.rsqrt %148 : vector<16x1xf32>
    %150 = vector.broadcast %149 : vector<16x1xf32> to vector<16x32xf32>
    %151 = arith.mulf %146, %150 : vector<16x32xf32>
    %152 = vector.broadcast %132 : vector<1x32xf32> to vector<16x32xf32>
    %153 = arith.mulf %151, %152 : vector<16x32xf32>
    %154 = vector.broadcast %133 : vector<1x32xf32> to vector<16x32xf32>
    %155 = arith.addf %153, %154 : vector<16x32xf32>
    %156 = arith.truncf %155 : vector<16x32xf32> to vector<16x32xbf16>
    %c0_58 = arith.constant 0 : index
    %c0_59 = arith.constant 0 : index
    %157 = vector.load %arg12[%c0_58, %c0_59] : memref<32x32xbf16, #tpu.memory_space<vmem>>, vector<32x32xbf16>
    %cst_60 = arith.constant dense<0.000000e+00> : vector<16x32xf32>
    %158 = tpu.matmul %156, %157, %cst_60 {dimension_numbers = #tpu.dot_dimension_numbers<[1], [0], [0], [1], [0, 0, 1, 1], [], []>} : vector<16x32xbf16>, vector<32x32xbf16>, vector<16x32xf32> -> vector<16x32xf32>
    %159 = arith.truncf %3 : vector<16x32xf32> to vector<16x32xbf16>
    %c0_61 = arith.constant 0 : index
    %c0_62 = arith.constant 0 : index
    %160 = vector.load %arg13[%c0_61, %c0_62] : memref<32x32xbf16, #tpu.memory_space<vmem>>, vector<32x32xbf16>
    %cst_63 = arith.constant dense<0.000000e+00> : vector<16x32xf32>
    %161 = tpu.matmul %159, %160, %cst_63 {dimension_numbers = #tpu.dot_dimension_numbers<[1], [0], [0], [1], [0, 0, 1, 1], [], []>} : vector<16x32xbf16>, vector<32x32xbf16>, vector<16x32xf32> -> vector<16x32xf32>
    %162 = arith.truncf %5 : vector<16x32xf32> to vector<16x32xbf16>
    %c0_64 = arith.constant 0 : index
    %c0_65 = arith.constant 0 : index
    %163 = vector.load %arg14[%c0_64, %c0_65] : memref<32x32xbf16, #tpu.memory_space<vmem>>, vector<32x32xbf16>
    %cst_66 = arith.constant dense<0.000000e+00> : vector<16x32xf32>
    %164 = tpu.matmul %162, %163, %cst_66 {dimension_numbers = #tpu.dot_dimension_numbers<[1], [0], [0], [1], [0, 0, 1, 1], [], []>} : vector<16x32xbf16>, vector<32x32xbf16>, vector<16x32xf32> -> vector<16x32xf32>
    %165 = arith.truncf %158 : vector<16x32xf32> to vector<16x32xbf16>
    %166 = arith.truncf %161 : vector<16x32xf32> to vector<16x32xbf16>
    %167 = arith.truncf %164 : vector<16x32xf32> to vector<16x32xbf16>
    %168 = vector.extract_strided_slice %165 {offsets = [0, 0], sizes = [16, 8], strides = [1, 1]} : vector<16x32xbf16> to vector<16x8xbf16>
    %169 = vector.shape_cast %168 : vector<16x8xbf16> to vector<2x8x8xbf16>
    %170 = vector.extract_strided_slice %166 {offsets = [0, 0], sizes = [16, 8], strides = [1, 1]} : vector<16x32xbf16> to vector<16x8xbf16>
    %171 = vector.shape_cast %170 : vector<16x8xbf16> to vector<2x8x8xbf16>
    %172 = vector.extract_strided_slice %167 {offsets = [0, 0], sizes = [16, 8], strides = [1, 1]} : vector<16x32xbf16> to vector<16x8xbf16>
    %173 = vector.shape_cast %172 : vector<16x8xbf16> to vector<2x8x8xbf16>
    "tpu.trace_start"() <{level = 10 : i32, message = "nqd,nkd->nqk"}> : () -> ()
    %cst_67 = arith.constant dense<0.000000e+00> : vector<2x8x8xf32>
    %174 = tpu.matmul %169, %171, %cst_67 {dimension_numbers = #tpu.dot_dimension_numbers<[2], [2], [1], [1], [0, 0, 0, 1, 1, 1], [0], [0]>} : vector<2x8x8xbf16>, vector<2x8x8xbf16>, vector<2x8x8xf32> -> vector<2x8x8xf32>
    "tpu.trace_stop"() : () -> ()
    %175 = vector.broadcast %12 : vector<2x1x8xf32> to vector<2x8x8xf32>
    %176 = arith.addf %174, %175 : vector<2x8x8xf32>
    %cst_68 = arith.constant dense<0xFF800000> : vector<2x8xf32>
    %177 = vector.multi_reduction <maximumf>, %176, %cst_68 [2] : vector<2x8x8xf32> to vector<2x8xf32>
    %178 = vector.shape_cast %177 : vector<2x8xf32> to vector<2x8x1xf32>
    %179 = vector.broadcast %178 : vector<2x8x1xf32> to vector<2x8x8xf32>
    %180 = arith.subf %176, %179 : vector<2x8x8xf32>
    %181 = math.exp %180 : vector<2x8x8xf32>
    %cst_69 = arith.constant dense<0.000000e+00> : vector<2x8xf32>
    %182 = vector.multi_reduction <add>, %181, %cst_69 [2] : vector<2x8x8xf32> to vector<2x8xf32>
    %183 = vector.shape_cast %182 : vector<2x8xf32> to vector<2x8x1xf32>
    %184 = tpu.reciprocal %183 {approx = true} : vector<2x8x1xf32> -> vector<2x8x1xf32>
    %185 = vector.broadcast %184 : vector<2x8x1xf32> to vector<2x8x8xf32>
    %186 = arith.mulf %181, %185 : vector<2x8x8xf32>
    %187 = arith.truncf %186 : vector<2x8x8xf32> to vector<2x8x8xbf16>
    "tpu.trace_start"() <{level = 10 : i32, message = "nqk,nkd->nqd"}> : () -> ()
    %cst_70 = arith.constant dense<0.000000e+00> : vector<2x8x8xf32>
    %188 = tpu.matmul %187, %173, %cst_70 {dimension_numbers = #tpu.dot_dimension_numbers<[2], [1], [1], [2], [0, 0, 0, 1, 1, 2], [0], [0]>} : vector<2x8x8xbf16>, vector<2x8x8xbf16>, vector<2x8x8xf32> -> vector<2x8x8xf32>
    "tpu.trace_stop"() : () -> ()
    %189 = vector.shape_cast %188 : vector<2x8x8xf32> to vector<16x8xf32>
    %190 = arith.truncf %189 : vector<16x8xf32> to vector<16x8xbf16>
    %c0_71 = arith.constant 0 : index
    %c0_72 = arith.constant 0 : index
    %191 = vector.load %arg26[%c0_71, %c0_72] : memref<16x32xbf16, #tpu.memory_space<vmem>>, vector<16x8xbf16>
    tpu.vector_store %arg26[%c0_71, %c0_72], %190 {strides = array<i32>} : memref<16x32xbf16, #tpu.memory_space<vmem>>, vector<16x8xbf16>,
    %192 = vector.extract_strided_slice %165 {offsets = [0, 8], sizes = [16, 8], strides = [1, 1]} : vector<16x32xbf16> to vector<16x8xbf16>
    %193 = vector.shape_cast %192 : vector<16x8xbf16> to vector<2x8x8xbf16>
    %194 = vector.extract_strided_slice %166 {offsets = [0, 8], sizes = [16, 8], strides = [1, 1]} : vector<16x32xbf16> to vector<16x8xbf16>
    %195 = vector.shape_cast %194 : vector<16x8xbf16> to vector<2x8x8xbf16>
    %196 = vector.extract_strided_slice %167 {offsets = [0, 8], sizes = [16, 8], strides = [1, 1]} : vector<16x32xbf16> to vector<16x8xbf16>
    %197 = vector.shape_cast %196 : vector<16x8xbf16> to vector<2x8x8xbf16>
    "tpu.trace_start"() <{level = 10 : i32, message = "nqd,nkd->nqk"}> : () -> ()
    %cst_73 = arith.constant dense<0.000000e+00> : vector<2x8x8xf32>
    %198 = tpu.matmul %193, %195, %cst_73 {dimension_numbers = #tpu.dot_dimension_numbers<[2], [2], [1], [1], [0, 0, 0, 1, 1, 1], [0], [0]>} : vector<2x8x8xbf16>, vector<2x8x8xbf16>, vector<2x8x8xf32> -> vector<2x8x8xf32>
    "tpu.trace_stop"() : () -> ()
    %199 = vector.broadcast %12 : vector<2x1x8xf32> to vector<2x8x8xf32>
    %200 = arith.addf %198, %199 : vector<2x8x8xf32>
    %cst_74 = arith.constant dense<0xFF800000> : vector<2x8xf32>
    %201 = vector.multi_reduction <maximumf>, %200, %cst_74 [2] : vector<2x8x8xf32> to vector<2x8xf32>
    %202 = vector.shape_cast %201 : vector<2x8xf32> to vector<2x8x1xf32>
    %203 = vector.broadcast %202 : vector<2x8x1xf32> to vector<2x8x8xf32>
    %204 = arith.subf %200, %203 : vector<2x8x8xf32>
    %205 = math.exp %204 : vector<2x8x8xf32>
    %cst_75 = arith.constant dense<0.000000e+00> : vector<2x8xf32>
    %206 = vector.multi_reduction <add>, %205, %cst_75 [2] : vector<2x8x8xf32> to vector<2x8xf32>
    %207 = vector.shape_cast %206 : vector<2x8xf32> to vector<2x8x1xf32>
    %208 = tpu.reciprocal %207 {approx = true} : vector<2x8x1xf32> -> vector<2x8x1xf32>
    %209 = vector.broadcast %208 : vector<2x8x1xf32> to vector<2x8x8xf32>
    %210 = arith.mulf %205, %209 : vector<2x8x8xf32>
    %211 = arith.truncf %210 : vector<2x8x8xf32> to vector<2x8x8xbf16>
    "tpu.trace_start"() <{level = 10 : i32, message = "nqk,nkd->nqd"}> : () -> ()
    %cst_76 = arith.constant dense<0.000000e+00> : vector<2x8x8xf32>
    %212 = tpu.matmul %211, %197, %cst_76 {dimension_numbers = #tpu.dot_dimension_numbers<[2], [1], [1], [2], [0, 0, 0, 1, 1, 2], [0], [0]>} : vector<2x8x8xbf16>, vector<2x8x8xbf16>, vector<2x8x8xf32> -> vector<2x8x8xf32>
    "tpu.trace_stop"() : () -> ()
    %213 = vector.shape_cast %212 : vector<2x8x8xf32> to vector<16x8xf32>
    %214 = arith.truncf %213 : vector<16x8xf32> to vector<16x8xbf16>
    %c0_77 = arith.constant 0 : index
    %c8_78 = arith.constant 8 : index
    %215 = vector.load %arg26[%c0_77, %c8_78] : memref<16x32xbf16, #tpu.memory_space<vmem>>, vector<16x8xbf16>
    tpu.vector_store %arg26[%c0_77, %c8_78], %214 {strides = array<i32>} : memref<16x32xbf16, #tpu.memory_space<vmem>>, vector<16x8xbf16>,
    %216 = vector.extract_strided_slice %165 {offsets = [0, 16], sizes = [16, 8], strides = [1, 1]} : vector<16x32xbf16> to vector<16x8xbf16>
    %217 = vector.shape_cast %216 : vector<16x8xbf16> to vector<2x8x8xbf16>
    %218 = vector.extract_strided_slice %166 {offsets = [0, 16], sizes = [16, 8], strides = [1, 1]} : vector<16x32xbf16> to vector<16x8xbf16>
    %219 = vector.shape_cast %218 : vector<16x8xbf16> to vector<2x8x8xbf16>
    %220 = vector.extract_strided_slice %167 {offsets = [0, 16], sizes = [16, 8], strides = [1, 1]} : vector<16x32xbf16> to vector<16x8xbf16>
    %221 = vector.shape_cast %220 : vector<16x8xbf16> to vector<2x8x8xbf16>
    "tpu.trace_start"() <{level = 10 : i32, message = "nqd,nkd->nqk"}> : () -> ()
    %cst_79 = arith.constant dense<0.000000e+00> : vector<2x8x8xf32>
    %222 = tpu.matmul %217, %219, %cst_79 {dimension_numbers = #tpu.dot_dimension_numbers<[2], [2], [1], [1], [0, 0, 0, 1, 1, 1], [0], [0]>} : vector<2x8x8xbf16>, vector<2x8x8xbf16>, vector<2x8x8xf32> -> vector<2x8x8xf32>
    "tpu.trace_stop"() : () -> ()
    %223 = vector.broadcast %12 : vector<2x1x8xf32> to vector<2x8x8xf32>
    %224 = arith.addf %222, %223 : vector<2x8x8xf32>
    %cst_80 = arith.constant dense<0xFF800000> : vector<2x8xf32>
    %225 = vector.multi_reduction <maximumf>, %224, %cst_80 [2] : vector<2x8x8xf32> to vector<2x8xf32>
    %226 = vector.shape_cast %225 : vector<2x8xf32> to vector<2x8x1xf32>
    %227 = vector.broadcast %226 : vector<2x8x1xf32> to vector<2x8x8xf32>
    %228 = arith.subf %224, %227 : vector<2x8x8xf32>
    %229 = math.exp %228 : vector<2x8x8xf32>
    %cst_81 = arith.constant dense<0.000000e+00> : vector<2x8xf32>
    %230 = vector.multi_reduction <add>, %229, %cst_81 [2] : vector<2x8x8xf32> to vector<2x8xf32>
    %231 = vector.shape_cast %230 : vector<2x8xf32> to vector<2x8x1xf32>
    %232 = tpu.reciprocal %231 {approx = true} : vector<2x8x1xf32> -> vector<2x8x1xf32>
    %233 = vector.broadcast %232 : vector<2x8x1xf32> to vector<2x8x8xf32>
    %234 = arith.mulf %229, %233 : vector<2x8x8xf32>
    %235 = arith.truncf %234 : vector<2x8x8xf32> to vector<2x8x8xbf16>
    "tpu.trace_start"() <{level = 10 : i32, message = "nqk,nkd->nqd"}> : () -> ()
    %cst_82 = arith.constant dense<0.000000e+00> : vector<2x8x8xf32>
    %236 = tpu.matmul %235, %221, %cst_82 {dimension_numbers = #tpu.dot_dimension_numbers<[2], [1], [1], [2], [0, 0, 0, 1, 1, 2], [0], [0]>} : vector<2x8x8xbf16>, vector<2x8x8xbf16>, vector<2x8x8xf32> -> vector<2x8x8xf32>
    "tpu.trace_stop"() : () -> ()
    %237 = vector.shape_cast %236 : vector<2x8x8xf32> to vector<16x8xf32>
    %238 = arith.truncf %237 : vector<16x8xf32> to vector<16x8xbf16>
    %c0_83 = arith.constant 0 : index
    %c16_84 = arith.constant 16 : index
    %239 = vector.load %arg26[%c0_83, %c16_84] : memref<16x32xbf16, #tpu.memory_space<vmem>>, vector<16x8xbf16>
    tpu.vector_store %arg26[%c0_83, %c16_84], %238 {strides = array<i32>} : memref<16x32xbf16, #tpu.memory_space<vmem>>, vector<16x8xbf16>,
    %240 = vector.extract_strided_slice %165 {offsets = [0, 24], sizes = [16, 8], strides = [1, 1]} : vector<16x32xbf16> to vector<16x8xbf16>
    %241 = vector.shape_cast %240 : vector<16x8xbf16> to vector<2x8x8xbf16>
    %242 = vector.extract_strided_slice %166 {offsets = [0, 24], sizes = [16, 8], strides = [1, 1]} : vector<16x32xbf16> to vector<16x8xbf16>
    %243 = vector.shape_cast %242 : vector<16x8xbf16> to vector<2x8x8xbf16>
    %244 = vector.extract_strided_slice %167 {offsets = [0, 24], sizes = [16, 8], strides = [1, 1]} : vector<16x32xbf16> to vector<16x8xbf16>
    %245 = vector.shape_cast %244 : vector<16x8xbf16> to vector<2x8x8xbf16>
    "tpu.trace_start"() <{level = 10 : i32, message = "nqd,nkd->nqk"}> : () -> ()
    %cst_85 = arith.constant dense<0.000000e+00> : vector<2x8x8xf32>
    %246 = tpu.matmul %241, %243, %cst_85 {dimension_numbers = #tpu.dot_dimension_numbers<[2], [2], [1], [1], [0, 0, 0, 1, 1, 1], [0], [0]>} : vector<2x8x8xbf16>, vector<2x8x8xbf16>, vector<2x8x8xf32> -> vector<2x8x8xf32>
    "tpu.trace_stop"() : () -> ()
    %247 = vector.broadcast %12 : vector<2x1x8xf32> to vector<2x8x8xf32>
    %248 = arith.addf %246, %247 : vector<2x8x8xf32>
    %cst_86 = arith.constant dense<0xFF800000> : vector<2x8xf32>
    %249 = vector.multi_reduction <maximumf>, %248, %cst_86 [2] : vector<2x8x8xf32> to vector<2x8xf32>
    %250 = vector.shape_cast %249 : vector<2x8xf32> to vector<2x8x1xf32>
    %251 = vector.broadcast %250 : vector<2x8x1xf32> to vector<2x8x8xf32>
    %252 = arith.subf %248, %251 : vector<2x8x8xf32>
    %253 = math.exp %252 : vector<2x8x8xf32>
    %cst_87 = arith.constant dense<0.000000e+00> : vector<2x8xf32>
    %254 = vector.multi_reduction <add>, %253, %cst_87 [2] : vector<2x8x8xf32> to vector<2x8xf32>
    %255 = vector.shape_cast %254 : vector<2x8xf32> to vector<2x8x1xf32>
    %256 = tpu.reciprocal %255 {approx = true} : vector<2x8x1xf32> -> vector<2x8x1xf32>
    %257 = vector.broadcast %256 : vector<2x8x1xf32> to vector<2x8x8xf32>
    %258 = arith.mulf %253, %257 : vector<2x8x8xf32>
    %259 = arith.truncf %258 : vector<2x8x8xf32> to vector<2x8x8xbf16>
    "tpu.trace_start"() <{level = 10 : i32, message = "nqk,nkd->nqd"}> : () -> ()
    %cst_88 = arith.constant dense<0.000000e+00> : vector<2x8x8xf32>
    %260 = tpu.matmul %259, %245, %cst_88 {dimension_numbers = #tpu.dot_dimension_numbers<[2], [1], [1], [2], [0, 0, 0, 1, 1, 2], [0], [0]>} : vector<2x8x8xbf16>, vector<2x8x8xbf16>, vector<2x8x8xf32> -> vector<2x8x8xf32>
    "tpu.trace_stop"() : () -> ()
    %261 = vector.shape_cast %260 : vector<2x8x8xf32> to vector<16x8xf32>
    %262 = arith.truncf %261 : vector<16x8xf32> to vector<16x8xbf16>
    %c0_89 = arith.constant 0 : index
    %c24_90 = arith.constant 24 : index
    %263 = vector.load %arg26[%c0_89, %c24_90] : memref<16x32xbf16, #tpu.memory_space<vmem>>, vector<16x8xbf16>
    tpu.vector_store %arg26[%c0_89, %c24_90], %262 {strides = array<i32>} : memref<16x32xbf16, #tpu.memory_space<vmem>>, vector<16x8xbf16>,
    %c0_91 = arith.constant 0 : index
    %c0_92 = arith.constant 0 : index
    %264 = vector.load %arg26[%c0_91, %c0_92] : memref<16x32xbf16, #tpu.memory_space<vmem>>, vector<16x32xbf16>
    %c0_93 = arith.constant 0 : index
    %c0_94 = arith.constant 0 : index
    %265 = vector.load %arg15[%c0_93, %c0_94] : memref<32x32xbf16, #tpu.memory_space<vmem>>, vector<32x32xbf16>
    %cst_95 = arith.constant dense<0.000000e+00> : vector<16x32xf32>
    %266 = tpu.matmul %264, %265, %cst_95 {dimension_numbers = #tpu.dot_dimension_numbers<[1], [0], [0], [1], [0, 0, 1, 1], [], []>} : vector<16x32xbf16>, vector<32x32xbf16>, vector<16x32xf32> -> vector<16x32xf32>
    %c0_96 = arith.constant 0 : index
    %c0_97 = arith.constant 0 : index
    %267 = vector.load %arg16[%c0_96, %c0_97] : memref<1x32xf32, #tpu.memory_space<vmem>>, vector<1x32xf32>
    %268 = vector.broadcast %267 : vector<1x32xf32> to vector<16x32xf32>
    %269 = arith.addf %266, %268 : vector<16x32xf32>
    %270 = arith.addf %269, %155 : vector<16x32xf32>
    %c0_98 = arith.constant 0 : index
    %c0_99 = arith.constant 0 : index
    %271 = vector.load %arg17[%c0_98, %c0_99] : memref<1x32xf32, #tpu.memory_space<vmem>>, vector<1x32xf32>
    %c0_100 = arith.constant 0 : index
    %c0_101 = arith.constant 0 : index
    %272 = vector.load %arg18[%c0_100, %c0_101] : memref<1x32xf32, #tpu.memory_space<vmem>>, vector<1x32xf32>
    %cst_102 = arith.constant dense<0.000000e+00> : vector<16xf32>
    %273 = vector.multi_reduction <add>, %270, %cst_102 [1] : vector<16x32xf32> to vector<16xf32>
    %274 = vector.shape_cast %273 : vector<16xf32> to vector<16x1xf32>
    %cst_103 = arith.constant 3.200000e+01 : f32
    %275 = vector.broadcast %cst_103 : f32 to vector<16x1xf32>
    %276 = arith.divf %274, %275 : vector<16x1xf32>
    %277 = vector.broadcast %276 : vector<16x1xf32> to vector<16x32xf32>
    %278 = arith.subf %270, %277 : vector<16x32xf32>
    %279 = arith.mulf %278, %278 : vector<16x32xf32>
    %cst_104 = arith.constant dense<0.000000e+00> : vector<16xf32>
    %280 = vector.multi_reduction <add>, %279, %cst_104 [1] : vector<16x32xf32> to vector<16xf32>
    %281 = vector.shape_cast %280 : vector<16xf32> to vector<16x1xf32>
    %cst_105 = arith.constant 3.200000e+01 : f32
    %282 = vector.broadcast %cst_105 : f32 to vector<16x1xf32>
    %283 = arith.divf %281, %282 : vector<16x1xf32>
    %284 = vector.broadcast %276 : vector<16x1xf32> to vector<16x32xf32>
    %285 = arith.subf %270, %284 : vector<16x32xf32>
    %cst_106 = arith.constant 9.99999974E-6 : f32
    %286 = vector.broadcast %cst_106 : f32 to vector<16x1xf32>
    %287 = arith.addf %283, %286 : vector<16x1xf32>
    %288 = math.rsqrt %287 : vector<16x1xf32>
    %289 = vector.broadcast %288 : vector<16x1xf32> to vector<16x32xf32>
    %290 = arith.mulf %285, %289 : vector<16x32xf32>
    %291 = vector.broadcast %271 : vector<1x32xf32> to vector<16x32xf32>
    %292 = arith.mulf %290, %291 : vector<16x32xf32>
    %293 = vector.broadcast %272 : vector<1x32xf32> to vector<16x32xf32>
    %294 = arith.addf %292, %293 : vector<16x32xf32>
    %295 = arith.truncf %294 : vector<16x32xf32> to vector<16x32xbf16>
    %c0_107 = arith.constant 0 : index
    %c0_108 = arith.constant 0 : index
    %296 = vector.load %arg19[%c0_107, %c0_108] : memref<32x128xbf16, #tpu.memory_space<vmem>>, vector<32x128xbf16>
    %cst_109 = arith.constant dense<0.000000e+00> : vector<16x128xf32>
    %297 = tpu.matmul %295, %296, %cst_109 {dimension_numbers = #tpu.dot_dimension_numbers<[1], [0], [0], [1], [0, 0, 1, 1], [], []>} : vector<16x32xbf16>, vector<32x128xbf16>, vector<16x128xf32> -> vector<16x128xf32>
    %c0_110 = arith.constant 0 : index
    %c0_111 = arith.constant 0 : index
    %298 = vector.load %arg20[%c0_110, %c0_111] : memref<1x128xf32, #tpu.memory_space<vmem>>, vector<1x128xf32>
    %299 = vector.broadcast %298 : vector<1x128xf32> to vector<16x128xf32>
    %300 = arith.addf %297, %299 : vector<16x128xf32>
    %cst_112 = arith.constant 0.000000e+00 : f32
    %301 = vector.broadcast %cst_112 : f32 to vector<16x128xf32>
    %302 = arith.maximumf %300, %301 : vector<16x128xf32>
    %303 = arith.truncf %302 : vector<16x128xf32> to vector<16x128xbf16>
    %c0_113 = arith.constant 0 : index
    %c0_114 = arith.constant 0 : index
    %304 = vector.load %arg21[%c0_113, %c0_114] : memref<128x32xbf16, #tpu.memory_space<vmem>>, vector<128x32xbf16>
    %cst_115 = arith.constant dense<0.000000e+00> : vector<16x32xf32>
    %305 = tpu.matmul %303, %304, %cst_115 {dimension_numbers = #tpu.dot_dimension_numbers<[1], [0], [0], [1], [0, 0, 1, 1], [], []>} : vector<16x128xbf16>, vector<128x32xbf16>, vector<16x32xf32> -> vector<16x32xf32>
    %c0_116 = arith.constant 0 : index
    %c0_117 = arith.constant 0 : index
    %306 = vector.load %arg22[%c0_116, %c0_117] : memref<1x32xf32, #tpu.memory_space<vmem>>, vector<1x32xf32>
    %307 = vector.broadcast %306 : vector<1x32xf32> to vector<16x32xf32>
    %308 = arith.addf %305, %307 : vector<16x32xf32>
    %309 = arith.addf %308, %294 : vector<16x32xf32>
    %c0_118 = arith.constant 0 : index
    %c0_119 = arith.constant 0 : index
    %310 = vector.load %arg23[%c0_118, %c0_119] : memref<1x32xf32, #tpu.memory_space<vmem>>, vector<1x32xf32>
    %c0_120 = arith.constant 0 : index
    %c0_121 = arith.constant 0 : index
    %311 = vector.load %arg24[%c0_120, %c0_121] : memref<1x32xf32, #tpu.memory_space<vmem>>, vector<1x32xf32>
    %cst_122 = arith.constant dense<0.000000e+00> : vector<16xf32>
    %312 = vector.multi_reduction <add>, %309, %cst_122 [1] : vector<16x32xf32> to vector<16xf32>
    %313 = vector.shape_cast %312 : vector<16xf32> to vector<16x1xf32>
    %cst_123 = arith.constant 3.200000e+01 : f32
    %314 = vector.broadcast %cst_123 : f32 to vector<16x1xf32>
    %315 = arith.divf %313, %314 : vector<16x1xf32>
    %316 = vector.broadcast %315 : vector<16x1xf32> to vector<16x32xf32>
    %317 = arith.subf %309, %316 : vector<16x32xf32>
    %318 = arith.mulf %317, %317 : vector<16x32xf32>
    %cst_124 = arith.constant dense<0.000000e+00> : vector<16xf32>
    %319 = vector.multi_reduction <add>, %318, %cst_124 [1] : vector<16x32xf32> to vector<16xf32>
    %320 = vector.shape_cast %319 : vector<16xf32> to vector<16x1xf32>
    %cst_125 = arith.constant 3.200000e+01 : f32
    %321 = vector.broadcast %cst_125 : f32 to vector<16x1xf32>
    %322 = arith.divf %320, %321 : vector<16x1xf32>
    %323 = vector.broadcast %315 : vector<16x1xf32> to vector<16x32xf32>
    %324 = arith.subf %309, %323 : vector<16x32xf32>
    %cst_126 = arith.constant 9.99999974E-6 : f32
    %325 = vector.broadcast %cst_126 : f32 to vector<16x1xf32>
    %326 = arith.addf %322, %325 : vector<16x1xf32>
    %327 = math.rsqrt %326 : vector<16x1xf32>
    %328 = vector.broadcast %327 : vector<16x1xf32> to vector<16x32xf32>
    %329 = arith.mulf %324, %328 : vector<16x32xf32>
    %330 = vector.broadcast %310 : vector<1x32xf32> to vector<16x32xf32>
    %331 = arith.mulf %329, %330 : vector<16x32xf32>
    %332 = vector.broadcast %311 : vector<1x32xf32> to vector<16x32xf32>
    %333 = arith.addf %331, %332 : vector<16x32xf32>
    %334 = vector.shape_cast %333 : vector<16x32xf32> to vector<2x8x32xf32>
    %c0_127 = arith.constant 0 : index
    %c0_128 = arith.constant 0 : index
    %c0_129 = arith.constant 0 : index
    %335 = vector.load %arg25[%c0_127, %c0_128, %c0_129] : memref<2x8x32xf32, #tpu.memory_space<vmem>>, vector<2x8x32xf32>
    tpu.vector_store %arg25[%c0_127, %c0_128, %c0_129], %334 {strides = array<i32>} : memref<2x8x32xf32, #tpu.memory_space<vmem>>, vector<2x8x32xf32>,
    return
  }
  func.func @transform_0(%arg0: i32) -> (i32, i32, i32) {
    %c0_i32 = arith.constant 0 : i32
    %c0_i32_0 = arith.constant 0 : i32
    %c0_i32_1 = arith.constant 0 : i32
    return %arg0, %c0_i32, %c0_i32_0 : i32, i32, i32
  }
  func.func @transform_1(%arg0: i32) -> (i32, i32, i32) {
    %c0_i32 = arith.constant 0 : i32
    %c0_i32_0 = arith.constant 0 : i32
    %c0_i32_1 = arith.constant 0 : i32
    return %arg0, %c0_i32, %c0_i32_0 : i32, i32, i32
  }
  func.func @transform_2(%arg0: i32) -> (i32, i32, i32) {
    %c0_i32 = arith.constant 0 : i32
    %c0_i32_0 = arith.constant 0 : i32
    %c0_i32_1 = arith.constant 0 : i32
    return %arg0, %c0_i32, %c0_i32_0 : i32, i32, i32
  }
  func.func @transform_3(%arg0: i32) -> (i32, i32, i32) {
    %c0_i32 = arith.constant 0 : i32
    %c0_i32_0 = arith.constant 0 : i32
    %c0_i32_1 = arith.constant 0 : i32
    return %arg0, %c0_i32, %c0_i32_0 : i32, i32, i32
  }
  func.func @transform_4(%arg0: i32) -> (i32, i32) {
    %c0_i32 = arith.constant 0 : i32
    %c0_i32_0 = arith.constant 0 : i32
    %c0_i32_1 = arith.constant 0 : i32
    return %c0_i32, %c0_i32_0 : i32, i32
  }
  func.func @transform_5(%arg0: i32) -> (i32, i32) {
    %c0_i32 = arith.constant 0 : i32
    %c0_i32_0 = arith.constant 0 : i32
    %c0_i32_1 = arith.constant 0 : i32
    return %c0_i32, %c0_i32_0 : i32, i32
  }
  func.func @transform_6(%arg0: i32) -> (i32, i32) {
    %c0_i32 = arith.constant 0 : i32
    %c0_i32_0 = arith.constant 0 : i32
    %c0_i32_1 = arith.constant 0 : i32
    return %c0_i32, %c0_i32_0 : i32, i32
  }
  func.func @transform_7(%arg0: i32) -> (i32, i32) {
    %c0_i32 = arith.constant 0 : i32
    %c0_i32_0 = arith.constant 0 : i32
    %c0_i32_1 = arith.constant 0 : i32
    return %c0_i32, %c0_i32_0 : i32, i32
  }
  func.func @transform_8(%arg0: i32) -> (i32, i32) {
    %c0_i32 = arith.constant 0 : i32
    %c0_i32_0 = arith.constant 0 : i32
    %c0_i32_1 = arith.constant 0 : i32
    return %c0_i32, %c0_i32_0 : i32, i32
  }
  func.func @transform_9(%arg0: i32) -> (i32, i32) {
    %c0_i32 = arith.constant 0 : i32
    %c0_i32_0 = arith.constant 0 : i32
    %c0_i32_1 = arith.constant 0 : i32
    return %c0_i32, %c0_i32_0 : i32, i32
  }
  func.func @transform_10(%arg0: i32) -> (i32, i32) {
    %c0_i32 = arith.constant 0 : i32
    %c0_i32_0 = arith.constant 0 : i32
    %c0_i32_1 = arith.constant 0 : i32
    return %c0_i32, %c0_i32_0 : i32, i32
  }
  func.func @transform_11(%arg0: i32) -> (i32, i32) {
    %c0_i32 = arith.constant 0 : i32
    %c0_i32_0 = arith.constant 0 : i32
    %c0_i32_1 = arith.constant 0 : i32
    return %c0_i32, %c0_i32_0 : i32, i32
  }
  func.func @transform_12(%arg0: i32) -> (i32, i32) {
    %c0_i32 = arith.constant 0 : i32
    %c0_i32_0 = arith.constant 0 : i32
    %c0_i32_1 = arith.constant 0 : i32
    return %c0_i32, %c0_i32_0 : i32, i32
  }
  func.func @transform_13(%arg0: i32) -> (i32, i32) {
    %c0_i32 = arith.constant 0 : i32
    %c0_i32_0 = arith.constant 0 : i32
    %c0_i32_1 = arith.constant 0 : i32
    return %c0_i32, %c0_i32_0 : i32, i32
  }
  func.func @transform_14(%arg0: i32) -> (i32, i32) {
    %c0_i32 = arith.constant 0 : i32
    %c0_i32_0 = arith.constant 0 : i32
    %c0_i32_1 = arith.constant 0 : i32
    return %c0_i32, %c0_i32_0 : i32, i32
  }
  func.func @transform_15(%arg0: i32) -> (i32, i32) {
    %c0_i32 = arith.constant 0 : i32
    %c0_i32_0 = arith.constant 0 : i32
    %c0_i32_1 = arith.constant 0 : i32
    return %c0_i32, %c0_i32_0 : i32, i32
  }
  func.func @transform_16(%arg0: i32) -> (i32, i32) {
    %c0_i32 = arith.constant 0 : i32
    %c0_i32_0 = arith.constant 0 : i32
    %c0_i32_1 = arith.constant 0 : i32
    return %c0_i32, %c0_i32_0 : i32, i32
  }
  func.func @transform_17(%arg0: i32) -> (i32, i32) {
    %c0_i32 = arith.constant 0 : i32
    %c0_i32_0 = arith.constant 0 : i32
    %c0_i32_1 = arith.constant 0 : i32
    return %c0_i32, %c0_i32_0 : i32, i32
  }
  func.func @transform_18(%arg0: i32) -> (i32, i32) {
    %c0_i32 = arith.constant 0 : i32
    %c0_i32_0 = arith.constant 0 : i32
    %c0_i32_1 = arith.constant 0 : i32
    return %c0_i32, %c0_i32_0 : i32, i32
  }
  func.func @transform_19(%arg0: i32) -> (i32, i32) {
    %c0_i32 = arith.constant 0 : i32
    %c0_i32_0 = arith.constant 0 : i32
    %c0_i32_1 = arith.constant 0 : i32
    return %c0_i32, %c0_i32_0 : i32, i32
  }
  func.func @transform_20(%arg0: i32) -> (i32, i32) {
    %c0_i32 = arith.constant 0 : i32
    %c0_i32_0 = arith.constant 0 : i32
    %c0_i32_1 = arith.constant 0 : i32
    return %c0_i32, %c0_i32_0 : i32, i32
  }
  func.func @transform_21(%arg0: i32) -> (i32, i32) {
    %c0_i32 = arith.constant 0 : i32
    %c0_i32_0 = arith.constant 0 : i32
    %c0_i32_1 = arith.constant 0 : i32
    return %c0_i32, %c0_i32_0 : i32, i32
  }
  func.func @transform_22(%arg0: i32) -> (i32, i32) {
    %c0_i32 = arith.constant 0 : i32
    %c0_i32_0 = arith.constant 0 : i32
    %c0_i32_1 = arith.constant 0 : i32
    return %c0_i32, %c0_i32_0 : i32, i32
  }
  func.func @transform_23(%arg0: i32) -> (i32, i32) {
    %c0_i32 = arith.constant 0 : i32
    %c0_i32_0 = arith.constant 0 : i32
    %c0_i32_1 = arith.constant 0 : i32
    return %c0_i32, %c0_i32_0 : i32, i32
  }
  func.func @transform_24(%arg0: i32) -> (i32, i32, i32) {
    %c0_i32 = arith.constant 0 : i32
    %c0_i32_0 = arith.constant 0 : i32
    %c0_i32_1 = arith.constant 0 : i32
    return %arg0, %c0_i32, %c0_i32_0 : i32, i32, i32
  }
}

module attributes {stable_mosaic.version = 11 : i64} {
  func.func @kernel(%arg0: i32, %arg1: memref<2x8x32xf32, #tpu.memory_space<vmem>>, %arg2: memref<2x8x32xf32, #tpu.memory_space<vmem>>, %arg3: memref<2x8x32xf32, #tpu.memory_space<vmem>>, %arg4: memref<2x1x8xf32, #tpu.memory_space<vmem>>, %arg5: memref<32x32xbf16, #tpu.memory_space<vmem>>, %arg6: memref<32x32xbf16, #tpu.memory_space<vmem>>, %arg7: memref<32x32xbf16, #tpu.memory_space<vmem>>, %arg8: memref<32x32xbf16, #tpu.memory_space<vmem>>, %arg9: memref<1x32xf32, #tpu.memory_space<vmem>>, %arg10: memref<1x32xf32, #tpu.memory_space<vmem>>, %arg11: memref<1x32xf32, #tpu.memory_space<vmem>>, %arg12: memref<32x32xbf16, #tpu.memory_space<vmem>>, %arg13: memref<32x32xbf16, #tpu.memory_space<vmem>>, %arg14: memref<32x32xbf16, #tpu.memory_space<vmem>>, %arg15: memref<32x32xbf16, #tpu.memory_space<vmem>>, %arg16: memref<1x32xf32, #tpu.memory_space<vmem>>, %arg17: memref<1x32xf32, #tpu.memory_space<vmem>>, %arg18: memref<1x32xf32, #tpu.memory_space<vmem>>, %arg19: memref<32x128xbf16, #tpu.memory_space<vmem>>, %arg20: memref<1x128xf32, #tpu.memory_space<vmem>>, %arg21: memref<128x32xbf16, #tpu.memory_space<vmem>>, %arg22: memref<1x32xf32, #tpu.memory_space<vmem>>, %arg23: memref<1x32xf32, #tpu.memory_space<vmem>>, %arg24: memref<1x32xf32, #tpu.memory_space<vmem>>, %arg25: memref<2x8x32xf32, #tpu.memory_space<vmem>>, %arg26: memref<16x32xbf16, #tpu.memory_space<vmem>>) attributes {dimension_semantics = [#tpu.dimension_semantics<parallel>], iteration_bounds = array<i64: 1>, scalar_prefetch = 0 : i64, scratch_operands = 1 : i64, tpu.core_type = #tpu.core_type<tc>, window_params = [{transform_indices = @transform_0, window_bounds = array<i64: 2, 8, 32>}, {transform_indices = @transform_1, window_bounds = array<i64: 2, 8, 32>}, {transform_indices = @transform_2, window_bounds = array<i64: 2, 8, 32>}, {transform_indices = @transform_3, window_bounds = array<i64: 2, 1, 8>}, {pipeline_mode = #tpu.pipeline_mode<synchronous>, transform_indices = @transform_4, window_bounds = array<i64: 32, 32>}, {pipeline_mode = #tpu.pipeline_mode<synchronous>, transform_indices = @transform_5, window_bounds = array<i64: 32, 32>}, {pipeline_mode = #tpu.pipeline_mode<synchronous>, transform_indices = @transform_6, window_bounds = array<i64: 32, 32>}, {pipeline_mode = #tpu.pipeline_mode<synchronous>, transform_indices = @transform_7, window_bounds = array<i64: 32, 32>}, {pipeline_mode = #tpu.pipeline_mode<synchronous>, transform_indices = @transform_8, window_bounds = array<i64: 1, 32>}, {pipeline_mode = #tpu.pipeline_mode<synchronous>, transform_indices = @transform_9, window_bounds = array<i64: 1, 32>}, {pipeline_mode = #tpu.pipeline_mode<synchronous>, transform_indices = @transform_10, window_bounds = array<i64: 1, 32>}, {pipeline_mode = #tpu.pipeline_mode<synchronous>, transform_indices = @transform_11, window_bounds = array<i64: 32, 32>}, {pipeline_mode = #tpu.pipeline_mode<synchronous>, transform_indices = @transform_12, window_bounds = array<i64: 32, 32>}, {pipeline_mode = #tpu.pipeline_mode<synchronous>, transform_indices = @transform_13, window_bounds = array<i64: 32, 32>}, {pipeline_mode = #tpu.pipeline_mode<synchronous>, transform_indices = @transform_14, window_bounds = array<i64: 32, 32>}, {pipeline_mode = #tpu.pipeline_mode<synchronous>, transform_indices = @transform_15, window_bounds = array<i64: 1, 32>}, {pipeline_mode = #tpu.pipeline_mode<synchronous>, transform_indices = @transform_16, window_bounds = array<i64: 1, 32>}, {pipeline_mode = #tpu.pipeline_mode<synchronous>, transform_indices = @transform_17, window_bounds = array<i64: 1, 32>}, {pipeline_mode = #tpu.pipeline_mode<synchronous>, transform_indices = @transform_18, window_bounds = array<i64: 32, 128>}, {pipeline_mode = #tpu.pipeline_mode<synchronous>, transform_indices = @transform_19, window_bounds = array<i64: 1, 128>}, {pipeline_mode = #tpu.pipeline_mode<synchronous>, transform_indices = @transform_20, window_bounds = array<i64: 128, 32>}, {pipeline_mode = #tpu.pipeline_mode<synchronous>, transform_indices = @transform_21, window_bounds = array<i64: 1, 32>}, {pipeline_mode = #tpu.pipeline_mode<synchronous>, transform_indices = @transform_22, window_bounds = array<i64: 1, 32>}, {pipeline_mode = #tpu.pipeline_mode<synchronous>, transform_indices = @transform_23, window_bounds = array<i64: 1, 32>}, {transform_indices = @transform_24, window_bounds = array<i64: 2, 8, 32>}]} {
    %c0 = arith.constant 0 : index
    %c0_0 = arith.constant 0 : index
    %c0_1 = arith.constant 0 : index
    %0 = vector.load %arg1[%c0, %c0_0, %c0_1] : memref<2x8x32xf32, #tpu.memory_space<vmem>>, vector<2x8x32xf32>
    %1 = vector.shape_cast %0 : vector<2x8x32xf32> to vector<16x32xf32>
    %c0_2 = arith.constant 0 : index
    %c0_3 = arith.constant 0 : index
    %c0_4 = arith.constant 0 : index
    %2 = vector.load %arg2[%c0_2, %c0_3, %c0_4] : memref<2x8x32xf32, #tpu.memory_space<vmem>>, vector<2x8x32xf32>
    %3 = vector.shape_cast %2 : vector<2x8x32xf32> to vector<16x32xf32>
    %c0_5 = arith.constant 0 : index
    %c0_6 = arith.constant 0 : index
    %c0_7 = arith.constant 0 : index
    %4 = vector.load %arg3[%c0_5, %c0_6, %c0_7] : memref<2x8x32xf32, #tpu.memory_space<vmem>>, vector<2x8x32xf32>
    %5 = vector.shape_cast %4 : vector<2x8x32xf32> to vector<16x32xf32>
    %6 = tpu.iota {dimensions = array<i32: 0>} : vector<8x8xi32>
    %7 = tpu.iota {dimensions = array<i32: 1>} : vector<8x8xi32>
    %8 = arith.cmpi sgt, %7, %6 : vector<8x8xi32>
    %cst = arith.constant -1.000000e+20 : f32
    %cst_8 = arith.constant 0.000000e+00 : f32
    %9 = vector.broadcast %cst : f32 to vector<8x8xf32>
    %10 = vector.broadcast %cst_8 : f32 to vector<8x8xf32>
    %11 = arith.select %8, %9, %10 : vector<8x8xi1>, vector<8x8xf32>
    %c0_9 = arith.constant 0 : index
    %c0_10 = arith.constant 0 : index
    %c0_11 = arith.constant 0 : index
    %12 = vector.load %arg4[%c0_9, %c0_10, %c0_11] : memref<2x1x8xf32, #tpu.memory_space<vmem>>, vector<2x1x8xf32>
    %13 = arith.truncf %1 : vector<16x32xf32> to vector<16x32xbf16>
    %c0_12 = arith.constant 0 : index
    %c0_13 = arith.constant 0 : index
    %14 = vector.load %arg5[%c0_12, %c0_13] : memref<32x32xbf16, #tpu.memory_space<vmem>>, vector<32x32xbf16>
    %cst_14 = arith.constant dense<0.000000e+00> : vector<16x32xf32>
    %15 = tpu.matmul %13, %14, %cst_14 {dimension_numbers = #tpu.dot_dimension_numbers<[1], [0], [0], [1], [0, 0, 1, 1], [], []>} : vector<16x32xbf16>, vector<32x32xbf16>, vector<16x32xf32> -> vector<16x32xf32>
    %16 = arith.truncf %1 : vector<16x32xf32> to vector<16x32xbf16>
    %c0_15 = arith.constant 0 : index
    %c0_16 = arith.constant 0 : index
    %17 = vector.load %arg6[%c0_15, %c0_16] : memref<32x32xbf16, #tpu.memory_space<vmem>>, vector<32x32xbf16>
    %cst_17 = arith.constant dense<0.000000e+00> : vector<16x32xf32>
    %18 = tpu.matmul %16, %17, %cst_17 {dimension_numbers = #tpu.dot_dimension_numbers<[1], [0], [0], [1], [0, 0, 1, 1], [], []>} : vector<16x32xbf16>, vector<32x32xbf16>, vector<16x32xf32> -> vector<16x32xf32>
    %19 = arith.truncf %1 : vector<16x32xf32> to vector<16x32xbf16>
    %c0_18 = arith.constant 0 : index
    %c0_19 = arith.constant 0 : index
    %20 = vector.load %arg7[%c0_18, %c0_19] : memref<32x32xbf16, #tpu.memory_space<vmem>>, vector<32x32xbf16>
    %cst_20 = arith.constant dense<0.000000e+00> : vector<16x32xf32>
    %21 = tpu.matmul %19, %20, %cst_20 {dimension_numbers = #tpu.dot_dimension_numbers<[1], [0], [0], [1], [0, 0, 1, 1], [], []>} : vector<16x32xbf16>, vector<32x32xbf16>, vector<16x32xf32> -> vector<16x32xf32>
    %22 = arith.truncf %15 : vector<16x32xf32> to vector<16x32xbf16>
    %23 = arith.truncf %18 : vector<16x32xf32> to vector<16x32xbf16>
    %24 = arith.truncf %21 : vector<16x32xf32> to vector<16x32xbf16>
    %25 = vector.extract_strided_slice %22 {offsets = [0, 0], sizes = [16, 8], strides = [1, 1]} : vector<16x32xbf16> to vector<16x8xbf16>
    %26 = vector.shape_cast %25 : vector<16x8xbf16> to vector<2x8x8xbf16>
    %27 = vector.extract_strided_slice %23 {offsets = [0, 0], sizes = [16, 8], strides = [1, 1]} : vector<16x32xbf16> to vector<16x8xbf16>
    %28 = vector.shape_cast %27 : vector<16x8xbf16> to vector<2x8x8xbf16>
    %29 = vector.extract_strided_slice %24 {offsets = [0, 0], sizes = [16, 8], strides = [1, 1]} : vector<16x32xbf16> to vector<16x8xbf16>
    %30 = vector.shape_cast %29 : vector<16x8xbf16> to vector<2x8x8xbf16>
    "tpu.trace_start"() <{level = 10 : i32, message = "nqd,nkd->nqk"}> : () -> ()
    %cst_21 = arith.constant dense<0.000000e+00> : vector<2x8x8xf32>
    %31 = tpu.matmul %26, %28, %cst_21 {dimension_numbers = #tpu.dot_dimension_numbers<[2], [2], [1], [1], [0, 0, 0, 1, 1, 1], [0], [0]>} : vector<2x8x8xbf16>, vector<2x8x8xbf16>, vector<2x8x8xf32> -> vector<2x8x8xf32>
    "tpu.trace_stop"() : () -> ()
    %32 = vector.shape_cast %11 : vector<8x8xf32> to vector<1x8x8xf32>
    %33 = vector.broadcast %32 : vector<1x8x8xf32> to vector<2x8x8xf32>
    %34 = arith.addf %31, %33 : vector<2x8x8xf32>
    %cst_22 = arith.constant dense<0xFF800000> : vector<2x8xf32>
    %35 = vector.multi_reduction <maximumf>, %34, %cst_22 [2] : vector<2x8x8xf32> to vector<2x8xf32>
    %36 = vector.shape_cast %35 : vector<2x8xf32> to vector<2x8x1xf32>
    %37 = vector.broadcast %36 : vector<2x8x1xf32> to vector<2x8x8xf32>
    %38 = arith.subf %34, %37 : vector<2x8x8xf32>
    %39 = math.exp %38 : vector<2x8x8xf32>
    %cst_23 = arith.constant dense<0.000000e+00> : vector<2x8xf32>
    %40 = vector.multi_reduction <add>, %39, %cst_23 [2] : vector<2x8x8xf32> to vector<2x8xf32>
    %41 = vector.shape_cast %40 : vector<2x8xf32> to vector<2x8x1xf32>
    %42 = tpu.reciprocal %41 {approx = true} : vector<2x8x1xf32> -> vector<2x8x1xf32>
    %43 = vector.broadcast %42 : vector<2x8x1xf32> to vector<2x8x8xf32>
    %44 = arith.mulf %39, %43 : vector<2x8x8xf32>
    %45 = arith.truncf %44 : vector<2x8x8xf32> to vector<2x8x8xbf16>
    "tpu.trace_start"() <{level = 10 : i32, message = "nqk,nkd->nqd"}> : () -> ()
    %cst_24 = arith.constant dense<0.000000e+00> : vector<2x8x8xf32>
    %46 = tpu.matmul %45, %30, %cst_24 {dimension_numbers = #tpu.dot_dimension_numbers<[2], [1], [1], [2], [0, 0, 0, 1, 1, 2], [0], [0]>} : vector<2x8x8xbf16>, vector<2x8x8xbf16>, vector<2x8x8xf32> -> vector<2x8x8xf32>
    "tpu.trace_stop"() : () -> ()
    %47 = vector.shape_cast %46 : vector<2x8x8xf32> to vector<16x8xf32>
    %48 = arith.truncf %47 : vector<16x8xf32> to vector<16x8xbf16>
    %c0_25 = arith.constant 0 : index
    %c0_26 = arith.constant 0 : index
    %49 = vector.load %arg26[%c0_25, %c0_26] : memref<16x32xbf16, #tpu.memory_space<vmem>>, vector<16x8xbf16>
    tpu.vector_store %arg26[%c0_25, %c0_26], %48 {strides = array<i32>} : memref<16x32xbf16, #tpu.memory_space<vmem>>, vector<16x8xbf16>,
    %50 = vector.extract_strided_slice %22 {offsets = [0, 8], sizes = [16, 8], strides = [1, 1]} : vector<16x32xbf16> to vector<16x8xbf16>
    %51 = vector.shape_cast %50 : vector<16x8xbf16> to vector<2x8x8xbf16>
    %52 = vector.extract_strided_slice %23 {offsets = [0, 8], sizes = [16, 8], strides = [1, 1]} : vector<16x32xbf16> to vector<16x8xbf16>
    %53 = vector.shape_cast %52 : vector<16x8xbf16> to vector<2x8x8xbf16>
    %54 = vector.extract_strided_slice %24 {offsets = [0, 8], sizes = [16, 8], strides = [1, 1]} : vector<16x32xbf16> to vector<16x8xbf16>
    %55 = vector.shape_cast %54 : vector<16x8xbf16> to vector<2x8x8xbf16>
    "tpu.trace_start"() <{level = 10 : i32, message = "nqd,nkd->nqk"}> : () -> ()
    %cst_27 = arith.constant dense<0.000000e+00> : vector<2x8x8xf32>
    %56 = tpu.matmul %51, %53, %cst_27 {dimension_numbers = #tpu.dot_dimension_numbers<[2], [2], [1], [1], [0, 0, 0, 1, 1, 1], [0], [0]>} : vector<2x8x8xbf16>, vector<2x8x8xbf16>, vector<2x8x8xf32> -> vector<2x8x8xf32>
    "tpu.trace_stop"() : () -> ()
    %57 = vector.shape_cast %11 : vector<8x8xf32> to vector<1x8x8xf32>
    %58 = vector.broadcast %57 : vector<1x8x8xf32> to vector<2x8x8xf32>
    %59 = arith.addf %56, %58 : vector<2x8x8xf32>
    %cst_28 = arith.constant dense<0xFF800000> : vector<2x8xf32>
    %60 = vector.multi_reduction <maximumf>, %59, %cst_28 [2] : vector<2x8x8xf32> to vector<2x8xf32>
    %61 = vector.shape_cast %60 : vector<2x8xf32> to vector<2x8x1xf32>
    %62 = vector.broadcast %61 : vector<2x8x1xf32> to vector<2x8x8xf32>
    %63 = arith.subf %59, %62 : vector<2x8x8xf32>
    %64 = math.exp %63 : vector<2x8x8xf32>
    %cst_29 = arith.constant dense<0.000000e+00> : vector<2x8xf32>
    %65 = vector.multi_reduction <add>, %64, %cst_29 [2] : vector<2x8x8xf32> to vector<2x8xf32>
    %66 = vector.shape_cast %65 : vector<2x8xf32> to vector<2x8x1xf32>
    %67 = tpu.reciprocal %66 {approx = true} : vector<2x8x1xf32> -> vector<2x8x1xf32>
    %68 = vector.broadcast %67 : vector<2x8x1xf32> to vector<2x8x8xf32>
    %69 = arith.mulf %64, %68 : vector<2x8x8xf32>
    %70 = arith.truncf %69 : vector<2x8x8xf32> to vector<2x8x8xbf16>
    "tpu.trace_start"() <{level = 10 : i32, message = "nqk,nkd->nqd"}> : () -> ()
    %cst_30 = arith.constant dense<0.000000e+00> : vector<2x8x8xf32>
    %71 = tpu.matmul %70, %55, %cst_30 {dimension_numbers = #tpu.dot_dimension_numbers<[2], [1], [1], [2], [0, 0, 0, 1, 1, 2], [0], [0]>} : vector<2x8x8xbf16>, vector<2x8x8xbf16>, vector<2x8x8xf32> -> vector<2x8x8xf32>
    "tpu.trace_stop"() : () -> ()
    %72 = vector.shape_cast %71 : vector<2x8x8xf32> to vector<16x8xf32>
    %73 = arith.truncf %72 : vector<16x8xf32> to vector<16x8xbf16>
    %c0_31 = arith.constant 0 : index
    %c8 = arith.constant 8 : index
    %74 = vector.load %arg26[%c0_31, %c8] : memref<16x32xbf16, #tpu.memory_space<vmem>>, vector<16x8xbf16>
    tpu.vector_store %arg26[%c0_31, %c8], %73 {strides = array<i32>} : memref<16x32xbf16, #tpu.memory_space<vmem>>, vector<16x8xbf16>,
    %75 = vector.extract_strided_slice %22 {offsets = [0, 16], sizes = [16, 8], strides = [1, 1]} : vector<16x32xbf16> to vector<16x8xbf16>
    %76 = vector.shape_cast %75 : vector<16x8xbf16> to vector<2x8x8xbf16>
    %77 = vector.extract_strided_slice %23 {offsets = [0, 16], sizes = [16, 8], strides = [1, 1]} : vector<16x32xbf16> to vector<16x8xbf16>
    %78 = vector.shape_cast %77 : vector<16x8xbf16> to vector<2x8x8xbf16>
    %79 = vector.extract_strided_slice %24 {offsets = [0, 16], sizes = [16, 8], strides = [1, 1]} : vector<16x32xbf16> to vector<16x8xbf16>
    %80 = vector.shape_cast %79 : vector<16x8xbf16> to vector<2x8x8xbf16>
    "tpu.trace_start"() <{level = 10 : i32, message = "nqd,nkd->nqk"}> : () -> ()
    %cst_32 = arith.constant dense<0.000000e+00> : vector<2x8x8xf32>
    %81 = tpu.matmul %76, %78, %cst_32 {dimension_numbers = #tpu.dot_dimension_numbers<[2], [2], [1], [1], [0, 0, 0, 1, 1, 1], [0], [0]>} : vector<2x8x8xbf16>, vector<2x8x8xbf16>, vector<2x8x8xf32> -> vector<2x8x8xf32>
    "tpu.trace_stop"() : () -> ()
    %82 = vector.shape_cast %11 : vector<8x8xf32> to vector<1x8x8xf32>
    %83 = vector.broadcast %82 : vector<1x8x8xf32> to vector<2x8x8xf32>
    %84 = arith.addf %81, %83 : vector<2x8x8xf32>
    %cst_33 = arith.constant dense<0xFF800000> : vector<2x8xf32>
    %85 = vector.multi_reduction <maximumf>, %84, %cst_33 [2] : vector<2x8x8xf32> to vector<2x8xf32>
    %86 = vector.shape_cast %85 : vector<2x8xf32> to vector<2x8x1xf32>
    %87 = vector.broadcast %86 : vector<2x8x1xf32> to vector<2x8x8xf32>
    %88 = arith.subf %84, %87 : vector<2x8x8xf32>
    %89 = math.exp %88 : vector<2x8x8xf32>
    %cst_34 = arith.constant dense<0.000000e+00> : vector<2x8xf32>
    %90 = vector.multi_reduction <add>, %89, %cst_34 [2] : vector<2x8x8xf32> to vector<2x8xf32>
    %91 = vector.shape_cast %90 : vector<2x8xf32> to vector<2x8x1xf32>
    %92 = tpu.reciprocal %91 {approx = true} : vector<2x8x1xf32> -> vector<2x8x1xf32>
    %93 = vector.broadcast %92 : vector<2x8x1xf32> to vector<2x8x8xf32>
    %94 = arith.mulf %89, %93 : vector<2x8x8xf32>
    %95 = arith.truncf %94 : vector<2x8x8xf32> to vector<2x8x8xbf16>
    "tpu.trace_start"() <{level = 10 : i32, message = "nqk,nkd->nqd"}> : () -> ()
    %cst_35 = arith.constant dense<0.000000e+00> : vector<2x8x8xf32>
    %96 = tpu.matmul %95, %80, %cst_35 {dimension_numbers = #tpu.dot_dimension_numbers<[2], [1], [1], [2], [0, 0, 0, 1, 1, 2], [0], [0]>} : vector<2x8x8xbf16>, vector<2x8x8xbf16>, vector<2x8x8xf32> -> vector<2x8x8xf32>
    "tpu.trace_stop"() : () -> ()
    %97 = vector.shape_cast %96 : vector<2x8x8xf32> to vector<16x8xf32>
    %98 = arith.truncf %97 : vector<16x8xf32> to vector<16x8xbf16>
    %c0_36 = arith.constant 0 : index
    %c16 = arith.constant 16 : index
    %99 = vector.load %arg26[%c0_36, %c16] : memref<16x32xbf16, #tpu.memory_space<vmem>>, vector<16x8xbf16>
    tpu.vector_store %arg26[%c0_36, %c16], %98 {strides = array<i32>} : memref<16x32xbf16, #tpu.memory_space<vmem>>, vector<16x8xbf16>,
    %100 = vector.extract_strided_slice %22 {offsets = [0, 24], sizes = [16, 8], strides = [1, 1]} : vector<16x32xbf16> to vector<16x8xbf16>
    %101 = vector.shape_cast %100 : vector<16x8xbf16> to vector<2x8x8xbf16>
    %102 = vector.extract_strided_slice %23 {offsets = [0, 24], sizes = [16, 8], strides = [1, 1]} : vector<16x32xbf16> to vector<16x8xbf16>
    %103 = vector.shape_cast %102 : vector<16x8xbf16> to vector<2x8x8xbf16>
    %104 = vector.extract_strided_slice %24 {offsets = [0, 24], sizes = [16, 8], strides = [1, 1]} : vector<16x32xbf16> to vector<16x8xbf16>
    %105 = vector.shape_cast %104 : vector<16x8xbf16> to vector<2x8x8xbf16>
    "tpu.trace_start"() <{level = 10 : i32, message = "nqd,nkd->nqk"}> : () -> ()
    %cst_37 = arith.constant dense<0.000000e+00> : vector<2x8x8xf32>
    %106 = tpu.matmul %101, %103, %cst_37 {dimension_numbers = #tpu.dot_dimension_numbers<[2], [2], [1], [1], [0, 0, 0, 1, 1, 1], [0], [0]>} : vector<2x8x8xbf16>, vector<2x8x8xbf16>, vector<2x8x8xf32> -> vector<2x8x8xf32>
    "tpu.trace_stop"() : () -> ()
    %107 = vector.shape_cast %11 : vector<8x8xf32> to vector<1x8x8xf32>
    %108 = vector.broadcast %107 : vector<1x8x8xf32> to vector<2x8x8xf32>
    %109 = arith.addf %106, %108 : vector<2x8x8xf32>
    %cst_38 = arith.constant dense<0xFF800000> : vector<2x8xf32>
    %110 = vector.multi_reduction <maximumf>, %109, %cst_38 [2] : vector<2x8x8xf32> to vector<2x8xf32>
    %111 = vector.shape_cast %110 : vector<2x8xf32> to vector<2x8x1xf32>
    %112 = vector.broadcast %111 : vector<2x8x1xf32> to vector<2x8x8xf32>
    %113 = arith.subf %109, %112 : vector<2x8x8xf32>
    %114 = math.exp %113 : vector<2x8x8xf32>
    %cst_39 = arith.constant dense<0.000000e+00> : vector<2x8xf32>
    %115 = vector.multi_reduction <add>, %114, %cst_39 [2] : vector<2x8x8xf32> to vector<2x8xf32>
    %116 = vector.shape_cast %115 : vector<2x8xf32> to vector<2x8x1xf32>
    %117 = tpu.reciprocal %116 {approx = true} : vector<2x8x1xf32> -> vector<2x8x1xf32>
    %118 = vector.broadcast %117 : vector<2x8x1xf32> to vector<2x8x8xf32>
    %119 = arith.mulf %114, %118 : vector<2x8x8xf32>
    %120 = arith.truncf %119 : vector<2x8x8xf32> to vector<2x8x8xbf16>
    "tpu.trace_start"() <{level = 10 : i32, message = "nqk,nkd->nqd"}> : () -> ()
    %cst_40 = arith.constant dense<0.000000e+00> : vector<2x8x8xf32>
    %121 = tpu.matmul %120, %105, %cst_40 {dimension_numbers = #tpu.dot_dimension_numbers<[2], [1], [1], [2], [0, 0, 0, 1, 1, 2], [0], [0]>} : vector<2x8x8xbf16>, vector<2x8x8xbf16>, vector<2x8x8xf32> -> vector<2x8x8xf32>
    "tpu.trace_stop"() : () -> ()
    %122 = vector.shape_cast %121 : vector<2x8x8xf32> to vector<16x8xf32>
    %123 = arith.truncf %122 : vector<16x8xf32> to vector<16x8xbf16>
    %c0_41 = arith.constant 0 : index
    %c24 = arith.constant 24 : index
    %124 = vector.load %arg26[%c0_41, %c24] : memref<16x32xbf16, #tpu.memory_space<vmem>>, vector<16x8xbf16>
    tpu.vector_store %arg26[%c0_41, %c24], %123 {strides = array<i32>} : memref<16x32xbf16, #tpu.memory_space<vmem>>, vector<16x8xbf16>,
    %c0_42 = arith.constant 0 : index
    %c0_43 = arith.constant 0 : index
    %125 = vector.load %arg26[%c0_42, %c0_43] : memref<16x32xbf16, #tpu.memory_space<vmem>>, vector<16x32xbf16>
    %c0_44 = arith.constant 0 : index
    %c0_45 = arith.constant 0 : index
    %126 = vector.load %arg8[%c0_44, %c0_45] : memref<32x32xbf16, #tpu.memory_space<vmem>>, vector<32x32xbf16>
    %cst_46 = arith.constant dense<0.000000e+00> : vector<16x32xf32>
    %127 = tpu.matmul %125, %126, %cst_46 {dimension_numbers = #tpu.dot_dimension_numbers<[1], [0], [0], [1], [0, 0, 1, 1], [], []>} : vector<16x32xbf16>, vector<32x32xbf16>, vector<16x32xf32> -> vector<16x32xf32>
    %c0_47 = arith.constant 0 : index
    %c0_48 = arith.constant 0 : index
    %128 = vector.load %arg9[%c0_47, %c0_48] : memref<1x32xf32, #tpu.memory_space<vmem>>, vector<1x32xf32>
    %129 = vector.broadcast %128 : vector<1x32xf32> to vector<16x32xf32>
    %130 = arith.addf %127, %129 : vector<16x32xf32>
    %131 = arith.addf %130, %1 : vector<16x32xf32>
    %c0_49 = arith.constant 0 : index
    %c0_50 = arith.constant 0 : index
    %132 = vector.load %arg10[%c0_49, %c0_50] : memref<1x32xf32, #tpu.memory_space<vmem>>, vector<1x32xf32>
    %c0_51 = arith.constant 0 : index
    %c0_52 = arith.constant 0 : index
    %133 = vector.load %arg11[%c0_51, %c0_52] : memref<1x32xf32, #tpu.memory_space<vmem>>, vector<1x32xf32>
    %cst_53 = arith.constant dense<0.000000e+00> : vector<16xf32>
    %134 = vector.multi_reduction <add>, %131, %cst_53 [1] : vector<16x32xf32> to vector<16xf32>
    %135 = vector.shape_cast %134 : vector<16xf32> to vector<16x1xf32>
    %cst_54 = arith.constant 3.200000e+01 : f32
    %136 = vector.broadcast %cst_54 : f32 to vector<16x1xf32>
    %137 = arith.divf %135, %136 : vector<16x1xf32>
    %138 = vector.broadcast %137 : vector<16x1xf32> to vector<16x32xf32>
    %139 = arith.subf %131, %138 : vector<16x32xf32>
    %140 = arith.mulf %139, %139 : vector<16x32xf32>
    %cst_55 = arith.constant dense<0.000000e+00> : vector<16xf32>
    %141 = vector.multi_reduction <add>, %140, %cst_55 [1] : vector<16x32xf32> to vector<16xf32>
    %142 = vector.shape_cast %141 : vector<16xf32> to vector<16x1xf32>
    %cst_56 = arith.constant 3.200000e+01 : f32
    %143 = vector.broadcast %cst_56 : f32 to vector<16x1xf32>
    %144 = arith.divf %142, %143 : vector<16x1xf32>
    %145 = vector.broadcast %137 : vector<16x1xf32> to vector<16x32xf32>
    %146 = arith.subf %131, %145 : vector<16x32xf32>
    %cst_57 = arith.constant 9.99999974E-6 : f32
    %147 = vector.broadcast %cst_57 : f32 to vector<16x1xf32>
    %148 = arith.addf %144, %147 : vector<16x1xf32>
    %149 = math.rsqrt %148 : vector<16x1xf32>
    %150 = vector.broadcast %149 : vector<16x1xf32> to vector<16x32xf32>
    %151 = arith.mulf %146, %150 : vector<16x32xf32>
    %152 = vector.broadcast %132 : vector<1x32xf32> to vector<16x32xf32>
    %153 = arith.mulf %151, %152 : vector<16x32xf32>
    %154 = vector.broadcast %133 : vector<1x32xf32> to vector<16x32xf32>
    %155 = arith.addf %153, %154 : vector<16x32xf32>
    %156 = arith.truncf %155 : vector<16x32xf32> to vector<16x32xbf16>
    %c0_58 = arith.constant 0 : index
    %c0_59 = arith.constant 0 : index
    %157 = vector.load %arg12[%c0_58, %c0_59] : memref<32x32xbf16, #tpu.memory_space<vmem>>, vector<32x32xbf16>
    %cst_60 = arith.constant dense<0.000000e+00> : vector<16x32xf32>
    %158 = tpu.matmul %156, %157, %cst_60 {dimension_numbers = #tpu.dot_dimension_numbers<[1], [0], [0], [1], [0, 0, 1, 1], [], []>} : vector<16x32xbf16>, vector<32x32xbf16>, vector<16x32xf32> -> vector<16x32xf32>
    %159 = arith.truncf %3 : vector<16x32xf32> to vector<16x32xbf16>
    %c0_61 = arith.constant 0 : index
    %c0_62 = arith.constant 0 : index
    %160 = vector.load %arg13[%c0_61, %c0_62] : memref<32x32xbf16, #tpu.memory_space<vmem>>, vector<32x32xbf16>
    %cst_63 = arith.constant dense<0.000000e+00> : vector<16x32xf32>
    %161 = tpu.matmul %159, %160, %cst_63 {dimension_numbers = #tpu.dot_dimension_numbers<[1], [0], [0], [1], [0, 0, 1, 1], [], []>} : vector<16x32xbf16>, vector<32x32xbf16>, vector<16x32xf32> -> vector<16x32xf32>
    %162 = arith.truncf %5 : vector<16x32xf32> to vector<16x32xbf16>
    %c0_64 = arith.constant 0 : index
    %c0_65 = arith.constant 0 : index
    %163 = vector.load %arg14[%c0_64, %c0_65] : memref<32x32xbf16, #tpu.memory_space<vmem>>, vector<32x32xbf16>
    %cst_66 = arith.constant dense<0.000000e+00> : vector<16x32xf32>
    %164 = tpu.matmul %162, %163, %cst_66 {dimension_numbers = #tpu.dot_dimension_numbers<[1], [0], [0], [1], [0, 0, 1, 1], [], []>} : vector<16x32xbf16>, vector<32x32xbf16>, vector<16x32xf32> -> vector<16x32xf32>
    %165 = arith.truncf %158 : vector<16x32xf32> to vector<16x32xbf16>
    %166 = arith.truncf %161 : vector<16x32xf32> to vector<16x32xbf16>
    %167 = arith.truncf %164 : vector<16x32xf32> to vector<16x32xbf16>
    %168 = vector.extract_strided_slice %165 {offsets = [0, 0], sizes = [16, 8], strides = [1, 1]} : vector<16x32xbf16> to vector<16x8xbf16>
    %169 = vector.shape_cast %168 : vector<16x8xbf16> to vector<2x8x8xbf16>
    %170 = vector.extract_strided_slice %166 {offsets = [0, 0], sizes = [16, 8], strides = [1, 1]} : vector<16x32xbf16> to vector<16x8xbf16>
    %171 = vector.shape_cast %170 : vector<16x8xbf16> to vector<2x8x8xbf16>
    %172 = vector.extract_strided_slice %167 {offsets = [0, 0], sizes = [16, 8], strides = [1, 1]} : vector<16x32xbf16> to vector<16x8xbf16>
    %173 = vector.shape_cast %172 : vector<16x8xbf16> to vector<2x8x8xbf16>
    "tpu.trace_start"() <{level = 10 : i32, message = "nqd,nkd->nqk"}> : () -> ()
    %cst_67 = arith.constant dense<0.000000e+00> : vector<2x8x8xf32>
    %174 = tpu.matmul %169, %171, %cst_67 {dimension_numbers = #tpu.dot_dimension_numbers<[2], [2], [1], [1], [0, 0, 0, 1, 1, 1], [0], [0]>} : vector<2x8x8xbf16>, vector<2x8x8xbf16>, vector<2x8x8xf32> -> vector<2x8x8xf32>
    "tpu.trace_stop"() : () -> ()
    %175 = vector.broadcast %12 : vector<2x1x8xf32> to vector<2x8x8xf32>
    %176 = arith.addf %174, %175 : vector<2x8x8xf32>
    %cst_68 = arith.constant dense<0xFF800000> : vector<2x8xf32>
    %177 = vector.multi_reduction <maximumf>, %176, %cst_68 [2] : vector<2x8x8xf32> to vector<2x8xf32>
    %178 = vector.shape_cast %177 : vector<2x8xf32> to vector<2x8x1xf32>
    %179 = vector.broadcast %178 : vector<2x8x1xf32> to vector<2x8x8xf32>
    %180 = arith.subf %176, %179 : vector<2x8x8xf32>
    %181 = math.exp %180 : vector<2x8x8xf32>
    %cst_69 = arith.constant dense<0.000000e+00> : vector<2x8xf32>
    %182 = vector.multi_reduction <add>, %181, %cst_69 [2] : vector<2x8x8xf32> to vector<2x8xf32>
    %183 = vector.shape_cast %182 : vector<2x8xf32> to vector<2x8x1xf32>
    %184 = tpu.reciprocal %183 {approx = true} : vector<2x8x1xf32> -> vector<2x8x1xf32>
    %185 = vector.broadcast %184 : vector<2x8x1xf32> to vector<2x8x8xf32>
    %186 = arith.mulf %181, %185 : vector<2x8x8xf32>
    %187 = arith.truncf %186 : vector<2x8x8xf32> to vector<2x8x8xbf16>
    "tpu.trace_start"() <{level = 10 : i32, message = "nqk,nkd->nqd"}> : () -> ()
    %cst_70 = arith.constant dense<0.000000e+00> : vector<2x8x8xf32>
    %188 = tpu.matmul %187, %173, %cst_70 {dimension_numbers = #tpu.dot_dimension_numbers<[2], [1], [1], [2], [0, 0, 0, 1, 1, 2], [0], [0]>} : vector<2x8x8xbf16>, vector<2x8x8xbf16>, vector<2x8x8xf32> -> vector<2x8x8xf32>
    "tpu.trace_stop"() : () -> ()
    %189 = vector.shape_cast %188 : vector<2x8x8xf32> to vector<16x8xf32>
    %190 = arith.truncf %189 : vector<16x8xf32> to vector<16x8xbf16>
    %c0_71 = arith.constant 0 : index
    %c0_72 = arith.constant 0 : index
    %191 = vector.load %arg26[%c0_71, %c0_72] : memref<16x32xbf16, #tpu.memory_space<vmem>>, vector<16x8xbf16>
    tpu.vector_store %arg26[%c0_71, %c0_72], %190 {strides = array<i32>} : memref<16x32xbf16, #tpu.memory_space<vmem>>, vector<16x8xbf16>,
    %192 = vector.extract_strided_slice %165 {offsets = [0, 8], sizes = [16, 8], strides = [1, 1]} : vector<16x32xbf16> to vector<16x8xbf16>
    %193 = vector.shape_cast %192 : vector<16x8xbf16> to vector<2x8x8xbf16>
    %194 = vector.extract_strided_slice %166 {offsets = [0, 8], sizes = [16, 8], strides = [1, 1]} : vector<16x32xbf16> to vector<16x8xbf16>
    %195 = vector.shape_cast %194 : vector<16x8xbf16> to vector<2x8x8xbf16>
    %196 = vector.extract_strided_slice %167 {offsets = [0, 8], sizes = [16, 8], strides = [1, 1]} : vector<16x32xbf16> to vector<16x8xbf16>
    %197 = vector.shape_cast %196 : vector<16x8xbf16> to vector<2x8x8xbf16>
    "tpu.trace_start"() <{level = 10 : i32, message = "nqd,nkd->nqk"}> : () -> ()
    %cst_73 = arith.constant dense<0.000000e+00> : vector<2x8x8xf32>
    %198 = tpu.matmul %193, %195, %cst_73 {dimension_numbers = #tpu.dot_dimension_numbers<[2], [2], [1], [1], [0, 0, 0, 1, 1, 1], [0], [0]>} : vector<2x8x8xbf16>, vector<2x8x8xbf16>, vector<2x8x8xf32> -> vector<2x8x8xf32>
    "tpu.trace_stop"() : () -> ()
    %199 = vector.broadcast %12 : vector<2x1x8xf32> to vector<2x8x8xf32>
    %200 = arith.addf %198, %199 : vector<2x8x8xf32>
    %cst_74 = arith.constant dense<0xFF800000> : vector<2x8xf32>
    %201 = vector.multi_reduction <maximumf>, %200, %cst_74 [2] : vector<2x8x8xf32> to vector<2x8xf32>
    %202 = vector.shape_cast %201 : vector<2x8xf32> to vector<2x8x1xf32>
    %203 = vector.broadcast %202 : vector<2x8x1xf32> to vector<2x8x8xf32>
    %204 = arith.subf %200, %203 : vector<2x8x8xf32>
    %205 = math.exp %204 : vector<2x8x8xf32>
    %cst_75 = arith.constant dense<0.000000e+00> : vector<2x8xf32>
    %206 = vector.multi_reduction <add>, %205, %cst_75 [2] : vector<2x8x8xf32> to vector<2x8xf32>
    %207 = vector.shape_cast %206 : vector<2x8xf32> to vector<2x8x1xf32>
    %208 = tpu.reciprocal %207 {approx = true} : vector<2x8x1xf32> -> vector<2x8x1xf32>
    %209 = vector.broadcast %208 : vector<2x8x1xf32> to vector<2x8x8xf32>
    %210 = arith.mulf %205, %209 : vector<2x8x8xf32>
    %211 = arith.truncf %210 : vector<2x8x8xf32> to vector<2x8x8xbf16>
    "tpu.trace_start"() <{level = 10 : i32, message = "nqk,nkd->nqd"}> : () -> ()
    %cst_76 = arith.constant dense<0.000000e+00> : vector<2x8x8xf32>
    %212 = tpu.matmul %211, %197, %cst_76 {dimension_numbers = #tpu.dot_dimension_numbers<[2], [1], [1], [2], [0, 0, 0, 1, 1, 2], [0], [0]>} : vector<2x8x8xbf16>, vector<2x8x8xbf16>, vector<2x8x8xf32> -> vector<2x8x8xf32>
    "tpu.trace_stop"() : () -> ()
    %213 = vector.shape_cast %212 : vector<2x8x8xf32> to vector<16x8xf32>
    %214 = arith.truncf %213 : vector<16x8xf32> to vector<16x8xbf16>
    %c0_77 = arith.constant 0 : index
    %c8_78 = arith.constant 8 : index
    %215 = vector.load %arg26[%c0_77, %c8_78] : memref<16x32xbf16, #tpu.memory_space<vmem>>, vector<16x8xbf16>
    tpu.vector_store %arg26[%c0_77, %c8_78], %214 {strides = array<i32>} : memref<16x32xbf16, #tpu.memory_space<vmem>>, vector<16x8xbf16>,
    %216 = vector.extract_strided_slice %165 {offsets = [0, 16], sizes = [16, 8], strides = [1, 1]} : vector<16x32xbf16> to vector<16x8xbf16>
    %217 = vector.shape_cast %216 : vector<16x8xbf16> to vector<2x8x8xbf16>
    %218 = vector.extract_strided_slice %166 {offsets = [0, 16], sizes = [16, 8], strides = [1, 1]} : vector<16x32xbf16> to vector<16x8xbf16>
    %219 = vector.shape_cast %218 : vector<16x8xbf16> to vector<2x8x8xbf16>
    %220 = vector.extract_strided_slice %167 {offsets = [0, 16], sizes = [16, 8], strides = [1, 1]} : vector<16x32xbf16> to vector<16x8xbf16>
    %221 = vector.shape_cast %220 : vector<16x8xbf16> to vector<2x8x8xbf16>
    "tpu.trace_start"() <{level = 10 : i32, message = "nqd,nkd->nqk"}> : () -> ()
    %cst_79 = arith.constant dense<0.000000e+00> : vector<2x8x8xf32>
    %222 = tpu.matmul %217, %219, %cst_79 {dimension_numbers = #tpu.dot_dimension_numbers<[2], [2], [1], [1], [0, 0, 0, 1, 1, 1], [0], [0]>} : vector<2x8x8xbf16>, vector<2x8x8xbf16>, vector<2x8x8xf32> -> vector<2x8x8xf32>
    "tpu.trace_stop"() : () -> ()
    %223 = vector.broadcast %12 : vector<2x1x8xf32> to vector<2x8x8xf32>
    %224 = arith.addf %222, %223 : vector<2x8x8xf32>
    %cst_80 = arith.constant dense<0xFF800000> : vector<2x8xf32>
    %225 = vector.multi_reduction <maximumf>, %224, %cst_80 [2] : vector<2x8x8xf32> to vector<2x8xf32>
    %226 = vector.shape_cast %225 : vector<2x8xf32> to vector<2x8x1xf32>
    %227 = vector.broadcast %226 : vector<2x8x1xf32> to vector<2x8x8xf32>
    %228 = arith.subf %224, %227 : vector<2x8x8xf32>
    %229 = math.exp %228 : vector<2x8x8xf32>
    %cst_81 = arith.constant dense<0.000000e+00> : vector<2x8xf32>
    %230 = vector.multi_reduction <add>, %229, %cst_81 [2] : vector<2x8x8xf32> to vector<2x8xf32>
    %231 = vector.shape_cast %230 : vector<2x8xf32> to vector<2x8x1xf32>
    %232 = tpu.reciprocal %231 {approx = true} : vector<2x8x1xf32> -> vector<2x8x1xf32>
    %233 = vector.broadcast %232 : vector<2x8x1xf32> to vector<2x8x8xf32>
    %234 = arith.mulf %229, %233 : vector<2x8x8xf32>
    %235 = arith.truncf %234 : vector<2x8x8xf32> to vector<2x8x8xbf16>
    "tpu.trace_start"() <{level = 10 : i32, message = "nqk,nkd->nqd"}> : () -> ()
    %cst_82 = arith.constant dense<0.000000e+00> : vector<2x8x8xf32>
    %236 = tpu.matmul %235, %221, %cst_82 {dimension_numbers = #tpu.dot_dimension_numbers<[2], [1], [1], [2], [0, 0, 0, 1, 1, 2], [0], [0]>} : vector<2x8x8xbf16>, vector<2x8x8xbf16>, vector<2x8x8xf32> -> vector<2x8x8xf32>
    "tpu.trace_stop"() : () -> ()
    %237 = vector.shape_cast %236 : vector<2x8x8xf32> to vector<16x8xf32>
    %238 = arith.truncf %237 : vector<16x8xf32> to vector<16x8xbf16>
    %c0_83 = arith.constant 0 : index
    %c16_84 = arith.constant 16 : index
    %239 = vector.load %arg26[%c0_83, %c16_84] : memref<16x32xbf16, #tpu.memory_space<vmem>>, vector<16x8xbf16>
    tpu.vector_store %arg26[%c0_83, %c16_84], %238 {strides = array<i32>} : memref<16x32xbf16, #tpu.memory_space<vmem>>, vector<16x8xbf16>,
    %240 = vector.extract_strided_slice %165 {offsets = [0, 24], sizes = [16, 8], strides = [1, 1]} : vector<16x32xbf16> to vector<16x8xbf16>
    %241 = vector.shape_cast %240 : vector<16x8xbf16> to vector<2x8x8xbf16>
    %242 = vector.extract_strided_slice %166 {offsets = [0, 24], sizes = [16, 8], strides = [1, 1]} : vector<16x32xbf16> to vector<16x8xbf16>
    %243 = vector.shape_cast %242 : vector<16x8xbf16> to vector<2x8x8xbf16>
    %244 = vector.extract_strided_slice %167 {offsets = [0, 24], sizes = [16, 8], strides = [1, 1]} : vector<16x32xbf16> to vector<16x8xbf16>
    %245 = vector.shape_cast %244 : vector<16x8xbf16> to vector<2x8x8xbf16>
    "tpu.trace_start"() <{level = 10 : i32, message = "nqd,nkd->nqk"}> : () -> ()
    %cst_85 = arith.constant dense<0.000000e+00> : vector<2x8x8xf32>
    %246 = tpu.matmul %241, %243, %cst_85 {dimension_numbers = #tpu.dot_dimension_numbers<[2], [2], [1], [1], [0, 0, 0, 1, 1, 1], [0], [0]>} : vector<2x8x8xbf16>, vector<2x8x8xbf16>, vector<2x8x8xf32> -> vector<2x8x8xf32>
    "tpu.trace_stop"() : () -> ()
    %247 = vector.broadcast %12 : vector<2x1x8xf32> to vector<2x8x8xf32>
    %248 = arith.addf %246, %247 : vector<2x8x8xf32>
    %cst_86 = arith.constant dense<0xFF800000> : vector<2x8xf32>
    %249 = vector.multi_reduction <maximumf>, %248, %cst_86 [2] : vector<2x8x8xf32> to vector<2x8xf32>
    %250 = vector.shape_cast %249 : vector<2x8xf32> to vector<2x8x1xf32>
    %251 = vector.broadcast %250 : vector<2x8x1xf32> to vector<2x8x8xf32>
    %252 = arith.subf %248, %251 : vector<2x8x8xf32>
    %253 = math.exp %252 : vector<2x8x8xf32>
    %cst_87 = arith.constant dense<0.000000e+00> : vector<2x8xf32>
    %254 = vector.multi_reduction <add>, %253, %cst_87 [2] : vector<2x8x8xf32> to vector<2x8xf32>
    %255 = vector.shape_cast %254 : vector<2x8xf32> to vector<2x8x1xf32>
    %256 = tpu.reciprocal %255 {approx = true} : vector<2x8x1xf32> -> vector<2x8x1xf32>
    %257 = vector.broadcast %256 : vector<2x8x1xf32> to vector<2x8x8xf32>
    %258 = arith.mulf %253, %257 : vector<2x8x8xf32>
    %259 = arith.truncf %258 : vector<2x8x8xf32> to vector<2x8x8xbf16>
    "tpu.trace_start"() <{level = 10 : i32, message = "nqk,nkd->nqd"}> : () -> ()
    %cst_88 = arith.constant dense<0.000000e+00> : vector<2x8x8xf32>
    %260 = tpu.matmul %259, %245, %cst_88 {dimension_numbers = #tpu.dot_dimension_numbers<[2], [1], [1], [2], [0, 0, 0, 1, 1, 2], [0], [0]>} : vector<2x8x8xbf16>, vector<2x8x8xbf16>, vector<2x8x8xf32> -> vector<2x8x8xf32>
    "tpu.trace_stop"() : () -> ()
    %261 = vector.shape_cast %260 : vector<2x8x8xf32> to vector<16x8xf32>
    %262 = arith.truncf %261 : vector<16x8xf32> to vector<16x8xbf16>
    %c0_89 = arith.constant 0 : index
    %c24_90 = arith.constant 24 : index
    %263 = vector.load %arg26[%c0_89, %c24_90] : memref<16x32xbf16, #tpu.memory_space<vmem>>, vector<16x8xbf16>
    tpu.vector_store %arg26[%c0_89, %c24_90], %262 {strides = array<i32>} : memref<16x32xbf16, #tpu.memory_space<vmem>>, vector<16x8xbf16>,
    %c0_91 = arith.constant 0 : index
    %c0_92 = arith.constant 0 : index
    %264 = vector.load %arg26[%c0_91, %c0_92] : memref<16x32xbf16, #tpu.memory_space<vmem>>, vector<16x32xbf16>
    %c0_93 = arith.constant 0 : index
    %c0_94 = arith.constant 0 : index
    %265 = vector.load %arg15[%c0_93, %c0_94] : memref<32x32xbf16, #tpu.memory_space<vmem>>, vector<32x32xbf16>
    %cst_95 = arith.constant dense<0.000000e+00> : vector<16x32xf32>
    %266 = tpu.matmul %264, %265, %cst_95 {dimension_numbers = #tpu.dot_dimension_numbers<[1], [0], [0], [1], [0, 0, 1, 1], [], []>} : vector<16x32xbf16>, vector<32x32xbf16>, vector<16x32xf32> -> vector<16x32xf32>
    %c0_96 = arith.constant 0 : index
    %c0_97 = arith.constant 0 : index
    %267 = vector.load %arg16[%c0_96, %c0_97] : memref<1x32xf32, #tpu.memory_space<vmem>>, vector<1x32xf32>
    %268 = vector.broadcast %267 : vector<1x32xf32> to vector<16x32xf32>
    %269 = arith.addf %266, %268 : vector<16x32xf32>
    %270 = arith.addf %269, %155 : vector<16x32xf32>
    %c0_98 = arith.constant 0 : index
    %c0_99 = arith.constant 0 : index
    %271 = vector.load %arg17[%c0_98, %c0_99] : memref<1x32xf32, #tpu.memory_space<vmem>>, vector<1x32xf32>
    %c0_100 = arith.constant 0 : index
    %c0_101 = arith.constant 0 : index
    %272 = vector.load %arg18[%c0_100, %c0_101] : memref<1x32xf32, #tpu.memory_space<vmem>>, vector<1x32xf32>
    %cst_102 = arith.constant dense<0.000000e+00> : vector<16xf32>
    %273 = vector.multi_reduction <add>, %270, %cst_102 [1] : vector<16x32xf32> to vector<16xf32>
    %274 = vector.shape_cast %273 : vector<16xf32> to vector<16x1xf32>
    %cst_103 = arith.constant 3.200000e+01 : f32
    %275 = vector.broadcast %cst_103 : f32 to vector<16x1xf32>
    %276 = arith.divf %274, %275 : vector<16x1xf32>
    %277 = vector.broadcast %276 : vector<16x1xf32> to vector<16x32xf32>
    %278 = arith.subf %270, %277 : vector<16x32xf32>
    %279 = arith.mulf %278, %278 : vector<16x32xf32>
    %cst_104 = arith.constant dense<0.000000e+00> : vector<16xf32>
    %280 = vector.multi_reduction <add>, %279, %cst_104 [1] : vector<16x32xf32> to vector<16xf32>
    %281 = vector.shape_cast %280 : vector<16xf32> to vector<16x1xf32>
    %cst_105 = arith.constant 3.200000e+01 : f32
    %282 = vector.broadcast %cst_105 : f32 to vector<16x1xf32>
    %283 = arith.divf %281, %282 : vector<16x1xf32>
    %284 = vector.broadcast %276 : vector<16x1xf32> to vector<16x32xf32>
    %285 = arith.subf %270, %284 : vector<16x32xf32>
    %cst_106 = arith.constant 9.99999974E-6 : f32
    %286 = vector.broadcast %cst_106 : f32 to vector<16x1xf32>
    %287 = arith.addf %283, %286 : vector<16x1xf32>
    %288 = math.rsqrt %287 : vector<16x1xf32>
    %289 = vector.broadcast %288 : vector<16x1xf32> to vector<16x32xf32>
    %290 = arith.mulf %285, %289 : vector<16x32xf32>
    %291 = vector.broadcast %271 : vector<1x32xf32> to vector<16x32xf32>
    %292 = arith.mulf %290, %291 : vector<16x32xf32>
    %293 = vector.broadcast %272 : vector<1x32xf32> to vector<16x32xf32>
    %294 = arith.addf %292, %293 : vector<16x32xf32>
    %295 = arith.truncf %294 : vector<16x32xf32> to vector<16x32xbf16>
    %c0_107 = arith.constant 0 : index
    %c0_108 = arith.constant 0 : index
    %296 = vector.load %arg19[%c0_107, %c0_108] : memref<32x128xbf16, #tpu.memory_space<vmem>>, vector<32x128xbf16>
    %cst_109 = arith.constant dense<0.000000e+00> : vector<16x128xf32>
    %297 = tpu.matmul %295, %296, %cst_109 {dimension_numbers = #tpu.dot_dimension_numbers<[1], [0], [0], [1], [0, 0, 1, 1], [], []>} : vector<16x32xbf16>, vector<32x128xbf16>, vector<16x128xf32> -> vector<16x128xf32>
    %c0_110 = arith.constant 0 : index
    %c0_111 = arith.constant 0 : index
    %298 = vector.load %arg20[%c0_110, %c0_111] : memref<1x128xf32, #tpu.memory_space<vmem>>, vector<1x128xf32>
    %299 = vector.broadcast %298 : vector<1x128xf32> to vector<16x128xf32>
    %300 = arith.addf %297, %299 : vector<16x128xf32>
    %cst_112 = arith.constant 0.000000e+00 : f32
    %301 = vector.broadcast %cst_112 : f32 to vector<16x128xf32>
    %302 = arith.maximumf %300, %301 : vector<16x128xf32>
    %303 = arith.truncf %302 : vector<16x128xf32> to vector<16x128xbf16>
    %c0_113 = arith.constant 0 : index
    %c0_114 = arith.constant 0 : index
    %304 = vector.load %arg21[%c0_113, %c0_114] : memref<128x32xbf16, #tpu.memory_space<vmem>>, vector<128x32xbf16>
    %cst_115 = arith.constant dense<0.000000e+00> : vector<16x32xf32>
    %305 = tpu.matmul %303, %304, %cst_115 {dimension_numbers = #tpu.dot_dimension_numbers<[1], [0], [0], [1], [0, 0, 1, 1], [], []>} : vector<16x128xbf16>, vector<128x32xbf16>, vector<16x32xf32> -> vector<16x32xf32>
    %c0_116 = arith.constant 0 : index
    %c0_117 = arith.constant 0 : index
    %306 = vector.load %arg22[%c0_116, %c0_117] : memref<1x32xf32, #tpu.memory_space<vmem>>, vector<1x32xf32>
    %307 = vector.broadcast %306 : vector<1x32xf32> to vector<16x32xf32>
    %308 = arith.addf %305, %307 : vector<16x32xf32>
    %309 = arith.addf %308, %294 : vector<16x32xf32>
    %c0_118 = arith.constant 0 : index
    %c0_119 = arith.constant 0 : index
    %310 = vector.load %arg23[%c0_118, %c0_119] : memref<1x32xf32, #tpu.memory_space<vmem>>, vector<1x32xf32>
    %c0_120 = arith.constant 0 : index
    %c0_121 = arith.constant 0 : index
    %311 = vector.load %arg24[%c0_120, %c0_121] : memref<1x32xf32, #tpu.memory_space<vmem>>, vector<1x32xf32>
    %cst_122 = arith.constant dense<0.000000e+00> : vector<16xf32>
    %312 = vector.multi_reduction <add>, %309, %cst_122 [1] : vector<16x32xf32> to vector<16xf32>
    %313 = vector.shape_cast %312 : vector<16xf32> to vector<16x1xf32>
    %cst_123 = arith.constant 3.200000e+01 : f32
    %314 = vector.broadcast %cst_123 : f32 to vector<16x1xf32>
    %315 = arith.divf %313, %314 : vector<16x1xf32>
    %316 = vector.broadcast %315 : vector<16x1xf32> to vector<16x32xf32>
    %317 = arith.subf %309, %316 : vector<16x32xf32>
    %318 = arith.mulf %317, %317 : vector<16x32xf32>
    %cst_124 = arith.constant dense<0.000000e+00> : vector<16xf32>
    %319 = vector.multi_reduction <add>, %318, %cst_124 [1] : vector<16x32xf32> to vector<16xf32>
    %320 = vector.shape_cast %319 : vector<16xf32> to vector<16x1xf32>
    %cst_125 = arith.constant 3.200000e+01 : f32
    %321 = vector.broadcast %cst_125 : f32 to vector<16x1xf32>
    %322 = arith.divf %320, %321 : vector<16x1xf32>
    %323 = vector.broadcast %315 : vector<16x1xf32> to vector<16x32xf32>
    %324 = arith.subf %309, %323 : vector<16x32xf32>
    %cst_126 = arith.constant 9.99999974E-6 : f32
    %325 = vector.broadcast %cst_126 : f32 to vector<16x1xf32>
    %326 = arith.addf %322, %325 : vector<16x1xf32>
    %327 = math.rsqrt %326 : vector<16x1xf32>
    %328 = vector.broadcast %327 : vector<16x1xf32> to vector<16x32xf32>
    %329 = arith.mulf %324, %328 : vector<16x32xf32>
    %330 = vector.broadcast %310 : vector<1x32xf32> to vector<16x32xf32>
    %331 = arith.mulf %329, %330 : vector<16x32xf32>
    %332 = vector.broadcast %311 : vector<1x32xf32> to vector<16x32xf32>
    %333 = arith.addf %331, %332 : vector<16x32xf32>
    %334 = vector.shape_cast %333 : vector<16x32xf32> to vector<2x8x32xf32>
    %c0_127 = arith.constant 0 : index
    %c0_128 = arith.constant 0 : index
    %c0_129 = arith.constant 0 : index
    %335 = vector.load %arg25[%c0_127, %c0_128, %c0_129] : memref<2x8x32xf32, #tpu.memory_space<vmem>>, vector<2x8x32xf32>
    tpu.vector_store %arg25[%c0_127, %c0_128, %c0_129], %334 {strides = array<i32>} : memref<2x8x32xf32, #tpu.memory_space<vmem>>, vector<2x8x32xf32>,
    return
  }
  func.func @transform_0(%arg0: i32) -> (i32, i32, i32) {
    %c0_i32 = arith.constant 0 : i32
    %c0_i32_0 = arith.constant 0 : i32
    %c0_i32_1 = arith.constant 0 : i32
    return %arg0, %c0_i32, %c0_i32_0 : i32, i32, i32
  }
  func.func @transform_1(%arg0: i32) -> (i32, i32, i32) {
    %c0_i32 = arith.constant 0 : i32
    %c0_i32_0 = arith.constant 0 : i32
    %c0_i32_1 = arith.constant 0 : i32
    return %arg0, %c0_i32, %c0_i32_0 : i32, i32, i32
  }
  func.func @transform_2(%arg0: i32) -> (i32, i32, i32) {
    %c0_i32 = arith.constant 0 : i32
    %c0_i32_0 = arith.constant 0 : i32
    %c0_i32_1 = arith.constant 0 : i32
    return %arg0, %c0_i32, %c0_i32_0 : i32, i32, i32
  }
  func.func @transform_3(%arg0: i32) -> (i32, i32, i32) {
    %c0_i32 = arith.constant 0 : i32
    %c0_i32_0 = arith.constant 0 : i32
    %c0_i32_1 = arith.constant 0 : i32
    return %arg0, %c0_i32, %c0_i32_0 : i32, i32, i32
  }
  func.func @transform_4(%arg0: i32) -> (i32, i32) {
    %c0_i32 = arith.constant 0 : i32
    %c0_i32_0 = arith.constant 0 : i32
    %c0_i32_1 = arith.constant 0 : i32
    return %c0_i32, %c0_i32_0 : i32, i32
  }
  func.func @transform_5(%arg0: i32) -> (i32, i32) {
    %c0_i32 = arith.constant 0 : i32
    %c0_i32_0 = arith.constant 0 : i32
    %c0_i32_1 = arith.constant 0 : i32
    return %c0_i32, %c0_i32_0 : i32, i32
  }
  func.func @transform_6(%arg0: i32) -> (i32, i32) {
    %c0_i32 = arith.constant 0 : i32
    %c0_i32_0 = arith.constant 0 : i32
    %c0_i32_1 = arith.constant 0 : i32
    return %c0_i32, %c0_i32_0 : i32, i32
  }
  func.func @transform_7(%arg0: i32) -> (i32, i32) {
    %c0_i32 = arith.constant 0 : i32
    %c0_i32_0 = arith.constant 0 : i32
    %c0_i32_1 = arith.constant 0 : i32
    return %c0_i32, %c0_i32_0 : i32, i32
  }
  func.func @transform_8(%arg0: i32) -> (i32, i32) {
    %c0_i32 = arith.constant 0 : i32
    %c0_i32_0 = arith.constant 0 : i32
    %c0_i32_1 = arith.constant 0 : i32
    return %c0_i32, %c0_i32_0 : i32, i32
  }
  func.func @transform_9(%arg0: i32) -> (i32, i32) {
    %c0_i32 = arith.constant 0 : i32
    %c0_i32_0 = arith.constant 0 : i32
    %c0_i32_1 = arith.constant 0 : i32
    return %c0_i32, %c0_i32_0 : i32, i32
  }
  func.func @transform_10(%arg0: i32) -> (i32, i32) {
    %c0_i32 = arith.constant 0 : i32
    %c0_i32_0 = arith.constant 0 : i32
    %c0_i32_1 = arith.constant 0 : i32
    return %c0_i32, %c0_i32_0 : i32, i32
  }
  func.func @transform_11(%arg0: i32) -> (i32, i32) {
    %c0_i32 = arith.constant 0 : i32
    %c0_i32_0 = arith.constant 0 : i32
    %c0_i32_1 = arith.constant 0 : i32
    return %c0_i32, %c0_i32_0 : i32, i32
  }
  func.func @transform_12(%arg0: i32) -> (i32, i32) {
    %c0_i32 = arith.constant 0 : i32
    %c0_i32_0 = arith.constant 0 : i32
    %c0_i32_1 = arith.constant 0 : i32
    return %c0_i32, %c0_i32_0 : i32, i32
  }
  func.func @transform_13(%arg0: i32) -> (i32, i32) {
    %c0_i32 = arith.constant 0 : i32
    %c0_i32_0 = arith.constant 0 : i32
    %c0_i32_1 = arith.constant 0 : i32
    return %c0_i32, %c0_i32_0 : i32, i32
  }
  func.func @transform_14(%arg0: i32) -> (i32, i32) {
    %c0_i32 = arith.constant 0 : i32
    %c0_i32_0 = arith.constant 0 : i32
    %c0_i32_1 = arith.constant 0 : i32
    return %c0_i32, %c0_i32_0 : i32, i32
  }
  func.func @transform_15(%arg0: i32) -> (i32, i32) {
    %c0_i32 = arith.constant 0 : i32
    %c0_i32_0 = arith.constant 0 : i32
    %c0_i32_1 = arith.constant 0 : i32
    return %c0_i32, %c0_i32_0 : i32, i32
  }
  func.func @transform_16(%arg0: i32) -> (i32, i32) {
    %c0_i32 = arith.constant 0 : i32
    %c0_i32_0 = arith.constant 0 : i32
    %c0_i32_1 = arith.constant 0 : i32
    return %c0_i32, %c0_i32_0 : i32, i32
  }
  func.func @transform_17(%arg0: i32) -> (i32, i32) {
    %c0_i32 = arith.constant 0 : i32
    %c0_i32_0 = arith.constant 0 : i32
    %c0_i32_1 = arith.constant 0 : i32
    return %c0_i32, %c0_i32_0 : i32, i32
  }
  func.func @transform_18(%arg0: i32) -> (i32, i32) {
    %c0_i32 = arith.constant 0 : i32
    %c0_i32_0 = arith.constant 0 : i32
    %c0_i32_1 = arith.constant 0 : i32
    return %c0_i32, %c0_i32_0 : i32, i32
  }
  func.func @transform_19(%arg0: i32) -> (i32, i32) {
    %c0_i32 = arith.constant 0 : i32
    %c0_i32_0 = arith.constant 0 : i32
    %c0_i32_1 = arith.constant 0 : i32
    return %c0_i32, %c0_i32_0 : i32, i32
  }
  func.func @transform_20(%arg0: i32) -> (i32, i32) {
    %c0_i32 = arith.constant 0 : i32
    %c0_i32_0 = arith.constant 0 : i32
    %c0_i32_1 = arith.constant 0 : i32
    return %c0_i32, %c0_i32_0 : i32, i32
  }
  func.func @transform_21(%arg0: i32) -> (i32, i32) {
    %c0_i32 = arith.constant 0 : i32
    %c0_i32_0 = arith.constant 0 : i32
    %c0_i32_1 = arith.constant 0 : i32
    return %c0_i32, %c0_i32_0 : i32, i32
  }
  func.func @transform_22(%arg0: i32) -> (i32, i32) {
    %c0_i32 = arith.constant 0 : i32
    %c0_i32_0 = arith.constant 0 : i32
    %c0_i32_1 = arith.constant 0 : i32
    return %c0_i32, %c0_i32_0 : i32, i32
  }
  func.func @transform_23(%arg0: i32) -> (i32, i32) {
    %c0_i32 = arith.constant 0 : i32
    %c0_i32_0 = arith.constant 0 : i32
    %c0_i32_1 = arith.constant 0 : i32
    return %c0_i32, %c0_i32_0 : i32, i32
  }
  func.func @transform_24(%arg0: i32) -> (i32, i32, i32) {
    %c0_i32 = arith.constant 0 : i32
    %c0_i32_0 = arith.constant 0 : i32
    %c0_i32_1 = arith.constant 0 : i32
    return %arg0, %c0_i32, %c0_i32_0 : i32, i32, i32
  }
}

</mosaic_0001>

<llo_original>
// kernel: tpu_custom_call.1
$region0: #{tpu_custom_call.1}
  #allocation0 [shape = 'u32[]', space=smem, size = 0x4, offset = 0x4, fixed_abs, tag = 'smem constant byte address 0x4 - core index']
  #allocation1 [shape = 'u32[144,128]{1,0:T(1,128)}', space=vmem, size = 0x12000, scoped, tag = 'internal scratch']
  #allocation2 [shape = 'bf16[16,32]{1,0:T(8,128)(2,1)}', space=vmem, size = 0x1000, scoped, tag = 'scratch operand']
  %s0 = inlined_call_operand.vmem [shape: f32[2,8,32], index: 0, kind: input, shape index: {}]
  %s1 = inlined_call_operand.vmem [shape: f32[2,8,32], index: 1, kind: input, shape index: {}]
  %s2 = inlined_call_operand.vmem [shape: f32[2,8,32], index: 2, kind: input, shape index: {}]
  %s3 = inlined_call_operand.hbm [shape: f32[2,1,8], index: 3, kind: input, shape index: {}]
  %s4 = inlined_call_operand.vmem [shape: bf16[32,32], index: 4, kind: input, shape index: {}]
  %s5 = inlined_call_operand.vmem [shape: bf16[32,32], index: 5, kind: input, shape index: {}]
  %s6 = inlined_call_operand.hbm [shape: bf16[32,32], index: 6, kind: input, shape index: {}]
  %s7 = inlined_call_operand.hbm [shape: bf16[32,32], index: 7, kind: input, shape index: {}]
  %s8 = inlined_call_operand.hbm [shape: f32[1,32], index: 8, kind: input, shape index: {}]
  %s9 = inlined_call_operand.hbm [shape: f32[1,32], index: 9, kind: input, shape index: {}]
  %s10 = inlined_call_operand.hbm [shape: f32[1,32], index: 10, kind: input, shape index: {}]
  %s11 = inlined_call_operand.vmem [shape: bf16[32,32], index: 11, kind: input, shape index: {}]
  %s12 = inlined_call_operand.hbm [shape: bf16[32,32], index: 12, kind: input, shape index: {}]
  %s13 = inlined_call_operand.hbm [shape: bf16[32,32], index: 13, kind: input, shape index: {}]
  %s14 = inlined_call_operand.hbm [shape: bf16[32,32], index: 14, kind: input, shape index: {}]
  %s15 = inlined_call_operand.hbm [shape: f32[1,32], index: 15, kind: input, shape index: {}]
  %s16 = inlined_call_operand.hbm [shape: f32[1,32], index: 16, kind: input, shape index: {}]
  %s17 = inlined_call_operand.hbm [shape: f32[1,32], index: 17, kind: input, shape index: {}]
  %s18 = inlined_call_operand.hbm [shape: bf16[32,128], index: 18, kind: input, shape index: {}]
  %s19 = inlined_call_operand.vmem [shape: f32[1,128], index: 19, kind: input, shape index: {}]
  %s20 = inlined_call_operand.vmem [shape: bf16[128,32], index: 20, kind: input, shape index: {}]
  %s21 = inlined_call_operand.vmem [shape: f32[1,32], index: 21, kind: input, shape index: {}]
  %s22 = inlined_call_operand.vmem [shape: f32[1,32], index: 22, kind: input, shape index: {}]
  %s23 = inlined_call_operand.vmem [shape: f32[1,32], index: 23, kind: input, shape index: {}]
  %s24 = inlined_call_operand.hbm [shape: f32[2,8,32], index: 24, kind: output, shape index: {}]
  %s25 = sld [smem:[#allocation0]]
  $region158: #{tpu_custom_call.1} parent=0
    _
  %s27 = ssub.s32 1, %s25
  %s28 = scalar_select 0, %s27, %s25
  $region1: #{tpu_custom_call.1} parent=0
    #allocation3 [shape = 'u8[1024]{0}', space=vmem, size = 0x400, scoped, tag = 'input window, operand 3, single buffered']
    #allocation4 [shape = 's32[1]{0}', space=sflag, size = 0x4, scoped, tag = 'scoped memory for tpu_custom_call.1']
    #allocation5 [shape = 's32[1]{0}', space=sflag, size = 0x4, scoped, tag = 'scoped memory for tpu_custom_call.1']
    #allocation6 [shape = 'u8[8192]{0}', space=vmem, size = 0x2000, scoped, tag = 'input window, operand 6, single buffered']
    #allocation7 [shape = 's32[1]{0}', space=sflag, size = 0x4, scoped, tag = 'scoped memory for tpu_custom_call.1']
    #allocation8 [shape = 'u8[8192]{0}', space=vmem, size = 0x2000, scoped, tag = 'input window, operand 7, single buffered']
    #allocation9 [shape = 'u8[512]{0}', space=vmem, size = 0x400, scoped, tag = 'input window, operand 8, single buffered']
    #allocation10 [shape = 's32[1]{0}', space=sflag, size = 0x4, scoped, tag = 'scoped memory for tpu_custom_call.1']
    #allocation11 [shape = 'u8[512]{0}', space=vmem, size = 0x400, scoped, tag = 'input window, operand 9, single buffered']
    #allocation12 [shape = 'u8[512]{0}', space=vmem, size = 0x400, scoped, tag = 'input window, operand 10, single buffered']
    #allocation13 [shape = 's32[1]{0}', space=sflag, size = 0x4, scoped, tag = 'scoped memory for tpu_custom_call.1']
    #allocation14 [shape = 'u8[8192]{0}', space=vmem, size = 0x2000, scoped, tag = 'input window, operand 12, single buffered']
    #allocation15 [shape = 'u8[8192]{0}', space=vmem, size = 0x2000, scoped, tag = 'input window, operand 13, single buffered']
    #allocation16 [shape = 's32[1]{0}', space=sflag, size = 0x4, scoped, tag = 'scoped memory for tpu_custom_call.1']
    #allocation17 [shape = 'u8[8192]{0}', space=vmem, size = 0x2000, scoped, tag = 'input window, operand 14, single buffered']
    #allocation18 [shape = 'u8[512]{0}', space=vmem, size = 0x400, scoped, tag = 'input window, operand 15, single buffered']
    #allocation19 [shape = 's32[1]{0}', space=sflag, size = 0x4, scoped, tag = 'scoped memory for tpu_custom_call.1']
    #allocation20 [shape = 'u8[512]{0}', space=vmem, size = 0x400, scoped, tag = 'input window, operand 16, single buffered']
    #allocation21 [shape = 'u8[512]{0}', space=vmem, size = 0x400, scoped, tag = 'input window, operand 17, single buffered']
    #allocation22 [shape = 's32[1]{0}', space=sflag, size = 0x4, scoped, tag = 'scoped memory for tpu_custom_call.1']
    #allocation23 [shape = 'u8[8192]{0}', space=vmem, size = 0x2000, scoped, tag = 'input window, operand 18, single buffered']
    #allocation24 [shape = 'u8[8192]{0}', space=vmem, size = 0x2000, scoped, tag = 'output window, operand 0, single buffered']
    %29 = vsyncpa [#allocation4], 0
    %30 = vsyncpa [#allocation7], 0
    %31 = vsyncpa [#allocation10], 0
    %32 = vsyncpa [#allocation13], 0
    %33 = vsyncpa [#allocation16], 0
    %34 = vsyncpa [#allocation19], 0
    %35 = vsyncpa [#allocation22], 0
    %36 = vsyncpa [#allocation5], 0
    // Predicated region
    $region2: #{tpu_custom_call.1} parent=1 // pred_check
      _
    $region3: #{tpu_custom_call.1} parent=1 // pred_check_branch
      %38 = sbr.rel (0) target = $region5
    $region4: #{tpu_custom_call.1} parent=1 // pred_region
      _
    $region5: #{tpu_custom_call.1} parent=1 // pred_fallthru
      _
    // Predicated region
    $region6: #{tpu_custom_call.1} parent=1 // pred_check
      _
    $region7: #{tpu_custom_call.1} parent=1 // pred_check_branch
      %40 = sbr.rel (0) target = $region9
    $region8: #{tpu_custom_call.1} parent=1 // pred_region
      _
    $region9: #{tpu_custom_call.1} parent=1 // pred_fallthru
      _
    // Predicated region
    $region10: #{tpu_custom_call.1} parent=1 // pred_check
      _
    $region11: #{tpu_custom_call.1} parent=1 // pred_check_branch
      %42 = sbr.rel (0) target = $region13
    $region12: #{tpu_custom_call.1} parent=1 // pred_region
      _
    $region13: #{tpu_custom_call.1} parent=1 // pred_fallthru
      _
    // Predicated region
    $region14: #{tpu_custom_call.1} parent=1 // pred_check
      _
    $region15: #{tpu_custom_call.1} parent=1 // pred_check_branch
      %44 = sbr.rel (0) target = $region17
    $region16: #{tpu_custom_call.1} parent=1 // pred_region
      %s46 = ssub.s32 32, 32
      %47 = vsyncadd [#allocation4], %s46
      %s48 = sshll.u32 [#allocation3], 4
      %s49 = int_to_ptr.vmem [resolvable:$true] %s48
      %54 = dma.hbm_to_vmem [thread:$0]  %s3, 32, %s49, [#allocation4], 16, 16, 1
    $region17: #{tpu_custom_call.1} parent=1 // pred_fallthru
      _
    // Predicated region
    $region18: #{tpu_custom_call.1} parent=1 // pred_check
      _
    $region19: #{tpu_custom_call.1} parent=1 // pred_check_branch
      %56 = sbr.rel (0) target = $region21
    $region20: #{tpu_custom_call.1} parent=1 // pred_region
      _
    $region21: #{tpu_custom_call.1} parent=1 // pred_fallthru
      _
    // Predicated region
    $region22: #{tpu_custom_call.1} parent=1 // pred_check
      _
    $region23: #{tpu_custom_call.1} parent=1 // pred_check_branch
      %58 = sbr.rel (0) target = $region25
    $region24: #{tpu_custom_call.1} parent=1 // pred_region
      _
    $region25: #{tpu_custom_call.1} parent=1 // pred_fallthru
      _
    // Predicated region
    $region26: #{tpu_custom_call.1} parent=1 // pred_check
      _
    $region27: #{tpu_custom_call.1} parent=1 // pred_check_branch
      %60 = sbr.rel (0) target = $region29
    $region28: #{tpu_custom_call.1} parent=1 // pred_region
      %s62 = ssub.s32 256, 256
      %63 = vsyncadd [#allocation7], %s62
      %s64 = sshll.u32 [#allocation6], 4
      %s65 = int_to_ptr.vmem [resolvable:$true] %s64
      %70 = dma.hbm_to_vmem [thread:$0]  %s6, 256, %s65, [#allocation7], 64, 64, 4
    $region29: #{tpu_custom_call.1} parent=1 // pred_fallthru
      _
    // Predicated region
    $region30: #{tpu_custom_call.1} parent=1 // pred_check
      _
    $region31: #{tpu_custom_call.1} parent=1 // pred_check_branch
      %72 = sbr.rel (0) target = $region33
    $region32: #{tpu_custom_call.1} parent=1 // pred_region
      %s74 = ssub.s32 256, 256
      %75 = vsyncadd [#allocation7], %s74
      %s76 = sshll.u32 [#allocation8], 4
      %s77 = int_to_ptr.vmem [resolvable:$true] %s76
      %82 = dma.hbm_to_vmem [thread:$0]  %s7, 256, %s77, [#allocation7], 64, 64, 4
    $region33: #{tpu_custom_call.1} parent=1 // pred_fallthru
      _
    // Predicated region
    $region34: #{tpu_custom_call.1} parent=1 // pred_check
      _
    $region35: #{tpu_custom_call.1} parent=1 // pred_check_branch
      %84 = sbr.rel (0) target = $region37
    $region36: #{tpu_custom_call.1} parent=1 // pred_region
      %s86 = ssub.s32 16, 16
      %87 = vsyncadd [#allocation10], %s86
      %s89 = sshll.u32 [#allocation9], 4
      %s90 = int_to_ptr.vmem [resolvable:$true] %s89
      %92 = dma.hbm_to_vmem [thread:$0]  %s8, 16, %s90, [#allocation10]
    $region37: #{tpu_custom_call.1} parent=1 // pred_fallthru
      _
    // Predicated region
    $region38: #{tpu_custom_call.1} parent=1 // pred_check
      _
    $region39: #{tpu_custom_call.1} parent=1 // pred_check_branch
      %94 = sbr.rel (0) target = $region41
    $region40: #{tpu_custom_call.1} parent=1 // pred_region
      %s96 = ssub.s32 16, 16
      %97 = vsyncadd [#allocation10], %s96
      %s99 = sshll.u32 [#allocation11], 4
      %s100 = int_to_ptr.vmem [resolvable:$true] %s99
      %102 = dma.hbm_to_vmem [thread:$0]  %s9, 16, %s100, [#allocation10]
    $region41: #{tpu_custom_call.1} parent=1 // pred_fallthru
      _
    // Predicated region
    $region42: #{tpu_custom_call.1} parent=1 // pred_check
      _
    $region43: #{tpu_custom_call.1} parent=1 // pred_check_branch
      %104 = sbr.rel (0) target = $region45
    $region44: #{tpu_custom_call.1} parent=1 // pred_region
      %s106 = ssub.s32 16, 16
      %107 = vsyncadd [#allocation13], %s106
      %s109 = sshll.u32 [#allocation12], 4
      %s110 = int_to_ptr.vmem [resolvable:$true] %s109
      %112 = dma.hbm_to_vmem [thread:$0]  %s10, 16, %s110, [#allocation13]
    $region45: #{tpu_custom_call.1} parent=1 // pred_fallthru
      _
    // Predicated region
    $region46: #{tpu_custom_call.1} parent=1 // pred_check
      _
    $region47: #{tpu_custom_call.1} parent=1 // pred_check_branch
      %114 = sbr.rel (0) target = $region49
    $region48: #{tpu_custom_call.1} parent=1 // pred_region
      _
    $region49: #{tpu_custom_call.1} parent=1 // pred_fallthru
      _
    // Predicated region
    $region50: #{tpu_custom_call.1} parent=1 // pred_check
      _
    $region51: #{tpu_custom_call.1} parent=1 // pred_check_branch
      %116 = sbr.rel (0) target = $region53
    $region52: #{tpu_custom_call.1} parent=1 // pred_region
      %s118 = ssub.s32 256, 256
      %119 = vsyncadd [#allocation13], %s118
      %s120 = sshll.u32 [#allocation14], 4
      %s121 = int_to_ptr.vmem [resolvable:$true] %s120
      %126 = dma.hbm_to_vmem [thread:$0]  %s12, 256, %s121, [#allocation13], 64, 64, 4
    $region53: #{tpu_custom_call.1} parent=1 // pred_fallthru
      _
    // Predicated region
    $region54: #{tpu_custom_call.1} parent=1 // pred_check
      _
    $region55: #{tpu_custom_call.1} parent=1 // pred_check_branch
      %128 = sbr.rel (0) target = $region57
    $region56: #{tpu_custom_call.1} parent=1 // pred_region
      %s130 = ssub.s32 256, 256
      %131 = vsyncadd [#allocation16], %s130
      %s132 = sshll.u32 [#allocation15], 4
      %s133 = int_to_ptr.vmem [resolvable:$true] %s132
      %138 = dma.hbm_to_vmem [thread:$0]  %s13, 256, %s133, [#allocation16], 64, 64, 4
    $region57: #{tpu_custom_call.1} parent=1 // pred_fallthru
      _
    // Predicated region
    $region58: #{tpu_custom_call.1} parent=1 // pred_check
      _
    $region59: #{tpu_custom_call.1} parent=1 // pred_check_branch
      %140 = sbr.rel (0) target = $region61
    $region60: #{tpu_custom_call.1} parent=1 // pred_region
      %s142 = ssub.s32 256, 256
      %143 = vsyncadd [#allocation16], %s142
      %s144 = sshll.u32 [#allocation17], 4
      %s145 = int_to_ptr.vmem [resolvable:$true] %s144
      %150 = dma.hbm_to_vmem [thread:$0]  %s14, 256, %s145, [#allocation16], 64, 64, 4
    $region61: #{tpu_custom_call.1} parent=1 // pred_fallthru
      _
    // Predicated region
    $region62: #{tpu_custom_call.1} parent=1 // pred_check
      _
    $region63: #{tpu_custom_call.1} parent=1 // pred_check_branch
      %152 = sbr.rel (0) target = $region65
    $region64: #{tpu_custom_call.1} parent=1 // pred_region
      %s154 = ssub.s32 16, 16
      %155 = vsyncadd [#allocation19], %s154
      %s157 = sshll.u32 [#allocation18], 4
      %s158 = int_to_ptr.vmem [resolvable:$true] %s157
      %160 = dma.hbm_to_vmem [thread:$0]  %s15, 16, %s158, [#allocation19]
    $region65: #{tpu_custom_call.1} parent=1 // pred_fallthru
      _
    // Predicated region
    $region66: #{tpu_custom_call.1} parent=1 // pred_check
      _
    $region67: #{tpu_custom_call.1} parent=1 // pred_check_branch
      %162 = sbr.rel (0) target = $region69
    $region68: #{tpu_custom_call.1} parent=1 // pred_region
      %s164 = ssub.s32 16, 16
      %165 = vsyncadd [#allocation19], %s164
      %s167 = sshll.u32 [#allocation20], 4
      %s168 = int_to_ptr.vmem [resolvable:$true] %s167
      %170 = dma.hbm_to_vmem [thread:$0]  %s16, 16, %s168, [#allocation19]
    $region69: #{tpu_custom_call.1} parent=1 // pred_fallthru
      _
    // Predicated region
    $region70: #{tpu_custom_call.1} parent=1 // pred_check
      _
    $region71: #{tpu_custom_call.1} parent=1 // pred_check_branch
      %172 = sbr.rel (0) target = $region73
    $region72: #{tpu_custom_call.1} parent=1 // pred_region
      %s174 = ssub.s32 16, 16
      %175 = vsyncadd [#allocation22], %s174
      %s177 = sshll.u32 [#allocation21], 4
      %s178 = int_to_ptr.vmem [resolvable:$true] %s177
      %180 = dma.hbm_to_vmem [thread:$0]  %s17, 16, %s178, [#allocation22]
    $region73: #{tpu_custom_call.1} parent=1 // pred_fallthru
      _
    // Predicated region
    $region74: #{tpu_custom_call.1} parent=1 // pred_check
      _
    $region75: #{tpu_custom_call.1} parent=1 // pred_check_branch
      %182 = sbr.rel (0) target = $region77
    $region76: #{tpu_custom_call.1} parent=1 // pred_region
      %s184 = ssub.s32 256, 256
      %185 = vsyncadd [#allocation22], %s184
      %s186 = sshll.u32 [#allocation23], 4
      %s187 = int_to_ptr.vmem [resolvable:$true] %s186
      %192 = dma.hbm_to_vmem [thread:$0]  %s18, 256, %s187, [#allocation22], 64, 64, 4
    $region77: #{tpu_custom_call.1} parent=1 // pred_fallthru
      _
    // Predicated region
    $region78: #{tpu_custom_call.1} parent=1 // pred_check
      _
    $region79: #{tpu_custom_call.1} parent=1 // pred_check_branch
      %194 = sbr.rel (0) target = $region81
    $region80: #{tpu_custom_call.1} parent=1 // pred_region
      _
    $region81: #{tpu_custom_call.1} parent=1 // pred_fallthru
      _
    // Predicated region
    $region82: #{tpu_custom_call.1} parent=1 // pred_check
      _
    $region83: #{tpu_custom_call.1} parent=1 // pred_check_branch
      %196 = sbr.rel (0) target = $region85
    $region84: #{tpu_custom_call.1} parent=1 // pred_region
      _
    $region85: #{tpu_custom_call.1} parent=1 // pred_fallthru
      _
    // Predicated region
    $region86: #{tpu_custom_call.1} parent=1 // pred_check
      _
    $region87: #{tpu_custom_call.1} parent=1 // pred_check_branch
      %198 = sbr.rel (0) target = $region89
    $region88: #{tpu_custom_call.1} parent=1 // pred_region
      _
    $region89: #{tpu_custom_call.1} parent=1 // pred_fallthru
      _
    // Predicated region
    $region90: #{tpu_custom_call.1} parent=1 // pred_check
      _
    $region91: #{tpu_custom_call.1} parent=1 // pred_check_branch
      %200 = sbr.rel (0) target = $region93
    $region92: #{tpu_custom_call.1} parent=1 // pred_region
      _
    $region93: #{tpu_custom_call.1} parent=1 // pred_fallthru
      _
    // Predicated region
    $region94: #{tpu_custom_call.1} parent=1 // pred_check
      _
    $region95: #{tpu_custom_call.1} parent=1 // pred_check_branch
      %202 = sbr.rel (0) target = $region97
    $region96: #{tpu_custom_call.1} parent=1 // pred_region
      _
    $region97: #{tpu_custom_call.1} parent=1 // pred_fallthru
      _
    // Predicated region
    $region98: #{tpu_custom_call.1} parent=1 // pred_check
      _
    $region99: #{tpu_custom_call.1} parent=1 // pred_check_branch
      %204 = sbr.rel (0) target = $region101
    $region100: #{tpu_custom_call.1} parent=1 // pred_region
      %205 = dma.done [#allocation4], 32
    $region101: #{tpu_custom_call.1} parent=1 // pred_fallthru
      _
    // Predicated region
    $region102: #{tpu_custom_call.1} parent=1 // pred_check
      _
    $region103: #{tpu_custom_call.1} parent=1 // pred_check_branch
      %207 = sbr.rel (0) target = $region105
    $region104: #{tpu_custom_call.1} parent=1 // pred_region
      %208 = dma.done [#allocation7], 256
    $region105: #{tpu_custom_call.1} parent=1 // pred_fallthru
      _
    // Predicated region
    $region106: #{tpu_custom_call.1} parent=1 // pred_check
      _
    $region107: #{tpu_custom_call.1} parent=1 // pred_check_branch
      %210 = sbr.rel (0) target = $region109
    $region108: #{tpu_custom_call.1} parent=1 // pred_region
      %211 = dma.done [#allocation7], 256
    $region109: #{tpu_custom_call.1} parent=1 // pred_fallthru
      _
    // Predicated region
    $region110: #{tpu_custom_call.1} parent=1 // pred_check
      _
    $region111: #{tpu_custom_call.1} parent=1 // pred_check_branch
      %213 = sbr.rel (0) target = $region113
    $region112: #{tpu_custom_call.1} parent=1 // pred_region
      %214 = dma.done [#allocation10], 16
    $region113: #{tpu_custom_call.1} parent=1 // pred_fallthru
      _
    // Predicated region
    $region114: #{tpu_custom_call.1} parent=1 // pred_check
      _
    $region115: #{tpu_custom_call.1} parent=1 // pred_check_branch
      %216 = sbr.rel (0) target = $region117
    $region116: #{tpu_custom_call.1} parent=1 // pred_region
      %217 = dma.done [#allocation10], 16
    $region117: #{tpu_custom_call.1} parent=1 // pred_fallthru
      _
    // Predicated region
    $region118: #{tpu_custom_call.1} parent=1 // pred_check
      _
    $region119: #{tpu_custom_call.1} parent=1 // pred_check_branch
      %219 = sbr.rel (0) target = $region121
    $region120: #{tpu_custom_call.1} parent=1 // pred_region
      %220 = dma.done [#allocation13], 16
    $region121: #{tpu_custom_call.1} parent=1 // pred_fallthru
      _
    // Predicated region
    $region122: #{tpu_custom_call.1} parent=1 // pred_check
      _
    $region123: #{tpu_custom_call.1} parent=1 // pred_check_branch
      %222 = sbr.rel (0) target = $region125
    $region124: #{tpu_custom_call.1} parent=1 // pred_region
      %223 = dma.done [#allocation13], 256
    $region125: #{tpu_custom_call.1} parent=1 // pred_fallthru
      _
    // Predicated region
    $region126: #{tpu_custom_call.1} parent=1 // pred_check
      _
    $region127: #{tpu_custom_call.1} parent=1 // pred_check_branch
      %225 = sbr.rel (0) target = $region129
    $region128: #{tpu_custom_call.1} parent=1 // pred_region
      %226 = dma.done [#allocation16], 256
    $region129: #{tpu_custom_call.1} parent=1 // pred_fallthru
      _
    // Predicated region
    $region130: #{tpu_custom_call.1} parent=1 // pred_check
      _
    $region131: #{tpu_custom_call.1} parent=1 // pred_check_branch
      %228 = sbr.rel (0) target = $region133
    $region132: #{tpu_custom_call.1} parent=1 // pred_region
      %229 = dma.done [#allocation16], 256
    $region133: #{tpu_custom_call.1} parent=1 // pred_fallthru
      _
    // Predicated region
    $region134: #{tpu_custom_call.1} parent=1 // pred_check
      _
    $region135: #{tpu_custom_call.1} parent=1 // pred_check_branch
      %231 = sbr.rel (0) target = $region137
    $region136: #{tpu_custom_call.1} parent=1 // pred_region
      %232 = dma.done [#allocation19], 16
    $region137: #{tpu_custom_call.1} parent=1 // pred_fallthru
      _
    // Predicated region
    $region138: #{tpu_custom_call.1} parent=1 // pred_check
      _
    $region139: #{tpu_custom_call.1} parent=1 // pred_check_branch
      %234 = sbr.rel (0) target = $region141
    $region140: #{tpu_custom_call.1} parent=1 // pred_region
      %235 = dma.done [#allocation19], 16
    $region141: #{tpu_custom_call.1} parent=1 // pred_fallthru
      _
    // Predicated region
    $region142: #{tpu_custom_call.1} parent=1 // pred_check
      _
    $region143: #{tpu_custom_call.1} parent=1 // pred_check_branch
      %237 = sbr.rel (0) target = $region145
    $region144: #{tpu_custom_call.1} parent=1 // pred_region
      %238 = dma.done [#allocation22], 16
    $region145: #{tpu_custom_call.1} parent=1 // pred_fallthru
      _
    // Predicated region
    $region146: #{tpu_custom_call.1} parent=1 // pred_check
      _
    $region147: #{tpu_custom_call.1} parent=1 // pred_check_branch
      %240 = sbr.rel (0) target = $region149
    $region148: #{tpu_custom_call.1} parent=1 // pred_region
      %241 = dma.done [#allocation22], 256
    $region149: #{tpu_custom_call.1} parent=1 // pred_fallthru
      _
    %v243 = vld [vmem:[%s0] sm:$0xff]
    %v244 = vld [vmem:[%s0 + $0x8] sm:$0xff]
    %v245 = vld [vmem:[%s1] sm:$0xff]
    %v246 = vld [vmem:[%s1 + $0x8] sm:$0xff]
    %v247 = vld [vmem:[%s2] sm:$0xff]
    %v248 = vld [vmem:[%s2 + $0x8] sm:$0xff]
    %v249 = vlaneseq
    %v250 = vshrl.u32 %v249, 7
    %v251 = vlaneseq
    %v252 = vand.u32 %v251, 127
    %vm253 = vcmp.gt.s32.totalorder %v252, %v250
    %v254 = vsel %vm253, -1e+20, 0.0
    %v255 = vld [vmem:[#allocation3] sm:$0x1]
    %v256 = vld [vmem:[#allocation3 + $0x1] sm:$0x1]
    %v257 = vpack.c.bf16 %v244, %v243
    %v258 = vld [vmem:[%s4] sm:$0xf]
    %v259 = vld [vmem:[%s4 + $0x4] sm:$0xf]
    %v260 = vld [vmem:[%s4 + $0x8] sm:$0xf]
    %v261 = vld [vmem:[%s4 + $0xc] sm:$0xf]
    %v266 = vunpack.c.l.b16 %v258
    %v267 = vunpack.c.l.b16 %v259
    %v268 = vunpack.c.l.b16 %v260
    %v269 = vunpack.c.l.b16 %v261
    %v270 = vpack.c.b16 %v267, %v266
    %v271 = vpack.c.b16 %v269, %v268
    %vm274 = vcmask 261120
    %v276 = vsel %vm274, %v257, 0
    %278 = vmatprep.subr.bf16.mxu0 0
    %279 = vmatpush1.bf16.msra.mxu0 0
    %280 = vmatprep.subr.bf16.mxu0 0
    %281 = vmatpush1.bf16.msra.mxu0 0
    %282 = vmatprep.subr.bf16.mxu0 0
    %283 = vmatpush1.bf16.msra.mxu0 0
    %284 = vmatprep.subr.bf16.mxu0 0
    %285 = vmatpush1.bf16.msra.mxu0 0
    %286 = vmatprep.subr.bf16.mxu0 0
    %287 = vmatpush1.bf16.msra.mxu0 0
    %288 = vmatprep.subr.bf16.mxu0 0
    %289 = vmatpush1.bf16.msra.mxu0 0
    %290 = vmatprep.subr.bf16.mxu0 0
    %291 = vmatpush1.bf16.msra.mxu0 %v271
    %292 = vmatprep.subr.bf16.mxu0 0
    %293 = vmatpush1.bf16.msra.mxu0 %v270
    %294 = vmatprep.subr.bf16.mxu0 0
    %295 = vmatpush2.bf16.msra.mxu0 0
    %296 = vmatprep.subr.bf16.mxu0 0
    %297 = vmatpush2.bf16.msra.mxu0 0
    %298 = vmatprep.subr.bf16.mxu0 0
    %299 = vmatpush2.bf16.msra.mxu0 0
    %300 = vmatprep.subr.bf16.mxu0 0
    %301 = vmatpush2.bf16.msra.mxu0 0
    %302 = vmatprep.subr.bf16.mxu0 0
    %303 = vmatpush2.bf16.msra.mxu0 0
    %304 = vmatprep.subr.bf16.mxu0 0
    %305 = vmatpush2.bf16.msra.mxu0 0
    %306 = vmatprep.subr.bf16.mxu0 0
    %307 = vmatpush2.bf16.msra.mxu0 0
    %308 = vmatprep.subr.bf16.mxu0 0
    %309 = vmatpush2.bf16.msra.mxu0 0
    %310 = vmatprep.mubr.bf16.mxu0 0
    %311 = vmatmul.mubr.bf16.gmra.mxu0 %v276
    %v312 = vpop.f32.mrf.mxu0
    %v313 = vadd.f32 0.0, %v312
    %v314 = vpop.f32.mrf.mxu0
    %v315 = vpop.f32.mrf.mxu0
    %v316 = vadd.f32 0.0, %v315
    %v317 = vpop.f32.mrf.mxu0
    %318 = vdwg.mxu0
    %v319 = vld [vmem:[%s5] sm:$0xf]
    %v320 = vld [vmem:[%s5 + $0x4] sm:$0xf]
    %v321 = vld [vmem:[%s5 + $0x8] sm:$0xf]
    %v322 = vld [vmem:[%s5 + $0xc] sm:$0xf]
    %v327 = vunpack.c.l.b16 %v319
    %v328 = vunpack.c.l.b16 %v320
    %v329 = vunpack.c.l.b16 %v321
    %v330 = vunpack.c.l.b16 %v322
    %v331 = vpack.c.b16 %v328, %v327
    %v332 = vpack.c.b16 %v330, %v329
    %335 = vmatprep.subr.bf16.mxu0 0
    %336 = vmatpush1.bf16.msra.mxu0 0
    %337 = vmatprep.subr.bf16.mxu0 0
    %338 = vmatpush1.bf16.msra.mxu0 0
    %339 = vmatprep.subr.bf16.mxu0 0
    %340 = vmatpush1.bf16.msra.mxu0 0
    %341 = vmatprep.subr.bf16.mxu0 0
    %342 = vmatpush1.bf16.msra.mxu0 0
    %343 = vmatprep.subr.bf16.mxu0 0
    %344 = vmatpush1.bf16.msra.mxu0 0
    %345 = vmatprep.subr.bf16.mxu0 0
    %346 = vmatpush1.bf16.msra.mxu0 0
    %347 = vmatprep.subr.bf16.mxu0 0
    %348 = vmatpush1.bf16.msra.mxu0 %v332
    %349 = vmatprep.subr.bf16.mxu0 0
    %350 = vmatpush1.bf16.msra.mxu0 %v331
    %351 = vmatprep.subr.bf16.mxu0 0
    %352 = vmatpush2.bf16.msra.mxu0 0
    %353 = vmatprep.subr.bf16.mxu0 0
    %354 = vmatpush2.bf16.msra.mxu0 0
    %355 = vmatprep.subr.bf16.mxu0 0
    %356 = vmatpush2.bf16.msra.mxu0 0
    %357 = vmatprep.subr.bf16.mxu0 0
    %358 = vmatpush2.bf16.msra.mxu0 0
    %359 = vmatprep.subr.bf16.mxu0 0
    %360 = vmatpush2.bf16.msra.mxu0 0
    %361 = vmatprep.subr.bf16.mxu0 0
    %362 = vmatpush2.bf16.msra.mxu0 0
    %363 = vmatprep.subr.bf16.mxu0 0
    %364 = vmatpush2.bf16.msra.mxu0 0
    %365 = vmatprep.subr.bf16.mxu0 0
    %366 = vmatpush2.bf16.msra.mxu0 0
    %367 = vmatprep.mubr.bf16.mxu0 0
    %368 = vmatmul.mubr.bf16.gmra.mxu0 %v276
    %v369 = vpop.f32.mrf.mxu0
    %v370 = vadd.f32 0.0, %v369
    %v371 = vpop.f32.mrf.mxu0
    %v372 = vpop.f32.mrf.mxu0
    %v373 = vadd.f32 0.0, %v372
    %v374 = vpop.f32.mrf.mxu0
    %375 = vdwg.mxu0
    %v376 = vld [vmem:[#allocation6] sm:$0xf]
    %v377 = vld [vmem:[#allocation6 + $0x4] sm:$0xf]
    %v378 = vld [vmem:[#allocation6 + $0x8] sm:$0xf]
    %v379 = vld [vmem:[#allocation6 + $0xc] sm:$0xf]
    %v384 = vunpack.c.l.b16 %v376
    %v385 = vunpack.c.l.b16 %v377
    %v386 = vunpack.c.l.b16 %v378
    %v387 = vunpack.c.l.b16 %v379
    %v388 = vpack.c.b16 %v385, %v384
    %v389 = vpack.c.b16 %v387, %v386
    %392 = vmatprep.subr.bf16.mxu0 0
    %393 = vmatpush1.bf16.msra.mxu0 0
    %394 = vmatprep.subr.bf16.mxu0 0
    %395 = vmatpush1.bf16.msra.mxu0 0
    %396 = vmatprep.subr.bf16.mxu0 0
    %397 = vmatpush1.bf16.msra.mxu0 0
    %398 = vmatprep.subr.bf16.mxu0 0
    %399 = vmatpush1.bf16.msra.mxu0 0
    %400 = vmatprep.subr.bf16.mxu0 0
    %401 = vmatpush1.bf16.msra.mxu0 0
    %402 = vmatprep.subr.bf16.mxu0 0
    %403 = vmatpush1.bf16.msra.mxu0 0
    %404 = vmatprep.subr.bf16.mxu0 0
    %405 = vmatpush1.bf16.msra.mxu0 %v389
    %406 = vmatprep.subr.bf16.mxu0 0
    %407 = vmatpush1.bf16.msra.mxu0 %v388
    %408 = vmatprep.subr.bf16.mxu0 0
    %409 = vmatpush2.bf16.msra.mxu0 0
    %410 = vmatprep.subr.bf16.mxu0 0
    %411 = vmatpush2.bf16.msra.mxu0 0
    %412 = vmatprep.subr.bf16.mxu0 0
    %413 = vmatpush2.bf16.msra.mxu0 0
    %414 = vmatprep.subr.bf16.mxu0 0
    %415 = vmatpush2.bf16.msra.mxu0 0
    %416 = vmatprep.subr.bf16.mxu0 0
    %417 = vmatpush2.bf16.msra.mxu0 0
    %418 = vmatprep.subr.bf16.mxu0 0
    %419 = vmatpush2.bf16.msra.mxu0 0
    %420 = vmatprep.subr.bf16.mxu0 0
    %421 = vmatpush2.bf16.msra.mxu0 0
    %422 = vmatprep.subr.bf16.mxu0 0
    %423 = vmatpush2.bf16.msra.mxu0 0
    %424 = vmatprep.mubr.bf16.mxu0 0
    %425 = vmatmul.mubr.bf16.gmra.mxu0 %v276
    %v426 = vpop.f32.mrf.mxu0
    %v427 = vadd.f32 0.0, %v426
    %v428 = vpop.f32.mrf.mxu0
    %v429 = vpop.f32.mrf.mxu0
    %v430 = vadd.f32 0.0, %v429
    %v431 = vpop.f32.mrf.mxu0
    %432 = vdwg.mxu0
    %v433 = vpack.c.bf16 %v316, %v313
    %v434 = vpack.c.bf16 %v373, %v370
    %v435 = vpack.c.bf16 %v430, %v427
    %v437 = vunpack.c.l.b16 %v433
    %v438 = vunpack.c.h.b16 %v433
    %v439 = vpack.c.b16 %v437, %v437
    %v440 = vpack.c.b16 %v438, %v438
    %v442 = vunpack.c.l.b16 %v434
    %v443 = vunpack.c.h.b16 %v434
    %v444 = vpack.c.b16 %v442, %v442
    %v445 = vpack.c.b16 %v443, %v443
    %v447 = vunpack.c.l.b16 %v435
    %v448 = vunpack.c.h.b16 %v435
    %v449 = vpack.c.b16 %v447, %v447
    %v450 = vpack.c.b16 %v448, %v448
    %vm451 = vcmask 64512
    %v453 = vsel %vm451, %v439, 0
    %v456 = vsel %vm451, %v444, 0
    %458 = vmatprep.subr.bf16.mxu0 0
    %459 = vmatpush1.bf16.xpose.msra.mxu0 0
    %460 = vmatprep.subr.bf16.mxu0 0
    %461 = vmatpush1.bf16.xpose.msra.mxu0 0
    %462 = vmatprep.subr.bf16.mxu0 0
    %463 = vmatpush1.bf16.xpose.msra.mxu0 0
    %464 = vmatprep.subr.bf16.mxu0 0
    %465 = vmatpush1.bf16.xpose.msra.mxu0 0
    %466 = vmatprep.subr.bf16.mxu0 0
    %467 = vmatpush1.bf16.xpose.msra.mxu0 0
    %468 = vmatprep.subr.bf16.mxu0 0
    %469 = vmatpush1.bf16.xpose.msra.mxu0 0
    %470 = vmatprep.subr.bf16.mxu0 0
    %471 = vmatpush1.bf16.xpose.msra.mxu0 0
    %472 = vmatprep.subr.bf16.mxu0 0
    %473 = vmatpush1.bf16.xpose.msra.mxu0 %v456
    %474 = vmatprep.subr.bf16.mxu0 0
    %475 = vmatpush2.bf16.xpose.msra.mxu0 0
    %476 = vmatprep.subr.bf16.mxu0 0
    %477 = vmatpush2.bf16.xpose.msra.mxu0 0
    %478 = vmatprep.subr.bf16.mxu0 0
    %479 = vmatpush2.bf16.xpose.msra.mxu0 0
    %480 = vmatprep.subr.bf16.mxu0 0
    %481 = vmatpush2.bf16.xpose.msra.mxu0 0
    %482 = vmatprep.subr.bf16.mxu0 0
    %483 = vmatpush2.bf16.xpose.msra.mxu0 0
    %484 = vmatprep.subr.bf16.mxu0 0
    %485 = vmatpush2.bf16.xpose.msra.mxu0 0
    %486 = vmatprep.subr.bf16.mxu0 0
    %487 = vmatpush2.bf16.xpose.msra.mxu0 0
    %488 = vmatprep.subr.bf16.mxu0 0
    %489 = vmatpush2.bf16.xpose.msra.mxu0 0
    %490 = vmatprep.mubr.bf16.mxu0 0
    %491 = vmatmul.mubr.bf16.gmra.mxu0 %v453
    %v492 = vpop.f32.mrf.mxu0
    %v493 = vadd.f32 %v254, %v492
    %v494 = vpop.f32.mrf.mxu0
    %v495 = vpop.f32.mrf.mxu0
    %v496 = vpop.f32.mrf.mxu0
    %497 = vdwg.mxu0
    %v499 = vsel %vm451, %v440, 0
    %v502 = vsel %vm451, %v445, 0
    %504 = vmatprep.subr.bf16.mxu0 0
    %505 = vmatpush1.bf16.xpose.msra.mxu0 0
    %506 = vmatprep.subr.bf16.mxu0 0
    %507 = vmatpush1.bf16.xpose.msra.mxu0 0
    %508 = vmatprep.subr.bf16.mxu0 0
    %509 = vmatpush1.bf16.xpose.msra.mxu0 0
    %510 = vmatprep.subr.bf16.mxu0 0
    %511 = vmatpush1.bf16.xpose.msra.mxu0 0
    %512 = vmatprep.subr.bf16.mxu0 0
    %513 = vmatpush1.bf16.xpose.msra.mxu0 0
    %514 = vmatprep.subr.bf16.mxu0 0
    %515 = vmatpush1.bf16.xpose.msra.mxu0 0
    %516 = vmatprep.subr.bf16.mxu0 0
    %517 = vmatpush1.bf16.xpose.msra.mxu0 0
    %518 = vmatprep.subr.bf16.mxu0 0
    %519 = vmatpush1.bf16.xpose.msra.mxu0 %v502
    %520 = vmatprep.subr.bf16.mxu0 0
    %521 = vmatpush2.bf16.xpose.msra.mxu0 0
    %522 = vmatprep.subr.bf16.mxu0 0
    %523 = vmatpush2.bf16.xpose.msra.mxu0 0
    %524 = vmatprep.subr.bf16.mxu0 0
    %525 = vmatpush2.bf16.xpose.msra.mxu0 0
    %526 = vmatprep.subr.bf16.mxu0 0
    %527 = vmatpush2.bf16.xpose.msra.mxu0 0
    %528 = vmatprep.subr.bf16.mxu0 0
    %529 = vmatpush2.bf16.xpose.msra.mxu0 0
    %530 = vmatprep.subr.bf16.mxu0 0
    %531 = vmatpush2.bf16.xpose.msra.mxu0 0
    %532 = vmatprep.subr.bf16.mxu0 0
    %533 = vmatpush2.bf16.xpose.msra.mxu0 0
    %534 = vmatprep.subr.bf16.mxu0 0
    %535 = vmatpush2.bf16.xpose.msra.mxu0 0
    %536 = vmatprep.mubr.bf16.mxu0 0
    %537 = vmatmul.mubr.bf16.gmra.mxu0 %v499
    %v538 = vpop.f32.mrf.mxu0
    %v539 = vadd.f32 %v254, %v538
    %v540 = vpop.f32.mrf.mxu0
    %v541 = vpop.f32.mrf.mxu0
    %v542 = vpop.f32.mrf.mxu0
    %543 = vdwg.mxu0
    %v544 = vsel %vm451, %v493, -inf
    %545 = vmax.xlane.f32.xlu0 %v544
    %v546 = vpop.xlane.xlu0 %545
    %v547 = vsel %vm451, %v539, -inf
    %548 = vmax.xlane.f32.xlu0 %v547
    %v549 = vpop.xlane.xlu0 %548
    %v550 = vsub.f32 %v493, %v546
    %v551 = vsub.f32 %v539, %v549
    %v552 = vmul.f32 %v550, 1.442695
    %v553 = vpow.pop %v552
    %v554 = vmul.f32 %v551, 1.442695
    %v555 = vpow.pop %v554
    %v556 = vsel %vm451, %v553, 0.0
    %557 = vadd.xlane.f32.xlu0 %v556
    %v558 = vpop.xlane.xlu0 %557
    %v559 = vsel %vm451, %v555, 0.0
    %560 = vadd.xlane.f32.xlu0 %v559
    %v561 = vpop.xlane.xlu0 %560
    %v562 = vrcp.pop %v558
    %v563 = vrcp.pop %v561
    %v564 = vmul.f32 %v553, %v562
    %v565 = vmul.f32 %v555, %v563
    %v566 = vpack.c.bf16 %v564, %v564
    %v567 = vpack.c.bf16 %v565, %v565
    %v569 = vsel %vm451, %v566, 0
    %vm571 = vcmask 1043456
    %v573 = vsel %vm571, %v449, 0
    %575 = vmatprep.subr.bf16.mxu0 0
    %576 = vmatpush1.bf16.msra.mxu0 0
    %577 = vmatprep.subr.bf16.mxu0 0
    %578 = vmatpush1.bf16.msra.mxu0 0
    %579 = vmatprep.subr.bf16.mxu0 0
    %580 = vmatpush1.bf16.msra.mxu0 0
    %581 = vmatprep.subr.bf16.mxu0 0
    %582 = vmatpush1.bf16.msra.mxu0 0
    %583 = vmatprep.subr.bf16.mxu0 0
    %584 = vmatpush1.bf16.msra.mxu0 0
    %585 = vmatprep.subr.bf16.mxu0 0
    %586 = vmatpush1.bf16.msra.mxu0 0
    %587 = vmatprep.subr.bf16.mxu0 0
    %588 = vmatpush1.bf16.msra.mxu0 0
    %589 = vmatprep.subr.bf16.mxu0 0
    %590 = vmatpush1.bf16.msra.mxu0 %v573
    %591 = vmatprep.subr.bf16.mxu0 0
    %592 = vmatpush2.bf16.msra.mxu0 0
    %593 = vmatprep.subr.bf16.mxu0 0
    %594 = vmatpush2.bf16.msra.mxu0 0
    %595 = vmatprep.subr.bf16.mxu0 0
    %596 = vmatpush2.bf16.msra.mxu0 0
    %597 = vmatprep.subr.bf16.mxu0 0
    %598 = vmatpush2.bf16.msra.mxu0 0
    %599 = vmatprep.subr.bf16.mxu0 0
    %600 = vmatpush2.bf16.msra.mxu0 0
    %601 = vmatprep.subr.bf16.mxu0 0
    %602 = vmatpush2.bf16.msra.mxu0 0
    %603 = vmatprep.subr.bf16.mxu0 0
    %604 = vmatpush2.bf16.msra.mxu0 0
    %605 = vmatprep.subr.bf16.mxu0 0
    %606 = vmatpush2.bf16.msra.mxu0 0
    %607 = vmatprep.mubr.bf16.mxu0 0
    %608 = vmatmul.mubr.bf16.gmra.mxu0 %v569
    %v609 = vpop.f32.mrf.mxu0
    %v610 = vadd.f32 0.0, %v609
    %v611 = vpop.f32.mrf.mxu0
    %v612 = vpop.f32.mrf.mxu0
    %v613 = vpop.f32.mrf.mxu0
    %614 = vdwg.mxu0
    %v616 = vsel %vm451, %v567, 0
    %v619 = vsel %vm571, %v450, 0
    %621 = vmatprep.subr.bf16.mxu0 0
    %622 = vmatpush1.bf16.msra.mxu0 0
    %623 = vmatprep.subr.bf16.mxu0 0
    %624 = vmatpush1.bf16.msra.mxu0 0
    %625 = vmatprep.subr.bf16.mxu0 0
    %626 = vmatpush1.bf16.msra.mxu0 0
    %627 = vmatprep.subr.bf16.mxu0 0
    %628 = vmatpush1.bf16.msra.mxu0 0
    %629 = vmatprep.subr.bf16.mxu0 0
    %630 = vmatpush1.bf16.msra.mxu0 0
    %631 = vmatprep.subr.bf16.mxu0 0
    %632 = vmatpush1.bf16.msra.mxu0 0
    %633 = vmatprep.subr.bf16.mxu0 0
    %634 = vmatpush1.bf16.msra.mxu0 0
    %635 = vmatprep.subr.bf16.mxu0 0
    %636 = vmatpush1.bf16.msra.mxu0 %v619
    %637 = vmatprep.subr.bf16.mxu0 0
    %638 = vmatpush2.bf16.msra.mxu0 0
    %639 = vmatprep.subr.bf16.mxu0 0
    %640 = vmatpush2.bf16.msra.mxu0 0
    %641 = vmatprep.subr.bf16.mxu0 0
    %642 = vmatpush2.bf16.msra.mxu0 0
    %643 = vmatprep.subr.bf16.mxu0 0
    %644 = vmatpush2.bf16.msra.mxu0 0
    %645 = vmatprep.subr.bf16.mxu0 0
    %646 = vmatpush2.bf16.msra.mxu0 0
    %647 = vmatprep.subr.bf16.mxu0 0
    %648 = vmatpush2.bf16.msra.mxu0 0
    %649 = vmatprep.subr.bf16.mxu0 0
    %650 = vmatpush2.bf16.msra.mxu0 0
    %651 = vmatprep.subr.bf16.mxu0 0
    %652 = vmatpush2.bf16.msra.mxu0 0
    %653 = vmatprep.mubr.bf16.mxu0 0
    %654 = vmatmul.mubr.bf16.gmra.mxu0 %v616
    %v655 = vpop.f32.mrf.mxu0
    %v656 = vadd.f32 0.0, %v655
    %v657 = vpop.f32.mrf.mxu0
    %v658 = vpop.f32.mrf.mxu0
    %v659 = vpop.f32.mrf.mxu0
    %660 = vdwg.mxu0
    %v661 = vpack.c.bf16 %v656, %v610
    %v663 = vunpack.c.l.b16 %v661
    %v664 = vunpack.c.h.b16 %v661
    %v665 = vpack.c.b16 %v663, %v663
    %v666 = vpack.c.b16 %v664, %v664
    %vm669 = vcmask 60416
    %670 = vst.msk [vmem:[#allocation2] sm:$0xf] %vm669, %v665
    %671 = vst.msk [vmem:[#allocation2 + $0x4] sm:$0xf] %vm669, %v666
    %672 = vrot.lane.b32.xlu0 %v439, 120
    %v673 = vpop.permute.xlu0 %672
    %674 = vrot.lane.b32.xlu0 %v444, 120
    %v675 = vpop.permute.xlu0 %674
    %v677 = vsel %vm451, %v673, 0
    %v680 = vsel %vm451, %v675, 0
    %682 = vmatprep.subr.bf16.mxu0 0
    %683 = vmatpush1.bf16.xpose.msra.mxu0 0
    %684 = vmatprep.subr.bf16.mxu0 0
    %685 = vmatpush1.bf16.xpose.msra.mxu0 0
    %686 = vmatprep.subr.bf16.mxu0 0
    %687 = vmatpush1.bf16.xpose.msra.mxu0 0
    %688 = vmatprep.subr.bf16.mxu0 0
    %689 = vmatpush1.bf16.xpose.msra.mxu0 0
    %690 = vmatprep.subr.bf16.mxu0 0
    %691 = vmatpush1.bf16.xpose.msra.mxu0 0
    %692 = vmatprep.subr.bf16.mxu0 0
    %693 = vmatpush1.bf16.xpose.msra.mxu0 0
    %694 = vmatprep.subr.bf16.mxu0 0
    %695 = vmatpush1.bf16.xpose.msra.mxu0 0
    %696 = vmatprep.subr.bf16.mxu0 0
    %697 = vmatpush1.bf16.xpose.msra.mxu0 %v680
    %698 = vmatprep.subr.bf16.mxu0 0
    %699 = vmatpush2.bf16.xpose.msra.mxu0 0
    %700 = vmatprep.subr.bf16.mxu0 0
    %701 = vmatpush2.bf16.xpose.msra.mxu0 0
    %702 = vmatprep.subr.bf16.mxu0 0
    %703 = vmatpush2.bf16.xpose.msra.mxu0 0
    %704 = vmatprep.subr.bf16.mxu0 0
    %705 = vmatpush2.bf16.xpose.msra.mxu0 0
    %706 = vmatprep.subr.bf16.mxu0 0
    %707 = vmatpush2.bf16.xpose.msra.mxu0 0
    %708 = vmatprep.subr.bf16.mxu0 0
    %709 = vmatpush2.bf16.xpose.msra.mxu0 0
    %710 = vmatprep.subr.bf16.mxu0 0
    %711 = vmatpush2.bf16.xpose.msra.mxu0 0
    %712 = vmatprep.subr.bf16.mxu0 0
    %713 = vmatpush2.bf16.xpose.msra.mxu0 0
    %714 = vmatprep.mubr.bf16.mxu0 0
    %715 = vmatmul.mubr.bf16.gmra.mxu0 %v677
    %v716 = vpop.f32.mrf.mxu0
    %v717 = vadd.f32 %v254, %v716
    %v718 = vpop.f32.mrf.mxu0
    %v719 = vpop.f32.mrf.mxu0
    %v720 = vpop.f32.mrf.mxu0
    %721 = vdwg.mxu0
    %722 = vrot.lane.b32.xlu0 %v440, 120
    %v723 = vpop.permute.xlu0 %722
    %724 = vrot.lane.b32.xlu0 %v445, 120
    %v725 = vpop.permute.xlu0 %724
    %v727 = vsel %vm451, %v723, 0
    %v730 = vsel %vm451, %v725, 0
    %732 = vmatprep.subr.bf16.mxu0 0
    %733 = vmatpush1.bf16.xpose.msra.mxu0 0
    %734 = vmatprep.subr.bf16.mxu0 0
    %735 = vmatpush1.bf16.xpose.msra.mxu0 0
    %736 = vmatprep.subr.bf16.mxu0 0
    %737 = vmatpush1.bf16.xpose.msra.mxu0 0
    %738 = vmatprep.subr.bf16.mxu0 0
    %739 = vmatpush1.bf16.xpose.msra.mxu0 0
    %740 = vmatprep.subr.bf16.mxu0 0
    %741 = vmatpush1.bf16.xpose.msra.mxu0 0
    %742 = vmatprep.subr.bf16.mxu0 0
    %743 = vmatpush1.bf16.xpose.msra.mxu0 0
    %744 = vmatprep.subr.bf16.mxu0 0
    %745 = vmatpush1.bf16.xpose.msra.mxu0 0
    %746 = vmatprep.subr.bf16.mxu0 0
    %747 = vmatpush1.bf16.xpose.msra.mxu0 %v730
    %748 = vmatprep.subr.bf16.mxu0 0
    %749 = vmatpush2.bf16.xpose.msra.mxu0 0
    %750 = vmatprep.subr.bf16.mxu0 0
    %751 = vmatpush2.bf16.xpose.msra.mxu0 0
    %752 = vmatprep.subr.bf16.mxu0 0
    %753 = vmatpush2.bf16.xpose.msra.mxu0 0
    %754 = vmatprep.subr.bf16.mxu0 0
    %755 = vmatpush2.bf16.xpose.msra.mxu0 0
    %756 = vmatprep.subr.bf16.mxu0 0
    %757 = vmatpush2.bf16.xpose.msra.mxu0 0
    %758 = vmatprep.subr.bf16.mxu0 0
    %759 = vmatpush2.bf16.xpose.msra.mxu0 0
    %760 = vmatprep.subr.bf16.mxu0 0
    %761 = vmatpush2.bf16.xpose.msra.mxu0 0
    %762 = vmatprep.subr.bf16.mxu0 0
    %763 = vmatpush2.bf16.xpose.msra.mxu0 0
    %764 = vmatprep.mubr.bf16.mxu0 0
    %765 = vmatmul.mubr.bf16.gmra.mxu0 %v727
    %v766 = vpop.f32.mrf.mxu0
    %v767 = vadd.f32 %v254, %v766
    %v768 = vpop.f32.mrf.mxu0
    %v769 = vpop.f32.mrf.mxu0
    %v770 = vpop.f32.mrf.mxu0
    %771 = vdwg.mxu0
    %v772 = vsel %vm451, %v717, -inf
    %773 = vmax.xlane.f32.xlu0 %v772
    %v774 = vpop.xlane.xlu0 %773
    %v775 = vsel %vm451, %v767, -inf
    %776 = vmax.xlane.f32.xlu0 %v775
    %v777 = vpop.xlane.xlu0 %776
    %v778 = vsub.f32 %v717, %v774
    %v779 = vsub.f32 %v767, %v777
    %v780 = vmul.f32 %v778, 1.442695
    %v781 = vpow.pop %v780
    %v782 = vmul.f32 %v779, 1.442695
    %v783 = vpow.pop %v782
    %v784 = vsel %vm451, %v781, 0.0
    %785 = vadd.xlane.f32.xlu0 %v784
    %v786 = vpop.xlane.xlu0 %785
    %v787 = vsel %vm451, %v783, 0.0
    %788 = vadd.xlane.f32.xlu0 %v787
    %v789 = vpop.xlane.xlu0 %788
    %v790 = vrcp.pop %v786
    %v791 = vrcp.pop %v789
    %v792 = vmul.f32 %v781, %v790
    %v793 = vmul.f32 %v783, %v791
    %v794 = vpack.c.bf16 %v792, %v792
    %v795 = vpack.c.bf16 %v793, %v793
    %796 = vrot.lane.b32.xlu0 %v449, 120
    %v797 = vpop.permute.xlu0 %796
    %v799 = vsel %vm451, %v794, 0
    %v802 = vsel %vm571, %v797, 0
    %804 = vmatprep.subr.bf16.mxu0 0
    %805 = vmatpush1.bf16.msra.mxu0 0
    %806 = vmatprep.subr.bf16.mxu0 0
    %807 = vmatpush1.bf16.msra.mxu0 0
    %808 = vmatprep.subr.bf16.mxu0 0
    %809 = vmatpush1.bf16.msra.mxu0 0
    %810 = vmatprep.subr.bf16.mxu0 0
    %811 = vmatpush1.bf16.msra.mxu0 0
    %812 = vmatprep.subr.bf16.mxu0 0
    %813 = vmatpush1.bf16.msra.mxu0 0
    %814 = vmatprep.subr.bf16.mxu0 0
    %815 = vmatpush1.bf16.msra.mxu0 0
    %816 = vmatprep.subr.bf16.mxu0 0
    %817 = vmatpush1.bf16.msra.mxu0 0
    %818 = vmatprep.subr.bf16.mxu0 0
    %819 = vmatpush1.bf16.msra.mxu0 %v802
    %820 = vmatprep.subr.bf16.mxu0 0
    %821 = vmatpush2.bf16.msra.mxu0 0
    %822 = vmatprep.subr.bf16.mxu0 0
    %823 = vmatpush2.bf16.msra.mxu0 0
    %824 = vmatprep.subr.bf16.mxu0 0
    %825 = vmatpush2.bf16.msra.mxu0 0
    %826 = vmatprep.subr.bf16.mxu0 0
    %827 = vmatpush2.bf16.msra.mxu0 0
    %828 = vmatprep.subr.bf16.mxu0 0
    %829 = vmatpush2.bf16.msra.mxu0 0
    %830 = vmatprep.subr.bf16.mxu0 0
    %831 = vmatpush2.bf16.msra.mxu0 0
    %832 = vmatprep.subr.bf16.mxu0 0
    %833 = vmatpush2.bf16.msra.mxu0 0
    %834 = vmatprep.subr.bf16.mxu0 0
    %835 = vmatpush2.bf16.msra.mxu0 0
    %836 = vmatprep.mubr.bf16.mxu0 0
    %837 = vmatmul.mubr.bf16.gmra.mxu0 %v799
    %v838 = vpop.f32.mrf.mxu0
    %v839 = vadd.f32 0.0, %v838
    %v840 = vpop.f32.mrf.mxu0
    %v841 = vpop.f32.mrf.mxu0
    %v842 = vpop.f32.mrf.mxu0
    %843 = vdwg.mxu0
    %844 = vrot.lane.b32.xlu0 %v450, 120
    %v845 = vpop.permute.xlu0 %844
    %v847 = vsel %vm451, %v795, 0
    %v850 = vsel %vm571, %v845, 0
    %852 = vmatprep.subr.bf16.mxu0 0
    %853 = vmatpush1.bf16.msra.mxu0 0
    %854 = vmatprep.subr.bf16.mxu0 0
    %855 = vmatpush1.bf16.msra.mxu0 0
    %856 = vmatprep.subr.bf16.mxu0 0
    %857 = vmatpush1.bf16.msra.mxu0 0
    %858 = vmatprep.subr.bf16.mxu0 0
    %859 = vmatpush1.bf16.msra.mxu0 0
    %860 = vmatprep.subr.bf16.mxu0 0
    %861 = vmatpush1.bf16.msra.mxu0 0
    %862 = vmatprep.subr.bf16.mxu0 0
    %863 = vmatpush1.bf16.msra.mxu0 0
    %864 = vmatprep.subr.bf16.mxu0 0
    %865 = vmatpush1.bf16.msra.mxu0 0
    %866 = vmatprep.subr.bf16.mxu0 0
    %867 = vmatpush1.bf16.msra.mxu0 %v850
    %868 = vmatprep.subr.bf16.mxu0 0
    %869 = vmatpush2.bf16.msra.mxu0 0
    %870 = vmatprep.subr.bf16.mxu0 0
    %871 = vmatpush2.bf16.msra.mxu0 0
    %872 = vmatprep.subr.bf16.mxu0 0
    %873 = vmatpush2.bf16.msra.mxu0 0
    %874 = vmatprep.subr.bf16.mxu0 0
    %875 = vmatpush2.bf16.msra.mxu0 0
    %876 = vmatprep.subr.bf16.mxu0 0
    %877 = vmatpush2.bf16.msra.mxu0 0
    %878 = vmatprep.subr.bf16.mxu0 0
    %879 = vmatpush2.bf16.msra.mxu0 0
    %880 = vmatprep.subr.bf16.mxu0 0
    %881 = vmatpush2.bf16.msra.mxu0 0
    %882 = vmatprep.subr.bf16.mxu0 0
    %883 = vmatpush2.bf16.msra.mxu0 0
    %884 = vmatprep.mubr.bf16.mxu0 0
    %885 = vmatmul.mubr.bf16.gmra.mxu0 %v847
    %v886 = vpop.f32.mrf.mxu0
    %v887 = vadd.f32 0.0, %v886
    %v888 = vpop.f32.mrf.mxu0
    %v889 = vpop.f32.mrf.mxu0
    %v890 = vpop.f32.mrf.mxu0
    %891 = vdwg.mxu0
    %v892 = vpack.c.bf16 %v887, %v839
    %v894 = vunpack.c.l.b16 %v892
    %v895 = vunpack.c.h.b16 %v892
    %v896 = vpack.c.b16 %v894, %v894
    %v897 = vpack.c.b16 %v895, %v895
    %898 = vrot.lane.b32.xlu0 %v896, 8
    %v899 = vpop.permute.xlu0 %898
    %900 = vrot.lane.b32.xlu0 %v897, 8
    %v901 = vpop.permute.xlu0 %900
    %vm904 = vcmask 126016
    %905 = vst.msk [vmem:[#allocation2] sm:$0xf] %vm904, %v899
    %906 = vst.msk [vmem:[#allocation2 + $0x4] sm:$0xf] %vm904, %v901
    %907 = vrot.lane.b32.xlu0 %v439, 112
    %v908 = vpop.permute.xlu0 %907
    %909 = vrot.lane.b32.xlu0 %v444, 112
    %v910 = vpop.permute.xlu0 %909
    %v912 = vsel %vm451, %v908, 0
    %v915 = vsel %vm451, %v910, 0
    %917 = vmatprep.subr.bf16.mxu0 0
    %918 = vmatpush1.bf16.xpose.msra.mxu0 0
    %919 = vmatprep.subr.bf16.mxu0 0
    %920 = vmatpush1.bf16.xpose.msra.mxu0 0
    %921 = vmatprep.subr.bf16.mxu0 0
    %922 = vmatpush1.bf16.xpose.msra.mxu0 0
    %923 = vmatprep.subr.bf16.mxu0 0
    %924 = vmatpush1.bf16.xpose.msra.mxu0 0
    %925 = vmatprep.subr.bf16.mxu0 0
    %926 = vmatpush1.bf16.xpose.msra.mxu0 0
    %927 = vmatprep.subr.bf16.mxu0 0
    %928 = vmatpush1.bf16.xpose.msra.mxu0 0
    %929 = vmatprep.subr.bf16.mxu0 0
    %930 = vmatpush1.bf16.xpose.msra.mxu0 0
    %931 = vmatprep.subr.bf16.mxu0 0
    %932 = vmatpush1.bf16.xpose.msra.mxu0 %v915
    %933 = vmatprep.subr.bf16.mxu0 0
    %934 = vmatpush2.bf16.xpose.msra.mxu0 0
    %935 = vmatprep.subr.bf16.mxu0 0
    %936 = vmatpush2.bf16.xpose.msra.mxu0 0
    %937 = vmatprep.subr.bf16.mxu0 0
    %938 = vmatpush2.bf16.xpose.msra.mxu0 0
    %939 = vmatprep.subr.bf16.mxu0 0
    %940 = vmatpush2.bf16.xpose.msra.mxu0 0
    %941 = vmatprep.subr.bf16.mxu0 0
    %942 = vmatpush2.bf16.xpose.msra.mxu0 0
    %943 = vmatprep.subr.bf16.mxu0 0
    %944 = vmatpush2.bf16.xpose.msra.mxu0 0
    %945 = vmatprep.subr.bf16.mxu0 0
    %946 = vmatpush2.bf16.xpose.msra.mxu0 0
    %947 = vmatprep.subr.bf16.mxu0 0
    %948 = vmatpush2.bf16.xpose.msra.mxu0 0
    %949 = vmatprep.mubr.bf16.mxu0 0
    %950 = vmatmul.mubr.bf16.gmra.mxu0 %v912
    %v951 = vpop.f32.mrf.mxu0
    %v952 = vadd.f32 %v254, %v951
    %v953 = vpop.f32.mrf.mxu0
    %v954 = vpop.f32.mrf.mxu0
    %v955 = vpop.f32.mrf.mxu0
    %956 = vdwg.mxu0
    %957 = vrot.lane.b32.xlu0 %v440, 112
    %v958 = vpop.permute.xlu0 %957
    %959 = vrot.lane.b32.xlu0 %v445, 112
    %v960 = vpop.permute.xlu0 %959
    %v962 = vsel %vm451, %v958, 0
    %v965 = vsel %vm451, %v960, 0
    %967 = vmatprep.subr.bf16.mxu0 0
    %968 = vmatpush1.bf16.xpose.msra.mxu0 0
    %969 = vmatprep.subr.bf16.mxu0 0
    %970 = vmatpush1.bf16.xpose.msra.mxu0 0
    %971 = vmatprep.subr.bf16.mxu0 0
    %972 = vmatpush1.bf16.xpose.msra.mxu0 0
    %973 = vmatprep.subr.bf16.mxu0 0
    %974 = vmatpush1.bf16.xpose.msra.mxu0 0
    %975 = vmatprep.subr.bf16.mxu0 0
    %976 = vmatpush1.bf16.xpose.msra.mxu0 0
    %977 = vmatprep.subr.bf16.mxu0 0
    %978 = vmatpush1.bf16.xpose.msra.mxu0 0
    %979 = vmatprep.subr.bf16.mxu0 0
    %980 = vmatpush1.bf16.xpose.msra.mxu0 0
    %981 = vmatprep.subr.bf16.mxu0 0
    %982 = vmatpush1.bf16.xpose.msra.mxu0 %v965
    %983 = vmatprep.subr.bf16.mxu0 0
    %984 = vmatpush2.bf16.xpose.msra.mxu0 0
    %985 = vmatprep.subr.bf16.mxu0 0
    %986 = vmatpush2.bf16.xpose.msra.mxu0 0
    %987 = vmatprep.subr.bf16.mxu0 0
    %988 = vmatpush2.bf16.xpose.msra.mxu0 0
    %989 = vmatprep.subr.bf16.mxu0 0
    %990 = vmatpush2.bf16.xpose.msra.mxu0 0
    %991 = vmatprep.subr.bf16.mxu0 0
    %992 = vmatpush2.bf16.xpose.msra.mxu0 0
    %993 = vmatprep.subr.bf16.mxu0 0
    %994 = vmatpush2.bf16.xpose.msra.mxu0 0
    %995 = vmatprep.subr.bf16.mxu0 0
    %996 = vmatpush2.bf16.xpose.msra.mxu0 0
    %997 = vmatprep.subr.bf16.mxu0 0
    %998 = vmatpush2.bf16.xpose.msra.mxu0 0
    %999 = vmatprep.mubr.bf16.mxu0 0
    %1000 = vmatmul.mubr.bf16.gmra.mxu0 %v962
    %v1001 = vpop.f32.mrf.mxu0
    %v1002 = vadd.f32 %v254, %v1001
    %v1003 = vpop.f32.mrf.mxu0
    %v1004 = vpop.f32.mrf.mxu0
    %v1005 = vpop.f32.mrf.mxu0
    %1006 = vdwg.mxu0
    %v1007 = vsel %vm451, %v952, -inf
    %1008 = vmax.xlane.f32.xlu0 %v1007
    %v1009 = vpop.xlane.xlu0 %1008
    %v1010 = vsel %vm451, %v1002, -inf
    %1011 = vmax.xlane.f32.xlu0 %v1010
    %v1012 = vpop.xlane.xlu0 %1011
    %v1013 = vsub.f32 %v952, %v1009
    %v1014 = vsub.f32 %v1002, %v1012
    %v1015 = vmul.f32 %v1013, 1.442695
    %v1016 = vpow.pop %v1015
    %v1017 = vmul.f32 %v1014, 1.442695
    %v1018 = vpow.pop %v1017
    %v1019 = vsel %vm451, %v1016, 0.0
    %1020 = vadd.xlane.f32.xlu0 %v1019
    %v1021 = vpop.xlane.xlu0 %1020
    %v1022 = vsel %vm451, %v1018, 0.0
    %1023 = vadd.xlane.f32.xlu0 %v1022
    %v1024 = vpop.xlane.xlu0 %1023
    %v1025 = vrcp.pop %v1021
    %v1026 = vrcp.pop %v1024
    %v1027 = vmul.f32 %v1016, %v1025
    %v1028 = vmul.f32 %v1018, %v1026
    %v1029 = vpack.c.bf16 %v1027, %v1027
    %v1030 = vpack.c.bf16 %v1028, %v1028
    %1031 = vrot.lane.b32.xlu0 %v449, 112
    %v1032 = vpop.permute.xlu0 %1031
    %v1034 = vsel %vm451, %v1029, 0
    %v1037 = vsel %vm571, %v1032, 0
    %1039 = vmatprep.subr.bf16.mxu0 0
    %1040 = vmatpush1.bf16.msra.mxu0 0
    %1041 = vmatprep.subr.bf16.mxu0 0
    %1042 = vmatpush1.bf16.msra.mxu0 0
    %1043 = vmatprep.subr.bf16.mxu0 0
    %1044 = vmatpush1.bf16.msra.mxu0 0
    %1045 = vmatprep.subr.bf16.mxu0 0
    %1046 = vmatpush1.bf16.msra.mxu0 0
    %1047 = vmatprep.subr.bf16.mxu0 0
    %1048 = vmatpush1.bf16.msra.mxu0 0
    %1049 = vmatprep.subr.bf16.mxu0 0
    %1050 = vmatpush1.bf16.msra.mxu0 0
    %1051 = vmatprep.subr.bf16.mxu0 0
    %1052 = vmatpush1.bf16.msra.mxu0 0
    %1053 = vmatprep.subr.bf16.mxu0 0
    %1054 = vmatpush1.bf16.msra.mxu0 %v1037
    %1055 = vmatprep.subr.bf16.mxu0 0
    %1056 = vmatpush2.bf16.msra.mxu0 0
    %1057 = vmatprep.subr.bf16.mxu0 0
    %1058 = vmatpush2.bf16.msra.mxu0 0
    %1059 = vmatprep.subr.bf16.mxu0 0
    %1060 = vmatpush2.bf16.msra.mxu0 0
    %1061 = vmatprep.subr.bf16.mxu0 0
    %1062 = vmatpush2.bf16.msra.mxu0 0
    %1063 = vmatprep.subr.bf16.mxu0 0
    %1064 = vmatpush2.bf16.msra.mxu0 0
    %1065 = vmatprep.subr.bf16.mxu0 0
    %1066 = vmatpush2.bf16.msra.mxu0 0
    %1067 = vmatprep.subr.bf16.mxu0 0
    %1068 = vmatpush2.bf16.msra.mxu0 0
    %1069 = vmatprep.subr.bf16.mxu0 0
    %1070 = vmatpush2.bf16.msra.mxu0 0
    %1071 = vmatprep.mubr.bf16.mxu0 0
    %1072 = vmatmul.mubr.bf16.gmra.mxu0 %v1034
    %v1073 = vpop.f32.mrf.mxu0
    %v1074 = vadd.f32 0.0, %v1073
    %v1075 = vpop.f32.mrf.mxu0
    %v1076 = vpop.f32.mrf.mxu0
    %v1077 = vpop.f32.mrf.mxu0
    %1078 = vdwg.mxu0
    %1079 = vrot.lane.b32.xlu0 %v450, 112
    %v1080 = vpop.permute.xlu0 %1079
    %v1082 = vsel %vm451, %v1030, 0
    %v1085 = vsel %vm571, %v1080, 0
    %1087 = vmatprep.subr.bf16.mxu0 0
    %1088 = vmatpush1.bf16.msra.mxu0 0
    %1089 = vmatprep.subr.bf16.mxu0 0
    %1090 = vmatpush1.bf16.msra.mxu0 0
    %1091 = vmatprep.subr.bf16.mxu0 0
    %1092 = vmatpush1.bf16.msra.mxu0 0
    %1093 = vmatprep.subr.bf16.mxu0 0
    %1094 = vmatpush1.bf16.msra.mxu0 0
    %1095 = vmatprep.subr.bf16.mxu0 0
    %1096 = vmatpush1.bf16.msra.mxu0 0
    %1097 = vmatprep.subr.bf16.mxu0 0
    %1098 = vmatpush1.bf16.msra.mxu0 0
    %1099 = vmatprep.subr.bf16.mxu0 0
    %1100 = vmatpush1.bf16.msra.mxu0 0
    %1101 = vmatprep.subr.bf16.mxu0 0
    %1102 = vmatpush1.bf16.msra.mxu0 %v1085
    %1103 = vmatprep.subr.bf16.mxu0 0
    %1104 = vmatpush2.bf16.msra.mxu0 0
    %1105 = vmatprep.subr.bf16.mxu0 0
    %1106 = vmatpush2.bf16.msra.mxu0 0
    %1107 = vmatprep.subr.bf16.mxu0 0
    %1108 = vmatpush2.bf16.msra.mxu0 0
    %1109 = vmatprep.subr.bf16.mxu0 0
    %1110 = vmatpush2.bf16.msra.mxu0 0
    %1111 = vmatprep.subr.bf16.mxu0 0
    %1112 = vmatpush2.bf16.msra.mxu0 0
    %1113 = vmatprep.subr.bf16.mxu0 0
    %1114 = vmatpush2.bf16.msra.mxu0 0
    %1115 = vmatprep.subr.bf16.mxu0 0
    %1116 = vmatpush2.bf16.msra.mxu0 0
    %1117 = vmatprep.subr.bf16.mxu0 0
    %1118 = vmatpush2.bf16.msra.mxu0 0
    %1119 = vmatprep.mubr.bf16.mxu0 0
    %1120 = vmatmul.mubr.bf16.gmra.mxu0 %v1082
    %v1121 = vpop.f32.mrf.mxu0
    %v1122 = vadd.f32 0.0, %v1121
    %v1123 = vpop.f32.mrf.mxu0
    %v1124 = vpop.f32.mrf.mxu0
    %v1125 = vpop.f32.mrf.mxu0
    %1126 = vdwg.mxu0
    %v1127 = vpack.c.bf16 %v1122, %v1074
    %v1129 = vunpack.c.l.b16 %v1127
    %v1130 = vunpack.c.h.b16 %v1127
    %v1131 = vpack.c.b16 %v1129, %v1129
    %v1132 = vpack.c.b16 %v1130, %v1130
    %1133 = vrot.lane.b32.xlu0 %v1131, 16
    %v1134 = vpop.permute.xlu0 %1133
    %1135 = vrot.lane.b32.xlu0 %v1132, 16
    %v1136 = vpop.permute.xlu0 %1135
    %vm1139 = vcmask 191616
    %1140 = vst.msk [vmem:[#allocation2] sm:$0xf] %vm1139, %v1134
    %1141 = vst.msk [vmem:[#allocation2 + $0x4] sm:$0xf] %vm1139, %v1136
    %1142 = vrot.lane.b32.xlu0 %v439, 104
    %v1143 = vpop.permute.xlu0 %1142
    %1144 = vrot.lane.b32.xlu0 %v444, 104
    %v1145 = vpop.permute.xlu0 %1144
    %v1147 = vsel %vm451, %v1143, 0
    %v1150 = vsel %vm451, %v1145, 0
    %1152 = vmatprep.subr.bf16.mxu0 0
    %1153 = vmatpush1.bf16.xpose.msra.mxu0 0
    %1154 = vmatprep.subr.bf16.mxu0 0
    %1155 = vmatpush1.bf16.xpose.msra.mxu0 0
    %1156 = vmatprep.subr.bf16.mxu0 0
    %1157 = vmatpush1.bf16.xpose.msra.mxu0 0
    %1158 = vmatprep.subr.bf16.mxu0 0
    %1159 = vmatpush1.bf16.xpose.msra.mxu0 0
    %1160 = vmatprep.subr.bf16.mxu0 0
    %1161 = vmatpush1.bf16.xpose.msra.mxu0 0
    %1162 = vmatprep.subr.bf16.mxu0 0
    %1163 = vmatpush1.bf16.xpose.msra.mxu0 0
    %1164 = vmatprep.subr.bf16.mxu0 0
    %1165 = vmatpush1.bf16.xpose.msra.mxu0 0
    %1166 = vmatprep.subr.bf16.mxu0 0
    %1167 = vmatpush1.bf16.xpose.msra.mxu0 %v1150
    %1168 = vmatprep.subr.bf16.mxu0 0
    %1169 = vmatpush2.bf16.xpose.msra.mxu0 0
    %1170 = vmatprep.subr.bf16.mxu0 0
    %1171 = vmatpush2.bf16.xpose.msra.mxu0 0
    %1172 = vmatprep.subr.bf16.mxu0 0
    %1173 = vmatpush2.bf16.xpose.msra.mxu0 0
    %1174 = vmatprep.subr.bf16.mxu0 0
    %1175 = vmatpush2.bf16.xpose.msra.mxu0 0
    %1176 = vmatprep.subr.bf16.mxu0 0
    %1177 = vmatpush2.bf16.xpose.msra.mxu0 0
    %1178 = vmatprep.subr.bf16.mxu0 0
    %1179 = vmatpush2.bf16.xpose.msra.mxu0 0
    %1180 = vmatprep.subr.bf16.mxu0 0
    %1181 = vmatpush2.bf16.xpose.msra.mxu0 0
    %1182 = vmatprep.subr.bf16.mxu0 0
    %1183 = vmatpush2.bf16.xpose.msra.mxu0 0
    %1184 = vmatprep.mubr.bf16.mxu0 0
    %1185 = vmatmul.mubr.bf16.gmra.mxu0 %v1147
    %v1186 = vpop.f32.mrf.mxu0
    %v1187 = vadd.f32 %v254, %v1186
    %v1188 = vpop.f32.mrf.mxu0
    %v1189 = vpop.f32.mrf.mxu0
    %v1190 = vpop.f32.mrf.mxu0
    %1191 = vdwg.mxu0
    %1192 = vrot.lane.b32.xlu0 %v440, 104
    %v1193 = vpop.permute.xlu0 %1192
    %1194 = vrot.lane.b32.xlu0 %v445, 104
    %v1195 = vpop.permute.xlu0 %1194
    %v1197 = vsel %vm451, %v1193, 0
    %v1200 = vsel %vm451, %v1195, 0
    %1202 = vmatprep.subr.bf16.mxu0 0
    %1203 = vmatpush1.bf16.xpose.msra.mxu0 0
    %1204 = vmatprep.subr.bf16.mxu0 0
    %1205 = vmatpush1.bf16.xpose.msra.mxu0 0
    %1206 = vmatprep.subr.bf16.mxu0 0
    %1207 = vmatpush1.bf16.xpose.msra.mxu0 0
    %1208 = vmatprep.subr.bf16.mxu0 0
    %1209 = vmatpush1.bf16.xpose.msra.mxu0 0
    %1210 = vmatprep.subr.bf16.mxu0 0
    %1211 = vmatpush1.bf16.xpose.msra.mxu0 0
    %1212 = vmatprep.subr.bf16.mxu0 0
    %1213 = vmatpush1.bf16.xpose.msra.mxu0 0
    %1214 = vmatprep.subr.bf16.mxu0 0
    %1215 = vmatpush1.bf16.xpose.msra.mxu0 0
    %1216 = vmatprep.subr.bf16.mxu0 0
    %1217 = vmatpush1.bf16.xpose.msra.mxu0 %v1200
    %1218 = vmatprep.subr.bf16.mxu0 0
    %1219 = vmatpush2.bf16.xpose.msra.mxu0 0
    %1220 = vmatprep.subr.bf16.mxu0 0
    %1221 = vmatpush2.bf16.xpose.msra.mxu0 0
    %1222 = vmatprep.subr.bf16.mxu0 0
    %1223 = vmatpush2.bf16.xpose.msra.mxu0 0
    %1224 = vmatprep.subr.bf16.mxu0 0
    %1225 = vmatpush2.bf16.xpose.msra.mxu0 0
    %1226 = vmatprep.subr.bf16.mxu0 0
    %1227 = vmatpush2.bf16.xpose.msra.mxu0 0
    %1228 = vmatprep.subr.bf16.mxu0 0
    %1229 = vmatpush2.bf16.xpose.msra.mxu0 0
    %1230 = vmatprep.subr.bf16.mxu0 0
    %1231 = vmatpush2.bf16.xpose.msra.mxu0 0
    %1232 = vmatprep.subr.bf16.mxu0 0
    %1233 = vmatpush2.bf16.xpose.msra.mxu0 0
    %1234 = vmatprep.mubr.bf16.mxu0 0
    %1235 = vmatmul.mubr.bf16.gmra.mxu0 %v1197
    %v1236 = vpop.f32.mrf.mxu0
    %v1237 = vadd.f32 %v254, %v1236
    %v1238 = vpop.f32.mrf.mxu0
    %v1239 = vpop.f32.mrf.mxu0
    %v1240 = vpop.f32.mrf.mxu0
    %1241 = vdwg.mxu0
    %v1242 = vsel %vm451, %v1187, -inf
    %1243 = vmax.xlane.f32.xlu0 %v1242
    %v1244 = vpop.xlane.xlu0 %1243
    %v1245 = vsel %vm451, %v1237, -inf
    %1246 = vmax.xlane.f32.xlu0 %v1245
    %v1247 = vpop.xlane.xlu0 %1246
    %v1248 = vsub.f32 %v1187, %v1244
    %v1249 = vsub.f32 %v1237, %v1247
    %v1250 = vmul.f32 %v1248, 1.442695
    %v1251 = vpow.pop %v1250
    %v1252 = vmul.f32 %v1249, 1.442695
    %v1253 = vpow.pop %v1252
    %v1254 = vsel %vm451, %v1251, 0.0
    %1255 = vadd.xlane.f32.xlu0 %v1254
    %v1256 = vpop.xlane.xlu0 %1255
    %v1257 = vsel %vm451, %v1253, 0.0
    %1258 = vadd.xlane.f32.xlu0 %v1257
    %v1259 = vpop.xlane.xlu0 %1258
    %v1260 = vrcp.pop %v1256
    %v1261 = vrcp.pop %v1259
    %v1262 = vmul.f32 %v1251, %v1260
    %v1263 = vmul.f32 %v1253, %v1261
    %v1264 = vpack.c.bf16 %v1262, %v1262
    %v1265 = vpack.c.bf16 %v1263, %v1263
    %1266 = vrot.lane.b32.xlu0 %v449, 104
    %v1267 = vpop.permute.xlu0 %1266
    %v1269 = vsel %vm451, %v1264, 0
    %v1272 = vsel %vm571, %v1267, 0
    %1274 = vmatprep.subr.bf16.mxu0 0
    %1275 = vmatpush1.bf16.msra.mxu0 0
    %1276 = vmatprep.subr.bf16.mxu0 0
    %1277 = vmatpush1.bf16.msra.mxu0 0
    %1278 = vmatprep.subr.bf16.mxu0 0
    %1279 = vmatpush1.bf16.msra.mxu0 0
    %1280 = vmatprep.subr.bf16.mxu0 0
    %1281 = vmatpush1.bf16.msra.mxu0 0
    %1282 = vmatprep.subr.bf16.mxu0 0
    %1283 = vmatpush1.bf16.msra.mxu0 0
    %1284 = vmatprep.subr.bf16.mxu0 0
    %1285 = vmatpush1.bf16.msra.mxu0 0
    %1286 = vmatprep.subr.bf16.mxu0 0
    %1287 = vmatpush1.bf16.msra.mxu0 0
    %1288 = vmatprep.subr.bf16.mxu0 0
    %1289 = vmatpush1.bf16.msra.mxu0 %v1272
    %1290 = vmatprep.subr.bf16.mxu0 0
    %1291 = vmatpush2.bf16.msra.mxu0 0
    %1292 = vmatprep.subr.bf16.mxu0 0
    %1293 = vmatpush2.bf16.msra.mxu0 0
    %1294 = vmatprep.subr.bf16.mxu0 0
    %1295 = vmatpush2.bf16.msra.mxu0 0
    %1296 = vmatprep.subr.bf16.mxu0 0
    %1297 = vmatpush2.bf16.msra.mxu0 0
    %1298 = vmatprep.subr.bf16.mxu0 0
    %1299 = vmatpush2.bf16.msra.mxu0 0
    %1300 = vmatprep.subr.bf16.mxu0 0
    %1301 = vmatpush2.bf16.msra.mxu0 0
    %1302 = vmatprep.subr.bf16.mxu0 0
    %1303 = vmatpush2.bf16.msra.mxu0 0
    %1304 = vmatprep.subr.bf16.mxu0 0
    %1305 = vmatpush2.bf16.msra.mxu0 0
    %1306 = vmatprep.mubr.bf16.mxu0 0
    %1307 = vmatmul.mubr.bf16.gmra.mxu0 %v1269
    %v1308 = vpop.f32.mrf.mxu0
    %v1309 = vadd.f32 0.0, %v1308
    %v1310 = vpop.f32.mrf.mxu0
    %v1311 = vpop.f32.mrf.mxu0
    %v1312 = vpop.f32.mrf.mxu0
    %1313 = vdwg.mxu0
    %1314 = vrot.lane.b32.xlu0 %v450, 104
    %v1315 = vpop.permute.xlu0 %1314
    %v1317 = vsel %vm451, %v1265, 0
    %v1320 = vsel %vm571, %v1315, 0
    %1322 = vmatprep.subr.bf16.mxu0 0
    %1323 = vmatpush1.bf16.msra.mxu0 0
    %1324 = vmatprep.subr.bf16.mxu0 0
    %1325 = vmatpush1.bf16.msra.mxu0 0
    %1326 = vmatprep.subr.bf16.mxu0 0
    %1327 = vmatpush1.bf16.msra.mxu0 0
    %1328 = vmatprep.subr.bf16.mxu0 0
    %1329 = vmatpush1.bf16.msra.mxu0 0
    %1330 = vmatprep.subr.bf16.mxu0 0
    %1331 = vmatpush1.bf16.msra.mxu0 0
    %1332 = vmatprep.subr.bf16.mxu0 0
    %1333 = vmatpush1.bf16.msra.mxu0 0
    %1334 = vmatprep.subr.bf16.mxu0 0
    %1335 = vmatpush1.bf16.msra.mxu0 0
    %1336 = vmatprep.subr.bf16.mxu0 0
    %1337 = vmatpush1.bf16.msra.mxu0 %v1320
    %1338 = vmatprep.subr.bf16.mxu0 0
    %1339 = vmatpush2.bf16.msra.mxu0 0
    %1340 = vmatprep.subr.bf16.mxu0 0
    %1341 = vmatpush2.bf16.msra.mxu0 0
    %1342 = vmatprep.subr.bf16.mxu0 0
    %1343 = vmatpush2.bf16.msra.mxu0 0
    %1344 = vmatprep.subr.bf16.mxu0 0
    %1345 = vmatpush2.bf16.msra.mxu0 0
    %1346 = vmatprep.subr.bf16.mxu0 0
    %1347 = vmatpush2.bf16.msra.mxu0 0
    %1348 = vmatprep.subr.bf16.mxu0 0
    %1349 = vmatpush2.bf16.msra.mxu0 0
    %1350 = vmatprep.subr.bf16.mxu0 0
    %1351 = vmatpush2.bf16.msra.mxu0 0
    %1352 = vmatprep.subr.bf16.mxu0 0
    %1353 = vmatpush2.bf16.msra.mxu0 0
    %1354 = vmatprep.mubr.bf16.mxu0 0
    %1355 = vmatmul.mubr.bf16.gmra.mxu0 %v1317
    %v1356 = vpop.f32.mrf.mxu0
    %v1357 = vadd.f32 0.0, %v1356
    %v1358 = vpop.f32.mrf.mxu0
    %v1359 = vpop.f32.mrf.mxu0
    %v1360 = vpop.f32.mrf.mxu0
    %1361 = vdwg.mxu0
    %v1362 = vpack.c.bf16 %v1357, %v1309
    %v1364 = vunpack.c.l.b16 %v1362
    %v1365 = vunpack.c.h.b16 %v1362
    %v1366 = vpack.c.b16 %v1364, %v1364
    %v1367 = vpack.c.b16 %v1365, %v1365
    %1368 = vrot.lane.b32.xlu0 %v1366, 24
    %v1369 = vpop.permute.xlu0 %1368
    %1370 = vrot.lane.b32.xlu0 %v1367, 24
    %v1371 = vpop.permute.xlu0 %1370
    %vm1374 = vcmask 257216
    %1375 = vst.msk [vmem:[#allocation2] sm:$0xf] %vm1374, %v1369
    %1376 = vst.msk [vmem:[#allocation2 + $0x4] sm:$0xf] %vm1374, %v1371
    %v1377 = vld [vmem:[#allocation2] sm:$0xf]
    %v1378 = vld [vmem:[#allocation2 + $0x4] sm:$0xf]
    %v1379 = vld [vmem:[#allocation8] sm:$0xf]
    %v1380 = vld [vmem:[#allocation8 + $0x4] sm:$0xf]
    %v1381 = vld [vmem:[#allocation8 + $0x8] sm:$0xf]
    %v1382 = vld [vmem:[#allocation8 + $0xc] sm:$0xf]
    %v1383 = vld [vmem:[#allocation9] sm:$0x1]
    %v1385 = vlaneseq
    %v1386 = vshrl.u32 %v1385, 7
    %v1387 = vsub.s32 0, %v1386
    %v1388 = vrot.slane %v1383, %v1387
    %v1392 = vunpack.c.l.b16 %v1377
    %v1393 = vunpack.c.l.b16 %v1378
    %v1394 = vpack.c.b16 %v1393, %v1392
    %v1399 = vunpack.c.l.b16 %v1379
    %v1400 = vunpack.c.l.b16 %v1380
    %v1401 = vunpack.c.l.b16 %v1381
    %v1402 = vunpack.c.l.b16 %v1382
    %v1403 = vpack.c.b16 %v1400, %v1399
    %v1404 = vpack.c.b16 %v1402, %v1401
    %v1408 = vsel %vm274, %v1394, 0
    %1410 = vmatprep.subr.bf16.mxu0 0
    %1411 = vmatpush1.bf16.msra.mxu0 0
    %1412 = vmatprep.subr.bf16.mxu0 0
    %1413 = vmatpush1.bf16.msra.mxu0 0
    %1414 = vmatprep.subr.bf16.mxu0 0
    %1415 = vmatpush1.bf16.msra.mxu0 0
    %1416 = vmatprep.subr.bf16.mxu0 0
    %1417 = vmatpush1.bf16.msra.mxu0 0
    %1418 = vmatprep.subr.bf16.mxu0 0
    %1419 = vmatpush1.bf16.msra.mxu0 0
    %1420 = vmatprep.subr.bf16.mxu0 0
    %1421 = vmatpush1.bf16.msra.mxu0 0
    %1422 = vmatprep.subr.bf16.mxu0 0
    %1423 = vmatpush1.bf16.msra.mxu0 %v1404
    %1424 = vmatprep.subr.bf16.mxu0 0
    %1425 = vmatpush1.bf16.msra.mxu0 %v1403
    %1426 = vmatprep.subr.bf16.mxu0 0
    %1427 = vmatpush2.bf16.msra.mxu0 0
    %1428 = vmatprep.subr.bf16.mxu0 0
    %1429 = vmatpush2.bf16.msra.mxu0 0
    %1430 = vmatprep.subr.bf16.mxu0 0
    %1431 = vmatpush2.bf16.msra.mxu0 0
    %1432 = vmatprep.subr.bf16.mxu0 0
    %1433 = vmatpush2.bf16.msra.mxu0 0
    %1434 = vmatprep.subr.bf16.mxu0 0
    %1435 = vmatpush2.bf16.msra.mxu0 0
    %1436 = vmatprep.subr.bf16.mxu0 0
    %1437 = vmatpush2.bf16.msra.mxu0 0
    %1438 = vmatprep.subr.bf16.mxu0 0
    %1439 = vmatpush2.bf16.msra.mxu0 0
    %1440 = vmatprep.subr.bf16.mxu0 0
    %1441 = vmatpush2.bf16.msra.mxu0 0
    %1442 = vmatprep.mubr.bf16.mxu0 0
    %1443 = vmatmul.mubr.bf16.gmra.mxu0 %v1408
    %v1444 = vpop.f32.mrf.mxu0
    %v1445 = vadd.f32 %v1388, %v1444
    %v1446 = vpop.f32.mrf.mxu0
    %v1447 = vpop.f32.mrf.mxu0
    %v1448 = vadd.f32 %v1388, %v1447
    %v1449 = vpop.f32.mrf.mxu0
    %1450 = vdwg.mxu0
    %v1451 = vadd.f32 %v1445, %v243
    %v1452 = vadd.f32 %v1448, %v244
    %v1453 = vld [vmem:[#allocation11] sm:$0x1]
    %v1454 = vld [vmem:[#allocation12] sm:$0x1]
    %v1455 = vsel %vm274, %v1451, 0.0
    %1456 = vadd.xlane.f32.xlu0 %v1455
    %v1457 = vpop.xlane.xlu0 %1456
    %v1458 = vsel %vm274, %v1452, 0.0
    %1459 = vadd.xlane.f32.xlu0 %v1458
    %v1460 = vpop.xlane.xlu0 %1459
    %v1461 = vrcp.pop 32.0
    %v1462 = vmul.f32 %v1457, %v1461
    %v1463 = vmul.f32 %v1460, %v1461
    %v1464 = vsub.f32 %v1451, %v1462
    %v1465 = vsub.f32 %v1452, %v1463
    %v1466 = vmul.f32 %v1464, %v1464
    %v1467 = vmul.f32 %v1465, %v1465
    %v1468 = vsel %vm274, %v1466, 0.0
    %1469 = vadd.xlane.f32.xlu0 %v1468
    %v1470 = vpop.xlane.xlu0 %1469
    %v1471 = vsel %vm274, %v1467, 0.0
    %1472 = vadd.xlane.f32.xlu0 %v1471
    %v1473 = vpop.xlane.xlu0 %1472
    %v1474 = vmul.f32 %v1470, %v1461
    %v1475 = vmul.f32 %v1473, %v1461
    %v1476 = vadd.f32 %v1474, 1e-05
    %v1477 = vadd.f32 %v1475, 1e-05
    %v1478 = vrsqrt.pop %v1476
    %v1479 = vrsqrt.pop %v1477
    %v1480 = vmul.f32 %v1464, %v1478
    %v1481 = vmul.f32 %v1465, %v1479
    %v1483 = vlaneseq
    %v1484 = vshrl.u32 %v1483, 7
    %v1485 = vsub.s32 0, %v1484
    %v1486 = vrot.slane %v1453, %v1485
    %v1488 = vmul.f32 %v1480, %v1486
    %v1489 = vmul.f32 %v1481, %v1486
    %v1491 = vlaneseq
    %v1492 = vshrl.u32 %v1491, 7
    %v1493 = vsub.s32 0, %v1492
    %v1494 = vrot.slane %v1454, %v1493
    %v1496 = vadd.f32 %v1488, %v1494
    %v1497 = vadd.f32 %v1489, %v1494
    %v1498 = vpack.c.bf16 %v1497, %v1496
    %v1499 = vld [vmem:[%s11] sm:$0xf]
    %v1500 = vld [vmem:[%s11 + $0x4] sm:$0xf]
    %v1501 = vld [vmem:[%s11 + $0x8] sm:$0xf]
    %v1502 = vld [vmem:[%s11 + $0xc] sm:$0xf]
    %v1507 = vunpack.c.l.b16 %v1499
    %v1508 = vunpack.c.l.b16 %v1500
    %v1509 = vunpack.c.l.b16 %v1501
    %v1510 = vunpack.c.l.b16 %v1502
    %v1511 = vpack.c.b16 %v1508, %v1507
    %v1512 = vpack.c.b16 %v1510, %v1509
    %v1516 = vsel %vm274, %v1498, 0
    %1518 = vmatprep.subr.bf16.mxu0 0
    %1519 = vmatpush1.bf16.msra.mxu0 0
    %1520 = vmatprep.subr.bf16.mxu0 0
    %1521 = vmatpush1.bf16.msra.mxu0 0
    %1522 = vmatprep.subr.bf16.mxu0 0
    %1523 = vmatpush1.bf16.msra.mxu0 0
    %1524 = vmatprep.subr.bf16.mxu0 0
    %1525 = vmatpush1.bf16.msra.mxu0 0
    %1526 = vmatprep.subr.bf16.mxu0 0
    %1527 = vmatpush1.bf16.msra.mxu0 0
    %1528 = vmatprep.subr.bf16.mxu0 0
    %1529 = vmatpush1.bf16.msra.mxu0 0
    %1530 = vmatprep.subr.bf16.mxu0 0
    %1531 = vmatpush1.bf16.msra.mxu0 %v1512
    %1532 = vmatprep.subr.bf16.mxu0 0
    %1533 = vmatpush1.bf16.msra.mxu0 %v1511
    %1534 = vmatprep.subr.bf16.mxu0 0
    %1535 = vmatpush2.bf16.msra.mxu0 0
    %1536 = vmatprep.subr.bf16.mxu0 0
    %1537 = vmatpush2.bf16.msra.mxu0 0
    %1538 = vmatprep.subr.bf16.mxu0 0
    %1539 = vmatpush2.bf16.msra.mxu0 0
    %1540 = vmatprep.subr.bf16.mxu0 0
    %1541 = vmatpush2.bf16.msra.mxu0 0
    %1542 = vmatprep.subr.bf16.mxu0 0
    %1543 = vmatpush2.bf16.msra.mxu0 0
    %1544 = vmatprep.subr.bf16.mxu0 0
    %1545 = vmatpush2.bf16.msra.mxu0 0
    %1546 = vmatprep.subr.bf16.mxu0 0
    %1547 = vmatpush2.bf16.msra.mxu0 0
    %1548 = vmatprep.subr.bf16.mxu0 0
    %1549 = vmatpush2.bf16.msra.mxu0 0
    %1550 = vmatprep.mubr.bf16.mxu0 0
    %1551 = vmatmul.mubr.bf16.gmra.mxu0 %v1516
    %v1552 = vpop.f32.mrf.mxu0
    %v1553 = vadd.f32 0.0, %v1552
    %v1554 = vpop.f32.mrf.mxu0
    %v1555 = vpop.f32.mrf.mxu0
    %v1556 = vadd.f32 0.0, %v1555
    %v1557 = vpop.f32.mrf.mxu0
    %1558 = vdwg.mxu0
    %v1559 = vpack.c.bf16 %v246, %v245
    %v1560 = vld [vmem:[#allocation14] sm:$0xf]
    %v1561 = vld [vmem:[#allocation14 + $0x4] sm:$0xf]
    %v1562 = vld [vmem:[#allocation14 + $0x8] sm:$0xf]
    %v1563 = vld [vmem:[#allocation14 + $0xc] sm:$0xf]
    %v1568 = vunpack.c.l.b16 %v1560
    %v1569 = vunpack.c.l.b16 %v1561
    %v1570 = vunpack.c.l.b16 %v1562
    %v1571 = vunpack.c.l.b16 %v1563
    %v1572 = vpack.c.b16 %v1569, %v1568
    %v1573 = vpack.c.b16 %v1571, %v1570
    %v1577 = vsel %vm274, %v1559, 0
    %1579 = vmatprep.subr.bf16.mxu0 0
    %1580 = vmatpush1.bf16.msra.mxu0 0
    %1581 = vmatprep.subr.bf16.mxu0 0
    %1582 = vmatpush1.bf16.msra.mxu0 0
    %1583 = vmatprep.subr.bf16.mxu0 0
    %1584 = vmatpush1.bf16.msra.mxu0 0
    %1585 = vmatprep.subr.bf16.mxu0 0
    %1586 = vmatpush1.bf16.msra.mxu0 0
    %1587 = vmatprep.subr.bf16.mxu0 0
    %1588 = vmatpush1.bf16.msra.mxu0 0
    %1589 = vmatprep.subr.bf16.mxu0 0
    %1590 = vmatpush1.bf16.msra.mxu0 0
    %1591 = vmatprep.subr.bf16.mxu0 0
    %1592 = vmatpush1.bf16.msra.mxu0 %v1573
    %1593 = vmatprep.subr.bf16.mxu0 0
    %1594 = vmatpush1.bf16.msra.mxu0 %v1572
    %1595 = vmatprep.subr.bf16.mxu0 0
    %1596 = vmatpush2.bf16.msra.mxu0 0
    %1597 = vmatprep.subr.bf16.mxu0 0
    %1598 = vmatpush2.bf16.msra.mxu0 0
    %1599 = vmatprep.subr.bf16.mxu0 0
    %1600 = vmatpush2.bf16.msra.mxu0 0
    %1601 = vmatprep.subr.bf16.mxu0 0
    %1602 = vmatpush2.bf16.msra.mxu0 0
    %1603 = vmatprep.subr.bf16.mxu0 0
    %1604 = vmatpush2.bf16.msra.mxu0 0
    %1605 = vmatprep.subr.bf16.mxu0 0
    %1606 = vmatpush2.bf16.msra.mxu0 0
    %1607 = vmatprep.subr.bf16.mxu0 0
    %1608 = vmatpush2.bf16.msra.mxu0 0
    %1609 = vmatprep.subr.bf16.mxu0 0
    %1610 = vmatpush2.bf16.msra.mxu0 0
    %1611 = vmatprep.mubr.bf16.mxu0 0
    %1612 = vmatmul.mubr.bf16.gmra.mxu0 %v1577
    %v1613 = vpop.f32.mrf.mxu0
    %v1614 = vadd.f32 0.0, %v1613
    %v1615 = vpop.f32.mrf.mxu0
    %v1616 = vpop.f32.mrf.mxu0
    %v1617 = vadd.f32 0.0, %v1616
    %v1618 = vpop.f32.mrf.mxu0
    %1619 = vdwg.mxu0
    %v1620 = vpack.c.bf16 %v248, %v247
    %v1621 = vld [vmem:[#allocation15] sm:$0xf]
    %v1622 = vld [vmem:[#allocation15 + $0x4] sm:$0xf]
    %v1623 = vld [vmem:[#allocation15 + $0x8] sm:$0xf]
    %v1624 = vld [vmem:[#allocation15 + $0xc] sm:$0xf]
    %v1629 = vunpack.c.l.b16 %v1621
    %v1630 = vunpack.c.l.b16 %v1622
    %v1631 = vunpack.c.l.b16 %v1623
    %v1632 = vunpack.c.l.b16 %v1624
    %v1633 = vpack.c.b16 %v1630, %v1629
    %v1634 = vpack.c.b16 %v1632, %v1631
    %v1638 = vsel %vm274, %v1620, 0
    %1640 = vmatprep.subr.bf16.mxu0 0
    %1641 = vmatpush1.bf16.msra.mxu0 0
    %1642 = vmatprep.subr.bf16.mxu0 0
    %1643 = vmatpush1.bf16.msra.mxu0 0
    %1644 = vmatprep.subr.bf16.mxu0 0
    %1645 = vmatpush1.bf16.msra.mxu0 0
    %1646 = vmatprep.subr.bf16.mxu0 0
    %1647 = vmatpush1.bf16.msra.mxu0 0
    %1648 = vmatprep.subr.bf16.mxu0 0
    %1649 = vmatpush1.bf16.msra.mxu0 0
    %1650 = vmatprep.subr.bf16.mxu0 0
    %1651 = vmatpush1.bf16.msra.mxu0 0
    %1652 = vmatprep.subr.bf16.mxu0 0
    %1653 = vmatpush1.bf16.msra.mxu0 %v1634
    %1654 = vmatprep.subr.bf16.mxu0 0
    %1655 = vmatpush1.bf16.msra.mxu0 %v1633
    %1656 = vmatprep.subr.bf16.mxu0 0
    %1657 = vmatpush2.bf16.msra.mxu0 0
    %1658 = vmatprep.subr.bf16.mxu0 0
    %1659 = vmatpush2.bf16.msra.mxu0 0
    %1660 = vmatprep.subr.bf16.mxu0 0
    %1661 = vmatpush2.bf16.msra.mxu0 0
    %1662 = vmatprep.subr.bf16.mxu0 0
    %1663 = vmatpush2.bf16.msra.mxu0 0
    %1664 = vmatprep.subr.bf16.mxu0 0
    %1665 = vmatpush2.bf16.msra.mxu0 0
    %1666 = vmatprep.subr.bf16.mxu0 0
    %1667 = vmatpush2.bf16.msra.mxu0 0
    %1668 = vmatprep.subr.bf16.mxu0 0
    %1669 = vmatpush2.bf16.msra.mxu0 0
    %1670 = vmatprep.subr.bf16.mxu0 0
    %1671 = vmatpush2.bf16.msra.mxu0 0
    %1672 = vmatprep.mubr.bf16.mxu0 0
    %1673 = vmatmul.mubr.bf16.gmra.mxu0 %v1638
    %v1674 = vpop.f32.mrf.mxu0
    %v1675 = vadd.f32 0.0, %v1674
    %v1676 = vpop.f32.mrf.mxu0
    %v1677 = vpop.f32.mrf.mxu0
    %v1678 = vadd.f32 0.0, %v1677
    %v1679 = vpop.f32.mrf.mxu0
    %1680 = vdwg.mxu0
    %v1681 = vpack.c.bf16 %v1556, %v1553
    %v1682 = vpack.c.bf16 %v1617, %v1614
    %v1683 = vpack.c.bf16 %v1678, %v1675
    %v1685 = vunpack.c.l.b16 %v1681
    %v1686 = vunpack.c.h.b16 %v1681
    %v1687 = vpack.c.b16 %v1685, %v1685
    %v1688 = vpack.c.b16 %v1686, %v1686
    %v1690 = vunpack.c.l.b16 %v1682
    %v1691 = vunpack.c.h.b16 %v1682
    %v1692 = vpack.c.b16 %v1690, %v1690
    %v1693 = vpack.c.b16 %v1691, %v1691
    %v1695 = vunpack.c.l.b16 %v1683
    %v1696 = vunpack.c.h.b16 %v1683
    %v1697 = vpack.c.b16 %v1695, %v1695
    %v1698 = vpack.c.b16 %v1696, %v1696
    %v1701 = vlaneseq
    %v1702 = vshrl.u32 %v1701, 7
    %v1703 = vsub.s32 0, %v1702
    %v1704 = vrot.slane %v255, %v1703
    %v1705 = vlaneseq
    %v1706 = vshrl.u32 %v1705, 7
    %v1707 = vsub.s32 0, %v1706
    %v1708 = vrot.slane %v256, %v1707
    %v1712 = vsel %vm451, %v1687, 0
    %v1715 = vsel %vm451, %v1692, 0
    %1717 = vmatprep.subr.bf16.mxu0 0
    %1718 = vmatpush1.bf16.xpose.msra.mxu0 0
    %1719 = vmatprep.subr.bf16.mxu0 0
    %1720 = vmatpush1.bf16.xpose.msra.mxu0 0
    %1721 = vmatprep.subr.bf16.mxu0 0
    %1722 = vmatpush1.bf16.xpose.msra.mxu0 0
    %1723 = vmatprep.subr.bf16.mxu0 0
    %1724 = vmatpush1.bf16.xpose.msra.mxu0 0
    %1725 = vmatprep.subr.bf16.mxu0 0
    %1726 = vmatpush1.bf16.xpose.msra.mxu0 0
    %1727 = vmatprep.subr.bf16.mxu0 0
    %1728 = vmatpush1.bf16.xpose.msra.mxu0 0
    %1729 = vmatprep.subr.bf16.mxu0 0
    %1730 = vmatpush1.bf16.xpose.msra.mxu0 0
    %1731 = vmatprep.subr.bf16.mxu0 0
    %1732 = vmatpush1.bf16.xpose.msra.mxu0 %v1715
    %1733 = vmatprep.subr.bf16.mxu0 0
    %1734 = vmatpush2.bf16.xpose.msra.mxu0 0
    %1735 = vmatprep.subr.bf16.mxu0 0
    %1736 = vmatpush2.bf16.xpose.msra.mxu0 0
    %1737 = vmatprep.subr.bf16.mxu0 0
    %1738 = vmatpush2.bf16.xpose.msra.mxu0 0
    %1739 = vmatprep.subr.bf16.mxu0 0
    %1740 = vmatpush2.bf16.xpose.msra.mxu0 0
    %1741 = vmatprep.subr.bf16.mxu0 0
    %1742 = vmatpush2.bf16.xpose.msra.mxu0 0
    %1743 = vmatprep.subr.bf16.mxu0 0
    %1744 = vmatpush2.bf16.xpose.msra.mxu0 0
    %1745 = vmatprep.subr.bf16.mxu0 0
    %1746 = vmatpush2.bf16.xpose.msra.mxu0 0
    %1747 = vmatprep.subr.bf16.mxu0 0
    %1748 = vmatpush2.bf16.xpose.msra.mxu0 0
    %1749 = vmatprep.mubr.bf16.mxu0 0
    %1750 = vmatmul.mubr.bf16.gmra.mxu0 %v1712
    %v1751 = vpop.f32.mrf.mxu0
    %v1752 = vadd.f32 %v1704, %v1751
    %v1753 = vpop.f32.mrf.mxu0
    %v1754 = vpop.f32.mrf.mxu0
    %v1755 = vpop.f32.mrf.mxu0
    %1756 = vdwg.mxu0
    %v1758 = vsel %vm451, %v1688, 0
    %v1761 = vsel %vm451, %v1693, 0
    %1763 = vmatprep.subr.bf16.mxu0 0
    %1764 = vmatpush1.bf16.xpose.msra.mxu0 0
    %1765 = vmatprep.subr.bf16.mxu0 0
    %1766 = vmatpush1.bf16.xpose.msra.mxu0 0
    %1767 = vmatprep.subr.bf16.mxu0 0
    %1768 = vmatpush1.bf16.xpose.msra.mxu0 0
    %1769 = vmatprep.subr.bf16.mxu0 0
    %1770 = vmatpush1.bf16.xpose.msra.mxu0 0
    %1771 = vmatprep.subr.bf16.mxu0 0
    %1772 = vmatpush1.bf16.xpose.msra.mxu0 0
    %1773 = vmatprep.subr.bf16.mxu0 0
    %1774 = vmatpush1.bf16.xpose.msra.mxu0 0
    %1775 = vmatprep.subr.bf16.mxu0 0
    %1776 = vmatpush1.bf16.xpose.msra.mxu0 0
    %1777 = vmatprep.subr.bf16.mxu0 0
    %1778 = vmatpush1.bf16.xpose.msra.mxu0 %v1761
    %1779 = vmatprep.subr.bf16.mxu0 0
    %1780 = vmatpush2.bf16.xpose.msra.mxu0 0
    %1781 = vmatprep.subr.bf16.mxu0 0
    %1782 = vmatpush2.bf16.xpose.msra.mxu0 0
    %1783 = vmatprep.subr.bf16.mxu0 0
    %1784 = vmatpush2.bf16.xpose.msra.mxu0 0
    %1785 = vmatprep.subr.bf16.mxu0 0
    %1786 = vmatpush2.bf16.xpose.msra.mxu0 0
    %1787 = vmatprep.subr.bf16.mxu0 0
    %1788 = vmatpush2.bf16.xpose.msra.mxu0 0
    %1789 = vmatprep.subr.bf16.mxu0 0
    %1790 = vmatpush2.bf16.xpose.msra.mxu0 0
    %1791 = vmatprep.subr.bf16.mxu0 0
    %1792 = vmatpush2.bf16.xpose.msra.mxu0 0
    %1793 = vmatprep.subr.bf16.mxu0 0
    %1794 = vmatpush2.bf16.xpose.msra.mxu0 0
    %1795 = vmatprep.mubr.bf16.mxu0 0
    %1796 = vmatmul.mubr.bf16.gmra.mxu0 %v1758
    %v1797 = vpop.f32.mrf.mxu0
    %v1798 = vadd.f32 %v1708, %v1797
    %v1799 = vpop.f32.mrf.mxu0
    %v1800 = vpop.f32.mrf.mxu0
    %v1801 = vpop.f32.mrf.mxu0
    %1802 = vdwg.mxu0
    %v1803 = vsel %vm451, %v1752, -inf
    %1804 = vmax.xlane.f32.xlu0 %v1803
    %v1805 = vpop.xlane.xlu0 %1804
    %v1806 = vsel %vm451, %v1798, -inf
    %1807 = vmax.xlane.f32.xlu0 %v1806
    %v1808 = vpop.xlane.xlu0 %1807
    %v1809 = vsub.f32 %v1752, %v1805
    %v1810 = vsub.f32 %v1798, %v1808
    %v1811 = vmul.f32 %v1809, 1.442695
    %v1812 = vpow.pop %v1811
    %v1813 = vmul.f32 %v1810, 1.442695
    %v1814 = vpow.pop %v1813
    %v1815 = vsel %vm451, %v1812, 0.0
    %1816 = vadd.xlane.f32.xlu0 %v1815
    %v1817 = vpop.xlane.xlu0 %1816
    %v1818 = vsel %vm451, %v1814, 0.0
    %1819 = vadd.xlane.f32.xlu0 %v1818
    %v1820 = vpop.xlane.xlu0 %1819
    %v1821 = vrcp.pop %v1817
    %v1822 = vrcp.pop %v1820
    %v1823 = vmul.f32 %v1812, %v1821
    %v1824 = vmul.f32 %v1814, %v1822
    %v1825 = vpack.c.bf16 %v1823, %v1823
    %v1826 = vpack.c.bf16 %v1824, %v1824
    %v1828 = vsel %vm451, %v1825, 0
    %v1831 = vsel %vm571, %v1697, 0
    %1833 = vmatprep.subr.bf16.mxu0 0
    %1834 = vmatpush1.bf16.msra.mxu0 0
    %1835 = vmatprep.subr.bf16.mxu0 0
    %1836 = vmatpush1.bf16.msra.mxu0 0
    %1837 = vmatprep.subr.bf16.mxu0 0
    %1838 = vmatpush1.bf16.msra.mxu0 0
    %1839 = vmatprep.subr.bf16.mxu0 0
    %1840 = vmatpush1.bf16.msra.mxu0 0
    %1841 = vmatprep.subr.bf16.mxu0 0
    %1842 = vmatpush1.bf16.msra.mxu0 0
    %1843 = vmatprep.subr.bf16.mxu0 0
    %1844 = vmatpush1.bf16.msra.mxu0 0
    %1845 = vmatprep.subr.bf16.mxu0 0
    %1846 = vmatpush1.bf16.msra.mxu0 0
    %1847 = vmatprep.subr.bf16.mxu0 0
    %1848 = vmatpush1.bf16.msra.mxu0 %v1831
    %1849 = vmatprep.subr.bf16.mxu0 0
    %1850 = vmatpush2.bf16.msra.mxu0 0
    %1851 = vmatprep.subr.bf16.mxu0 0
    %1852 = vmatpush2.bf16.msra.mxu0 0
    %1853 = vmatprep.subr.bf16.mxu0 0
    %1854 = vmatpush2.bf16.msra.mxu0 0
    %1855 = vmatprep.subr.bf16.mxu0 0
    %1856 = vmatpush2.bf16.msra.mxu0 0
    %1857 = vmatprep.subr.bf16.mxu0 0
    %1858 = vmatpush2.bf16.msra.mxu0 0
    %1859 = vmatprep.subr.bf16.mxu0 0
    %1860 = vmatpush2.bf16.msra.mxu0 0
    %1861 = vmatprep.subr.bf16.mxu0 0
    %1862 = vmatpush2.bf16.msra.mxu0 0
    %1863 = vmatprep.subr.bf16.mxu0 0
    %1864 = vmatpush2.bf16.msra.mxu0 0
    %1865 = vmatprep.mubr.bf16.mxu0 0
    %1866 = vmatmul.mubr.bf16.gmra.mxu0 %v1828
    %v1867 = vpop.f32.mrf.mxu0
    %v1868 = vadd.f32 0.0, %v1867
    %v1869 = vpop.f32.mrf.mxu0
    %v1870 = vpop.f32.mrf.mxu0
    %v1871 = vpop.f32.mrf.mxu0
    %1872 = vdwg.mxu0
    %v1874 = vsel %vm451, %v1826, 0
    %v1877 = vsel %vm571, %v1698, 0
    %1879 = vmatprep.subr.bf16.mxu0 0
    %1880 = vmatpush1.bf16.msra.mxu0 0
    %1881 = vmatprep.subr.bf16.mxu0 0
    %1882 = vmatpush1.bf16.msra.mxu0 0
    %1883 = vmatprep.subr.bf16.mxu0 0
    %1884 = vmatpush1.bf16.msra.mxu0 0
    %1885 = vmatprep.subr.bf16.mxu0 0
    %1886 = vmatpush1.bf16.msra.mxu0 0
    %1887 = vmatprep.subr.bf16.mxu0 0
    %1888 = vmatpush1.bf16.msra.mxu0 0
    %1889 = vmatprep.subr.bf16.mxu0 0
    %1890 = vmatpush1.bf16.msra.mxu0 0
    %1891 = vmatprep.subr.bf16.mxu0 0
    %1892 = vmatpush1.bf16.msra.mxu0 0
    %1893 = vmatprep.subr.bf16.mxu0 0
    %1894 = vmatpush1.bf16.msra.mxu0 %v1877
    %1895 = vmatprep.subr.bf16.mxu0 0
    %1896 = vmatpush2.bf16.msra.mxu0 0
    %1897 = vmatprep.subr.bf16.mxu0 0
    %1898 = vmatpush2.bf16.msra.mxu0 0
    %1899 = vmatprep.subr.bf16.mxu0 0
    %1900 = vmatpush2.bf16.msra.mxu0 0
    %1901 = vmatprep.subr.bf16.mxu0 0
    %1902 = vmatpush2.bf16.msra.mxu0 0
    %1903 = vmatprep.subr.bf16.mxu0 0
    %1904 = vmatpush2.bf16.msra.mxu0 0
    %1905 = vmatprep.subr.bf16.mxu0 0
    %1906 = vmatpush2.bf16.msra.mxu0 0
    %1907 = vmatprep.subr.bf16.mxu0 0
    %1908 = vmatpush2.bf16.msra.mxu0 0
    %1909 = vmatprep.subr.bf16.mxu0 0
    %1910 = vmatpush2.bf16.msra.mxu0 0
    %1911 = vmatprep.mubr.bf16.mxu0 0
    %1912 = vmatmul.mubr.bf16.gmra.mxu0 %v1874
    %v1913 = vpop.f32.mrf.mxu0
    %v1914 = vadd.f32 0.0, %v1913
    %v1915 = vpop.f32.mrf.mxu0
    %v1916 = vpop.f32.mrf.mxu0
    %v1917 = vpop.f32.mrf.mxu0
    %1918 = vdwg.mxu0
    %v1919 = vpack.c.bf16 %v1914, %v1868
    %v1921 = vunpack.c.l.b16 %v1919
    %v1922 = vunpack.c.h.b16 %v1919
    %v1923 = vpack.c.b16 %v1921, %v1921
    %v1924 = vpack.c.b16 %v1922, %v1922
    %1927 = vst.msk [vmem:[#allocation2] sm:$0xf] %vm669, %v1923
    %1928 = vst.msk [vmem:[#allocation2 + $0x4] sm:$0xf] %vm669, %v1924
    %1929 = vrot.lane.b32.xlu0 %v1687, 120
    %v1930 = vpop.permute.xlu0 %1929
    %1931 = vrot.lane.b32.xlu0 %v1692, 120
    %v1932 = vpop.permute.xlu0 %1931
    %v1934 = vsel %vm451, %v1930, 0
    %v1937 = vsel %vm451, %v1932, 0
    %1939 = vmatprep.subr.bf16.mxu0 0
    %1940 = vmatpush1.bf16.xpose.msra.mxu0 0
    %1941 = vmatprep.subr.bf16.mxu0 0
    %1942 = vmatpush1.bf16.xpose.msra.mxu0 0
    %1943 = vmatprep.subr.bf16.mxu0 0
    %1944 = vmatpush1.bf16.xpose.msra.mxu0 0
    %1945 = vmatprep.subr.bf16.mxu0 0
    %1946 = vmatpush1.bf16.xpose.msra.mxu0 0
    %1947 = vmatprep.subr.bf16.mxu0 0
    %1948 = vmatpush1.bf16.xpose.msra.mxu0 0
    %1949 = vmatprep.subr.bf16.mxu0 0
    %1950 = vmatpush1.bf16.xpose.msra.mxu0 0
    %1951 = vmatprep.subr.bf16.mxu0 0
    %1952 = vmatpush1.bf16.xpose.msra.mxu0 0
    %1953 = vmatprep.subr.bf16.mxu0 0
    %1954 = vmatpush1.bf16.xpose.msra.mxu0 %v1937
    %1955 = vmatprep.subr.bf16.mxu0 0
    %1956 = vmatpush2.bf16.xpose.msra.mxu0 0
    %1957 = vmatprep.subr.bf16.mxu0 0
    %1958 = vmatpush2.bf16.xpose.msra.mxu0 0
    %1959 = vmatprep.subr.bf16.mxu0 0
    %1960 = vmatpush2.bf16.xpose.msra.mxu0 0
    %1961 = vmatprep.subr.bf16.mxu0 0
    %1962 = vmatpush2.bf16.xpose.msra.mxu0 0
    %1963 = vmatprep.subr.bf16.mxu0 0
    %1964 = vmatpush2.bf16.xpose.msra.mxu0 0
    %1965 = vmatprep.subr.bf16.mxu0 0
    %1966 = vmatpush2.bf16.xpose.msra.mxu0 0
    %1967 = vmatprep.subr.bf16.mxu0 0
    %1968 = vmatpush2.bf16.xpose.msra.mxu0 0
    %1969 = vmatprep.subr.bf16.mxu0 0
    %1970 = vmatpush2.bf16.xpose.msra.mxu0 0
    %1971 = vmatprep.mubr.bf16.mxu0 0
    %1972 = vmatmul.mubr.bf16.gmra.mxu0 %v1934
    %v1973 = vpop.f32.mrf.mxu0
    %v1974 = vadd.f32 %v1704, %v1973
    %v1975 = vpop.f32.mrf.mxu0
    %v1976 = vpop.f32.mrf.mxu0
    %v1977 = vpop.f32.mrf.mxu0
    %1978 = vdwg.mxu0
    %1979 = vrot.lane.b32.xlu0 %v1688, 120
    %v1980 = vpop.permute.xlu0 %1979
    %1981 = vrot.lane.b32.xlu0 %v1693, 120
    %v1982 = vpop.permute.xlu0 %1981
    %v1984 = vsel %vm451, %v1980, 0
    %v1987 = vsel %vm451, %v1982, 0
    %1989 = vmatprep.subr.bf16.mxu0 0
    %1990 = vmatpush1.bf16.xpose.msra.mxu0 0
    %1991 = vmatprep.subr.bf16.mxu0 0
    %1992 = vmatpush1.bf16.xpose.msra.mxu0 0
    %1993 = vmatprep.subr.bf16.mxu0 0
    %1994 = vmatpush1.bf16.xpose.msra.mxu0 0
    %1995 = vmatprep.subr.bf16.mxu0 0
    %1996 = vmatpush1.bf16.xpose.msra.mxu0 0
    %1997 = vmatprep.subr.bf16.mxu0 0
    %1998 = vmatpush1.bf16.xpose.msra.mxu0 0
    %1999 = vmatprep.subr.bf16.mxu0 0
    %2000 = vmatpush1.bf16.xpose.msra.mxu0 0
    %2001 = vmatprep.subr.bf16.mxu0 0
    %2002 = vmatpush1.bf16.xpose.msra.mxu0 0
    %2003 = vmatprep.subr.bf16.mxu0 0
    %2004 = vmatpush1.bf16.xpose.msra.mxu0 %v1987
    %2005 = vmatprep.subr.bf16.mxu0 0
    %2006 = vmatpush2.bf16.xpose.msra.mxu0 0
    %2007 = vmatprep.subr.bf16.mxu0 0
    %2008 = vmatpush2.bf16.xpose.msra.mxu0 0
    %2009 = vmatprep.subr.bf16.mxu0 0
    %2010 = vmatpush2.bf16.xpose.msra.mxu0 0
    %2011 = vmatprep.subr.bf16.mxu0 0
    %2012 = vmatpush2.bf16.xpose.msra.mxu0 0
    %2013 = vmatprep.subr.bf16.mxu0 0
    %2014 = vmatpush2.bf16.xpose.msra.mxu0 0
    %2015 = vmatprep.subr.bf16.mxu0 0
    %2016 = vmatpush2.bf16.xpose.msra.mxu0 0
    %2017 = vmatprep.subr.bf16.mxu0 0
    %2018 = vmatpush2.bf16.xpose.msra.mxu0 0
    %2019 = vmatprep.subr.bf16.mxu0 0
    %2020 = vmatpush2.bf16.xpose.msra.mxu0 0
    %2021 = vmatprep.mubr.bf16.mxu0 0
    %2022 = vmatmul.mubr.bf16.gmra.mxu0 %v1984
    %v2023 = vpop.f32.mrf.mxu0
    %v2024 = vadd.f32 %v1708, %v2023
    %v2025 = vpop.f32.mrf.mxu0
    %v2026 = vpop.f32.mrf.mxu0
    %v2027 = vpop.f32.mrf.mxu0
    %2028 = vdwg.mxu0
    %v2029 = vsel %vm451, %v1974, -inf
    %2030 = vmax.xlane.f32.xlu0 %v2029
    %v2031 = vpop.xlane.xlu0 %2030
    %v2032 = vsel %vm451, %v2024, -inf
    %2033 = vmax.xlane.f32.xlu0 %v2032
    %v2034 = vpop.xlane.xlu0 %2033
    %v2035 = vsub.f32 %v1974, %v2031
    %v2036 = vsub.f32 %v2024, %v2034
    %v2037 = vmul.f32 %v2035, 1.442695
    %v2038 = vpow.pop %v2037
    %v2039 = vmul.f32 %v2036, 1.442695
    %v2040 = vpow.pop %v2039
    %v2041 = vsel %vm451, %v2038, 0.0
    %2042 = vadd.xlane.f32.xlu0 %v2041
    %v2043 = vpop.xlane.xlu0 %2042
    %v2044 = vsel %vm451, %v2040, 0.0
    %2045 = vadd.xlane.f32.xlu0 %v2044
    %v2046 = vpop.xlane.xlu0 %2045
    %v2047 = vrcp.pop %v2043
    %v2048 = vrcp.pop %v2046
    %v2049 = vmul.f32 %v2038, %v2047
    %v2050 = vmul.f32 %v2040, %v2048
    %v2051 = vpack.c.bf16 %v2049, %v2049
    %v2052 = vpack.c.bf16 %v2050, %v2050
    %2053 = vrot.lane.b32.xlu0 %v1697, 120
    %v2054 = vpop.permute.xlu0 %2053
    %v2056 = vsel %vm451, %v2051, 0
    %v2059 = vsel %vm571, %v2054, 0
    %2061 = vmatprep.subr.bf16.mxu0 0
    %2062 = vmatpush1.bf16.msra.mxu0 0
    %2063 = vmatprep.subr.bf16.mxu0 0
    %2064 = vmatpush1.bf16.msra.mxu0 0
    %2065 = vmatprep.subr.bf16.mxu0 0
    %2066 = vmatpush1.bf16.msra.mxu0 0
    %2067 = vmatprep.subr.bf16.mxu0 0
    %2068 = vmatpush1.bf16.msra.mxu0 0
    %2069 = vmatprep.subr.bf16.mxu0 0
    %2070 = vmatpush1.bf16.msra.mxu0 0
    %2071 = vmatprep.subr.bf16.mxu0 0
    %2072 = vmatpush1.bf16.msra.mxu0 0
    %2073 = vmatprep.subr.bf16.mxu0 0
    %2074 = vmatpush1.bf16.msra.mxu0 0
    %2075 = vmatprep.subr.bf16.mxu0 0
    %2076 = vmatpush1.bf16.msra.mxu0 %v2059
    %2077 = vmatprep.subr.bf16.mxu0 0
    %2078 = vmatpush2.bf16.msra.mxu0 0
    %2079 = vmatprep.subr.bf16.mxu0 0
    %2080 = vmatpush2.bf16.msra.mxu0 0
    %2081 = vmatprep.subr.bf16.mxu0 0
    %2082 = vmatpush2.bf16.msra.mxu0 0
    %2083 = vmatprep.subr.bf16.mxu0 0
    %2084 = vmatpush2.bf16.msra.mxu0 0
    %2085 = vmatprep.subr.bf16.mxu0 0
    %2086 = vmatpush2.bf16.msra.mxu0 0
    %2087 = vmatprep.subr.bf16.mxu0 0
    %2088 = vmatpush2.bf16.msra.mxu0 0
    %2089 = vmatprep.subr.bf16.mxu0 0
    %2090 = vmatpush2.bf16.msra.mxu0 0
    %2091 = vmatprep.subr.bf16.mxu0 0
    %2092 = vmatpush2.bf16.msra.mxu0 0
    %2093 = vmatprep.mubr.bf16.mxu0 0
    %2094 = vmatmul.mubr.bf16.gmra.mxu0 %v2056
    %v2095 = vpop.f32.mrf.mxu0
    %v2096 = vadd.f32 0.0, %v2095
    %v2097 = vpop.f32.mrf.mxu0
    %v2098 = vpop.f32.mrf.mxu0
    %v2099 = vpop.f32.mrf.mxu0
    %2100 = vdwg.mxu0
    %2101 = vrot.lane.b32.xlu0 %v1698, 120
    %v2102 = vpop.permute.xlu0 %2101
    %v2104 = vsel %vm451, %v2052, 0
    %v2107 = vsel %vm571, %v2102, 0
    %2109 = vmatprep.subr.bf16.mxu0 0
    %2110 = vmatpush1.bf16.msra.mxu0 0
    %2111 = vmatprep.subr.bf16.mxu0 0
    %2112 = vmatpush1.bf16.msra.mxu0 0
    %2113 = vmatprep.subr.bf16.mxu0 0
    %2114 = vmatpush1.bf16.msra.mxu0 0
    %2115 = vmatprep.subr.bf16.mxu0 0
    %2116 = vmatpush1.bf16.msra.mxu0 0
    %2117 = vmatprep.subr.bf16.mxu0 0
    %2118 = vmatpush1.bf16.msra.mxu0 0
    %2119 = vmatprep.subr.bf16.mxu0 0
    %2120 = vmatpush1.bf16.msra.mxu0 0
    %2121 = vmatprep.subr.bf16.mxu0 0
    %2122 = vmatpush1.bf16.msra.mxu0 0
    %2123 = vmatprep.subr.bf16.mxu0 0
    %2124 = vmatpush1.bf16.msra.mxu0 %v2107
    %2125 = vmatprep.subr.bf16.mxu0 0
    %2126 = vmatpush2.bf16.msra.mxu0 0
    %2127 = vmatprep.subr.bf16.mxu0 0
    %2128 = vmatpush2.bf16.msra.mxu0 0
    %2129 = vmatprep.subr.bf16.mxu0 0
    %2130 = vmatpush2.bf16.msra.mxu0 0
    %2131 = vmatprep.subr.bf16.mxu0 0
    %2132 = vmatpush2.bf16.msra.mxu0 0
    %2133 = vmatprep.subr.bf16.mxu0 0
    %2134 = vmatpush2.bf16.msra.mxu0 0
    %2135 = vmatprep.subr.bf16.mxu0 0
    %2136 = vmatpush2.bf16.msra.mxu0 0
    %2137 = vmatprep.subr.bf16.mxu0 0
    %2138 = vmatpush2.bf16.msra.mxu0 0
    %2139 = vmatprep.subr.bf16.mxu0 0
    %2140 = vmatpush2.bf16.msra.mxu0 0
    %2141 = vmatprep.mubr.bf16.mxu0 0
    %2142 = vmatmul.mubr.bf16.gmra.mxu0 %v2104
    %v2143 = vpop.f32.mrf.mxu0
    %v2144 = vadd.f32 0.0, %v2143
    %v2145 = vpop.f32.mrf.mxu0
    %v2146 = vpop.f32.mrf.mxu0
    %v2147 = vpop.f32.mrf.mxu0
    %2148 = vdwg.mxu0
    %v2149 = vpack.c.bf16 %v2144, %v2096
    %v2151 = vunpack.c.l.b16 %v2149
    %v2152 = vunpack.c.h.b16 %v2149
    %v2153 = vpack.c.b16 %v2151, %v2151
    %v2154 = vpack.c.b16 %v2152, %v2152
    %2155 = vrot.lane.b32.xlu0 %v2153, 8
    %v2156 = vpop.permute.xlu0 %2155
    %2157 = vrot.lane.b32.xlu0 %v2154, 8
    %v2158 = vpop.permute.xlu0 %2157
    %2161 = vst.msk [vmem:[#allocation2] sm:$0xf] %vm904, %v2156
    %2162 = vst.msk [vmem:[#allocation2 + $0x4] sm:$0xf] %vm904, %v2158
    %2163 = vrot.lane.b32.xlu0 %v1687, 112
    %v2164 = vpop.permute.xlu0 %2163
    %2165 = vrot.lane.b32.xlu0 %v1692, 112
    %v2166 = vpop.permute.xlu0 %2165
    %v2168 = vsel %vm451, %v2164, 0
    %v2171 = vsel %vm451, %v2166, 0
    %2173 = vmatprep.subr.bf16.mxu0 0
    %2174 = vmatpush1.bf16.xpose.msra.mxu0 0
    %2175 = vmatprep.subr.bf16.mxu0 0
    %2176 = vmatpush1.bf16.xpose.msra.mxu0 0
    %2177 = vmatprep.subr.bf16.mxu0 0
    %2178 = vmatpush1.bf16.xpose.msra.mxu0 0
    %2179 = vmatprep.subr.bf16.mxu0 0
    %2180 = vmatpush1.bf16.xpose.msra.mxu0 0
    %2181 = vmatprep.subr.bf16.mxu0 0
    %2182 = vmatpush1.bf16.xpose.msra.mxu0 0
    %2183 = vmatprep.subr.bf16.mxu0 0
    %2184 = vmatpush1.bf16.xpose.msra.mxu0 0
    %2185 = vmatprep.subr.bf16.mxu0 0
    %2186 = vmatpush1.bf16.xpose.msra.mxu0 0
    %2187 = vmatprep.subr.bf16.mxu0 0
    %2188 = vmatpush1.bf16.xpose.msra.mxu0 %v2171
    %2189 = vmatprep.subr.bf16.mxu0 0
    %2190 = vmatpush2.bf16.xpose.msra.mxu0 0
    %2191 = vmatprep.subr.bf16.mxu0 0
    %2192 = vmatpush2.bf16.xpose.msra.mxu0 0
    %2193 = vmatprep.subr.bf16.mxu0 0
    %2194 = vmatpush2.bf16.xpose.msra.mxu0 0
    %2195 = vmatprep.subr.bf16.mxu0 0
    %2196 = vmatpush2.bf16.xpose.msra.mxu0 0
    %2197 = vmatprep.subr.bf16.mxu0 0
    %2198 = vmatpush2.bf16.xpose.msra.mxu0 0
    %2199 = vmatprep.subr.bf16.mxu0 0
    %2200 = vmatpush2.bf16.xpose.msra.mxu0 0
    %2201 = vmatprep.subr.bf16.mxu0 0
    %2202 = vmatpush2.bf16.xpose.msra.mxu0 0
    %2203 = vmatprep.subr.bf16.mxu0 0
    %2204 = vmatpush2.bf16.xpose.msra.mxu0 0
    %2205 = vmatprep.mubr.bf16.mxu0 0
    %2206 = vmatmul.mubr.bf16.gmra.mxu0 %v2168
    %v2207 = vpop.f32.mrf.mxu0
    %v2208 = vadd.f32 %v1704, %v2207
    %v2209 = vpop.f32.mrf.mxu0
    %v2210 = vpop.f32.mrf.mxu0
    %v2211 = vpop.f32.mrf.mxu0
    %2212 = vdwg.mxu0
    %2213 = vrot.lane.b32.xlu0 %v1688, 112
    %v2214 = vpop.permute.xlu0 %2213
    %2215 = vrot.lane.b32.xlu0 %v1693, 112
    %v2216 = vpop.permute.xlu0 %2215
    %v2218 = vsel %vm451, %v2214, 0
    %v2221 = vsel %vm451, %v2216, 0
    %2223 = vmatprep.subr.bf16.mxu0 0
    %2224 = vmatpush1.bf16.xpose.msra.mxu0 0
    %2225 = vmatprep.subr.bf16.mxu0 0
    %2226 = vmatpush1.bf16.xpose.msra.mxu0 0
    %2227 = vmatprep.subr.bf16.mxu0 0
    %2228 = vmatpush1.bf16.xpose.msra.mxu0 0
    %2229 = vmatprep.subr.bf16.mxu0 0
    %2230 = vmatpush1.bf16.xpose.msra.mxu0 0
    %2231 = vmatprep.subr.bf16.mxu0 0
    %2232 = vmatpush1.bf16.xpose.msra.mxu0 0
    %2233 = vmatprep.subr.bf16.mxu0 0
    %2234 = vmatpush1.bf16.xpose.msra.mxu0 0
    %2235 = vmatprep.subr.bf16.mxu0 0
    %2236 = vmatpush1.bf16.xpose.msra.mxu0 0
    %2237 = vmatprep.subr.bf16.mxu0 0
    %2238 = vmatpush1.bf16.xpose.msra.mxu0 %v2221
    %2239 = vmatprep.subr.bf16.mxu0 0
    %2240 = vmatpush2.bf16.xpose.msra.mxu0 0
    %2241 = vmatprep.subr.bf16.mxu0 0
    %2242 = vmatpush2.bf16.xpose.msra.mxu0 0
    %2243 = vmatprep.subr.bf16.mxu0 0
    %2244 = vmatpush2.bf16.xpose.msra.mxu0 0
    %2245 = vmatprep.subr.bf16.mxu0 0
    %2246 = vmatpush2.bf16.xpose.msra.mxu0 0
    %2247 = vmatprep.subr.bf16.mxu0 0
    %2248 = vmatpush2.bf16.xpose.msra.mxu0 0
    %2249 = vmatprep.subr.bf16.mxu0 0
    %2250 = vmatpush2.bf16.xpose.msra.mxu0 0
    %2251 = vmatprep.subr.bf16.mxu0 0
    %2252 = vmatpush2.bf16.xpose.msra.mxu0 0
    %2253 = vmatprep.subr.bf16.mxu0 0
    %2254 = vmatpush2.bf16.xpose.msra.mxu0 0
    %2255 = vmatprep.mubr.bf16.mxu0 0
    %2256 = vmatmul.mubr.bf16.gmra.mxu0 %v2218
    %v2257 = vpop.f32.mrf.mxu0
    %v2258 = vadd.f32 %v1708, %v2257
    %v2259 = vpop.f32.mrf.mxu0
    %v2260 = vpop.f32.mrf.mxu0
    %v2261 = vpop.f32.mrf.mxu0
    %2262 = vdwg.mxu0
    %v2263 = vsel %vm451, %v2208, -inf
    %2264 = vmax.xlane.f32.xlu0 %v2263
    %v2265 = vpop.xlane.xlu0 %2264
    %v2266 = vsel %vm451, %v2258, -inf
    %2267 = vmax.xlane.f32.xlu0 %v2266
    %v2268 = vpop.xlane.xlu0 %2267
    %v2269 = vsub.f32 %v2208, %v2265
    %v2270 = vsub.f32 %v2258, %v2268
    %v2271 = vmul.f32 %v2269, 1.442695
    %v2272 = vpow.pop %v2271
    %v2273 = vmul.f32 %v2270, 1.442695
    %v2274 = vpow.pop %v2273
    %v2275 = vsel %vm451, %v2272, 0.0
    %2276 = vadd.xlane.f32.xlu0 %v2275
    %v2277 = vpop.xlane.xlu0 %2276
    %v2278 = vsel %vm451, %v2274, 0.0
    %2279 = vadd.xlane.f32.xlu0 %v2278
    %v2280 = vpop.xlane.xlu0 %2279
    %v2281 = vrcp.pop %v2277
    %v2282 = vrcp.pop %v2280
    %v2283 = vmul.f32 %v2272, %v2281
    %v2284 = vmul.f32 %v2274, %v2282
    %v2285 = vpack.c.bf16 %v2283, %v2283
    %v2286 = vpack.c.bf16 %v2284, %v2284
    %2287 = vrot.lane.b32.xlu0 %v1697, 112
    %v2288 = vpop.permute.xlu0 %2287
    %v2290 = vsel %vm451, %v2285, 0
    %v2293 = vsel %vm571, %v2288, 0
    %2295 = vmatprep.subr.bf16.mxu0 0
    %2296 = vmatpush1.bf16.msra.mxu0 0
    %2297 = vmatprep.subr.bf16.mxu0 0
    %2298 = vmatpush1.bf16.msra.mxu0 0
    %2299 = vmatprep.subr.bf16.mxu0 0
    %2300 = vmatpush1.bf16.msra.mxu0 0
    %2301 = vmatprep.subr.bf16.mxu0 0
    %2302 = vmatpush1.bf16.msra.mxu0 0
    %2303 = vmatprep.subr.bf16.mxu0 0
    %2304 = vmatpush1.bf16.msra.mxu0 0
    %2305 = vmatprep.subr.bf16.mxu0 0
    %2306 = vmatpush1.bf16.msra.mxu0 0
    %2307 = vmatprep.subr.bf16.mxu0 0
    %2308 = vmatpush1.bf16.msra.mxu0 0
    %2309 = vmatprep.subr.bf16.mxu0 0
    %2310 = vmatpush1.bf16.msra.mxu0 %v2293
    %2311 = vmatprep.subr.bf16.mxu0 0
    %2312 = vmatpush2.bf16.msra.mxu0 0
    %2313 = vmatprep.subr.bf16.mxu0 0
    %2314 = vmatpush2.bf16.msra.mxu0 0
    %2315 = vmatprep.subr.bf16.mxu0 0
    %2316 = vmatpush2.bf16.msra.mxu0 0
    %2317 = vmatprep.subr.bf16.mxu0 0
    %2318 = vmatpush2.bf16.msra.mxu0 0
    %2319 = vmatprep.subr.bf16.mxu0 0
    %2320 = vmatpush2.bf16.msra.mxu0 0
    %2321 = vmatprep.subr.bf16.mxu0 0
    %2322 = vmatpush2.bf16.msra.mxu0 0
    %2323 = vmatprep.subr.bf16.mxu0 0
    %2324 = vmatpush2.bf16.msra.mxu0 0
    %2325 = vmatprep.subr.bf16.mxu0 0
    %2326 = vmatpush2.bf16.msra.mxu0 0
    %2327 = vmatprep.mubr.bf16.mxu0 0
    %2328 = vmatmul.mubr.bf16.gmra.mxu0 %v2290
    %v2329 = vpop.f32.mrf.mxu0
    %v2330 = vadd.f32 0.0, %v2329
    %v2331 = vpop.f32.mrf.mxu0
    %v2332 = vpop.f32.mrf.mxu0
    %v2333 = vpop.f32.mrf.mxu0
    %2334 = vdwg.mxu0
    %2335 = vrot.lane.b32.xlu0 %v1698, 112
    %v2336 = vpop.permute.xlu0 %2335
    %v2338 = vsel %vm451, %v2286, 0
    %v2341 = vsel %vm571, %v2336, 0
    %2343 = vmatprep.subr.bf16.mxu0 0
    %2344 = vmatpush1.bf16.msra.mxu0 0
    %2345 = vmatprep.subr.bf16.mxu0 0
    %2346 = vmatpush1.bf16.msra.mxu0 0
    %2347 = vmatprep.subr.bf16.mxu0 0
    %2348 = vmatpush1.bf16.msra.mxu0 0
    %2349 = vmatprep.subr.bf16.mxu0 0
    %2350 = vmatpush1.bf16.msra.mxu0 0
    %2351 = vmatprep.subr.bf16.mxu0 0
    %2352 = vmatpush1.bf16.msra.mxu0 0
    %2353 = vmatprep.subr.bf16.mxu0 0
    %2354 = vmatpush1.bf16.msra.mxu0 0
    %2355 = vmatprep.subr.bf16.mxu0 0
    %2356 = vmatpush1.bf16.msra.mxu0 0
    %2357 = vmatprep.subr.bf16.mxu0 0
    %2358 = vmatpush1.bf16.msra.mxu0 %v2341
    %2359 = vmatprep.subr.bf16.mxu0 0
    %2360 = vmatpush2.bf16.msra.mxu0 0
    %2361 = vmatprep.subr.bf16.mxu0 0
    %2362 = vmatpush2.bf16.msra.mxu0 0
    %2363 = vmatprep.subr.bf16.mxu0 0
    %2364 = vmatpush2.bf16.msra.mxu0 0
    %2365 = vmatprep.subr.bf16.mxu0 0
    %2366 = vmatpush2.bf16.msra.mxu0 0
    %2367 = vmatprep.subr.bf16.mxu0 0
    %2368 = vmatpush2.bf16.msra.mxu0 0
    %2369 = vmatprep.subr.bf16.mxu0 0
    %2370 = vmatpush2.bf16.msra.mxu0 0
    %2371 = vmatprep.subr.bf16.mxu0 0
    %2372 = vmatpush2.bf16.msra.mxu0 0
    %2373 = vmatprep.subr.bf16.mxu0 0
    %2374 = vmatpush2.bf16.msra.mxu0 0
    %2375 = vmatprep.mubr.bf16.mxu0 0
    %2376 = vmatmul.mubr.bf16.gmra.mxu0 %v2338
    %v2377 = vpop.f32.mrf.mxu0
    %v2378 = vadd.f32 0.0, %v2377
    %v2379 = vpop.f32.mrf.mxu0
    %v2380 = vpop.f32.mrf.mxu0
    %v2381 = vpop.f32.mrf.mxu0
    %2382 = vdwg.mxu0
    %v2383 = vpack.c.bf16 %v2378, %v2330
    %v2385 = vunpack.c.l.b16 %v2383
    %v2386 = vunpack.c.h.b16 %v2383
    %v2387 = vpack.c.b16 %v2385, %v2385
    %v2388 = vpack.c.b16 %v2386, %v2386
    %2389 = vrot.lane.b32.xlu0 %v2387, 16
    %v2390 = vpop.permute.xlu0 %2389
    %2391 = vrot.lane.b32.xlu0 %v2388, 16
    %v2392 = vpop.permute.xlu0 %2391
    %2395 = vst.msk [vmem:[#allocation2] sm:$0xf] %vm1139, %v2390
    %2396 = vst.msk [vmem:[#allocation2 + $0x4] sm:$0xf] %vm1139, %v2392
    %2397 = vrot.lane.b32.xlu0 %v1687, 104
    %v2398 = vpop.permute.xlu0 %2397
    %2399 = vrot.lane.b32.xlu0 %v1692, 104
    %v2400 = vpop.permute.xlu0 %2399
    %v2402 = vsel %vm451, %v2398, 0
    %v2405 = vsel %vm451, %v2400, 0
    %2407 = vmatprep.subr.bf16.mxu0 0
    %2408 = vmatpush1.bf16.xpose.msra.mxu0 0
    %2409 = vmatprep.subr.bf16.mxu0 0
    %2410 = vmatpush1.bf16.xpose.msra.mxu0 0
    %2411 = vmatprep.subr.bf16.mxu0 0
    %2412 = vmatpush1.bf16.xpose.msra.mxu0 0
    %2413 = vmatprep.subr.bf16.mxu0 0
    %2414 = vmatpush1.bf16.xpose.msra.mxu0 0
    %2415 = vmatprep.subr.bf16.mxu0 0
    %2416 = vmatpush1.bf16.xpose.msra.mxu0 0
    %2417 = vmatprep.subr.bf16.mxu0 0
    %2418 = vmatpush1.bf16.xpose.msra.mxu0 0
    %2419 = vmatprep.subr.bf16.mxu0 0
    %2420 = vmatpush1.bf16.xpose.msra.mxu0 0
    %2421 = vmatprep.subr.bf16.mxu0 0
    %2422 = vmatpush1.bf16.xpose.msra.mxu0 %v2405
    %2423 = vmatprep.subr.bf16.mxu0 0
    %2424 = vmatpush2.bf16.xpose.msra.mxu0 0
    %2425 = vmatprep.subr.bf16.mxu0 0
    %2426 = vmatpush2.bf16.xpose.msra.mxu0 0
    %2427 = vmatprep.subr.bf16.mxu0 0
    %2428 = vmatpush2.bf16.xpose.msra.mxu0 0
    %2429 = vmatprep.subr.bf16.mxu0 0
    %2430 = vmatpush2.bf16.xpose.msra.mxu0 0
    %2431 = vmatprep.subr.bf16.mxu0 0
    %2432 = vmatpush2.bf16.xpose.msra.mxu0 0
    %2433 = vmatprep.subr.bf16.mxu0 0
    %2434 = vmatpush2.bf16.xpose.msra.mxu0 0
    %2435 = vmatprep.subr.bf16.mxu0 0
    %2436 = vmatpush2.bf16.xpose.msra.mxu0 0
    %2437 = vmatprep.subr.bf16.mxu0 0
    %2438 = vmatpush2.bf16.xpose.msra.mxu0 0
    %2439 = vmatprep.mubr.bf16.mxu0 0
    %2440 = vmatmul.mubr.bf16.gmra.mxu0 %v2402
    %v2441 = vpop.f32.mrf.mxu0
    %v2442 = vadd.f32 %v1704, %v2441
    %v2443 = vpop.f32.mrf.mxu0
    %v2444 = vpop.f32.mrf.mxu0
    %v2445 = vpop.f32.mrf.mxu0
    %2446 = vdwg.mxu0
    %2447 = vrot.lane.b32.xlu0 %v1688, 104
    %v2448 = vpop.permute.xlu0 %2447
    %2449 = vrot.lane.b32.xlu0 %v1693, 104
    %v2450 = vpop.permute.xlu0 %2449
    %v2452 = vsel %vm451, %v2448, 0
    %v2455 = vsel %vm451, %v2450, 0
    %2457 = vmatprep.subr.bf16.mxu0 0
    %2458 = vmatpush1.bf16.xpose.msra.mxu0 0
    %2459 = vmatprep.subr.bf16.mxu0 0
    %2460 = vmatpush1.bf16.xpose.msra.mxu0 0
    %2461 = vmatprep.subr.bf16.mxu0 0
    %2462 = vmatpush1.bf16.xpose.msra.mxu0 0
    %2463 = vmatprep.subr.bf16.mxu0 0
    %2464 = vmatpush1.bf16.xpose.msra.mxu0 0
    %2465 = vmatprep.subr.bf16.mxu0 0
    %2466 = vmatpush1.bf16.xpose.msra.mxu0 0
    %2467 = vmatprep.subr.bf16.mxu0 0
    %2468 = vmatpush1.bf16.xpose.msra.mxu0 0
    %2469 = vmatprep.subr.bf16.mxu0 0
    %2470 = vmatpush1.bf16.xpose.msra.mxu0 0
    %2471 = vmatprep.subr.bf16.mxu0 0
    %2472 = vmatpush1.bf16.xpose.msra.mxu0 %v2455
    %2473 = vmatprep.subr.bf16.mxu0 0
    %2474 = vmatpush2.bf16.xpose.msra.mxu0 0
    %2475 = vmatprep.subr.bf16.mxu0 0
    %2476 = vmatpush2.bf16.xpose.msra.mxu0 0
    %2477 = vmatprep.subr.bf16.mxu0 0
    %2478 = vmatpush2.bf16.xpose.msra.mxu0 0
    %2479 = vmatprep.subr.bf16.mxu0 0
    %2480 = vmatpush2.bf16.xpose.msra.mxu0 0
    %2481 = vmatprep.subr.bf16.mxu0 0
    %2482 = vmatpush2.bf16.xpose.msra.mxu0 0
    %2483 = vmatprep.subr.bf16.mxu0 0
    %2484 = vmatpush2.bf16.xpose.msra.mxu0 0
    %2485 = vmatprep.subr.bf16.mxu0 0
    %2486 = vmatpush2.bf16.xpose.msra.mxu0 0
    %2487 = vmatprep.subr.bf16.mxu0 0
    %2488 = vmatpush2.bf16.xpose.msra.mxu0 0
    %2489 = vmatprep.mubr.bf16.mxu0 0
    %2490 = vmatmul.mubr.bf16.gmra.mxu0 %v2452
    %v2491 = vpop.f32.mrf.mxu0
    %v2492 = vadd.f32 %v1708, %v2491
    %v2493 = vpop.f32.mrf.mxu0
    %v2494 = vpop.f32.mrf.mxu0
    %v2495 = vpop.f32.mrf.mxu0
    %2496 = vdwg.mxu0
    %v2497 = vsel %vm451, %v2442, -inf
    %2498 = vmax.xlane.f32.xlu0 %v2497
    %v2499 = vpop.xlane.xlu0 %2498
    %v2500 = vsel %vm451, %v2492, -inf
    %2501 = vmax.xlane.f32.xlu0 %v2500
    %v2502 = vpop.xlane.xlu0 %2501
    %v2503 = vsub.f32 %v2442, %v2499
    %v2504 = vsub.f32 %v2492, %v2502
    %v2505 = vmul.f32 %v2503, 1.442695
    %v2506 = vpow.pop %v2505
    %v2507 = vmul.f32 %v2504, 1.442695
    %v2508 = vpow.pop %v2507
    %v2509 = vsel %vm451, %v2506, 0.0
    %2510 = vadd.xlane.f32.xlu0 %v2509
    %v2511 = vpop.xlane.xlu0 %2510
    %v2512 = vsel %vm451, %v2508, 0.0
    %2513 = vadd.xlane.f32.xlu0 %v2512
    %v2514 = vpop.xlane.xlu0 %2513
    %v2515 = vrcp.pop %v2511
    %v2516 = vrcp.pop %v2514
    %v2517 = vmul.f32 %v2506, %v2515
    %v2518 = vmul.f32 %v2508, %v2516
    %v2519 = vpack.c.bf16 %v2517, %v2517
    %v2520 = vpack.c.bf16 %v2518, %v2518
    %2521 = vrot.lane.b32.xlu0 %v1697, 104
    %v2522 = vpop.permute.xlu0 %2521
    %v2524 = vsel %vm451, %v2519, 0
    %v2527 = vsel %vm571, %v2522, 0
    %2529 = vmatprep.subr.bf16.mxu0 0
    %2530 = vmatpush1.bf16.msra.mxu0 0
    %2531 = vmatprep.subr.bf16.mxu0 0
    %2532 = vmatpush1.bf16.msra.mxu0 0
    %2533 = vmatprep.subr.bf16.mxu0 0
    %2534 = vmatpush1.bf16.msra.mxu0 0
    %2535 = vmatprep.subr.bf16.mxu0 0
    %2536 = vmatpush1.bf16.msra.mxu0 0
    %2537 = vmatprep.subr.bf16.mxu0 0
    %2538 = vmatpush1.bf16.msra.mxu0 0
    %2539 = vmatprep.subr.bf16.mxu0 0
    %2540 = vmatpush1.bf16.msra.mxu0 0
    %2541 = vmatprep.subr.bf16.mxu0 0
    %2542 = vmatpush1.bf16.msra.mxu0 0
    %2543 = vmatprep.subr.bf16.mxu0 0
    %2544 = vmatpush1.bf16.msra.mxu0 %v2527
    %2545 = vmatprep.subr.bf16.mxu0 0
    %2546 = vmatpush2.bf16.msra.mxu0 0
    %2547 = vmatprep.subr.bf16.mxu0 0
    %2548 = vmatpush2.bf16.msra.mxu0 0
    %2549 = vmatprep.subr.bf16.mxu0 0
    %2550 = vmatpush2.bf16.msra.mxu0 0
    %2551 = vmatprep.subr.bf16.mxu0 0
    %2552 = vmatpush2.bf16.msra.mxu0 0
    %2553 = vmatprep.subr.bf16.mxu0 0
    %2554 = vmatpush2.bf16.msra.mxu0 0
    %2555 = vmatprep.subr.bf16.mxu0 0
    %2556 = vmatpush2.bf16.msra.mxu0 0
    %2557 = vmatprep.subr.bf16.mxu0 0
    %2558 = vmatpush2.bf16.msra.mxu0 0
    %2559 = vmatprep.subr.bf16.mxu0 0
    %2560 = vmatpush2.bf16.msra.mxu0 0
    %2561 = vmatprep.mubr.bf16.mxu0 0
    %2562 = vmatmul.mubr.bf16.gmra.mxu0 %v2524
    %v2563 = vpop.f32.mrf.mxu0
    %v2564 = vadd.f32 0.0, %v2563
    %v2565 = vpop.f32.mrf.mxu0
    %v2566 = vpop.f32.mrf.mxu0
    %v2567 = vpop.f32.mrf.mxu0
    %2568 = vdwg.mxu0
    %2569 = vrot.lane.b32.xlu0 %v1698, 104
    %v2570 = vpop.permute.xlu0 %2569
    %v2572 = vsel %vm451, %v2520, 0
    %v2575 = vsel %vm571, %v2570, 0
    %2577 = vmatprep.subr.bf16.mxu0 0
    %2578 = vmatpush1.bf16.msra.mxu0 0
    %2579 = vmatprep.subr.bf16.mxu0 0
    %2580 = vmatpush1.bf16.msra.mxu0 0
    %2581 = vmatprep.subr.bf16.mxu0 0
    %2582 = vmatpush1.bf16.msra.mxu0 0
    %2583 = vmatprep.subr.bf16.mxu0 0
    %2584 = vmatpush1.bf16.msra.mxu0 0
    %2585 = vmatprep.subr.bf16.mxu0 0
    %2586 = vmatpush1.bf16.msra.mxu0 0
    %2587 = vmatprep.subr.bf16.mxu0 0
    %2588 = vmatpush1.bf16.msra.mxu0 0
    %2589 = vmatprep.subr.bf16.mxu0 0
    %2590 = vmatpush1.bf16.msra.mxu0 0
    %2591 = vmatprep.subr.bf16.mxu0 0
    %2592 = vmatpush1.bf16.msra.mxu0 %v2575
    %2593 = vmatprep.subr.bf16.mxu0 0
    %2594 = vmatpush2.bf16.msra.mxu0 0
    %2595 = vmatprep.subr.bf16.mxu0 0
    %2596 = vmatpush2.bf16.msra.mxu0 0
    %2597 = vmatprep.subr.bf16.mxu0 0
    %2598 = vmatpush2.bf16.msra.mxu0 0
    %2599 = vmatprep.subr.bf16.mxu0 0
    %2600 = vmatpush2.bf16.msra.mxu0 0
    %2601 = vmatprep.subr.bf16.mxu0 0
    %2602 = vmatpush2.bf16.msra.mxu0 0
    %2603 = vmatprep.subr.bf16.mxu0 0
    %2604 = vmatpush2.bf16.msra.mxu0 0
    %2605 = vmatprep.subr.bf16.mxu0 0
    %2606 = vmatpush2.bf16.msra.mxu0 0
    %2607 = vmatprep.subr.bf16.mxu0 0
    %2608 = vmatpush2.bf16.msra.mxu0 0
    %2609 = vmatprep.mubr.bf16.mxu0 0
    %2610 = vmatmul.mubr.bf16.gmra.mxu0 %v2572
    %v2611 = vpop.f32.mrf.mxu0
    %v2612 = vadd.f32 0.0, %v2611
    %v2613 = vpop.f32.mrf.mxu0
    %v2614 = vpop.f32.mrf.mxu0
    %v2615 = vpop.f32.mrf.mxu0
    %2616 = vdwg.mxu0
    %v2617 = vpack.c.bf16 %v2612, %v2564
    %v2619 = vunpack.c.l.b16 %v2617
    %v2620 = vunpack.c.h.b16 %v2617
    %v2621 = vpack.c.b16 %v2619, %v2619
    %v2622 = vpack.c.b16 %v2620, %v2620
    %2623 = vrot.lane.b32.xlu0 %v2621, 24
    %v2624 = vpop.permute.xlu0 %2623
    %2625 = vrot.lane.b32.xlu0 %v2622, 24
    %v2626 = vpop.permute.xlu0 %2625
    %2629 = vst.msk [vmem:[#allocation2] sm:$0xf] %vm1374, %v2624
    %2630 = vst.msk [vmem:[#allocation2 + $0x4] sm:$0xf] %vm1374, %v2626
    %v2631 = vld [vmem:[#allocation2] sm:$0xf]
    %v2632 = vld [vmem:[#allocation2 + $0x4] sm:$0xf]
    %v2633 = vld [vmem:[#allocation17] sm:$0xf]
    %v2634 = vld [vmem:[#allocation17 + $0x4] sm:$0xf]
    %v2635 = vld [vmem:[#allocation17 + $0x8] sm:$0xf]
    %v2636 = vld [vmem:[#allocation17 + $0xc] sm:$0xf]
    %v2637 = vld [vmem:[#allocation18] sm:$0x1]
    %v2639 = vlaneseq
    %v2640 = vshrl.u32 %v2639, 7
    %v2641 = vsub.s32 0, %v2640
    %v2642 = vrot.slane %v2637, %v2641
    %v2646 = vunpack.c.l.b16 %v2631
    %v2647 = vunpack.c.l.b16 %v2632
    %v2648 = vpack.c.b16 %v2647, %v2646
    %v2653 = vunpack.c.l.b16 %v2633
    %v2654 = vunpack.c.l.b16 %v2634
    %v2655 = vunpack.c.l.b16 %v2635
    %v2656 = vunpack.c.l.b16 %v2636
    %v2657 = vpack.c.b16 %v2654, %v2653
    %v2658 = vpack.c.b16 %v2656, %v2655
    %v2662 = vsel %vm274, %v2648, 0
    %2664 = vmatprep.subr.bf16.mxu0 0
    %2665 = vmatpush1.bf16.msra.mxu0 0
    %2666 = vmatprep.subr.bf16.mxu0 0
    %2667 = vmatpush1.bf16.msra.mxu0 0
    %2668 = vmatprep.subr.bf16.mxu0 0
    %2669 = vmatpush1.bf16.msra.mxu0 0
    %2670 = vmatprep.subr.bf16.mxu0 0
    %2671 = vmatpush1.bf16.msra.mxu0 0
    %2672 = vmatprep.subr.bf16.mxu0 0
    %2673 = vmatpush1.bf16.msra.mxu0 0
    %2674 = vmatprep.subr.bf16.mxu0 0
    %2675 = vmatpush1.bf16.msra.mxu0 0
    %2676 = vmatprep.subr.bf16.mxu0 0
    %2677 = vmatpush1.bf16.msra.mxu0 %v2658
    %2678 = vmatprep.subr.bf16.mxu0 0
    %2679 = vmatpush1.bf16.msra.mxu0 %v2657
    %2680 = vmatprep.subr.bf16.mxu0 0
    %2681 = vmatpush2.bf16.msra.mxu0 0
    %2682 = vmatprep.subr.bf16.mxu0 0
    %2683 = vmatpush2.bf16.msra.mxu0 0
    %2684 = vmatprep.subr.bf16.mxu0 0
    %2685 = vmatpush2.bf16.msra.mxu0 0
    %2686 = vmatprep.subr.bf16.mxu0 0
    %2687 = vmatpush2.bf16.msra.mxu0 0
    %2688 = vmatprep.subr.bf16.mxu0 0
    %2689 = vmatpush2.bf16.msra.mxu0 0
    %2690 = vmatprep.subr.bf16.mxu0 0
    %2691 = vmatpush2.bf16.msra.mxu0 0
    %2692 = vmatprep.subr.bf16.mxu0 0
    %2693 = vmatpush2.bf16.msra.mxu0 0
    %2694 = vmatprep.subr.bf16.mxu0 0
    %2695 = vmatpush2.bf16.msra.mxu0 0
    %2696 = vmatprep.mubr.bf16.mxu0 0
    %2697 = vmatmul.mubr.bf16.gmra.mxu0 %v2662
    %v2698 = vpop.f32.mrf.mxu0
    %v2699 = vadd.f32 %v2642, %v2698
    %v2700 = vpop.f32.mrf.mxu0
    %v2701 = vpop.f32.mrf.mxu0
    %v2702 = vadd.f32 %v2642, %v2701
    %v2703 = vpop.f32.mrf.mxu0
    %2704 = vdwg.mxu0
    %v2705 = vadd.f32 %v2699, %v1496
    %v2706 = vadd.f32 %v2702, %v1497
    %v2707 = vld [vmem:[#allocation20] sm:$0x1]
    %v2708 = vld [vmem:[#allocation21] sm:$0x1]
    %v2709 = vsel %vm274, %v2705, 0.0
    %2710 = vadd.xlane.f32.xlu0 %v2709
    %v2711 = vpop.xlane.xlu0 %2710
    %v2712 = vsel %vm274, %v2706, 0.0
    %2713 = vadd.xlane.f32.xlu0 %v2712
    %v2714 = vpop.xlane.xlu0 %2713
    %v2715 = vmul.f32 %v2711, %v1461
    %v2716 = vmul.f32 %v2714, %v1461
    %v2717 = vsub.f32 %v2705, %v2715
    %v2718 = vsub.f32 %v2706, %v2716
    %v2719 = vmul.f32 %v2717, %v2717
    %v2720 = vmul.f32 %v2718, %v2718
    %v2721 = vsel %vm274, %v2719, 0.0
    %2722 = vadd.xlane.f32.xlu0 %v2721
    %v2723 = vpop.xlane.xlu0 %2722
    %v2724 = vsel %vm274, %v2720, 0.0
    %2725 = vadd.xlane.f32.xlu0 %v2724
    %v2726 = vpop.xlane.xlu0 %2725
    %v2727 = vmul.f32 %v2723, %v1461
    %v2728 = vmul.f32 %v2726, %v1461
    %v2729 = vadd.f32 %v2727, 1e-05
    %v2730 = vadd.f32 %v2728, 1e-05
    %v2731 = vrsqrt.pop %v2729
    %v2732 = vrsqrt.pop %v2730
    %v2733 = vmul.f32 %v2717, %v2731
    %v2734 = vmul.f32 %v2718, %v2732
    %v2736 = vlaneseq
    %v2737 = vshrl.u32 %v2736, 7
    %v2738 = vsub.s32 0, %v2737
    %v2739 = vrot.slane %v2707, %v2738
    %v2741 = vmul.f32 %v2733, %v2739
    %v2742 = vmul.f32 %v2734, %v2739
    %v2744 = vlaneseq
    %v2745 = vshrl.u32 %v2744, 7
    %v2746 = vsub.s32 0, %v2745
    %v2747 = vrot.slane %v2708, %v2746
    %v2749 = vadd.f32 %v2741, %v2747
    %v2750 = vadd.f32 %v2742, %v2747
    %v2751 = vpack.c.bf16 %v2750, %v2749
    %v2752 = vld [vmem:[#allocation23] sm:$0xf]
    %v2753 = vld [vmem:[#allocation23 + $0x4] sm:$0xf]
    %v2754 = vld [vmem:[#allocation23 + $0x8] sm:$0xf]
    %v2755 = vld [vmem:[#allocation23 + $0xc] sm:$0xf]
    %v2756 = vld [vmem:[%s19] sm:$0x1]
    %v2758 = vlaneseq
    %v2759 = vshrl.u32 %v2758, 7
    %v2760 = vsub.s32 0, %v2759
    %v2761 = vrot.slane %v2756, %v2760
    %v2767 = vunpack.c.l.b16 %v2752
    %v2768 = vunpack.c.l.b16 %v2753
    %v2769 = vunpack.c.l.b16 %v2754
    %v2770 = vunpack.c.l.b16 %v2755
    %v2771 = vpack.c.b16 %v2768, %v2767
    %v2772 = vpack.c.b16 %v2770, %v2769
    %v2776 = vsel %vm274, %v2751, 0
    %2778 = vmatprep.subr.bf16.mxu0 0
    %2779 = vmatpush1.bf16.msra.mxu0 0
    %2780 = vmatprep.subr.bf16.mxu0 0
    %2781 = vmatpush1.bf16.msra.mxu0 0
    %2782 = vmatprep.subr.bf16.mxu0 0
    %2783 = vmatpush1.bf16.msra.mxu0 0
    %2784 = vmatprep.subr.bf16.mxu0 0
    %2785 = vmatpush1.bf16.msra.mxu0 0
    %2786 = vmatprep.subr.bf16.mxu0 0
    %2787 = vmatpush1.bf16.msra.mxu0 0
    %2788 = vmatprep.subr.bf16.mxu0 0
    %2789 = vmatpush1.bf16.msra.mxu0 0
    %2790 = vmatprep.subr.bf16.mxu0 0
    %2791 = vmatpush1.bf16.msra.mxu0 %v2772
    %2792 = vmatprep.subr.bf16.mxu0 0
    %2793 = vmatpush1.bf16.msra.mxu0 %v2771
    %2794 = vmatprep.subr.bf16.mxu0 0
    %2795 = vmatpush2.bf16.msra.mxu0 0
    %2796 = vmatprep.subr.bf16.mxu0 0
    %2797 = vmatpush2.bf16.msra.mxu0 0
    %2798 = vmatprep.subr.bf16.mxu0 0
    %2799 = vmatpush2.bf16.msra.mxu0 0
    %2800 = vmatprep.subr.bf16.mxu0 0
    %2801 = vmatpush2.bf16.msra.mxu0 0
    %2802 = vmatprep.subr.bf16.mxu0 0
    %2803 = vmatpush2.bf16.msra.mxu0 0
    %2804 = vmatprep.subr.bf16.mxu0 0
    %2805 = vmatpush2.bf16.msra.mxu0 0
    %2806 = vmatprep.subr.bf16.mxu0 0
    %2807 = vmatpush2.bf16.msra.mxu0 0
    %2808 = vmatprep.subr.bf16.mxu0 0
    %2809 = vmatpush2.bf16.msra.mxu0 0
    %2810 = vmatprep.mubr.bf16.mxu0 0
    %2811 = vmatmul.mubr.bf16.gmra.mxu0 %v2776
    %v2812 = vpop.f32.mrf.mxu0
    %v2813 = vadd.f32 %v2761, %v2812
    %v2814 = vpop.f32.mrf.mxu0
    %v2815 = vpop.f32.mrf.mxu0
    %v2816 = vadd.f32 %v2761, %v2815
    %v2817 = vpop.f32.mrf.mxu0
    %2818 = vdwg.mxu0
    %v2819 = vmax.f32 %v2813, 0.0
    %v2820 = vmax.f32 %v2816, 0.0
    %v2821 = vpack.c.bf16 %v2820, %v2819
    %v2822 = vld [vmem:[%s20] sm:$0xf]
    %v2823 = vld [vmem:[%s20 + $0x4] sm:$0xf]
    %v2824 = vld [vmem:[%s20 + $0x8] sm:$0xf]
    %v2825 = vld [vmem:[%s20 + $0xc] sm:$0xf]
    %v2826 = vld [vmem:[%s20 + $0x10] sm:$0xf]
    %v2827 = vld [vmem:[%s20 + $0x14] sm:$0xf]
    %v2828 = vld [vmem:[%s20 + $0x18] sm:$0xf]
    %v2829 = vld [vmem:[%s20 + $0x1c] sm:$0xf]
    %v2830 = vld [vmem:[%s20 + $0x20] sm:$0xf]
    %v2831 = vld [vmem:[%s20 + $0x24] sm:$0xf]
    %v2832 = vld [vmem:[%s20 + $0x28] sm:$0xf]
    %v2833 = vld [vmem:[%s20 + $0x2c] sm:$0xf]
    %v2834 = vld [vmem:[%s20 + $0x30] sm:$0xf]
    %v2835 = vld [vmem:[%s20 + $0x34] sm:$0xf]
    %v2836 = vld [vmem:[%s20 + $0x38] sm:$0xf]
    %v2837 = vld [vmem:[%s20 + $0x3c] sm:$0xf]
    %v2838 = vld [vmem:[%s21] sm:$0x1]
    %v2840 = vlaneseq
    %v2841 = vshrl.u32 %v2840, 7
    %v2842 = vsub.s32 0, %v2841
    %v2843 = vrot.slane %v2838, %v2842
    %v2861 = vunpack.c.l.b16 %v2822
    %v2862 = vunpack.c.l.b16 %v2823
    %v2863 = vunpack.c.l.b16 %v2824
    %v2864 = vunpack.c.l.b16 %v2825
    %v2865 = vunpack.c.l.b16 %v2826
    %v2866 = vunpack.c.l.b16 %v2827
    %v2867 = vunpack.c.l.b16 %v2828
    %v2868 = vunpack.c.l.b16 %v2829
    %v2869 = vunpack.c.l.b16 %v2830
    %v2870 = vunpack.c.l.b16 %v2831
    %v2871 = vunpack.c.l.b16 %v2832
    %v2872 = vunpack.c.l.b16 %v2833
    %v2873 = vunpack.c.l.b16 %v2834
    %v2874 = vunpack.c.l.b16 %v2835
    %v2875 = vunpack.c.l.b16 %v2836
    %v2876 = vunpack.c.l.b16 %v2837
    %v2877 = vpack.c.b16 %v2862, %v2861
    %v2878 = vpack.c.b16 %v2864, %v2863
    %v2879 = vpack.c.b16 %v2866, %v2865
    %v2880 = vpack.c.b16 %v2868, %v2867
    %v2881 = vpack.c.b16 %v2870, %v2869
    %v2882 = vpack.c.b16 %v2872, %v2871
    %v2883 = vpack.c.b16 %v2874, %v2873
    %v2884 = vpack.c.b16 %v2876, %v2875
    %2893 = vmatprep.subr.bf16.mxu0 0
    %2894 = vmatpush1.bf16.msra.mxu0 %v2884
    %2895 = vmatprep.subr.bf16.mxu0 0
    %2896 = vmatpush1.bf16.msra.mxu0 %v2883
    %2897 = vmatprep.subr.bf16.mxu0 0
    %2898 = vmatpush1.bf16.msra.mxu0 %v2882
    %2899 = vmatprep.subr.bf16.mxu0 0
    %2900 = vmatpush1.bf16.msra.mxu0 %v2881
    %2901 = vmatprep.subr.bf16.mxu0 0
    %2902 = vmatpush1.bf16.msra.mxu0 %v2880
    %2903 = vmatprep.subr.bf16.mxu0 0
    %2904 = vmatpush1.bf16.msra.mxu0 %v2879
    %2905 = vmatprep.subr.bf16.mxu0 0
    %2906 = vmatpush1.bf16.msra.mxu0 %v2878
    %2907 = vmatprep.subr.bf16.mxu0 0
    %2908 = vmatpush1.bf16.msra.mxu0 %v2877
    %2909 = vmatprep.subr.bf16.mxu0 0
    %2910 = vmatpush2.bf16.msra.mxu0 0
    %2911 = vmatprep.subr.bf16.mxu0 0
    %2912 = vmatpush2.bf16.msra.mxu0 0
    %2913 = vmatprep.subr.bf16.mxu0 0
    %2914 = vmatpush2.bf16.msra.mxu0 0
    %2915 = vmatprep.subr.bf16.mxu0 0
    %2916 = vmatpush2.bf16.msra.mxu0 0
    %2917 = vmatprep.subr.bf16.mxu0 0
    %2918 = vmatpush2.bf16.msra.mxu0 0
    %2919 = vmatprep.subr.bf16.mxu0 0
    %2920 = vmatpush2.bf16.msra.mxu0 0
    %2921 = vmatprep.subr.bf16.mxu0 0
    %2922 = vmatpush2.bf16.msra.mxu0 0
    %2923 = vmatprep.subr.bf16.mxu0 0
    %2924 = vmatpush2.bf16.msra.mxu0 0
    %2925 = vmatprep.mubr.bf16.mxu0 0
    %2926 = vmatmul.mubr.bf16.gmra.mxu0 %v2821
    %v2927 = vpop.f32.mrf.mxu0
    %v2928 = vadd.f32 %v2843, %v2927
    %v2929 = vpop.f32.mrf.mxu0
    %v2930 = vpop.f32.mrf.mxu0
    %v2931 = vadd.f32 %v2843, %v2930
    %v2932 = vpop.f32.mrf.mxu0
    %2933 = vdwg.mxu0
    %v2934 = vadd.f32 %v2928, %v2749
    %v2935 = vadd.f32 %v2931, %v2750
    %v2936 = vld [vmem:[%s22] sm:$0x1]
    %v2937 = vld [vmem:[%s23] sm:$0x1]
    %v2938 = vsel %vm274, %v2934, 0.0
    %2939 = vadd.xlane.f32.xlu0 %v2938
    %v2940 = vpop.xlane.xlu0 %2939
    %v2941 = vsel %vm274, %v2935, 0.0
    %2942 = vadd.xlane.f32.xlu0 %v2941
    %v2943 = vpop.xlane.xlu0 %2942
    %v2944 = vmul.f32 %v2940, %v1461
    %v2945 = vmul.f32 %v2943, %v1461
    %v2946 = vsub.f32 %v2934, %v2944
    %v2947 = vsub.f32 %v2935, %v2945
    %v2948 = vmul.f32 %v2946, %v2946
    %v2949 = vmul.f32 %v2947, %v2947
    %v2950 = vsel %vm274, %v2948, 0.0
    %2951 = vadd.xlane.f32.xlu0 %v2950
    %v2952 = vpop.xlane.xlu0 %2951
    %v2953 = vsel %vm274, %v2949, 0.0
    %2954 = vadd.xlane.f32.xlu0 %v2953
    %v2955 = vpop.xlane.xlu0 %2954
    %v2956 = vmul.f32 %v2952, %v1461
    %v2957 = vmul.f32 %v2955, %v1461
    %v2958 = vadd.f32 %v2956, 1e-05
    %v2959 = vadd.f32 %v2957, 1e-05
    %v2960 = vrsqrt.pop %v2958
    %v2961 = vrsqrt.pop %v2959
    %v2962 = vmul.f32 %v2946, %v2960
    %v2963 = vmul.f32 %v2947, %v2961
    %v2965 = vlaneseq
    %v2966 = vshrl.u32 %v2965, 7
    %v2967 = vsub.s32 0, %v2966
    %v2968 = vrot.slane %v2936, %v2967
    %v2970 = vmul.f32 %v2962, %v2968
    %v2971 = vmul.f32 %v2963, %v2968
    %v2973 = vlaneseq
    %v2974 = vshrl.u32 %v2973, 7
    %v2975 = vsub.s32 0, %v2974
    %v2976 = vrot.slane %v2937, %v2975
    %v2978 = vadd.f32 %v2970, %v2976
    %v2979 = vadd.f32 %v2971, %v2976
    %2980 = vst.msk [vmem:[#allocation24] sm:$0xff] %vm274, %v2978
    %2981 = vst.msk [vmem:[#allocation24 + $0x8] sm:$0xff] %vm274, %v2979
    // Predicated region
    $region150: #{tpu_custom_call.1} parent=1 // pred_check
      _
    $region151: #{tpu_custom_call.1} parent=1 // pred_check_branch
      %2983 = sbr.rel (0) target = $region153
    $region152: #{tpu_custom_call.1} parent=1 // pred_region
      %s2985 = ssub.s32 256, 256
      %2986 = vsyncadd [#allocation5], %s2985
      %s2987 = sshll.u32 [#allocation24], 4
      %s2988 = int_to_ptr.vmem [resolvable:$true] %s2987
      %2993 = dma.vmem_to_hbm [thread:$0]  %s2988, 256, %s24, [#allocation5], 128, 128, 8
    $region153: #{tpu_custom_call.1} parent=1 // pred_fallthru
      _
    // Predicated region
    $region154: #{tpu_custom_call.1} parent=1 // pred_check
      _
    $region155: #{tpu_custom_call.1} parent=1 // pred_check_branch
      %2995 = sbr.rel (0) target = $region157
    $region156: #{tpu_custom_call.1} parent=1 // pred_region
      %2996 = dma.done [#allocation5], 256
    $region157: #{tpu_custom_call.1} parent=1 // pred_fallthru
      _
    %2997 = vsyncpa [#allocation4], 1
    %2998 = vsyncpa [#allocation7], 1
    %2999 = vsyncpa [#allocation10], 1
    %3000 = vsyncpa [#allocation13], 1
    %3001 = vsyncpa [#allocation16], 1
    %3002 = vsyncpa [#allocation19], 1
    %3003 = vsyncpa [#allocation22], 1
    %3004 = vsyncpa [#allocation5], 1

// kernel: tpu_custom_call.1
$region0: #{tpu_custom_call.1}
  #allocation0 [shape = 'u32[]', space=smem, size = 0x4, offset = 0x4, fixed_abs, tag = 'smem constant byte address 0x4 - core index']
  #allocation1 [shape = 'u32[144,128]{1,0:T(1,128)}', space=vmem, size = 0x12000, scoped, tag = 'internal scratch']
  #allocation2 [shape = 'bf16[16,32]{1,0:T(8,128)(2,1)}', space=vmem, size = 0x1000, scoped, tag = 'scratch operand']
  %s0 = inlined_call_operand.vmem [shape: f32[2,8,32], index: 0, kind: input, shape index: {}]
  %s1 = inlined_call_operand.vmem [shape: f32[2,8,32], index: 1, kind: input, shape index: {}]
  %s2 = inlined_call_operand.vmem [shape: f32[2,8,32], index: 2, kind: input, shape index: {}]
  %s3 = inlined_call_operand.hbm [shape: f32[2,1,8], index: 3, kind: input, shape index: {}]
  %s4 = inlined_call_operand.vmem [shape: bf16[32,32], index: 4, kind: input, shape index: {}]
  %s5 = inlined_call_operand.vmem [shape: bf16[32,32], index: 5, kind: input, shape index: {}]
  %s6 = inlined_call_operand.hbm [shape: bf16[32,32], index: 6, kind: input, shape index: {}]
  %s7 = inlined_call_operand.hbm [shape: bf16[32,32], index: 7, kind: input, shape index: {}]
  %s8 = inlined_call_operand.hbm [shape: f32[1,32], index: 8, kind: input, shape index: {}]
  %s9 = inlined_call_operand.hbm [shape: f32[1,32], index: 9, kind: input, shape index: {}]
  %s10 = inlined_call_operand.hbm [shape: f32[1,32], index: 10, kind: input, shape index: {}]
  %s11 = inlined_call_operand.vmem [shape: bf16[32,32], index: 11, kind: input, shape index: {}]
  %s12 = inlined_call_operand.hbm [shape: bf16[32,32], index: 12, kind: input, shape index: {}]
  %s13 = inlined_call_operand.hbm [shape: bf16[32,32], index: 13, kind: input, shape index: {}]
  %s14 = inlined_call_operand.hbm [shape: bf16[32,32], index: 14, kind: input, shape index: {}]
  %s15 = inlined_call_operand.hbm [shape: f32[1,32], index: 15, kind: input, shape index: {}]
  %s16 = inlined_call_operand.hbm [shape: f32[1,32], index: 16, kind: input, shape index: {}]
  %s17 = inlined_call_operand.hbm [shape: f32[1,32], index: 17, kind: input, shape index: {}]
  %s18 = inlined_call_operand.hbm [shape: bf16[32,128], index: 18, kind: input, shape index: {}]
  %s19 = inlined_call_operand.vmem [shape: f32[1,128], index: 19, kind: input, shape index: {}]
  %s20 = inlined_call_operand.vmem [shape: bf16[128,32], index: 20, kind: input, shape index: {}]
  %s21 = inlined_call_operand.vmem [shape: f32[1,32], index: 21, kind: input, shape index: {}]
  %s22 = inlined_call_operand.vmem [shape: f32[1,32], index: 22, kind: input, shape index: {}]
  %s23 = inlined_call_operand.vmem [shape: f32[1,32], index: 23, kind: input, shape index: {}]
  %s24 = inlined_call_operand.hbm [shape: f32[2,8,32], index: 24, kind: output, shape index: {}]
  %s25 = sld [smem:[#allocation0]]
  $region158: #{tpu_custom_call.1} parent=0
    _
  %s27 = ssub.s32 1, %s25
  %s28 = scalar_select 0, %s27, %s25
  $region1: #{tpu_custom_call.1} parent=0
    #allocation3 [shape = 'u8[1024]{0}', space=vmem, size = 0x400, scoped, tag = 'input window, operand 3, single buffered']
    #allocation4 [shape = 's32[1]{0}', space=sflag, size = 0x4, scoped, tag = 'scoped memory for tpu_custom_call.1']
    #allocation5 [shape = 's32[1]{0}', space=sflag, size = 0x4, scoped, tag = 'scoped memory for tpu_custom_call.1']
    #allocation6 [shape = 'u8[8192]{0}', space=vmem, size = 0x2000, scoped, tag = 'input window, operand 6, single buffered']
    #allocation7 [shape = 's32[1]{0}', space=sflag, size = 0x4, scoped, tag = 'scoped memory for tpu_custom_call.1']
    #allocation8 [shape = 'u8[8192]{0}', space=vmem, size = 0x2000, scoped, tag = 'input window, operand 7, single buffered']
    #allocation9 [shape = 'u8[512]{0}', space=vmem, size = 0x400, scoped, tag = 'input window, operand 8, single buffered']
    #allocation10 [shape = 's32[1]{0}', space=sflag, size = 0x4, scoped, tag = 'scoped memory for tpu_custom_call.1']
    #allocation11 [shape = 'u8[512]{0}', space=vmem, size = 0x400, scoped, tag = 'input window, operand 9, single buffered']
    #allocation12 [shape = 'u8[512]{0}', space=vmem, size = 0x400, scoped, tag = 'input window, operand 10, single buffered']
    #allocation13 [shape = 's32[1]{0}', space=sflag, size = 0x4, scoped, tag = 'scoped memory for tpu_custom_call.1']
    #allocation14 [shape = 'u8[8192]{0}', space=vmem, size = 0x2000, scoped, tag = 'input window, operand 12, single buffered']
    #allocation15 [shape = 'u8[8192]{0}', space=vmem, size = 0x2000, scoped, tag = 'input window, operand 13, single buffered']
    #allocation16 [shape = 's32[1]{0}', space=sflag, size = 0x4, scoped, tag = 'scoped memory for tpu_custom_call.1']
    #allocation17 [shape = 'u8[8192]{0}', space=vmem, size = 0x2000, scoped, tag = 'input window, operand 14, single buffered']
    #allocation18 [shape = 'u8[512]{0}', space=vmem, size = 0x400, scoped, tag = 'input window, operand 15, single buffered']
    #allocation19 [shape = 's32[1]{0}', space=sflag, size = 0x4, scoped, tag = 'scoped memory for tpu_custom_call.1']
    #allocation20 [shape = 'u8[512]{0}', space=vmem, size = 0x400, scoped, tag = 'input window, operand 16, single buffered']
    #allocation21 [shape = 'u8[512]{0}', space=vmem, size = 0x400, scoped, tag = 'input window, operand 17, single buffered']
    #allocation22 [shape = 's32[1]{0}', space=sflag, size = 0x4, scoped, tag = 'scoped memory for tpu_custom_call.1']
    #allocation23 [shape = 'u8[8192]{0}', space=vmem, size = 0x2000, scoped, tag = 'input window, operand 18, single buffered']
    #allocation24 [shape = 'u8[8192]{0}', space=vmem, size = 0x2000, scoped, tag = 'output window, operand 0, single buffered']
    %29 = vsyncpa [#allocation4], 0
    %30 = vsyncpa [#allocation7], 0
    %31 = vsyncpa [#allocation10], 0
    %32 = vsyncpa [#allocation13], 0
    %33 = vsyncpa [#allocation16], 0
    %34 = vsyncpa [#allocation19], 0
    %35 = vsyncpa [#allocation22], 0
    %36 = vsyncpa [#allocation5], 0
    // Predicated region
    $region2: #{tpu_custom_call.1} parent=1 // pred_check
      _
    $region3: #{tpu_custom_call.1} parent=1 // pred_check_branch
      %38 = sbr.rel (0) target = $region5
    $region4: #{tpu_custom_call.1} parent=1 // pred_region
      _
    $region5: #{tpu_custom_call.1} parent=1 // pred_fallthru
      _
    // Predicated region
    $region6: #{tpu_custom_call.1} parent=1 // pred_check
      _
    $region7: #{tpu_custom_call.1} parent=1 // pred_check_branch
      %40 = sbr.rel (0) target = $region9
    $region8: #{tpu_custom_call.1} parent=1 // pred_region
      _
    $region9: #{tpu_custom_call.1} parent=1 // pred_fallthru
      _
    // Predicated region
    $region10: #{tpu_custom_call.1} parent=1 // pred_check
      _
    $region11: #{tpu_custom_call.1} parent=1 // pred_check_branch
      %42 = sbr.rel (0) target = $region13
    $region12: #{tpu_custom_call.1} parent=1 // pred_region
      _
    $region13: #{tpu_custom_call.1} parent=1 // pred_fallthru
      _
    // Predicated region
    $region14: #{tpu_custom_call.1} parent=1 // pred_check
      _
    $region15: #{tpu_custom_call.1} parent=1 // pred_check_branch
      %44 = sbr.rel (0) target = $region17
    $region16: #{tpu_custom_call.1} parent=1 // pred_region
      %s46 = ssub.s32 32, 32
      %47 = vsyncadd [#allocation4], %s46
      %s48 = sshll.u32 [#allocation3], 4
      %s49 = int_to_ptr.vmem [resolvable:$true] %s48
      %54 = dma.hbm_to_vmem [thread:$0]  %s3, 32, %s49, [#allocation4], 16, 16, 1
    $region17: #{tpu_custom_call.1} parent=1 // pred_fallthru
      _
    // Predicated region
    $region18: #{tpu_custom_call.1} parent=1 // pred_check
      _
    $region19: #{tpu_custom_call.1} parent=1 // pred_check_branch
      %56 = sbr.rel (0) target = $region21
    $region20: #{tpu_custom_call.1} parent=1 // pred_region
      _
    $region21: #{tpu_custom_call.1} parent=1 // pred_fallthru
      _
    // Predicated region
    $region22: #{tpu_custom_call.1} parent=1 // pred_check
      _
    $region23: #{tpu_custom_call.1} parent=1 // pred_check_branch
      %58 = sbr.rel (0) target = $region25
    $region24: #{tpu_custom_call.1} parent=1 // pred_region
      _
    $region25: #{tpu_custom_call.1} parent=1 // pred_fallthru
      _
    // Predicated region
    $region26: #{tpu_custom_call.1} parent=1 // pred_check
      _
    $region27: #{tpu_custom_call.1} parent=1 // pred_check_branch
      %60 = sbr.rel (0) target = $region29
    $region28: #{tpu_custom_call.1} parent=1 // pred_region
      %s62 = ssub.s32 256, 256
      %63 = vsyncadd [#allocation7], %s62
      %s64 = sshll.u32 [#allocation6], 4
      %s65 = int_to_ptr.vmem [resolvable:$true] %s64
      %70 = dma.hbm_to_vmem [thread:$0]  %s6, 256, %s65, [#allocation7], 64, 64, 4
    $region29: #{tpu_custom_call.1} parent=1 // pred_fallthru
      _
    // Predicated region
    $region30: #{tpu_custom_call.1} parent=1 // pred_check
      _
    $region31: #{tpu_custom_call.1} parent=1 // pred_check_branch
      %72 = sbr.rel (0) target = $region33
    $region32: #{tpu_custom_call.1} parent=1 // pred_region
      %s74 = ssub.s32 256, 256
      %75 = vsyncadd [#allocation7], %s74
      %s76 = sshll.u32 [#allocation8], 4
      %s77 = int_to_ptr.vmem [resolvable:$true] %s76
      %82 = dma.hbm_to_vmem [thread:$0]  %s7, 256, %s77, [#allocation7], 64, 64, 4
    $region33: #{tpu_custom_call.1} parent=1 // pred_fallthru
      _
    // Predicated region
    $region34: #{tpu_custom_call.1} parent=1 // pred_check
      _
    $region35: #{tpu_custom_call.1} parent=1 // pred_check_branch
      %84 = sbr.rel (0) target = $region37
    $region36: #{tpu_custom_call.1} parent=1 // pred_region
      %s86 = ssub.s32 16, 16
      %87 = vsyncadd [#allocation10], %s86
      %s89 = sshll.u32 [#allocation9], 4
      %s90 = int_to_ptr.vmem [resolvable:$true] %s89
      %92 = dma.hbm_to_vmem [thread:$0]  %s8, 16, %s90, [#allocation10]
    $region37: #{tpu_custom_call.1} parent=1 // pred_fallthru
      _
    // Predicated region
    $region38: #{tpu_custom_call.1} parent=1 // pred_check
      _
    $region39: #{tpu_custom_call.1} parent=1 // pred_check_branch
      %94 = sbr.rel (0) target = $region41
    $region40: #{tpu_custom_call.1} parent=1 // pred_region
      %s96 = ssub.s32 16, 16
      %97 = vsyncadd [#allocation10], %s96
      %s99 = sshll.u32 [#allocation11], 4
      %s100 = int_to_ptr.vmem [resolvable:$true] %s99
      %102 = dma.hbm_to_vmem [thread:$0]  %s9, 16, %s100, [#allocation10]
    $region41: #{tpu_custom_call.1} parent=1 // pred_fallthru
      _
    // Predicated region
    $region42: #{tpu_custom_call.1} parent=1 // pred_check
      _
    $region43: #{tpu_custom_call.1} parent=1 // pred_check_branch
      %104 = sbr.rel (0) target = $region45
    $region44: #{tpu_custom_call.1} parent=1 // pred_region
      %s106 = ssub.s32 16, 16
      %107 = vsyncadd [#allocation13], %s106
      %s109 = sshll.u32 [#allocation12], 4
      %s110 = int_to_ptr.vmem [resolvable:$true] %s109
      %112 = dma.hbm_to_vmem [thread:$0]  %s10, 16, %s110, [#allocation13]
    $region45: #{tpu_custom_call.1} parent=1 // pred_fallthru
      _
    // Predicated region
    $region46: #{tpu_custom_call.1} parent=1 // pred_check
      _
    $region47: #{tpu_custom_call.1} parent=1 // pred_check_branch
      %114 = sbr.rel (0) target = $region49
    $region48: #{tpu_custom_call.1} parent=1 // pred_region
      _
    $region49: #{tpu_custom_call.1} parent=1 // pred_fallthru
      _
    // Predicated region
    $region50: #{tpu_custom_call.1} parent=1 // pred_check
      _
    $region51: #{tpu_custom_call.1} parent=1 // pred_check_branch
      %116 = sbr.rel (0) target = $region53
    $region52: #{tpu_custom_call.1} parent=1 // pred_region
      %s118 = ssub.s32 256, 256
      %119 = vsyncadd [#allocation13], %s118
      %s120 = sshll.u32 [#allocation14], 4
      %s121 = int_to_ptr.vmem [resolvable:$true] %s120
      %126 = dma.hbm_to_vmem [thread:$0]  %s12, 256, %s121, [#allocation13], 64, 64, 4
    $region53: #{tpu_custom_call.1} parent=1 // pred_fallthru
      _
    // Predicated region
    $region54: #{tpu_custom_call.1} parent=1 // pred_check
      _
    $region55: #{tpu_custom_call.1} parent=1 // pred_check_branch
      %128 = sbr.rel (0) target = $region57
    $region56: #{tpu_custom_call.1} parent=1 // pred_region
      %s130 = ssub.s32 256, 256
      %131 = vsyncadd [#allocation16], %s130
      %s132 = sshll.u32 [#allocation15], 4
      %s133 = int_to_ptr.vmem [resolvable:$true] %s132
      %138 = dma.hbm_to_vmem [thread:$0]  %s13, 256, %s133, [#allocation16], 64, 64, 4
    $region57: #{tpu_custom_call.1} parent=1 // pred_fallthru
      _
    // Predicated region
    $region58: #{tpu_custom_call.1} parent=1 // pred_check
      _
    $region59: #{tpu_custom_call.1} parent=1 // pred_check_branch
      %140 = sbr.rel (0) target = $region61
    $region60: #{tpu_custom_call.1} parent=1 // pred_region
      %s142 = ssub.s32 256, 256
      %143 = vsyncadd [#allocation16], %s142
      %s144 = sshll.u32 [#allocation17], 4
      %s145 = int_to_ptr.vmem [resolvable:$true] %s144
      %150 = dma.hbm_to_vmem [thread:$0]  %s14, 256, %s145, [#allocation16], 64, 64, 4
    $region61: #{tpu_custom_call.1} parent=1 // pred_fallthru
      _
    // Predicated region
    $region62: #{tpu_custom_call.1} parent=1 // pred_check
      _
    $region63: #{tpu_custom_call.1} parent=1 // pred_check_branch
      %152 = sbr.rel (0) target = $region65
    $region64: #{tpu_custom_call.1} parent=1 // pred_region
      %s154 = ssub.s32 16, 16
      %155 = vsyncadd [#allocation19], %s154
      %s157 = sshll.u32 [#allocation18], 4
      %s158 = int_to_ptr.vmem [resolvable:$true] %s157
      %160 = dma.hbm_to_vmem [thread:$0]  %s15, 16, %s158, [#allocation19]
    $region65: #{tpu_custom_call.1} parent=1 // pred_fallthru
      _
    // Predicated region
    $region66: #{tpu_custom_call.1} parent=1 // pred_check
      _
    $region67: #{tpu_custom_call.1} parent=1 // pred_check_branch
      %162 = sbr.rel (0) target = $region69
    $region68: #{tpu_custom_call.1} parent=1 // pred_region
      %s164 = ssub.s32 16, 16
      %165 = vsyncadd [#allocation19], %s164
      %s167 = sshll.u32 [#allocation20], 4
      %s168 = int_to_ptr.vmem [resolvable:$true] %s167
      %170 = dma.hbm_to_vmem [thread:$0]  %s16, 16, %s168, [#allocation19]
    $region69: #{tpu_custom_call.1} parent=1 // pred_fallthru
      _
    // Predicated region
    $region70: #{tpu_custom_call.1} parent=1 // pred_check
      _
    $region71: #{tpu_custom_call.1} parent=1 // pred_check_branch
      %172 = sbr.rel (0) target = $region73
    $region72: #{tpu_custom_call.1} parent=1 // pred_region
      %s174 = ssub.s32 16, 16
      %175 = vsyncadd [#allocation22], %s174
      %s177 = sshll.u32 [#allocation21], 4
      %s178 = int_to_ptr.vmem [resolvable:$true] %s177
      %180 = dma.hbm_to_vmem [thread:$0]  %s17, 16, %s178, [#allocation22]
    $region73: #{tpu_custom_call.1} parent=1 // pred_fallthru
      _
    // Predicated region
    $region74: #{tpu_custom_call.1} parent=1 // pred_check
      _
    $region75: #{tpu_custom_call.1} parent=1 // pred_check_branch
      %182 = sbr.rel (0) target = $region77
    $region76: #{tpu_custom_call.1} parent=1 // pred_region
      %s184 = ssub.s32 256, 256
      %185 = vsyncadd [#allocation22], %s184
      %s186 = sshll.u32 [#allocation23], 4
      %s187 = int_to_ptr.vmem [resolvable:$true] %s186
      %192 = dma.hbm_to_vmem [thread:$0]  %s18, 256, %s187, [#allocation22], 64, 64, 4
    $region77: #{tpu_custom_call.1} parent=1 // pred_fallthru
      _
    // Predicated region
    $region78: #{tpu_custom_call.1} parent=1 // pred_check
      _
    $region79: #{tpu_custom_call.1} parent=1 // pred_check_branch
      %194 = sbr.rel (0) target = $region81
    $region80: #{tpu_custom_call.1} parent=1 // pred_region
      _
    $region81: #{tpu_custom_call.1} parent=1 // pred_fallthru
      _
    // Predicated region
    $region82: #{tpu_custom_call.1} parent=1 // pred_check
      _
    $region83: #{tpu_custom_call.1} parent=1 // pred_check_branch
      %196 = sbr.rel (0) target = $region85
    $region84: #{tpu_custom_call.1} parent=1 // pred_region
      _
    $region85: #{tpu_custom_call.1} parent=1 // pred_fallthru
      _
    // Predicated region
    $region86: #{tpu_custom_call.1} parent=1 // pred_check
      _
    $region87: #{tpu_custom_call.1} parent=1 // pred_check_branch
      %198 = sbr.rel (0) target = $region89
    $region88: #{tpu_custom_call.1} parent=1 // pred_region
      _
    $region89: #{tpu_custom_call.1} parent=1 // pred_fallthru
      _
    // Predicated region
    $region90: #{tpu_custom_call.1} parent=1 // pred_check
      _
    $region91: #{tpu_custom_call.1} parent=1 // pred_check_branch
      %200 = sbr.rel (0) target = $region93
    $region92: #{tpu_custom_call.1} parent=1 // pred_region
      _
    $region93: #{tpu_custom_call.1} parent=1 // pred_fallthru
      _
    // Predicated region
    $region94: #{tpu_custom_call.1} parent=1 // pred_check
      _
    $region95: #{tpu_custom_call.1} parent=1 // pred_check_branch
      %202 = sbr.rel (0) target = $region97
    $region96: #{tpu_custom_call.1} parent=1 // pred_region
      _
    $region97: #{tpu_custom_call.1} parent=1 // pred_fallthru
      _
    // Predicated region
    $region98: #{tpu_custom_call.1} parent=1 // pred_check
      _
    $region99: #{tpu_custom_call.1} parent=1 // pred_check_branch
      %204 = sbr.rel (0) target = $region101
    $region100: #{tpu_custom_call.1} parent=1 // pred_region
      %205 = dma.done [#allocation4], 32
    $region101: #{tpu_custom_call.1} parent=1 // pred_fallthru
      _
    // Predicated region
    $region102: #{tpu_custom_call.1} parent=1 // pred_check
      _
    $region103: #{tpu_custom_call.1} parent=1 // pred_check_branch
      %207 = sbr.rel (0) target = $region105
    $region104: #{tpu_custom_call.1} parent=1 // pred_region
      %208 = dma.done [#allocation7], 256
    $region105: #{tpu_custom_call.1} parent=1 // pred_fallthru
      _
    // Predicated region
    $region106: #{tpu_custom_call.1} parent=1 // pred_check
      _
    $region107: #{tpu_custom_call.1} parent=1 // pred_check_branch
      %210 = sbr.rel (0) target = $region109
    $region108: #{tpu_custom_call.1} parent=1 // pred_region
      %211 = dma.done [#allocation7], 256
    $region109: #{tpu_custom_call.1} parent=1 // pred_fallthru
      _
    // Predicated region
    $region110: #{tpu_custom_call.1} parent=1 // pred_check
      _
    $region111: #{tpu_custom_call.1} parent=1 // pred_check_branch
      %213 = sbr.rel (0) target = $region113
    $region112: #{tpu_custom_call.1} parent=1 // pred_region
      %214 = dma.done [#allocation10], 16
    $region113: #{tpu_custom_call.1} parent=1 // pred_fallthru
      _
    // Predicated region
    $region114: #{tpu_custom_call.1} parent=1 // pred_check
      _
    $region115: #{tpu_custom_call.1} parent=1 // pred_check_branch
      %216 = sbr.rel (0) target = $region117
    $region116: #{tpu_custom_call.1} parent=1 // pred_region
      %217 = dma.done [#allocation10], 16
    $region117: #{tpu_custom_call.1} parent=1 // pred_fallthru
      _
    // Predicated region
    $region118: #{tpu_custom_call.1} parent=1 // pred_check
      _
    $region119: #{tpu_custom_call.1} parent=1 // pred_check_branch
      %219 = sbr.rel (0) target = $region121
    $region120: #{tpu_custom_call.1} parent=1 // pred_region
      %220 = dma.done [#allocation13], 16
    $region121: #{tpu_custom_call.1} parent=1 // pred_fallthru
      _
    // Predicated region
    $region122: #{tpu_custom_call.1} parent=1 // pred_check
      _
    $region123: #{tpu_custom_call.1} parent=1 // pred_check_branch
      %222 = sbr.rel (0) target = $region125
    $region124: #{tpu_custom_call.1} parent=1 // pred_region
      %223 = dma.done [#allocation13], 256
    $region125: #{tpu_custom_call.1} parent=1 // pred_fallthru
      _
    // Predicated region
    $region126: #{tpu_custom_call.1} parent=1 // pred_check
      _
    $region127: #{tpu_custom_call.1} parent=1 // pred_check_branch
      %225 = sbr.rel (0) target = $region129
    $region128: #{tpu_custom_call.1} parent=1 // pred_region
      %226 = dma.done [#allocation16], 256
    $region129: #{tpu_custom_call.1} parent=1 // pred_fallthru
      _
    // Predicated region
    $region130: #{tpu_custom_call.1} parent=1 // pred_check
      _
    $region131: #{tpu_custom_call.1} parent=1 // pred_check_branch
      %228 = sbr.rel (0) target = $region133
    $region132: #{tpu_custom_call.1} parent=1 // pred_region
      %229 = dma.done [#allocation16], 256
    $region133: #{tpu_custom_call.1} parent=1 // pred_fallthru
      _
    // Predicated region
    $region134: #{tpu_custom_call.1} parent=1 // pred_check
      _
    $region135: #{tpu_custom_call.1} parent=1 // pred_check_branch
      %231 = sbr.rel (0) target = $region137
    $region136: #{tpu_custom_call.1} parent=1 // pred_region
      %232 = dma.done [#allocation19], 16
    $region137: #{tpu_custom_call.1} parent=1 // pred_fallthru
      _
    // Predicated region
    $region138: #{tpu_custom_call.1} parent=1 // pred_check
      _
    $region139: #{tpu_custom_call.1} parent=1 // pred_check_branch
      %234 = sbr.rel (0) target = $region141
    $region140: #{tpu_custom_call.1} parent=1 // pred_region
      %235 = dma.done [#allocation19], 16
    $region141: #{tpu_custom_call.1} parent=1 // pred_fallthru
      _
    // Predicated region
    $region142: #{tpu_custom_call.1} parent=1 // pred_check
      _
    $region143: #{tpu_custom_call.1} parent=1 // pred_check_branch
      %237 = sbr.rel (0) target = $region145
    $region144: #{tpu_custom_call.1} parent=1 // pred_region
      %238 = dma.done [#allocation22], 16
    $region145: #{tpu_custom_call.1} parent=1 // pred_fallthru
      _
    // Predicated region
    $region146: #{tpu_custom_call.1} parent=1 // pred_check
      _
    $region147: #{tpu_custom_call.1} parent=1 // pred_check_branch
      %240 = sbr.rel (0) target = $region149
    $region148: #{tpu_custom_call.1} parent=1 // pred_region
      %241 = dma.done [#allocation22], 256
    $region149: #{tpu_custom_call.1} parent=1 // pred_fallthru
      _
    %v243 = vld [vmem:[%s0] sm:$0xff]
    %v244 = vld [vmem:[%s0 + $0x8] sm:$0xff]
    %v245 = vld [vmem:[%s1] sm:$0xff]
    %v246 = vld [vmem:[%s1 + $0x8] sm:$0xff]
    %v247 = vld [vmem:[%s2] sm:$0xff]
    %v248 = vld [vmem:[%s2 + $0x8] sm:$0xff]
    %v249 = vlaneseq
    %v250 = vshrl.u32 %v249, 7
    %v251 = vlaneseq
    %v252 = vand.u32 %v251, 127
    %vm253 = vcmp.gt.s32.totalorder %v252, %v250
    %v254 = vsel %vm253, -1e+20, 0.0
    %v255 = vld [vmem:[#allocation3] sm:$0x1]
    %v256 = vld [vmem:[#allocation3 + $0x1] sm:$0x1]
    %v257 = vpack.c.bf16 %v244, %v243
    %v258 = vld [vmem:[%s4] sm:$0xf]
    %v259 = vld [vmem:[%s4 + $0x4] sm:$0xf]
    %v260 = vld [vmem:[%s4 + $0x8] sm:$0xf]
    %v261 = vld [vmem:[%s4 + $0xc] sm:$0xf]
    %v266 = vunpack.c.l.b16 %v258
    %v267 = vunpack.c.l.b16 %v259
    %v268 = vunpack.c.l.b16 %v260
    %v269 = vunpack.c.l.b16 %v261
    %v270 = vpack.c.b16 %v267, %v266
    %v271 = vpack.c.b16 %v269, %v268
    %vm274 = vcmask 261120
    %v276 = vsel %vm274, %v257, 0
    %278 = vmatprep.subr.bf16.mxu0 0
    %279 = vmatpush1.bf16.msra.mxu0 0
    %280 = vmatprep.subr.bf16.mxu0 0
    %281 = vmatpush1.bf16.msra.mxu0 0
    %282 = vmatprep.subr.bf16.mxu0 0
    %283 = vmatpush1.bf16.msra.mxu0 0
    %284 = vmatprep.subr.bf16.mxu0 0
    %285 = vmatpush1.bf16.msra.mxu0 0
    %286 = vmatprep.subr.bf16.mxu0 0
    %287 = vmatpush1.bf16.msra.mxu0 0
    %288 = vmatprep.subr.bf16.mxu0 0
    %289 = vmatpush1.bf16.msra.mxu0 0
    %290 = vmatprep.subr.bf16.mxu0 0
    %291 = vmatpush1.bf16.msra.mxu0 %v271
    %292 = vmatprep.subr.bf16.mxu0 0
    %293 = vmatpush1.bf16.msra.mxu0 %v270
    %294 = vmatprep.subr.bf16.mxu0 0
    %295 = vmatpush2.bf16.msra.mxu0 0
    %296 = vmatprep.subr.bf16.mxu0 0
    %297 = vmatpush2.bf16.msra.mxu0 0
    %298 = vmatprep.subr.bf16.mxu0 0
    %299 = vmatpush2.bf16.msra.mxu0 0
    %300 = vmatprep.subr.bf16.mxu0 0
    %301 = vmatpush2.bf16.msra.mxu0 0
    %302 = vmatprep.subr.bf16.mxu0 0
    %303 = vmatpush2.bf16.msra.mxu0 0
    %304 = vmatprep.subr.bf16.mxu0 0
    %305 = vmatpush2.bf16.msra.mxu0 0
    %306 = vmatprep.subr.bf16.mxu0 0
    %307 = vmatpush2.bf16.msra.mxu0 0
    %308 = vmatprep.subr.bf16.mxu0 0
    %309 = vmatpush2.bf16.msra.mxu0 0
    %310 = vmatprep.mubr.bf16.mxu0 0
    %311 = vmatmul.mubr.bf16.gmra.mxu0 %v276
    %v312 = vpop.f32.mrf.mxu0
    %v313 = vadd.f32 0.0, %v312
    %v314 = vpop.f32.mrf.mxu0
    %v315 = vpop.f32.mrf.mxu0
    %v316 = vadd.f32 0.0, %v315
    %v317 = vpop.f32.mrf.mxu0
    %318 = vdwg.mxu0
    %v319 = vld [vmem:[%s5] sm:$0xf]
    %v320 = vld [vmem:[%s5 + $0x4] sm:$0xf]
    %v321 = vld [vmem:[%s5 + $0x8] sm:$0xf]
    %v322 = vld [vmem:[%s5 + $0xc] sm:$0xf]
    %v327 = vunpack.c.l.b16 %v319
    %v328 = vunpack.c.l.b16 %v320
    %v329 = vunpack.c.l.b16 %v321
    %v330 = vunpack.c.l.b16 %v322
    %v331 = vpack.c.b16 %v328, %v327
    %v332 = vpack.c.b16 %v330, %v329
    %335 = vmatprep.subr.bf16.mxu0 0
    %336 = vmatpush1.bf16.msra.mxu0 0
    %337 = vmatprep.subr.bf16.mxu0 0
    %338 = vmatpush1.bf16.msra.mxu0 0
    %339 = vmatprep.subr.bf16.mxu0 0
    %340 = vmatpush1.bf16.msra.mxu0 0
    %341 = vmatprep.subr.bf16.mxu0 0
    %342 = vmatpush1.bf16.msra.mxu0 0
    %343 = vmatprep.subr.bf16.mxu0 0
    %344 = vmatpush1.bf16.msra.mxu0 0
    %345 = vmatprep.subr.bf16.mxu0 0
    %346 = vmatpush1.bf16.msra.mxu0 0
    %347 = vmatprep.subr.bf16.mxu0 0
    %348 = vmatpush1.bf16.msra.mxu0 %v332
    %349 = vmatprep.subr.bf16.mxu0 0
    %350 = vmatpush1.bf16.msra.mxu0 %v331
    %351 = vmatprep.subr.bf16.mxu0 0
    %352 = vmatpush2.bf16.msra.mxu0 0
    %353 = vmatprep.subr.bf16.mxu0 0
    %354 = vmatpush2.bf16.msra.mxu0 0
    %355 = vmatprep.subr.bf16.mxu0 0
    %356 = vmatpush2.bf16.msra.mxu0 0
    %357 = vmatprep.subr.bf16.mxu0 0
    %358 = vmatpush2.bf16.msra.mxu0 0
    %359 = vmatprep.subr.bf16.mxu0 0
    %360 = vmatpush2.bf16.msra.mxu0 0
    %361 = vmatprep.subr.bf16.mxu0 0
    %362 = vmatpush2.bf16.msra.mxu0 0
    %363 = vmatprep.subr.bf16.mxu0 0
    %364 = vmatpush2.bf16.msra.mxu0 0
    %365 = vmatprep.subr.bf16.mxu0 0
    %366 = vmatpush2.bf16.msra.mxu0 0
    %367 = vmatprep.mubr.bf16.mxu0 0
    %368 = vmatmul.mubr.bf16.gmra.mxu0 %v276
    %v369 = vpop.f32.mrf.mxu0
    %v370 = vadd.f32 0.0, %v369
    %v371 = vpop.f32.mrf.mxu0
    %v372 = vpop.f32.mrf.mxu0
    %v373 = vadd.f32 0.0, %v372
    %v374 = vpop.f32.mrf.mxu0
    %375 = vdwg.mxu0
    %v376 = vld [vmem:[#allocation6] sm:$0xf]
    %v377 = vld [vmem:[#allocation6 + $0x4] sm:$0xf]
    %v378 = vld [vmem:[#allocation6 + $0x8] sm:$0xf]
    %v379 = vld [vmem:[#allocation6 + $0xc] sm:$0xf]
    %v384 = vunpack.c.l.b16 %v376
    %v385 = vunpack.c.l.b16 %v377
    %v386 = vunpack.c.l.b16 %v378
    %v387 = vunpack.c.l.b16 %v379
    %v388 = vpack.c.b16 %v385, %v384
    %v389 = vpack.c.b16 %v387, %v386
    %392 = vmatprep.subr.bf16.mxu0 0
    %393 = vmatpush1.bf16.msra.mxu0 0
    %394 = vmatprep.subr.bf16.mxu0 0
    %395 = vmatpush1.bf16.msra.mxu0 0
    %396 = vmatprep.subr.bf16.mxu0 0
    %397 = vmatpush1.bf16.msra.mxu0 0
    %398 = vmatprep.subr.bf16.mxu0 0
    %399 = vmatpush1.bf16.msra.mxu0 0
    %400 = vmatprep.subr.bf16.mxu0 0
    %401 = vmatpush1.bf16.msra.mxu0 0
    %402 = vmatprep.subr.bf16.mxu0 0
    %403 = vmatpush1.bf16.msra.mxu0 0
    %404 = vmatprep.subr.bf16.mxu0 0
    %405 = vmatpush1.bf16.msra.mxu0 %v389
    %406 = vmatprep.subr.bf16.mxu0 0
    %407 = vmatpush1.bf16.msra.mxu0 %v388
    %408 = vmatprep.subr.bf16.mxu0 0
    %409 = vmatpush2.bf16.msra.mxu0 0
    %410 = vmatprep.subr.bf16.mxu0 0
    %411 = vmatpush2.bf16.msra.mxu0 0
    %412 = vmatprep.subr.bf16.mxu0 0
    %413 = vmatpush2.bf16.msra.mxu0 0
    %414 = vmatprep.subr.bf16.mxu0 0
    %415 = vmatpush2.bf16.msra.mxu0 0
    %416 = vmatprep.subr.bf16.mxu0 0
    %417 = vmatpush2.bf16.msra.mxu0 0
    %418 = vmatprep.subr.bf16.mxu0 0
    %419 = vmatpush2.bf16.msra.mxu0 0
    %420 = vmatprep.subr.bf16.mxu0 0
    %421 = vmatpush2.bf16.msra.mxu0 0
    %422 = vmatprep.subr.bf16.mxu0 0
    %423 = vmatpush2.bf16.msra.mxu0 0
    %424 = vmatprep.mubr.bf16.mxu0 0
    %425 = vmatmul.mubr.bf16.gmra.mxu0 %v276
    %v426 = vpop.f32.mrf.mxu0
    %v427 = vadd.f32 0.0, %v426
    %v428 = vpop.f32.mrf.mxu0
    %v429 = vpop.f32.mrf.mxu0
    %v430 = vadd.f32 0.0, %v429
    %v431 = vpop.f32.mrf.mxu0
    %432 = vdwg.mxu0
    %v433 = vpack.c.bf16 %v316, %v313
    %v434 = vpack.c.bf16 %v373, %v370
    %v435 = vpack.c.bf16 %v430, %v427
    %v437 = vunpack.c.l.b16 %v433
    %v438 = vunpack.c.h.b16 %v433
    %v439 = vpack.c.b16 %v437, %v437
    %v440 = vpack.c.b16 %v438, %v438
    %v442 = vunpack.c.l.b16 %v434
    %v443 = vunpack.c.h.b16 %v434
    %v444 = vpack.c.b16 %v442, %v442
    %v445 = vpack.c.b16 %v443, %v443
    %v447 = vunpack.c.l.b16 %v435
    %v448 = vunpack.c.h.b16 %v435
    %v449 = vpack.c.b16 %v447, %v447
    %v450 = vpack.c.b16 %v448, %v448
    %vm451 = vcmask 64512
    %v453 = vsel %vm451, %v439, 0
    %v456 = vsel %vm451, %v444, 0
    %458 = vmatprep.subr.bf16.mxu0 0
    %459 = vmatpush1.bf16.xpose.msra.mxu0 0
    %460 = vmatprep.subr.bf16.mxu0 0
    %461 = vmatpush1.bf16.xpose.msra.mxu0 0
    %462 = vmatprep.subr.bf16.mxu0 0
    %463 = vmatpush1.bf16.xpose.msra.mxu0 0
    %464 = vmatprep.subr.bf16.mxu0 0
    %465 = vmatpush1.bf16.xpose.msra.mxu0 0
    %466 = vmatprep.subr.bf16.mxu0 0
    %467 = vmatpush1.bf16.xpose.msra.mxu0 0
    %468 = vmatprep.subr.bf16.mxu0 0
    %469 = vmatpush1.bf16.xpose.msra.mxu0 0
    %470 = vmatprep.subr.bf16.mxu0 0
    %471 = vmatpush1.bf16.xpose.msra.mxu0 0
    %472 = vmatprep.subr.bf16.mxu0 0
    %473 = vmatpush1.bf16.xpose.msra.mxu0 %v456
    %474 = vmatprep.subr.bf16.mxu0 0
    %475 = vmatpush2.bf16.xpose.msra.mxu0 0
    %476 = vmatprep.subr.bf16.mxu0 0
    %477 = vmatpush2.bf16.xpose.msra.mxu0 0
    %478 = vmatprep.subr.bf16.mxu0 0
    %479 = vmatpush2.bf16.xpose.msra.mxu0 0
    %480 = vmatprep.subr.bf16.mxu0 0
    %481 = vmatpush2.bf16.xpose.msra.mxu0 0
    %482 = vmatprep.subr.bf16.mxu0 0
    %483 = vmatpush2.bf16.xpose.msra.mxu0 0
    %484 = vmatprep.subr.bf16.mxu0 0
    %485 = vmatpush2.bf16.xpose.msra.mxu0 0
    %486 = vmatprep.subr.bf16.mxu0 0
    %487 = vmatpush2.bf16.xpose.msra.mxu0 0
    %488 = vmatprep.subr.bf16.mxu0 0
    %489 = vmatpush2.bf16.xpose.msra.mxu0 0
    %490 = vmatprep.mubr.bf16.mxu0 0
    %491 = vmatmul.mubr.bf16.gmra.mxu0 %v453
    %v492 = vpop.f32.mrf.mxu0
    %v493 = vadd.f32 %v254, %v492
    %v494 = vpop.f32.mrf.mxu0
    %v495 = vpop.f32.mrf.mxu0
    %v496 = vpop.f32.mrf.mxu0
    %497 = vdwg.mxu0
    %v499 = vsel %vm451, %v440, 0
    %v502 = vsel %vm451, %v445, 0
    %504 = vmatprep.subr.bf16.mxu0 0
    %505 = vmatpush1.bf16.xpose.msra.mxu0 0
    %506 = vmatprep.subr.bf16.mxu0 0
    %507 = vmatpush1.bf16.xpose.msra.mxu0 0
    %508 = vmatprep.subr.bf16.mxu0 0
    %509 = vmatpush1.bf16.xpose.msra.mxu0 0
    %510 = vmatprep.subr.bf16.mxu0 0
    %511 = vmatpush1.bf16.xpose.msra.mxu0 0
    %512 = vmatprep.subr.bf16.mxu0 0
    %513 = vmatpush1.bf16.xpose.msra.mxu0 0
    %514 = vmatprep.subr.bf16.mxu0 0
    %515 = vmatpush1.bf16.xpose.msra.mxu0 0
    %516 = vmatprep.subr.bf16.mxu0 0
    %517 = vmatpush1.bf16.xpose.msra.mxu0 0
    %518 = vmatprep.subr.bf16.mxu0 0
    %519 = vmatpush1.bf16.xpose.msra.mxu0 %v502
    %520 = vmatprep.subr.bf16.mxu0 0
    %521 = vmatpush2.bf16.xpose.msra.mxu0 0
    %522 = vmatprep.subr.bf16.mxu0 0
    %523 = vmatpush2.bf16.xpose.msra.mxu0 0
    %524 = vmatprep.subr.bf16.mxu0 0
    %525 = vmatpush2.bf16.xpose.msra.mxu0 0
    %526 = vmatprep.subr.bf16.mxu0 0
    %527 = vmatpush2.bf16.xpose.msra.mxu0 0
    %528 = vmatprep.subr.bf16.mxu0 0
    %529 = vmatpush2.bf16.xpose.msra.mxu0 0
    %530 = vmatprep.subr.bf16.mxu0 0
    %531 = vmatpush2.bf16.xpose.msra.mxu0 0
    %532 = vmatprep.subr.bf16.mxu0 0
    %533 = vmatpush2.bf16.xpose.msra.mxu0 0
    %534 = vmatprep.subr.bf16.mxu0 0
    %535 = vmatpush2.bf16.xpose.msra.mxu0 0
    %536 = vmatprep.mubr.bf16.mxu0 0
    %537 = vmatmul.mubr.bf16.gmra.mxu0 %v499
    %v538 = vpop.f32.mrf.mxu0
    %v539 = vadd.f32 %v254, %v538
    %v540 = vpop.f32.mrf.mxu0
    %v541 = vpop.f32.mrf.mxu0
    %v542 = vpop.f32.mrf.mxu0
    %543 = vdwg.mxu0
    %v544 = vsel %vm451, %v493, -inf
    %545 = vmax.xlane.f32.xlu0 %v544
    %v546 = vpop.xlane.xlu0 %545
    %v547 = vsel %vm451, %v539, -inf
    %548 = vmax.xlane.f32.xlu0 %v547
    %v549 = vpop.xlane.xlu0 %548
    %v550 = vsub.f32 %v493, %v546
    %v551 = vsub.f32 %v539, %v549
    %v552 = vmul.f32 %v550, 1.442695
    %v553 = vpow.pop %v552
    %v554 = vmul.f32 %v551, 1.442695
    %v555 = vpow.pop %v554
    %v556 = vsel %vm451, %v553, 0.0
    %557 = vadd.xlane.f32.xlu0 %v556
    %v558 = vpop.xlane.xlu0 %557
    %v559 = vsel %vm451, %v555, 0.0
    %560 = vadd.xlane.f32.xlu0 %v559
    %v561 = vpop.xlane.xlu0 %560
    %v562 = vrcp.pop %v558
    %v563 = vrcp.pop %v561
    %v564 = vmul.f32 %v553, %v562
    %v565 = vmul.f32 %v555, %v563
    %v566 = vpack.c.bf16 %v564, %v564
    %v567 = vpack.c.bf16 %v565, %v565
    %v569 = vsel %vm451, %v566, 0
    %vm571 = vcmask 1043456
    %v573 = vsel %vm571, %v449, 0
    %575 = vmatprep.subr.bf16.mxu0 0
    %576 = vmatpush1.bf16.msra.mxu0 0
    %577 = vmatprep.subr.bf16.mxu0 0
    %578 = vmatpush1.bf16.msra.mxu0 0
    %579 = vmatprep.subr.bf16.mxu0 0
    %580 = vmatpush1.bf16.msra.mxu0 0
    %581 = vmatprep.subr.bf16.mxu0 0
    %582 = vmatpush1.bf16.msra.mxu0 0
    %583 = vmatprep.subr.bf16.mxu0 0
    %584 = vmatpush1.bf16.msra.mxu0 0
    %585 = vmatprep.subr.bf16.mxu0 0
    %586 = vmatpush1.bf16.msra.mxu0 0
    %587 = vmatprep.subr.bf16.mxu0 0
    %588 = vmatpush1.bf16.msra.mxu0 0
    %589 = vmatprep.subr.bf16.mxu0 0
    %590 = vmatpush1.bf16.msra.mxu0 %v573
    %591 = vmatprep.subr.bf16.mxu0 0
    %592 = vmatpush2.bf16.msra.mxu0 0
    %593 = vmatprep.subr.bf16.mxu0 0
    %594 = vmatpush2.bf16.msra.mxu0 0
    %595 = vmatprep.subr.bf16.mxu0 0
    %596 = vmatpush2.bf16.msra.mxu0 0
    %597 = vmatprep.subr.bf16.mxu0 0
    %598 = vmatpush2.bf16.msra.mxu0 0
    %599 = vmatprep.subr.bf16.mxu0 0
    %600 = vmatpush2.bf16.msra.mxu0 0
    %601 = vmatprep.subr.bf16.mxu0 0
    %602 = vmatpush2.bf16.msra.mxu0 0
    %603 = vmatprep.subr.bf16.mxu0 0
    %604 = vmatpush2.bf16.msra.mxu0 0
    %605 = vmatprep.subr.bf16.mxu0 0
    %606 = vmatpush2.bf16.msra.mxu0 0
    %607 = vmatprep.mubr.bf16.mxu0 0
    %608 = vmatmul.mubr.bf16.gmra.mxu0 %v569
    %v609 = vpop.f32.mrf.mxu0
    %v610 = vadd.f32 0.0, %v609
    %v611 = vpop.f32.mrf.mxu0
    %v612 = vpop.f32.mrf.mxu0
    %v613 = vpop.f32.mrf.mxu0
    %614 = vdwg.mxu0
    %v616 = vsel %vm451, %v567, 0
    %v619 = vsel %vm571, %v450, 0
    %621 = vmatprep.subr.bf16.mxu0 0
    %622 = vmatpush1.bf16.msra.mxu0 0
    %623 = vmatprep.subr.bf16.mxu0 0
    %624 = vmatpush1.bf16.msra.mxu0 0
    %625 = vmatprep.subr.bf16.mxu0 0
    %626 = vmatpush1.bf16.msra.mxu0 0
    %627 = vmatprep.subr.bf16.mxu0 0
    %628 = vmatpush1.bf16.msra.mxu0 0
    %629 = vmatprep.subr.bf16.mxu0 0
    %630 = vmatpush1.bf16.msra.mxu0 0
    %631 = vmatprep.subr.bf16.mxu0 0
    %632 = vmatpush1.bf16.msra.mxu0 0
    %633 = vmatprep.subr.bf16.mxu0 0
    %634 = vmatpush1.bf16.msra.mxu0 0
    %635 = vmatprep.subr.bf16.mxu0 0
    %636 = vmatpush1.bf16.msra.mxu0 %v619
    %637 = vmatprep.subr.bf16.mxu0 0
    %638 = vmatpush2.bf16.msra.mxu0 0
    %639 = vmatprep.subr.bf16.mxu0 0
    %640 = vmatpush2.bf16.msra.mxu0 0
    %641 = vmatprep.subr.bf16.mxu0 0
    %642 = vmatpush2.bf16.msra.mxu0 0
    %643 = vmatprep.subr.bf16.mxu0 0
    %644 = vmatpush2.bf16.msra.mxu0 0
    %645 = vmatprep.subr.bf16.mxu0 0
    %646 = vmatpush2.bf16.msra.mxu0 0
    %647 = vmatprep.subr.bf16.mxu0 0
    %648 = vmatpush2.bf16.msra.mxu0 0
    %649 = vmatprep.subr.bf16.mxu0 0
    %650 = vmatpush2.bf16.msra.mxu0 0
    %651 = vmatprep.subr.bf16.mxu0 0
    %652 = vmatpush2.bf16.msra.mxu0 0
    %653 = vmatprep.mubr.bf16.mxu0 0
    %654 = vmatmul.mubr.bf16.gmra.mxu0 %v616
    %v655 = vpop.f32.mrf.mxu0
    %v656 = vadd.f32 0.0, %v655
    %v657 = vpop.f32.mrf.mxu0
    %v658 = vpop.f32.mrf.mxu0
    %v659 = vpop.f32.mrf.mxu0
    %660 = vdwg.mxu0
    %v661 = vpack.c.bf16 %v656, %v610
    %v663 = vunpack.c.l.b16 %v661
    %v664 = vunpack.c.h.b16 %v661
    %v665 = vpack.c.b16 %v663, %v663
    %v666 = vpack.c.b16 %v664, %v664
    %vm669 = vcmask 60416
    %670 = vst.msk [vmem:[#allocation2] sm:$0xf] %vm669, %v665
    %671 = vst.msk [vmem:[#allocation2 + $0x4] sm:$0xf] %vm669, %v666
    %672 = vrot.lane.b32.xlu0 %v439, 120
    %v673 = vpop.permute.xlu0 %672
    %674 = vrot.lane.b32.xlu0 %v444, 120
    %v675 = vpop.permute.xlu0 %674
    %v677 = vsel %vm451, %v673, 0
    %v680 = vsel %vm451, %v675, 0
    %682 = vmatprep.subr.bf16.mxu0 0
    %683 = vmatpush1.bf16.xpose.msra.mxu0 0
    %684 = vmatprep.subr.bf16.mxu0 0
    %685 = vmatpush1.bf16.xpose.msra.mxu0 0
    %686 = vmatprep.subr.bf16.mxu0 0
    %687 = vmatpush1.bf16.xpose.msra.mxu0 0
    %688 = vmatprep.subr.bf16.mxu0 0
    %689 = vmatpush1.bf16.xpose.msra.mxu0 0
    %690 = vmatprep.subr.bf16.mxu0 0
    %691 = vmatpush1.bf16.xpose.msra.mxu0 0
    %692 = vmatprep.subr.bf16.mxu0 0
    %693 = vmatpush1.bf16.xpose.msra.mxu0 0
    %694 = vmatprep.subr.bf16.mxu0 0
    %695 = vmatpush1.bf16.xpose.msra.mxu0 0
    %696 = vmatprep.subr.bf16.mxu0 0
    %697 = vmatpush1.bf16.xpose.msra.mxu0 %v680
    %698 = vmatprep.subr.bf16.mxu0 0
    %699 = vmatpush2.bf16.xpose.msra.mxu0 0
    %700 = vmatprep.subr.bf16.mxu0 0
    %701 = vmatpush2.bf16.xpose.msra.mxu0 0
    %702 = vmatprep.subr.bf16.mxu0 0
    %703 = vmatpush2.bf16.xpose.msra.mxu0 0
    %704 = vmatprep.subr.bf16.mxu0 0
    %705 = vmatpush2.bf16.xpose.msra.mxu0 0
    %706 = vmatprep.subr.bf16.mxu0 0
    %707 = vmatpush2.bf16.xpose.msra.mxu0 0
    %708 = vmatprep.subr.bf16.mxu0 0
    %709 = vmatpush2.bf16.xpose.msra.mxu0 0
    %710 = vmatprep.subr.bf16.mxu0 0
    %711 = vmatpush2.bf16.xpose.msra.mxu0 0
    %712 = vmatprep.subr.bf16.mxu0 0
    %713 = vmatpush2.bf16.xpose.msra.mxu0 0
    %714 = vmatprep.mubr.bf16.mxu0 0
    %715 = vmatmul.mubr.bf16.gmra.mxu0 %v677
    %v716 = vpop.f32.mrf.mxu0
    %v717 = vadd.f32 %v254, %v716
    %v718 = vpop.f32.mrf.mxu0
    %v719 = vpop.f32.mrf.mxu0
    %v720 = vpop.f32.mrf.mxu0
    %721 = vdwg.mxu0
    %722 = vrot.lane.b32.xlu0 %v440, 120
    %v723 = vpop.permute.xlu0 %722
    %724 = vrot.lane.b32.xlu0 %v445, 120
    %v725 = vpop.permute.xlu0 %724
    %v727 = vsel %vm451, %v723, 0
    %v730 = vsel %vm451, %v725, 0
    %732 = vmatprep.subr.bf16.mxu0 0
    %733 = vmatpush1.bf16.xpose.msra.mxu0 0
    %734 = vmatprep.subr.bf16.mxu0 0
    %735 = vmatpush1.bf16.xpose.msra.mxu0 0
    %736 = vmatprep.subr.bf16.mxu0 0
    %737 = vmatpush1.bf16.xpose.msra.mxu0 0
    %738 = vmatprep.subr.bf16.mxu0 0
    %739 = vmatpush1.bf16.xpose.msra.mxu0 0
    %740 = vmatprep.subr.bf16.mxu0 0
    %741 = vmatpush1.bf16.xpose.msra.mxu0 0
    %742 = vmatprep.subr.bf16.mxu0 0
    %743 = vmatpush1.bf16.xpose.msra.mxu0 0
    %744 = vmatprep.subr.bf16.mxu0 0
    %745 = vmatpush1.bf16.xpose.msra.mxu0 0
    %746 = vmatprep.subr.bf16.mxu0 0
    %747 = vmatpush1.bf16.xpose.msra.mxu0 %v730
    %748 = vmatprep.subr.bf16.mxu0 0
    %749 = vmatpush2.bf16.xpose.msra.mxu0 0
    %750 = vmatprep.subr.bf16.mxu0 0
    %751 = vmatpush2.bf16.xpose.msra.mxu0 0
    %752 = vmatprep.subr.bf16.mxu0 0
    %753 = vmatpush2.bf16.xpose.msra.mxu0 0
    %754 = vmatprep.subr.bf16.mxu0 0
    %755 = vmatpush2.bf16.xpose.msra.mxu0 0
    %756 = vmatprep.subr.bf16.mxu0 0
    %757 = vmatpush2.bf16.xpose.msra.mxu0 0
    %758 = vmatprep.subr.bf16.mxu0 0
    %759 = vmatpush2.bf16.xpose.msra.mxu0 0
    %760 = vmatprep.subr.bf16.mxu0 0
    %761 = vmatpush2.bf16.xpose.msra.mxu0 0
    %762 = vmatprep.subr.bf16.mxu0 0
    %763 = vmatpush2.bf16.xpose.msra.mxu0 0
    %764 = vmatprep.mubr.bf16.mxu0 0
    %765 = vmatmul.mubr.bf16.gmra.mxu0 %v727
    %v766 = vpop.f32.mrf.mxu0
    %v767 = vadd.f32 %v254, %v766
    %v768 = vpop.f32.mrf.mxu0
    %v769 = vpop.f32.mrf.mxu0
    %v770 = vpop.f32.mrf.mxu0
    %771 = vdwg.mxu0
    %v772 = vsel %vm451, %v717, -inf
    %773 = vmax.xlane.f32.xlu0 %v772
    %v774 = vpop.xlane.xlu0 %773
    %v775 = vsel %vm451, %v767, -inf
    %776 = vmax.xlane.f32.xlu0 %v775
    %v777 = vpop.xlane.xlu0 %776
    %v778 = vsub.f32 %v717, %v774
    %v779 = vsub.f32 %v767, %v777
    %v780 = vmul.f32 %v778, 1.442695
    %v781 = vpow.pop %v780
    %v782 = vmul.f32 %v779, 1.442695
    %v783 = vpow.pop %v782
    %v784 = vsel %vm451, %v781, 0.0
    %785 = vadd.xlane.f32.xlu0 %v784
    %v786 = vpop.xlane.xlu0 %785
    %v787 = vsel %vm451, %v783, 0.0
    %788 = vadd.xlane.f32.xlu0 %v787
    %v789 = vpop.xlane.xlu0 %788
    %v790 = vrcp.pop %v786
    %v791 = vrcp.pop %v789
    %v792 = vmul.f32 %v781, %v790
    %v793 = vmul.f32 %v783, %v791
    %v794 = vpack.c.bf16 %v792, %v792
    %v795 = vpack.c.bf16 %v793, %v793
    %796 = vrot.lane.b32.xlu0 %v449, 120
    %v797 = vpop.permute.xlu0 %796
    %v799 = vsel %vm451, %v794, 0
    %v802 = vsel %vm571, %v797, 0
    %804 = vmatprep.subr.bf16.mxu0 0
    %805 = vmatpush1.bf16.msra.mxu0 0
    %806 = vmatprep.subr.bf16.mxu0 0
    %807 = vmatpush1.bf16.msra.mxu0 0
    %808 = vmatprep.subr.bf16.mxu0 0
    %809 = vmatpush1.bf16.msra.mxu0 0
    %810 = vmatprep.subr.bf16.mxu0 0
    %811 = vmatpush1.bf16.msra.mxu0 0
    %812 = vmatprep.subr.bf16.mxu0 0
    %813 = vmatpush1.bf16.msra.mxu0 0
    %814 = vmatprep.subr.bf16.mxu0 0
    %815 = vmatpush1.bf16.msra.mxu0 0
    %816 = vmatprep.subr.bf16.mxu0 0
    %817 = vmatpush1.bf16.msra.mxu0 0
    %818 = vmatprep.subr.bf16.mxu0 0
    %819 = vmatpush1.bf16.msra.mxu0 %v802
    %820 = vmatprep.subr.bf16.mxu0 0
    %821 = vmatpush2.bf16.msra.mxu0 0
    %822 = vmatprep.subr.bf16.mxu0 0
    %823 = vmatpush2.bf16.msra.mxu0 0
    %824 = vmatprep.subr.bf16.mxu0 0
    %825 = vmatpush2.bf16.msra.mxu0 0
    %826 = vmatprep.subr.bf16.mxu0 0
    %827 = vmatpush2.bf16.msra.mxu0 0
    %828 = vmatprep.subr.bf16.mxu0 0
    %829 = vmatpush2.bf16.msra.mxu0 0
    %830 = vmatprep.subr.bf16.mxu0 0
    %831 = vmatpush2.bf16.msra.mxu0 0
    %832 = vmatprep.subr.bf16.mxu0 0
    %833 = vmatpush2.bf16.msra.mxu0 0
    %834 = vmatprep.subr.bf16.mxu0 0
    %835 = vmatpush2.bf16.msra.mxu0 0
    %836 = vmatprep.mubr.bf16.mxu0 0
    %837 = vmatmul.mubr.bf16.gmra.mxu0 %v799
    %v838 = vpop.f32.mrf.mxu0
    %v839 = vadd.f32 0.0, %v838
    %v840 = vpop.f32.mrf.mxu0
    %v841 = vpop.f32.mrf.mxu0
    %v842 = vpop.f32.mrf.mxu0
    %843 = vdwg.mxu0
    %844 = vrot.lane.b32.xlu0 %v450, 120
    %v845 = vpop.permute.xlu0 %844
    %v847 = vsel %vm451, %v795, 0
    %v850 = vsel %vm571, %v845, 0
    %852 = vmatprep.subr.bf16.mxu0 0
    %853 = vmatpush1.bf16.msra.mxu0 0
    %854 = vmatprep.subr.bf16.mxu0 0
    %855 = vmatpush1.bf16.msra.mxu0 0
    %856 = vmatprep.subr.bf16.mxu0 0
    %857 = vmatpush1.bf16.msra.mxu0 0
    %858 = vmatprep.subr.bf16.mxu0 0
    %859 = vmatpush1.bf16.msra.mxu0 0
    %860 = vmatprep.subr.bf16.mxu0 0
    %861 = vmatpush1.bf16.msra.mxu0 0
    %862 = vmatprep.subr.bf16.mxu0 0
    %863 = vmatpush1.bf16.msra.mxu0 0
    %864 = vmatprep.subr.bf16.mxu0 0
    %865 = vmatpush1.bf16.msra.mxu0 0
    %866 = vmatprep.subr.bf16.mxu0 0
    %867 = vmatpush1.bf16.msra.mxu0 %v850
    %868 = vmatprep.subr.bf16.mxu0 0
    %869 = vmatpush2.bf16.msra.mxu0 0
    %870 = vmatprep.subr.bf16.mxu0 0
    %871 = vmatpush2.bf16.msra.mxu0 0
    %872 = vmatprep.subr.bf16.mxu0 0
    %873 = vmatpush2.bf16.msra.mxu0 0
    %874 = vmatprep.subr.bf16.mxu0 0
    %875 = vmatpush2.bf16.msra.mxu0 0
    %876 = vmatprep.subr.bf16.mxu0 0
    %877 = vmatpush2.bf16.msra.mxu0 0
    %878 = vmatprep.subr.bf16.mxu0 0
    %879 = vmatpush2.bf16.msra.mxu0 0
    %880 = vmatprep.subr.bf16.mxu0 0
    %881 = vmatpush2.bf16.msra.mxu0 0
    %882 = vmatprep.subr.bf16.mxu0 0
    %883 = vmatpush2.bf16.msra.mxu0 0
    %884 = vmatprep.mubr.bf16.mxu0 0
    %885 = vmatmul.mubr.bf16.gmra.mxu0 %v847
    %v886 = vpop.f32.mrf.mxu0
    %v887 = vadd.f32 0.0, %v886
    %v888 = vpop.f32.mrf.mxu0
    %v889 = vpop.f32.mrf.mxu0
    %v890 = vpop.f32.mrf.mxu0
    %891 = vdwg.mxu0
    %v892 = vpack.c.bf16 %v887, %v839
    %v894 = vunpack.c.l.b16 %v892
    %v895 = vunpack.c.h.b16 %v892
    %v896 = vpack.c.b16 %v894, %v894
    %v897 = vpack.c.b16 %v895, %v895
    %898 = vrot.lane.b32.xlu0 %v896, 8
    %v899 = vpop.permute.xlu0 %898
    %900 = vrot.lane.b32.xlu0 %v897, 8
    %v901 = vpop.permute.xlu0 %900
    %vm904 = vcmask 126016
    %905 = vst.msk [vmem:[#allocation2] sm:$0xf] %vm904, %v899
    %906 = vst.msk [vmem:[#allocation2 + $0x4] sm:$0xf] %vm904, %v901
    %907 = vrot.lane.b32.xlu0 %v439, 112
    %v908 = vpop.permute.xlu0 %907
    %909 = vrot.lane.b32.xlu0 %v444, 112
    %v910 = vpop.permute.xlu0 %909
    %v912 = vsel %vm451, %v908, 0
    %v915 = vsel %vm451, %v910, 0
    %917 = vmatprep.subr.bf16.mxu0 0
    %918 = vmatpush1.bf16.xpose.msra.mxu0 0
    %919 = vmatprep.subr.bf16.mxu0 0
    %920 = vmatpush1.bf16.xpose.msra.mxu0 0
    %921 = vmatprep.subr.bf16.mxu0 0
    %922 = vmatpush1.bf16.xpose.msra.mxu0 0
    %923 = vmatprep.subr.bf16.mxu0 0
    %924 = vmatpush1.bf16.xpose.msra.mxu0 0
    %925 = vmatprep.subr.bf16.mxu0 0
    %926 = vmatpush1.bf16.xpose.msra.mxu0 0
    %927 = vmatprep.subr.bf16.mxu0 0
    %928 = vmatpush1.bf16.xpose.msra.mxu0 0
    %929 = vmatprep.subr.bf16.mxu0 0
    %930 = vmatpush1.bf16.xpose.msra.mxu0 0
    %931 = vmatprep.subr.bf16.mxu0 0
    %932 = vmatpush1.bf16.xpose.msra.mxu0 %v915
    %933 = vmatprep.subr.bf16.mxu0 0
    %934 = vmatpush2.bf16.xpose.msra.mxu0 0
    %935 = vmatprep.subr.bf16.mxu0 0
    %936 = vmatpush2.bf16.xpose.msra.mxu0 0
    %937 = vmatprep.subr.bf16.mxu0 0
    %938 = vmatpush2.bf16.xpose.msra.mxu0 0
    %939 = vmatprep.subr.bf16.mxu0 0
    %940 = vmatpush2.bf16.xpose.msra.mxu0 0
    %941 = vmatprep.subr.bf16.mxu0 0
    %942 = vmatpush2.bf16.xpose.msra.mxu0 0
    %943 = vmatprep.subr.bf16.mxu0 0
    %944 = vmatpush2.bf16.xpose.msra.mxu0 0
    %945 = vmatprep.subr.bf16.mxu0 0
    %946 = vmatpush2.bf16.xpose.msra.mxu0 0
    %947 = vmatprep.subr.bf16.mxu0 0
    %948 = vmatpush2.bf16.xpose.msra.mxu0 0
    %949 = vmatprep.mubr.bf16.mxu0 0
    %950 = vmatmul.mubr.bf16.gmra.mxu0 %v912
    %v951 = vpop.f32.mrf.mxu0
    %v952 = vadd.f32 %v254, %v951
    %v953 = vpop.f32.mrf.mxu0
    %v954 = vpop.f32.mrf.mxu0
    %v955 = vpop.f32.mrf.mxu0
    %956 = vdwg.mxu0
    %957 = vrot.lane.b32.xlu0 %v440, 112
    %v958 = vpop.permute.xlu0 %957
    %959 = vrot.lane.b32.xlu0 %v445, 112
    %v960 = vpop.permute.xlu0 %959
    %v962 = vsel %vm451, %v958, 0
    %v965 = vsel %vm451, %v960, 0
    %967 = vmatprep.subr.bf16.mxu0 0
    %968 = vmatpush1.bf16.xpose.msra.mxu0 0
    %969 = vmatprep.subr.bf16.mxu0 0
    %970 = vmatpush1.bf16.xpose.msra.mxu0 0
    %971 = vmatprep.subr.bf16.mxu0 0
    %972 = vmatpush1.bf16.xpose.msra.mxu0 0
    %973 = vmatprep.subr.bf16.mxu0 0
    %974 = vmatpush1.bf16.xpose.msra.mxu0 0
    %975 = vmatprep.subr.bf16.mxu0 0
    %976 = vmatpush1.bf16.xpose.msra.mxu0 0
    %977 = vmatprep.subr.bf16.mxu0 0
    %978 = vmatpush1.bf16.xpose.msra.mxu0 0
    %979 = vmatprep.subr.bf16.mxu0 0
    %980 = vmatpush1.bf16.xpose.msra.mxu0 0
    %981 = vmatprep.subr.bf16.mxu0 0
    %982 = vmatpush1.bf16.xpose.msra.mxu0 %v965
    %983 = vmatprep.subr.bf16.mxu0 0
    %984 = vmatpush2.bf16.xpose.msra.mxu0 0
    %985 = vmatprep.subr.bf16.mxu0 0
    %986 = vmatpush2.bf16.xpose.msra.mxu0 0
    %987 = vmatprep.subr.bf16.mxu0 0
    %988 = vmatpush2.bf16.xpose.msra.mxu0 0
    %989 = vmatprep.subr.bf16.mxu0 0
    %990 = vmatpush2.bf16.xpose.msra.mxu0 0
    %991 = vmatprep.subr.bf16.mxu0 0
    %992 = vmatpush2.bf16.xpose.msra.mxu0 0
    %993 = vmatprep.subr.bf16.mxu0 0
    %994 = vmatpush2.bf16.xpose.msra.mxu0 0
    %995 = vmatprep.subr.bf16.mxu0 0
    %996 = vmatpush2.bf16.xpose.msra.mxu0 0
    %997 = vmatprep.subr.bf16.mxu0 0
    %998 = vmatpush2.bf16.xpose.msra.mxu0 0
    %999 = vmatprep.mubr.bf16.mxu0 0
    %1000 = vmatmul.mubr.bf16.gmra.mxu0 %v962
    %v1001 = vpop.f32.mrf.mxu0
    %v1002 = vadd.f32 %v254, %v1001
    %v1003 = vpop.f32.mrf.mxu0
    %v1004 = vpop.f32.mrf.mxu0
    %v1005 = vpop.f32.mrf.mxu0
    %1006 = vdwg.mxu0
    %v1007 = vsel %vm451, %v952, -inf
    %1008 = vmax.xlane.f32.xlu0 %v1007
    %v1009 = vpop.xlane.xlu0 %1008
    %v1010 = vsel %vm451, %v1002, -inf
    %1011 = vmax.xlane.f32.xlu0 %v1010
    %v1012 = vpop.xlane.xlu0 %1011
    %v1013 = vsub.f32 %v952, %v1009
    %v1014 = vsub.f32 %v1002, %v1012
    %v1015 = vmul.f32 %v1013, 1.442695
    %v1016 = vpow.pop %v1015
    %v1017 = vmul.f32 %v1014, 1.442695
    %v1018 = vpow.pop %v1017
    %v1019 = vsel %vm451, %v1016, 0.0
    %1020 = vadd.xlane.f32.xlu0 %v1019
    %v1021 = vpop.xlane.xlu0 %1020
    %v1022 = vsel %vm451, %v1018, 0.0
    %1023 = vadd.xlane.f32.xlu0 %v1022
    %v1024 = vpop.xlane.xlu0 %1023
    %v1025 = vrcp.pop %v1021
    %v1026 = vrcp.pop %v1024
    %v1027 = vmul.f32 %v1016, %v1025
    %v1028 = vmul.f32 %v1018, %v1026
    %v1029 = vpack.c.bf16 %v1027, %v1027
    %v1030 = vpack.c.bf16 %v1028, %v1028
    %1031 = vrot.lane.b32.xlu0 %v449, 112
    %v1032 = vpop.permute.xlu0 %1031
    %v1034 = vsel %vm451, %v1029, 0
    %v1037 = vsel %vm571, %v1032, 0
    %1039 = vmatprep.subr.bf16.mxu0 0
    %1040 = vmatpush1.bf16.msra.mxu0 0
    %1041 = vmatprep.subr.bf16.mxu0 0
    %1042 = vmatpush1.bf16.msra.mxu0 0
    %1043 = vmatprep.subr.bf16.mxu0 0
    %1044 = vmatpush1.bf16.msra.mxu0 0
    %1045 = vmatprep.subr.bf16.mxu0 0
    %1046 = vmatpush1.bf16.msra.mxu0 0
    %1047 = vmatprep.subr.bf16.mxu0 0
    %1048 = vmatpush1.bf16.msra.mxu0 0
    %1049 = vmatprep.subr.bf16.mxu0 0
    %1050 = vmatpush1.bf16.msra.mxu0 0
    %1051 = vmatprep.subr.bf16.mxu0 0
    %1052 = vmatpush1.bf16.msra.mxu0 0
    %1053 = vmatprep.subr.bf16.mxu0 0
    %1054 = vmatpush1.bf16.msra.mxu0 %v1037
    %1055 = vmatprep.subr.bf16.mxu0 0
    %1056 = vmatpush2.bf16.msra.mxu0 0
    %1057 = vmatprep.subr.bf16.mxu0 0
    %1058 = vmatpush2.bf16.msra.mxu0 0
    %1059 = vmatprep.subr.bf16.mxu0 0
    %1060 = vmatpush2.bf16.msra.mxu0 0
    %1061 = vmatprep.subr.bf16.mxu0 0
    %1062 = vmatpush2.bf16.msra.mxu0 0
    %1063 = vmatprep.subr.bf16.mxu0 0
    %1064 = vmatpush2.bf16.msra.mxu0 0
    %1065 = vmatprep.subr.bf16.mxu0 0
    %1066 = vmatpush2.bf16.msra.mxu0 0
    %1067 = vmatprep.subr.bf16.mxu0 0
    %1068 = vmatpush2.bf16.msra.mxu0 0
    %1069 = vmatprep.subr.bf16.mxu0 0
    %1070 = vmatpush2.bf16.msra.mxu0 0
    %1071 = vmatprep.mubr.bf16.mxu0 0
    %1072 = vmatmul.mubr.bf16.gmra.mxu0 %v1034
    %v1073 = vpop.f32.mrf.mxu0
    %v1074 = vadd.f32 0.0, %v1073
    %v1075 = vpop.f32.mrf.mxu0
    %v1076 = vpop.f32.mrf.mxu0
    %v1077 = vpop.f32.mrf.mxu0
    %1078 = vdwg.mxu0
    %1079 = vrot.lane.b32.xlu0 %v450, 112
    %v1080 = vpop.permute.xlu0 %1079
    %v1082 = vsel %vm451, %v1030, 0
    %v1085 = vsel %vm571, %v1080, 0
    %1087 = vmatprep.subr.bf16.mxu0 0
    %1088 = vmatpush1.bf16.msra.mxu0 0
    %1089 = vmatprep.subr.bf16.mxu0 0
    %1090 = vmatpush1.bf16.msra.mxu0 0
    %1091 = vmatprep.subr.bf16.mxu0 0
    %1092 = vmatpush1.bf16.msra.mxu0 0
    %1093 = vmatprep.subr.bf16.mxu0 0
    %1094 = vmatpush1.bf16.msra.mxu0 0
    %1095 = vmatprep.subr.bf16.mxu0 0
    %1096 = vmatpush1.bf16.msra.mxu0 0
    %1097 = vmatprep.subr.bf16.mxu0 0
    %1098 = vmatpush1.bf16.msra.mxu0 0
    %1099 = vmatprep.subr.bf16.mxu0 0
    %1100 = vmatpush1.bf16.msra.mxu0 0
    %1101 = vmatprep.subr.bf16.mxu0 0
    %1102 = vmatpush1.bf16.msra.mxu0 %v1085
    %1103 = vmatprep.subr.bf16.mxu0 0
    %1104 = vmatpush2.bf16.msra.mxu0 0
    %1105 = vmatprep.subr.bf16.mxu0 0
    %1106 = vmatpush2.bf16.msra.mxu0 0
    %1107 = vmatprep.subr.bf16.mxu0 0
    %1108 = vmatpush2.bf16.msra.mxu0 0
    %1109 = vmatprep.subr.bf16.mxu0 0
    %1110 = vmatpush2.bf16.msra.mxu0 0
    %1111 = vmatprep.subr.bf16.mxu0 0
    %1112 = vmatpush2.bf16.msra.mxu0 0
    %1113 = vmatprep.subr.bf16.mxu0 0
    %1114 = vmatpush2.bf16.msra.mxu0 0
    %1115 = vmatprep.subr.bf16.mxu0 0
    %1116 = vmatpush2.bf16.msra.mxu0 0
    %1117 = vmatprep.subr.bf16.mxu0 0
    %1118 = vmatpush2.bf16.msra.mxu0 0
    %1119 = vmatprep.mubr.bf16.mxu0 0
    %1120 = vmatmul.mubr.bf16.gmra.mxu0 %v1082
    %v1121 = vpop.f32.mrf.mxu0
    %v1122 = vadd.f32 0.0, %v1121
    %v1123 = vpop.f32.mrf.mxu0
    %v1124 = vpop.f32.mrf.mxu0
    %v1125 = vpop.f32.mrf.mxu0
    %1126 = vdwg.mxu0
    %v1127 = vpack.c.bf16 %v1122, %v1074
    %v1129 = vunpack.c.l.b16 %v1127
    %v1130 = vunpack.c.h.b16 %v1127
    %v1131 = vpack.c.b16 %v1129, %v1129
    %v1132 = vpack.c.b16 %v1130, %v1130
    %1133 = vrot.lane.b32.xlu0 %v1131, 16
    %v1134 = vpop.permute.xlu0 %1133
    %1135 = vrot.lane.b32.xlu0 %v1132, 16
    %v1136 = vpop.permute.xlu0 %1135
    %vm1139 = vcmask 191616
    %1140 = vst.msk [vmem:[#allocation2] sm:$0xf] %vm1139, %v1134
    %1141 = vst.msk [vmem:[#allocation2 + $0x4] sm:$0xf] %vm1139, %v1136
    %1142 = vrot.lane.b32.xlu0 %v439, 104
    %v1143 = vpop.permute.xlu0 %1142
    %1144 = vrot.lane.b32.xlu0 %v444, 104
    %v1145 = vpop.permute.xlu0 %1144
    %v1147 = vsel %vm451, %v1143, 0
    %v1150 = vsel %vm451, %v1145, 0
    %1152 = vmatprep.subr.bf16.mxu0 0
    %1153 = vmatpush1.bf16.xpose.msra.mxu0 0
    %1154 = vmatprep.subr.bf16.mxu0 0
    %1155 = vmatpush1.bf16.xpose.msra.mxu0 0
    %1156 = vmatprep.subr.bf16.mxu0 0
    %1157 = vmatpush1.bf16.xpose.msra.mxu0 0
    %1158 = vmatprep.subr.bf16.mxu0 0
    %1159 = vmatpush1.bf16.xpose.msra.mxu0 0
    %1160 = vmatprep.subr.bf16.mxu0 0
    %1161 = vmatpush1.bf16.xpose.msra.mxu0 0
    %1162 = vmatprep.subr.bf16.mxu0 0
    %1163 = vmatpush1.bf16.xpose.msra.mxu0 0
    %1164 = vmatprep.subr.bf16.mxu0 0
    %1165 = vmatpush1.bf16.xpose.msra.mxu0 0
    %1166 = vmatprep.subr.bf16.mxu0 0
    %1167 = vmatpush1.bf16.xpose.msra.mxu0 %v1150
    %1168 = vmatprep.subr.bf16.mxu0 0
    %1169 = vmatpush2.bf16.xpose.msra.mxu0 0
    %1170 = vmatprep.subr.bf16.mxu0 0
    %1171 = vmatpush2.bf16.xpose.msra.mxu0 0
    %1172 = vmatprep.subr.bf16.mxu0 0
    %1173 = vmatpush2.bf16.xpose.msra.mxu0 0
    %1174 = vmatprep.subr.bf16.mxu0 0
    %1175 = vmatpush2.bf16.xpose.msra.mxu0 0
    %1176 = vmatprep.subr.bf16.mxu0 0
    %1177 = vmatpush2.bf16.xpose.msra.mxu0 0
    %1178 = vmatprep.subr.bf16.mxu0 0
    %1179 = vmatpush2.bf16.xpose.msra.mxu0 0
    %1180 = vmatprep.subr.bf16.mxu0 0
    %1181 = vmatpush2.bf16.xpose.msra.mxu0 0
    %1182 = vmatprep.subr.bf16.mxu0 0
    %1183 = vmatpush2.bf16.xpose.msra.mxu0 0
    %1184 = vmatprep.mubr.bf16.mxu0 0
    %1185 = vmatmul.mubr.bf16.gmra.mxu0 %v1147
    %v1186 = vpop.f32.mrf.mxu0
    %v1187 = vadd.f32 %v254, %v1186
    %v1188 = vpop.f32.mrf.mxu0
    %v1189 = vpop.f32.mrf.mxu0
    %v1190 = vpop.f32.mrf.mxu0
    %1191 = vdwg.mxu0
    %1192 = vrot.lane.b32.xlu0 %v440, 104
    %v1193 = vpop.permute.xlu0 %1192
    %1194 = vrot.lane.b32.xlu0 %v445, 104
    %v1195 = vpop.permute.xlu0 %1194
    %v1197 = vsel %vm451, %v1193, 0
    %v1200 = vsel %vm451, %v1195, 0
    %1202 = vmatprep.subr.bf16.mxu0 0
    %1203 = vmatpush1.bf16.xpose.msra.mxu0 0
    %1204 = vmatprep.subr.bf16.mxu0 0
    %1205 = vmatpush1.bf16.xpose.msra.mxu0 0
    %1206 = vmatprep.subr.bf16.mxu0 0
    %1207 = vmatpush1.bf16.xpose.msra.mxu0 0
    %1208 = vmatprep.subr.bf16.mxu0 0
    %1209 = vmatpush1.bf16.xpose.msra.mxu0 0
    %1210 = vmatprep.subr.bf16.mxu0 0
    %1211 = vmatpush1.bf16.xpose.msra.mxu0 0
    %1212 = vmatprep.subr.bf16.mxu0 0
    %1213 = vmatpush1.bf16.xpose.msra.mxu0 0
    %1214 = vmatprep.subr.bf16.mxu0 0
    %1215 = vmatpush1.bf16.xpose.msra.mxu0 0
    %1216 = vmatprep.subr.bf16.mxu0 0
    %1217 = vmatpush1.bf16.xpose.msra.mxu0 %v1200
    %1218 = vmatprep.subr.bf16.mxu0 0
    %1219 = vmatpush2.bf16.xpose.msra.mxu0 0
    %1220 = vmatprep.subr.bf16.mxu0 0
    %1221 = vmatpush2.bf16.xpose.msra.mxu0 0
    %1222 = vmatprep.subr.bf16.mxu0 0
    %1223 = vmatpush2.bf16.xpose.msra.mxu0 0
    %1224 = vmatprep.subr.bf16.mxu0 0
    %1225 = vmatpush2.bf16.xpose.msra.mxu0 0
    %1226 = vmatprep.subr.bf16.mxu0 0
    %1227 = vmatpush2.bf16.xpose.msra.mxu0 0
    %1228 = vmatprep.subr.bf16.mxu0 0
    %1229 = vmatpush2.bf16.xpose.msra.mxu0 0
    %1230 = vmatprep.subr.bf16.mxu0 0
    %1231 = vmatpush2.bf16.xpose.msra.mxu0 0
    %1232 = vmatprep.subr.bf16.mxu0 0
    %1233 = vmatpush2.bf16.xpose.msra.mxu0 0
    %1234 = vmatprep.mubr.bf16.mxu0 0
    %1235 = vmatmul.mubr.bf16.gmra.mxu0 %v1197
    %v1236 = vpop.f32.mrf.mxu0
    %v1237 = vadd.f32 %v254, %v1236
    %v1238 = vpop.f32.mrf.mxu0
    %v1239 = vpop.f32.mrf.mxu0
    %v1240 = vpop.f32.mrf.mxu0
    %1241 = vdwg.mxu0
    %v1242 = vsel %vm451, %v1187, -inf
    %1243 = vmax.xlane.f32.xlu0 %v1242
    %v1244 = vpop.xlane.xlu0 %1243
    %v1245 = vsel %vm451, %v1237, -inf
    %1246 = vmax.xlane.f32.xlu0 %v1245
    %v1247 = vpop.xlane.xlu0 %1246
    %v1248 = vsub.f32 %v1187, %v1244
    %v1249 = vsub.f32 %v1237, %v1247
    %v1250 = vmul.f32 %v1248, 1.442695
    %v1251 = vpow.pop %v1250
    %v1252 = vmul.f32 %v1249, 1.442695
    %v1253 = vpow.pop %v1252
    %v1254 = vsel %vm451, %v1251, 0.0
    %1255 = vadd.xlane.f32.xlu0 %v1254
    %v1256 = vpop.xlane.xlu0 %1255
    %v1257 = vsel %vm451, %v1253, 0.0
    %1258 = vadd.xlane.f32.xlu0 %v1257
    %v1259 = vpop.xlane.xlu0 %1258
    %v1260 = vrcp.pop %v1256
    %v1261 = vrcp.pop %v1259
    %v1262 = vmul.f32 %v1251, %v1260
    %v1263 = vmul.f32 %v1253, %v1261
    %v1264 = vpack.c.bf16 %v1262, %v1262
    %v1265 = vpack.c.bf16 %v1263, %v1263
    %1266 = vrot.lane.b32.xlu0 %v449, 104
    %v1267 = vpop.permute.xlu0 %1266
    %v1269 = vsel %vm451, %v1264, 0
    %v1272 = vsel %vm571, %v1267, 0
    %1274 = vmatprep.subr.bf16.mxu0 0
    %1275 = vmatpush1.bf16.msra.mxu0 0
    %1276 = vmatprep.subr.bf16.mxu0 0
    %1277 = vmatpush1.bf16.msra.mxu0 0
    %1278 = vmatprep.subr.bf16.mxu0 0
    %1279 = vmatpush1.bf16.msra.mxu0 0
    %1280 = vmatprep.subr.bf16.mxu0 0
    %1281 = vmatpush1.bf16.msra.mxu0 0
    %1282 = vmatprep.subr.bf16.mxu0 0
    %1283 = vmatpush1.bf16.msra.mxu0 0
    %1284 = vmatprep.subr.bf16.mxu0 0
    %1285 = vmatpush1.bf16.msra.mxu0 0
    %1286 = vmatprep.subr.bf16.mxu0 0
    %1287 = vmatpush1.bf16.msra.mxu0 0
    %1288 = vmatprep.subr.bf16.mxu0 0
    %1289 = vmatpush1.bf16.msra.mxu0 %v1272
    %1290 = vmatprep.subr.bf16.mxu0 0
    %1291 = vmatpush2.bf16.msra.mxu0 0
    %1292 = vmatprep.subr.bf16.mxu0 0
    %1293 = vmatpush2.bf16.msra.mxu0 0
    %1294 = vmatprep.subr.bf16.mxu0 0
    %1295 = vmatpush2.bf16.msra.mxu0 0
    %1296 = vmatprep.subr.bf16.mxu0 0
    %1297 = vmatpush2.bf16.msra.mxu0 0
    %1298 = vmatprep.subr.bf16.mxu0 0
    %1299 = vmatpush2.bf16.msra.mxu0 0
    %1300 = vmatprep.subr.bf16.mxu0 0
    %1301 = vmatpush2.bf16.msra.mxu0 0
    %1302 = vmatprep.subr.bf16.mxu0 0
    %1303 = vmatpush2.bf16.msra.mxu0 0
    %1304 = vmatprep.subr.bf16.mxu0 0
    %1305 = vmatpush2.bf16.msra.mxu0 0
    %1306 = vmatprep.mubr.bf16.mxu0 0
    %1307 = vmatmul.mubr.bf16.gmra.mxu0 %v1269
    %v1308 = vpop.f32.mrf.mxu0
    %v1309 = vadd.f32 0.0, %v1308
    %v1310 = vpop.f32.mrf.mxu0
    %v1311 = vpop.f32.mrf.mxu0
    %v1312 = vpop.f32.mrf.mxu0
    %1313 = vdwg.mxu0
    %1314 = vrot.lane.b32.xlu0 %v450, 104
    %v1315 = vpop.permute.xlu0 %1314
    %v1317 = vsel %vm451, %v1265, 0
    %v1320 = vsel %vm571, %v1315, 0
    %1322 = vmatprep.subr.bf16.mxu0 0
    %1323 = vmatpush1.bf16.msra.mxu0 0
    %1324 = vmatprep.subr.bf16.mxu0 0
    %1325 = vmatpush1.bf16.msra.mxu0 0
    %1326 = vmatprep.subr.bf16.mxu0 0
    %1327 = vmatpush1.bf16.msra.mxu0 0
    %1328 = vmatprep.subr.bf16.mxu0 0
    %1329 = vmatpush1.bf16.msra.mxu0 0
    %1330 = vmatprep.subr.bf16.mxu0 0
    %1331 = vmatpush1.bf16.msra.mxu0 0
    %1332 = vmatprep.subr.bf16.mxu0 0
    %1333 = vmatpush1.bf16.msra.mxu0 0
    %1334 = vmatprep.subr.bf16.mxu0 0
    %1335 = vmatpush1.bf16.msra.mxu0 0
    %1336 = vmatprep.subr.bf16.mxu0 0
    %1337 = vmatpush1.bf16.msra.mxu0 %v1320
    %1338 = vmatprep.subr.bf16.mxu0 0
    %1339 = vmatpush2.bf16.msra.mxu0 0
    %1340 = vmatprep.subr.bf16.mxu0 0
    %1341 = vmatpush2.bf16.msra.mxu0 0
    %1342 = vmatprep.subr.bf16.mxu0 0
    %1343 = vmatpush2.bf16.msra.mxu0 0
    %1344 = vmatprep.subr.bf16.mxu0 0
    %1345 = vmatpush2.bf16.msra.mxu0 0
    %1346 = vmatprep.subr.bf16.mxu0 0
    %1347 = vmatpush2.bf16.msra.mxu0 0
    %1348 = vmatprep.subr.bf16.mxu0 0
    %1349 = vmatpush2.bf16.msra.mxu0 0
    %1350 = vmatprep.subr.bf16.mxu0 0
    %1351 = vmatpush2.bf16.msra.mxu0 0
    %1352 = vmatprep.subr.bf16.mxu0 0
    %1353 = vmatpush2.bf16.msra.mxu0 0
    %1354 = vmatprep.mubr.bf16.mxu0 0
    %1355 = vmatmul.mubr.bf16.gmra.mxu0 %v1317
    %v1356 = vpop.f32.mrf.mxu0
    %v1357 = vadd.f32 0.0, %v1356
    %v1358 = vpop.f32.mrf.mxu0
    %v1359 = vpop.f32.mrf.mxu0
    %v1360 = vpop.f32.mrf.mxu0
    %1361 = vdwg.mxu0
    %v1362 = vpack.c.bf16 %v1357, %v1309
    %v1364 = vunpack.c.l.b16 %v1362
    %v1365 = vunpack.c.h.b16 %v1362
    %v1366 = vpack.c.b16 %v1364, %v1364
    %v1367 = vpack.c.b16 %v1365, %v1365
    %1368 = vrot.lane.b32.xlu0 %v1366, 24
    %v1369 = vpop.permute.xlu0 %1368
    %1370 = vrot.lane.b32.xlu0 %v1367, 24
    %v1371 = vpop.permute.xlu0 %1370
    %vm1374 = vcmask 257216
    %1375 = vst.msk [vmem:[#allocation2] sm:$0xf] %vm1374, %v1369
    %1376 = vst.msk [vmem:[#allocation2 + $0x4] sm:$0xf] %vm1374, %v1371
    %v1377 = vld [vmem:[#allocation2] sm:$0xf]
    %v1378 = vld [vmem:[#allocation2 + $0x4] sm:$0xf]
    %v1379 = vld [vmem:[#allocation8] sm:$0xf]
    %v1380 = vld [vmem:[#allocation8 + $0x4] sm:$0xf]
    %v1381 = vld [vmem:[#allocation8 + $0x8] sm:$0xf]
    %v1382 = vld [vmem:[#allocation8 + $0xc] sm:$0xf]
    %v1383 = vld [vmem:[#allocation9] sm:$0x1]
    %v1385 = vlaneseq
    %v1386 = vshrl.u32 %v1385, 7
    %v1387 = vsub.s32 0, %v1386
    %v1388 = vrot.slane %v1383, %v1387
    %v1392 = vunpack.c.l.b16 %v1377
    %v1393 = vunpack.c.l.b16 %v1378
    %v1394 = vpack.c.b16 %v1393, %v1392
    %v1399 = vunpack.c.l.b16 %v1379
    %v1400 = vunpack.c.l.b16 %v1380
    %v1401 = vunpack.c.l.b16 %v1381
    %v1402 = vunpack.c.l.b16 %v1382
    %v1403 = vpack.c.b16 %v1400, %v1399
    %v1404 = vpack.c.b16 %v1402, %v1401
    %v1408 = vsel %vm274, %v1394, 0
    %1410 = vmatprep.subr.bf16.mxu0 0
    %1411 = vmatpush1.bf16.msra.mxu0 0
    %1412 = vmatprep.subr.bf16.mxu0 0
    %1413 = vmatpush1.bf16.msra.mxu0 0
    %1414 = vmatprep.subr.bf16.mxu0 0
    %1415 = vmatpush1.bf16.msra.mxu0 0
    %1416 = vmatprep.subr.bf16.mxu0 0
    %1417 = vmatpush1.bf16.msra.mxu0 0
    %1418 = vmatprep.subr.bf16.mxu0 0
    %1419 = vmatpush1.bf16.msra.mxu0 0
    %1420 = vmatprep.subr.bf16.mxu0 0
    %1421 = vmatpush1.bf16.msra.mxu0 0
    %1422 = vmatprep.subr.bf16.mxu0 0
    %1423 = vmatpush1.bf16.msra.mxu0 %v1404
    %1424 = vmatprep.subr.bf16.mxu0 0
    %1425 = vmatpush1.bf16.msra.mxu0 %v1403
    %1426 = vmatprep.subr.bf16.mxu0 0
    %1427 = vmatpush2.bf16.msra.mxu0 0
    %1428 = vmatprep.subr.bf16.mxu0 0
    %1429 = vmatpush2.bf16.msra.mxu0 0
    %1430 = vmatprep.subr.bf16.mxu0 0
    %1431 = vmatpush2.bf16.msra.mxu0 0
    %1432 = vmatprep.subr.bf16.mxu0 0
    %1433 = vmatpush2.bf16.msra.mxu0 0
    %1434 = vmatprep.subr.bf16.mxu0 0
    %1435 = vmatpush2.bf16.msra.mxu0 0
    %1436 = vmatprep.subr.bf16.mxu0 0
    %1437 = vmatpush2.bf16.msra.mxu0 0
    %1438 = vmatprep.subr.bf16.mxu0 0
    %1439 = vmatpush2.bf16.msra.mxu0 0
    %1440 = vmatprep.subr.bf16.mxu0 0
    %1441 = vmatpush2.bf16.msra.mxu0 0
    %1442 = vmatprep.mubr.bf16.mxu0 0
    %1443 = vmatmul.mubr.bf16.gmra.mxu0 %v1408
    %v1444 = vpop.f32.mrf.mxu0
    %v1445 = vadd.f32 %v1388, %v1444
    %v1446 = vpop.f32.mrf.mxu0
    %v1447 = vpop.f32.mrf.mxu0
    %v1448 = vadd.f32 %v1388, %v1447
    %v1449 = vpop.f32.mrf.mxu0
    %1450 = vdwg.mxu0
    %v1451 = vadd.f32 %v1445, %v243
    %v1452 = vadd.f32 %v1448, %v244
    %v1453 = vld [vmem:[#allocation11] sm:$0x1]
    %v1454 = vld [vmem:[#allocation12] sm:$0x1]
    %v1455 = vsel %vm274, %v1451, 0.0
    %1456 = vadd.xlane.f32.xlu0 %v1455
    %v1457 = vpop.xlane.xlu0 %1456
    %v1458 = vsel %vm274, %v1452, 0.0
    %1459 = vadd.xlane.f32.xlu0 %v1458
    %v1460 = vpop.xlane.xlu0 %1459
    %v1461 = vrcp.pop 32.0
    %v1462 = vmul.f32 %v1457, %v1461
    %v1463 = vmul.f32 %v1460, %v1461
    %v1464 = vsub.f32 %v1451, %v1462
    %v1465 = vsub.f32 %v1452, %v1463
    %v1466 = vmul.f32 %v1464, %v1464
    %v1467 = vmul.f32 %v1465, %v1465
    %v1468 = vsel %vm274, %v1466, 0.0
    %1469 = vadd.xlane.f32.xlu0 %v1468
    %v1470 = vpop.xlane.xlu0 %1469
    %v1471 = vsel %vm274, %v1467, 0.0
    %1472 = vadd.xlane.f32.xlu0 %v1471
    %v1473 = vpop.xlane.xlu0 %1472
    %v1474 = vmul.f32 %v1470, %v1461
    %v1475 = vmul.f32 %v1473, %v1461
    %v1476 = vadd.f32 %v1474, 1e-05
    %v1477 = vadd.f32 %v1475, 1e-05
    %v1478 = vrsqrt.pop %v1476
    %v1479 = vrsqrt.pop %v1477
    %v1480 = vmul.f32 %v1464, %v1478
    %v1481 = vmul.f32 %v1465, %v1479
    %v1483 = vlaneseq
    %v1484 = vshrl.u32 %v1483, 7
    %v1485 = vsub.s32 0, %v1484
    %v1486 = vrot.slane %v1453, %v1485
    %v1488 = vmul.f32 %v1480, %v1486
    %v1489 = vmul.f32 %v1481, %v1486
    %v1491 = vlaneseq
    %v1492 = vshrl.u32 %v1491, 7
    %v1493 = vsub.s32 0, %v1492
    %v1494 = vrot.slane %v1454, %v1493
    %v1496 = vadd.f32 %v1488, %v1494
    %v1497 = vadd.f32 %v1489, %v1494
    %v1498 = vpack.c.bf16 %v1497, %v1496
    %v1499 = vld [vmem:[%s11] sm:$0xf]
    %v1500 = vld [vmem:[%s11 + $0x4] sm:$0xf]
    %v1501 = vld [vmem:[%s11 + $0x8] sm:$0xf]
    %v1502 = vld [vmem:[%s11 + $0xc] sm:$0xf]
    %v1507 = vunpack.c.l.b16 %v1499
    %v1508 = vunpack.c.l.b16 %v1500
    %v1509 = vunpack.c.l.b16 %v1501
    %v1510 = vunpack.c.l.b16 %v1502
    %v1511 = vpack.c.b16 %v1508, %v1507
    %v1512 = vpack.c.b16 %v1510, %v1509
    %v1516 = vsel %vm274, %v1498, 0
    %1518 = vmatprep.subr.bf16.mxu0 0
    %1519 = vmatpush1.bf16.msra.mxu0 0
    %1520 = vmatprep.subr.bf16.mxu0 0
    %1521 = vmatpush1.bf16.msra.mxu0 0
    %1522 = vmatprep.subr.bf16.mxu0 0
    %1523 = vmatpush1.bf16.msra.mxu0 0
    %1524 = vmatprep.subr.bf16.mxu0 0
    %1525 = vmatpush1.bf16.msra.mxu0 0
    %1526 = vmatprep.subr.bf16.mxu0 0
    %1527 = vmatpush1.bf16.msra.mxu0 0
    %1528 = vmatprep.subr.bf16.mxu0 0
    %1529 = vmatpush1.bf16.msra.mxu0 0
    %1530 = vmatprep.subr.bf16.mxu0 0
    %1531 = vmatpush1.bf16.msra.mxu0 %v1512
    %1532 = vmatprep.subr.bf16.mxu0 0
    %1533 = vmatpush1.bf16.msra.mxu0 %v1511
    %1534 = vmatprep.subr.bf16.mxu0 0
    %1535 = vmatpush2.bf16.msra.mxu0 0
    %1536 = vmatprep.subr.bf16.mxu0 0
    %1537 = vmatpush2.bf16.msra.mxu0 0
    %1538 = vmatprep.subr.bf16.mxu0 0
    %1539 = vmatpush2.bf16.msra.mxu0 0
    %1540 = vmatprep.subr.bf16.mxu0 0
    %1541 = vmatpush2.bf16.msra.mxu0 0
    %1542 = vmatprep.subr.bf16.mxu0 0
    %1543 = vmatpush2.bf16.msra.mxu0 0
    %1544 = vmatprep.subr.bf16.mxu0 0
    %1545 = vmatpush2.bf16.msra.mxu0 0
    %1546 = vmatprep.subr.bf16.mxu0 0
    %1547 = vmatpush2.bf16.msra.mxu0 0
    %1548 = vmatprep.subr.bf16.mxu0 0
    %1549 = vmatpush2.bf16.msra.mxu0 0
    %1550 = vmatprep.mubr.bf16.mxu0 0
    %1551 = vmatmul.mubr.bf16.gmra.mxu0 %v1516
    %v1552 = vpop.f32.mrf.mxu0
    %v1553 = vadd.f32 0.0, %v1552
    %v1554 = vpop.f32.mrf.mxu0
    %v1555 = vpop.f32.mrf.mxu0
    %v1556 = vadd.f32 0.0, %v1555
    %v1557 = vpop.f32.mrf.mxu0
    %1558 = vdwg.mxu0
    %v1559 = vpack.c.bf16 %v246, %v245
    %v1560 = vld [vmem:[#allocation14] sm:$0xf]
    %v1561 = vld [vmem:[#allocation14 + $0x4] sm:$0xf]
    %v1562 = vld [vmem:[#allocation14 + $0x8] sm:$0xf]
    %v1563 = vld [vmem:[#allocation14 + $0xc] sm:$0xf]
    %v1568 = vunpack.c.l.b16 %v1560
    %v1569 = vunpack.c.l.b16 %v1561
    %v1570 = vunpack.c.l.b16 %v1562
    %v1571 = vunpack.c.l.b16 %v1563
    %v1572 = vpack.c.b16 %v1569, %v1568
    %v1573 = vpack.c.b16 %v1571, %v1570
    %v1577 = vsel %vm274, %v1559, 0
    %1579 = vmatprep.subr.bf16.mxu0 0
    %1580 = vmatpush1.bf16.msra.mxu0 0
    %1581 = vmatprep.subr.bf16.mxu0 0
    %1582 = vmatpush1.bf16.msra.mxu0 0
    %1583 = vmatprep.subr.bf16.mxu0 0
    %1584 = vmatpush1.bf16.msra.mxu0 0
    %1585 = vmatprep.subr.bf16.mxu0 0
    %1586 = vmatpush1.bf16.msra.mxu0 0
    %1587 = vmatprep.subr.bf16.mxu0 0
    %1588 = vmatpush1.bf16.msra.mxu0 0
    %1589 = vmatprep.subr.bf16.mxu0 0
    %1590 = vmatpush1.bf16.msra.mxu0 0
    %1591 = vmatprep.subr.bf16.mxu0 0
    %1592 = vmatpush1.bf16.msra.mxu0 %v1573
    %1593 = vmatprep.subr.bf16.mxu0 0
    %1594 = vmatpush1.bf16.msra.mxu0 %v1572
    %1595 = vmatprep.subr.bf16.mxu0 0
    %1596 = vmatpush2.bf16.msra.mxu0 0
    %1597 = vmatprep.subr.bf16.mxu0 0
    %1598 = vmatpush2.bf16.msra.mxu0 0
    %1599 = vmatprep.subr.bf16.mxu0 0
    %1600 = vmatpush2.bf16.msra.mxu0 0
    %1601 = vmatprep.subr.bf16.mxu0 0
    %1602 = vmatpush2.bf16.msra.mxu0 0
    %1603 = vmatprep.subr.bf16.mxu0 0
    %1604 = vmatpush2.bf16.msra.mxu0 0
    %1605 = vmatprep.subr.bf16.mxu0 0
    %1606 = vmatpush2.bf16.msra.mxu0 0
    %1607 = vmatprep.subr.bf16.mxu0 0
    %1608 = vmatpush2.bf16.msra.mxu0 0
    %1609 = vmatprep.subr.bf16.mxu0 0
    %1610 = vmatpush2.bf16.msra.mxu0 0
    %1611 = vmatprep.mubr.bf16.mxu0 0
    %1612 = vmatmul.mubr.bf16.gmra.mxu0 %v1577
    %v1613 = vpop.f32.mrf.mxu0
    %v1614 = vadd.f32 0.0, %v1613
    %v1615 = vpop.f32.mrf.mxu0
    %v1616 = vpop.f32.mrf.mxu0
    %v1617 = vadd.f32 0.0, %v1616
    %v1618 = vpop.f32.mrf.mxu0
    %1619 = vdwg.mxu0
    %v1620 = vpack.c.bf16 %v248, %v247
    %v1621 = vld [vmem:[#allocation15] sm:$0xf]
    %v1622 = vld [vmem:[#allocation15 + $0x4] sm:$0xf]
    %v1623 = vld [vmem:[#allocation15 + $0x8] sm:$0xf]
    %v1624 = vld [vmem:[#allocation15 + $0xc] sm:$0xf]
    %v1629 = vunpack.c.l.b16 %v1621
    %v1630 = vunpack.c.l.b16 %v1622
    %v1631 = vunpack.c.l.b16 %v1623
    %v1632 = vunpack.c.l.b16 %v1624
    %v1633 = vpack.c.b16 %v1630, %v1629
    %v1634 = vpack.c.b16 %v1632, %v1631
    %v1638 = vsel %vm274, %v1620, 0
    %1640 = vmatprep.subr.bf16.mxu0 0
    %1641 = vmatpush1.bf16.msra.mxu0 0
    %1642 = vmatprep.subr.bf16.mxu0 0
    %1643 = vmatpush1.bf16.msra.mxu0 0
    %1644 = vmatprep.subr.bf16.mxu0 0
    %1645 = vmatpush1.bf16.msra.mxu0 0
    %1646 = vmatprep.subr.bf16.mxu0 0
    %1647 = vmatpush1.bf16.msra.mxu0 0
    %1648 = vmatprep.subr.bf16.mxu0 0
    %1649 = vmatpush1.bf16.msra.mxu0 0
    %1650 = vmatprep.subr.bf16.mxu0 0
    %1651 = vmatpush1.bf16.msra.mxu0 0
    %1652 = vmatprep.subr.bf16.mxu0 0
    %1653 = vmatpush1.bf16.msra.mxu0 %v1634
    %1654 = vmatprep.subr.bf16.mxu0 0
    %1655 = vmatpush1.bf16.msra.mxu0 %v1633
    %1656 = vmatprep.subr.bf16.mxu0 0
    %1657 = vmatpush2.bf16.msra.mxu0 0
    %1658 = vmatprep.subr.bf16.mxu0 0
    %1659 = vmatpush2.bf16.msra.mxu0 0
    %1660 = vmatprep.subr.bf16.mxu0 0
    %1661 = vmatpush2.bf16.msra.mxu0 0
    %1662 = vmatprep.subr.bf16.mxu0 0
    %1663 = vmatpush2.bf16.msra.mxu0 0
    %1664 = vmatprep.subr.bf16.mxu0 0
    %1665 = vmatpush2.bf16.msra.mxu0 0
    %1666 = vmatprep.subr.bf16.mxu0 0
    %1667 = vmatpush2.bf16.msra.mxu0 0
    %1668 = vmatprep.subr.bf16.mxu0 0
    %1669 = vmatpush2.bf16.msra.mxu0 0
    %1670 = vmatprep.subr.bf16.mxu0 0
    %1671 = vmatpush2.bf16.msra.mxu0 0
    %1672 = vmatprep.mubr.bf16.mxu0 0
    %1673 = vmatmul.mubr.bf16.gmra.mxu0 %v1638
    %v1674 = vpop.f32.mrf.mxu0
    %v1675 = vadd.f32 0.0, %v1674
    %v1676 = vpop.f32.mrf.mxu0
    %v1677 = vpop.f32.mrf.mxu0
    %v1678 = vadd.f32 0.0, %v1677
    %v1679 = vpop.f32.mrf.mxu0
    %1680 = vdwg.mxu0
    %v1681 = vpack.c.bf16 %v1556, %v1553
    %v1682 = vpack.c.bf16 %v1617, %v1614
    %v1683 = vpack.c.bf16 %v1678, %v1675
    %v1685 = vunpack.c.l.b16 %v1681
    %v1686 = vunpack.c.h.b16 %v1681
    %v1687 = vpack.c.b16 %v1685, %v1685
    %v1688 = vpack.c.b16 %v1686, %v1686
    %v1690 = vunpack.c.l.b16 %v1682
    %v1691 = vunpack.c.h.b16 %v1682
    %v1692 = vpack.c.b16 %v1690, %v1690
    %v1693 = vpack.c.b16 %v1691, %v1691
    %v1695 = vunpack.c.l.b16 %v1683
    %v1696 = vunpack.c.h.b16 %v1683
    %v1697 = vpack.c.b16 %v1695, %v1695
    %v1698 = vpack.c.b16 %v1696, %v1696
    %v1701 = vlaneseq
    %v1702 = vshrl.u32 %v1701, 7
    %v1703 = vsub.s32 0, %v1702
    %v1704 = vrot.slane %v255, %v1703
    %v1705 = vlaneseq
    %v1706 = vshrl.u32 %v1705, 7
    %v1707 = vsub.s32 0, %v1706
    %v1708 = vrot.slane %v256, %v1707
    %v1712 = vsel %vm451, %v1687, 0
    %v1715 = vsel %vm451, %v1692, 0
    %1717 = vmatprep.subr.bf16.mxu0 0
    %1718 = vmatpush1.bf16.xpose.msra.mxu0 0
    %1719 = vmatprep.subr.bf16.mxu0 0
    %1720 = vmatpush1.bf16.xpose.msra.mxu0 0
    %1721 = vmatprep.subr.bf16.mxu0 0
    %1722 = vmatpush1.bf16.xpose.msra.mxu0 0
    %1723 = vmatprep.subr.bf16.mxu0 0
    %1724 = vmatpush1.bf16.xpose.msra.mxu0 0
    %1725 = vmatprep.subr.bf16.mxu0 0
    %1726 = vmatpush1.bf16.xpose.msra.mxu0 0
    %1727 = vmatprep.subr.bf16.mxu0 0
    %1728 = vmatpush1.bf16.xpose.msra.mxu0 0
    %1729 = vmatprep.subr.bf16.mxu0 0
    %1730 = vmatpush1.bf16.xpose.msra.mxu0 0
    %1731 = vmatprep.subr.bf16.mxu0 0
    %1732 = vmatpush1.bf16.xpose.msra.mxu0 %v1715
    %1733 = vmatprep.subr.bf16.mxu0 0
    %1734 = vmatpush2.bf16.xpose.msra.mxu0 0
    %1735 = vmatprep.subr.bf16.mxu0 0
    %1736 = vmatpush2.bf16.xpose.msra.mxu0 0
    %1737 = vmatprep.subr.bf16.mxu0 0
    %1738 = vmatpush2.bf16.xpose.msra.mxu0 0
    %1739 = vmatprep.subr.bf16.mxu0 0
    %1740 = vmatpush2.bf16.xpose.msra.mxu0 0
    %1741 = vmatprep.subr.bf16.mxu0 0
    %1742 = vmatpush2.bf16.xpose.msra.mxu0 0
    %1743 = vmatprep.subr.bf16.mxu0 0
    %1744 = vmatpush2.bf16.xpose.msra.mxu0 0
    %1745 = vmatprep.subr.bf16.mxu0 0
    %1746 = vmatpush2.bf16.xpose.msra.mxu0 0
    %1747 = vmatprep.subr.bf16.mxu0 0
    %1748 = vmatpush2.bf16.xpose.msra.mxu0 0
    %1749 = vmatprep.mubr.bf16.mxu0 0
    %1750 = vmatmul.mubr.bf16.gmra.mxu0 %v1712
    %v1751 = vpop.f32.mrf.mxu0
    %v1752 = vadd.f32 %v1704, %v1751
    %v1753 = vpop.f32.mrf.mxu0
    %v1754 = vpop.f32.mrf.mxu0
    %v1755 = vpop.f32.mrf.mxu0
    %1756 = vdwg.mxu0
    %v1758 = vsel %vm451, %v1688, 0
    %v1761 = vsel %vm451, %v1693, 0
    %1763 = vmatprep.subr.bf16.mxu0 0
    %1764 = vmatpush1.bf16.xpose.msra.mxu0 0
    %1765 = vmatprep.subr.bf16.mxu0 0
    %1766 = vmatpush1.bf16.xpose.msra.mxu0 0
    %1767 = vmatprep.subr.bf16.mxu0 0
    %1768 = vmatpush1.bf16.xpose.msra.mxu0 0
    %1769 = vmatprep.subr.bf16.mxu0 0
    %1770 = vmatpush1.bf16.xpose.msra.mxu0 0
    %1771 = vmatprep.subr.bf16.mxu0 0
    %1772 = vmatpush1.bf16.xpose.msra.mxu0 0
    %1773 = vmatprep.subr.bf16.mxu0 0
    %1774 = vmatpush1.bf16.xpose.msra.mxu0 0
    %1775 = vmatprep.subr.bf16.mxu0 0
    %1776 = vmatpush1.bf16.xpose.msra.mxu0 0
    %1777 = vmatprep.subr.bf16.mxu0 0
    %1778 = vmatpush1.bf16.xpose.msra.mxu0 %v1761
    %1779 = vmatprep.subr.bf16.mxu0 0
    %1780 = vmatpush2.bf16.xpose.msra.mxu0 0
    %1781 = vmatprep.subr.bf16.mxu0 0
    %1782 = vmatpush2.bf16.xpose.msra.mxu0 0
    %1783 = vmatprep.subr.bf16.mxu0 0
    %1784 = vmatpush2.bf16.xpose.msra.mxu0 0
    %1785 = vmatprep.subr.bf16.mxu0 0
    %1786 = vmatpush2.bf16.xpose.msra.mxu0 0
    %1787 = vmatprep.subr.bf16.mxu0 0
    %1788 = vmatpush2.bf16.xpose.msra.mxu0 0
    %1789 = vmatprep.subr.bf16.mxu0 0
    %1790 = vmatpush2.bf16.xpose.msra.mxu0 0
    %1791 = vmatprep.subr.bf16.mxu0 0
    %1792 = vmatpush2.bf16.xpose.msra.mxu0 0
    %1793 = vmatprep.subr.bf16.mxu0 0
    %1794 = vmatpush2.bf16.xpose.msra.mxu0 0
    %1795 = vmatprep.mubr.bf16.mxu0 0
    %1796 = vmatmul.mubr.bf16.gmra.mxu0 %v1758
    %v1797 = vpop.f32.mrf.mxu0
    %v1798 = vadd.f32 %v1708, %v1797
    %v1799 = vpop.f32.mrf.mxu0
    %v1800 = vpop.f32.mrf.mxu0
    %v1801 = vpop.f32.mrf.mxu0
    %1802 = vdwg.mxu0
    %v1803 = vsel %vm451, %v1752, -inf
    %1804 = vmax.xlane.f32.xlu0 %v1803
    %v1805 = vpop.xlane.xlu0 %1804
    %v1806 = vsel %vm451, %v1798, -inf
    %1807 = vmax.xlane.f32.xlu0 %v1806
    %v1808 = vpop.xlane.xlu0 %1807
    %v1809 = vsub.f32 %v1752, %v1805
    %v1810 = vsub.f32 %v1798, %v1808
    %v1811 = vmul.f32 %v1809, 1.442695
    %v1812 = vpow.pop %v1811
    %v1813 = vmul.f32 %v1810, 1.442695
    %v1814 = vpow.pop %v1813
    %v1815 = vsel %vm451, %v1812, 0.0
    %1816 = vadd.xlane.f32.xlu0 %v1815
    %v1817 = vpop.xlane.xlu0 %1816
    %v1818 = vsel %vm451, %v1814, 0.0
    %1819 = vadd.xlane.f32.xlu0 %v1818
    %v1820 = vpop.xlane.xlu0 %1819
    %v1821 = vrcp.pop %v1817
    %v1822 = vrcp.pop %v1820
    %v1823 = vmul.f32 %v1812, %v1821
    %v1824 = vmul.f32 %v1814, %v1822
    %v1825 = vpack.c.bf16 %v1823, %v1823
    %v1826 = vpack.c.bf16 %v1824, %v1824
    %v1828 = vsel %vm451, %v1825, 0
    %v1831 = vsel %vm571, %v1697, 0
    %1833 = vmatprep.subr.bf16.mxu0 0
    %1834 = vmatpush1.bf16.msra.mxu0 0
    %1835 = vmatprep.subr.bf16.mxu0 0
    %1836 = vmatpush1.bf16.msra.mxu0 0
    %1837 = vmatprep.subr.bf16.mxu0 0
    %1838 = vmatpush1.bf16.msra.mxu0 0
    %1839 = vmatprep.subr.bf16.mxu0 0
    %1840 = vmatpush1.bf16.msra.mxu0 0
    %1841 = vmatprep.subr.bf16.mxu0 0
    %1842 = vmatpush1.bf16.msra.mxu0 0
    %1843 = vmatprep.subr.bf16.mxu0 0
    %1844 = vmatpush1.bf16.msra.mxu0 0
    %1845 = vmatprep.subr.bf16.mxu0 0
    %1846 = vmatpush1.bf16.msra.mxu0 0
    %1847 = vmatprep.subr.bf16.mxu0 0
    %1848 = vmatpush1.bf16.msra.mxu0 %v1831
    %1849 = vmatprep.subr.bf16.mxu0 0
    %1850 = vmatpush2.bf16.msra.mxu0 0
    %1851 = vmatprep.subr.bf16.mxu0 0
    %1852 = vmatpush2.bf16.msra.mxu0 0
    %1853 = vmatprep.subr.bf16.mxu0 0
    %1854 = vmatpush2.bf16.msra.mxu0 0
    %1855 = vmatprep.subr.bf16.mxu0 0
    %1856 = vmatpush2.bf16.msra.mxu0 0
    %1857 = vmatprep.subr.bf16.mxu0 0
    %1858 = vmatpush2.bf16.msra.mxu0 0
    %1859 = vmatprep.subr.bf16.mxu0 0
    %1860 = vmatpush2.bf16.msra.mxu0 0
    %1861 = vmatprep.subr.bf16.mxu0 0
    %1862 = vmatpush2.bf16.msra.mxu0 0
    %1863 = vmatprep.subr.bf16.mxu0 0
    %1864 = vmatpush2.bf16.msra.mxu0 0
    %1865 = vmatprep.mubr.bf16.mxu0 0
    %1866 = vmatmul.mubr.bf16.gmra.mxu0 %v1828
    %v1867 = vpop.f32.mrf.mxu0
    %v1868 = vadd.f32 0.0, %v1867
    %v1869 = vpop.f32.mrf.mxu0
    %v1870 = vpop.f32.mrf.mxu0
    %v1871 = vpop.f32.mrf.mxu0
    %1872 = vdwg.mxu0
    %v1874 = vsel %vm451, %v1826, 0
    %v1877 = vsel %vm571, %v1698, 0
    %1879 = vmatprep.subr.bf16.mxu0 0
    %1880 = vmatpush1.bf16.msra.mxu0 0
    %1881 = vmatprep.subr.bf16.mxu0 0
    %1882 = vmatpush1.bf16.msra.mxu0 0
    %1883 = vmatprep.subr.bf16.mxu0 0
    %1884 = vmatpush1.bf16.msra.mxu0 0
    %1885 = vmatprep.subr.bf16.mxu0 0
    %1886 = vmatpush1.bf16.msra.mxu0 0
    %1887 = vmatprep.subr.bf16.mxu0 0
    %1888 = vmatpush1.bf16.msra.mxu0 0
    %1889 = vmatprep.subr.bf16.mxu0 0
    %1890 = vmatpush1.bf16.msra.mxu0 0
    %1891 = vmatprep.subr.bf16.mxu0 0
    %1892 = vmatpush1.bf16.msra.mxu0 0
    %1893 = vmatprep.subr.bf16.mxu0 0
    %1894 = vmatpush1.bf16.msra.mxu0 %v1877
    %1895 = vmatprep.subr.bf16.mxu0 0
    %1896 = vmatpush2.bf16.msra.mxu0 0
    %1897 = vmatprep.subr.bf16.mxu0 0
    %1898 = vmatpush2.bf16.msra.mxu0 0
    %1899 = vmatprep.subr.bf16.mxu0 0
    %1900 = vmatpush2.bf16.msra.mxu0 0
    %1901 = vmatprep.subr.bf16.mxu0 0
    %1902 = vmatpush2.bf16.msra.mxu0 0
    %1903 = vmatprep.subr.bf16.mxu0 0
    %1904 = vmatpush2.bf16.msra.mxu0 0
    %1905 = vmatprep.subr.bf16.mxu0 0
    %1906 = vmatpush2.bf16.msra.mxu0 0
    %1907 = vmatprep.subr.bf16.mxu0 0
    %1908 = vmatpush2.bf16.msra.mxu0 0
    %1909 = vmatprep.subr.bf16.mxu0 0
    %1910 = vmatpush2.bf16.msra.mxu0 0
    %1911 = vmatprep.mubr.bf16.mxu0 0
    %1912 = vmatmul.mubr.bf16.gmra.mxu0 %v1874
    %v1913 = vpop.f32.mrf.mxu0
    %v1914 = vadd.f32 0.0, %v1913
    %v1915 = vpop.f32.mrf.mxu0
    %v1916 = vpop.f32.mrf.mxu0
    %v1917 = vpop.f32.mrf.mxu0
    %1918 = vdwg.mxu0
    %v1919 = vpack.c.bf16 %v1914, %v1868
    %v1921 = vunpack.c.l.b16 %v1919
    %v1922 = vunpack.c.h.b16 %v1919
    %v1923 = vpack.c.b16 %v1921, %v1921
    %v1924 = vpack.c.b16 %v1922, %v1922
    %1927 = vst.msk [vmem:[#allocation2] sm:$0xf] %vm669, %v1923
    %1928 = vst.msk [vmem:[#allocation2 + $0x4] sm:$0xf] %vm669, %v1924
    %1929 = vrot.lane.b32.xlu0 %v1687, 120
    %v1930 = vpop.permute.xlu0 %1929
    %1931 = vrot.lane.b32.xlu0 %v1692, 120
    %v1932 = vpop.permute.xlu0 %1931
    %v1934 = vsel %vm451, %v1930, 0
    %v1937 = vsel %vm451, %v1932, 0
    %1939 = vmatprep.subr.bf16.mxu0 0
    %1940 = vmatpush1.bf16.xpose.msra.mxu0 0
    %1941 = vmatprep.subr.bf16.mxu0 0
    %1942 = vmatpush1.bf16.xpose.msra.mxu0 0
    %1943 = vmatprep.subr.bf16.mxu0 0
    %1944 = vmatpush1.bf16.xpose.msra.mxu0 0
    %1945 = vmatprep.subr.bf16.mxu0 0
    %1946 = vmatpush1.bf16.xpose.msra.mxu0 0
    %1947 = vmatprep.subr.bf16.mxu0 0
    %1948 = vmatpush1.bf16.xpose.msra.mxu0 0
    %1949 = vmatprep.subr.bf16.mxu0 0
    %1950 = vmatpush1.bf16.xpose.msra.mxu0 0
    %1951 = vmatprep.subr.bf16.mxu0 0
    %1952 = vmatpush1.bf16.xpose.msra.mxu0 0
    %1953 = vmatprep.subr.bf16.mxu0 0
    %1954 = vmatpush1.bf16.xpose.msra.mxu0 %v1937
    %1955 = vmatprep.subr.bf16.mxu0 0
    %1956 = vmatpush2.bf16.xpose.msra.mxu0 0
    %1957 = vmatprep.subr.bf16.mxu0 0
    %1958 = vmatpush2.bf16.xpose.msra.mxu0 0
    %1959 = vmatprep.subr.bf16.mxu0 0
    %1960 = vmatpush2.bf16.xpose.msra.mxu0 0
    %1961 = vmatprep.subr.bf16.mxu0 0
    %1962 = vmatpush2.bf16.xpose.msra.mxu0 0
    %1963 = vmatprep.subr.bf16.mxu0 0
    %1964 = vmatpush2.bf16.xpose.msra.mxu0 0
    %1965 = vmatprep.subr.bf16.mxu0 0
    %1966 = vmatpush2.bf16.xpose.msra.mxu0 0
    %1967 = vmatprep.subr.bf16.mxu0 0
    %1968 = vmatpush2.bf16.xpose.msra.mxu0 0
    %1969 = vmatprep.subr.bf16.mxu0 0
    %1970 = vmatpush2.bf16.xpose.msra.mxu0 0
    %1971 = vmatprep.mubr.bf16.mxu0 0
    %1972 = vmatmul.mubr.bf16.gmra.mxu0 %v1934
    %v1973 = vpop.f32.mrf.mxu0
    %v1974 = vadd.f32 %v1704, %v1973
    %v1975 = vpop.f32.mrf.mxu0
    %v1976 = vpop.f32.mrf.mxu0
    %v1977 = vpop.f32.mrf.mxu0
    %1978 = vdwg.mxu0
    %1979 = vrot.lane.b32.xlu0 %v1688, 120
    %v1980 = vpop.permute.xlu0 %1979
    %1981 = vrot.lane.b32.xlu0 %v1693, 120
    %v1982 = vpop.permute.xlu0 %1981
    %v1984 = vsel %vm451, %v1980, 0
    %v1987 = vsel %vm451, %v1982, 0
    %1989 = vmatprep.subr.bf16.mxu0 0
    %1990 = vmatpush1.bf16.xpose.msra.mxu0 0
    %1991 = vmatprep.subr.bf16.mxu0 0
    %1992 = vmatpush1.bf16.xpose.msra.mxu0 0
    %1993 = vmatprep.subr.bf16.mxu0 0
    %1994 = vmatpush1.bf16.xpose.msra.mxu0 0
    %1995 = vmatprep.subr.bf16.mxu0 0
    %1996 = vmatpush1.bf16.xpose.msra.mxu0 0
    %1997 = vmatprep.subr.bf16.mxu0 0
    %1998 = vmatpush1.bf16.xpose.msra.mxu0 0
    %1999 = vmatprep.subr.bf16.mxu0 0
    %2000 = vmatpush1.bf16.xpose.msra.mxu0 0
    %2001 = vmatprep.subr.bf16.mxu0 0
    %2002 = vmatpush1.bf16.xpose.msra.mxu0 0
    %2003 = vmatprep.subr.bf16.mxu0 0
    %2004 = vmatpush1.bf16.xpose.msra.mxu0 %v1987
    %2005 = vmatprep.subr.bf16.mxu0 0
    %2006 = vmatpush2.bf16.xpose.msra.mxu0 0
    %2007 = vmatprep.subr.bf16.mxu0 0
    %2008 = vmatpush2.bf16.xpose.msra.mxu0 0
    %2009 = vmatprep.subr.bf16.mxu0 0
    %2010 = vmatpush2.bf16.xpose.msra.mxu0 0
    %2011 = vmatprep.subr.bf16.mxu0 0
    %2012 = vmatpush2.bf16.xpose.msra.mxu0 0
    %2013 = vmatprep.subr.bf16.mxu0 0
    %2014 = vmatpush2.bf16.xpose.msra.mxu0 0
    %2015 = vmatprep.subr.bf16.mxu0 0
    %2016 = vmatpush2.bf16.xpose.msra.mxu0 0
    %2017 = vmatprep.subr.bf16.mxu0 0
    %2018 = vmatpush2.bf16.xpose.msra.mxu0 0
    %2019 = vmatprep.subr.bf16.mxu0 0
    %2020 = vmatpush2.bf16.xpose.msra.mxu0 0
    %2021 = vmatprep.mubr.bf16.mxu0 0
    %2022 = vmatmul.mubr.bf16.gmra.mxu0 %v1984
    %v2023 = vpop.f32.mrf.mxu0
    %v2024 = vadd.f32 %v1708, %v2023
    %v2025 = vpop.f32.mrf.mxu0
    %v2026 = vpop.f32.mrf.mxu0
    %v2027 = vpop.f32.mrf.mxu0
    %2028 = vdwg.mxu0
    %v2029 = vsel %vm451, %v1974, -inf
    %2030 = vmax.xlane.f32.xlu0 %v2029
    %v2031 = vpop.xlane.xlu0 %2030
    %v2032 = vsel %vm451, %v2024, -inf
    %2033 = vmax.xlane.f32.xlu0 %v2032
    %v2034 = vpop.xlane.xlu0 %2033
    %v2035 = vsub.f32 %v1974, %v2031
    %v2036 = vsub.f32 %v2024, %v2034
    %v2037 = vmul.f32 %v2035, 1.442695
    %v2038 = vpow.pop %v2037
    %v2039 = vmul.f32 %v2036, 1.442695
    %v2040 = vpow.pop %v2039
    %v2041 = vsel %vm451, %v2038, 0.0
    %2042 = vadd.xlane.f32.xlu0 %v2041
    %v2043 = vpop.xlane.xlu0 %2042
    %v2044 = vsel %vm451, %v2040, 0.0
    %2045 = vadd.xlane.f32.xlu0 %v2044
    %v2046 = vpop.xlane.xlu0 %2045
    %v2047 = vrcp.pop %v2043
    %v2048 = vrcp.pop %v2046
    %v2049 = vmul.f32 %v2038, %v2047
    %v2050 = vmul.f32 %v2040, %v2048
    %v2051 = vpack.c.bf16 %v2049, %v2049
    %v2052 = vpack.c.bf16 %v2050, %v2050
    %2053 = vrot.lane.b32.xlu0 %v1697, 120
    %v2054 = vpop.permute.xlu0 %2053
    %v2056 = vsel %vm451, %v2051, 0
    %v2059 = vsel %vm571, %v2054, 0
    %2061 = vmatprep.subr.bf16.mxu0 0
    %2062 = vmatpush1.bf16.msra.mxu0 0
    %2063 = vmatprep.subr.bf16.mxu0 0
    %2064 = vmatpush1.bf16.msra.mxu0 0
    %2065 = vmatprep.subr.bf16.mxu0 0
    %2066 = vmatpush1.bf16.msra.mxu0 0
    %2067 = vmatprep.subr.bf16.mxu0 0
    %2068 = vmatpush1.bf16.msra.mxu0 0
    %2069 = vmatprep.subr.bf16.mxu0 0
    %2070 = vmatpush1.bf16.msra.mxu0 0
    %2071 = vmatprep.subr.bf16.mxu0 0
    %2072 = vmatpush1.bf16.msra.mxu0 0
    %2073 = vmatprep.subr.bf16.mxu0 0
    %2074 = vmatpush1.bf16.msra.mxu0 0
    %2075 = vmatprep.subr.bf16.mxu0 0
    %2076 = vmatpush1.bf16.msra.mxu0 %v2059
    %2077 = vmatprep.subr.bf16.mxu0 0
    %2078 = vmatpush2.bf16.msra.mxu0 0
    %2079 = vmatprep.subr.bf16.mxu0 0
    %2080 = vmatpush2.bf16.msra.mxu0 0
    %2081 = vmatprep.subr.bf16.mxu0 0
    %2082 = vmatpush2.bf16.msra.mxu0 0
    %2083 = vmatprep.subr.bf16.mxu0 0
    %2084 = vmatpush2.bf16.msra.mxu0 0
    %2085 = vmatprep.subr.bf16.mxu0 0
    %2086 = vmatpush2.bf16.msra.mxu0 0
    %2087 = vmatprep.subr.bf16.mxu0 0
    %2088 = vmatpush2.bf16.msra.mxu0 0
    %2089 = vmatprep.subr.bf16.mxu0 0
    %2090 = vmatpush2.bf16.msra.mxu0 0
    %2091 = vmatprep.subr.bf16.mxu0 0
    %2092 = vmatpush2.bf16.msra.mxu0 0
    %2093 = vmatprep.mubr.bf16.mxu0 0
    %2094 = vmatmul.mubr.bf16.gmra.mxu0 %v2056
    %v2095 = vpop.f32.mrf.mxu0
    %v2096 = vadd.f32 0.0, %v2095
    %v2097 = vpop.f32.mrf.mxu0
    %v2098 = vpop.f32.mrf.mxu0
    %v2099 = vpop.f32.mrf.mxu0
    %2100 = vdwg.mxu0
    %2101 = vrot.lane.b32.xlu0 %v1698, 120
    %v2102 = vpop.permute.xlu0 %2101
    %v2104 = vsel %vm451, %v2052, 0
    %v2107 = vsel %vm571, %v2102, 0
    %2109 = vmatprep.subr.bf16.mxu0 0
    %2110 = vmatpush1.bf16.msra.mxu0 0
    %2111 = vmatprep.subr.bf16.mxu0 0
    %2112 = vmatpush1.bf16.msra.mxu0 0
    %2113 = vmatprep.subr.bf16.mxu0 0
    %2114 = vmatpush1.bf16.msra.mxu0 0
    %2115 = vmatprep.subr.bf16.mxu0 0
    %2116 = vmatpush1.bf16.msra.mxu0 0
    %2117 = vmatprep.subr.bf16.mxu0 0
    %2118 = vmatpush1.bf16.msra.mxu0 0
    %2119 = vmatprep.subr.bf16.mxu0 0
    %2120 = vmatpush1.bf16.msra.mxu0 0
    %2121 = vmatprep.subr.bf16.mxu0 0
    %2122 = vmatpush1.bf16.msra.mxu0 0
    %2123 = vmatprep.subr.bf16.mxu0 0
    %2124 = vmatpush1.bf16.msra.mxu0 %v2107
    %2125 = vmatprep.subr.bf16.mxu0 0
    %2126 = vmatpush2.bf16.msra.mxu0 0
    %2127 = vmatprep.subr.bf16.mxu0 0
    %2128 = vmatpush2.bf16.msra.mxu0 0
    %2129 = vmatprep.subr.bf16.mxu0 0
    %2130 = vmatpush2.bf16.msra.mxu0 0
    %2131 = vmatprep.subr.bf16.mxu0 0
    %2132 = vmatpush2.bf16.msra.mxu0 0
    %2133 = vmatprep.subr.bf16.mxu0 0
    %2134 = vmatpush2.bf16.msra.mxu0 0
    %2135 = vmatprep.subr.bf16.mxu0 0
    %2136 = vmatpush2.bf16.msra.mxu0 0
    %2137 = vmatprep.subr.bf16.mxu0 0
    %2138 = vmatpush2.bf16.msra.mxu0 0
    %2139 = vmatprep.subr.bf16.mxu0 0
    %2140 = vmatpush2.bf16.msra.mxu0 0
    %2141 = vmatprep.mubr.bf16.mxu0 0
    %2142 = vmatmul.mubr.bf16.gmra.mxu0 %v2104
    %v2143 = vpop.f32.mrf.mxu0
    %v2144 = vadd.f32 0.0, %v2143
    %v2145 = vpop.f32.mrf.mxu0
    %v2146 = vpop.f32.mrf.mxu0
    %v2147 = vpop.f32.mrf.mxu0
    %2148 = vdwg.mxu0
    %v2149 = vpack.c.bf16 %v2144, %v2096
    %v2151 = vunpack.c.l.b16 %v2149
    %v2152 = vunpack.c.h.b16 %v2149
    %v2153 = vpack.c.b16 %v2151, %v2151
    %v2154 = vpack.c.b16 %v2152, %v2152
    %2155 = vrot.lane.b32.xlu0 %v2153, 8
    %v2156 = vpop.permute.xlu0 %2155
    %2157 = vrot.lane.b32.xlu0 %v2154, 8
    %v2158 = vpop.permute.xlu0 %2157
    %2161 = vst.msk [vmem:[#allocation2] sm:$0xf] %vm904, %v2156
    %2162 = vst.msk [vmem:[#allocation2 + $0x4] sm:$0xf] %vm904, %v2158
    %2163 = vrot.lane.b32.xlu0 %v1687, 112
    %v2164 = vpop.permute.xlu0 %2163
    %2165 = vrot.lane.b32.xlu0 %v1692, 112
    %v2166 = vpop.permute.xlu0 %2165
    %v2168 = vsel %vm451, %v2164, 0
    %v2171 = vsel %vm451, %v2166, 0
    %2173 = vmatprep.subr.bf16.mxu0 0
    %2174 = vmatpush1.bf16.xpose.msra.mxu0 0
    %2175 = vmatprep.subr.bf16.mxu0 0
    %2176 = vmatpush1.bf16.xpose.msra.mxu0 0
    %2177 = vmatprep.subr.bf16.mxu0 0
    %2178 = vmatpush1.bf16.xpose.msra.mxu0 0
    %2179 = vmatprep.subr.bf16.mxu0 0
    %2180 = vmatpush1.bf16.xpose.msra.mxu0 0
    %2181 = vmatprep.subr.bf16.mxu0 0
    %2182 = vmatpush1.bf16.xpose.msra.mxu0 0
    %2183 = vmatprep.subr.bf16.mxu0 0
    %2184 = vmatpush1.bf16.xpose.msra.mxu0 0
    %2185 = vmatprep.subr.bf16.mxu0 0
    %2186 = vmatpush1.bf16.xpose.msra.mxu0 0
    %2187 = vmatprep.subr.bf16.mxu0 0
    %2188 = vmatpush1.bf16.xpose.msra.mxu0 %v2171
    %2189 = vmatprep.subr.bf16.mxu0 0
    %2190 = vmatpush2.bf16.xpose.msra.mxu0 0
    %2191 = vmatprep.subr.bf16.mxu0 0
    %2192 = vmatpush2.bf16.xpose.msra.mxu0 0
    %2193 = vmatprep.subr.bf16.mxu0 0
    %2194 = vmatpush2.bf16.xpose.msra.mxu0 0
    %2195 = vmatprep.subr.bf16.mxu0 0
    %2196 = vmatpush2.bf16.xpose.msra.mxu0 0
    %2197 = vmatprep.subr.bf16.mxu0 0
    %2198 = vmatpush2.bf16.xpose.msra.mxu0 0
    %2199 = vmatprep.subr.bf16.mxu0 0
    %2200 = vmatpush2.bf16.xpose.msra.mxu0 0
    %2201 = vmatprep.subr.bf16.mxu0 0
    %2202 = vmatpush2.bf16.xpose.msra.mxu0 0
    %2203 = vmatprep.subr.bf16.mxu0 0
    %2204 = vmatpush2.bf16.xpose.msra.mxu0 0
    %2205 = vmatprep.mubr.bf16.mxu0 0
    %2206 = vmatmul.mubr.bf16.gmra.mxu0 %v2168
    %v2207 = vpop.f32.mrf.mxu0
    %v2208 = vadd.f32 %v1704, %v2207
    %v2209 = vpop.f32.mrf.mxu0
    %v2210 = vpop.f32.mrf.mxu0
    %v2211 = vpop.f32.mrf.mxu0
    %2212 = vdwg.mxu0
    %2213 = vrot.lane.b32.xlu0 %v1688, 112
    %v2214 = vpop.permute.xlu0 %2213
    %2215 = vrot.lane.b32.xlu0 %v1693, 112
    %v2216 = vpop.permute.xlu0 %2215
    %v2218 = vsel %vm451, %v2214, 0
    %v2221 = vsel %vm451, %v2216, 0
    %2223 = vmatprep.subr.bf16.mxu0 0
    %2224 = vmatpush1.bf16.xpose.msra.mxu0 0
    %2225 = vmatprep.subr.bf16.mxu0 0
    %2226 = vmatpush1.bf16.xpose.msra.mxu0 0
    %2227 = vmatprep.subr.bf16.mxu0 0
    %2228 = vmatpush1.bf16.xpose.msra.mxu0 0
    %2229 = vmatprep.subr.bf16.mxu0 0
    %2230 = vmatpush1.bf16.xpose.msra.mxu0 0
    %2231 = vmatprep.subr.bf16.mxu0 0
    %2232 = vmatpush1.bf16.xpose.msra.mxu0 0
    %2233 = vmatprep.subr.bf16.mxu0 0
    %2234 = vmatpush1.bf16.xpose.msra.mxu0 0
    %2235 = vmatprep.subr.bf16.mxu0 0
    %2236 = vmatpush1.bf16.xpose.msra.mxu0 0
    %2237 = vmatprep.subr.bf16.mxu0 0
    %2238 = vmatpush1.bf16.xpose.msra.mxu0 %v2221
    %2239 = vmatprep.subr.bf16.mxu0 0
    %2240 = vmatpush2.bf16.xpose.msra.mxu0 0
    %2241 = vmatprep.subr.bf16.mxu0 0
    %2242 = vmatpush2.bf16.xpose.msra.mxu0 0
    %2243 = vmatprep.subr.bf16.mxu0 0
    %2244 = vmatpush2.bf16.xpose.msra.mxu0 0
    %2245 = vmatprep.subr.bf16.mxu0 0
    %2246 = vmatpush2.bf16.xpose.msra.mxu0 0
    %2247 = vmatprep.subr.bf16.mxu0 0
    %2248 = vmatpush2.bf16.xpose.msra.mxu0 0
    %2249 = vmatprep.subr.bf16.mxu0 0
    %2250 = vmatpush2.bf16.xpose.msra.mxu0 0
    %2251 = vmatprep.subr.bf16.mxu0 0
    %2252 = vmatpush2.bf16.xpose.msra.mxu0 0
    %2253 = vmatprep.subr.bf16.mxu0 0
    %2254 = vmatpush2.bf16.xpose.msra.mxu0 0
    %2255 = vmatprep.mubr.bf16.mxu0 0
    %2256 = vmatmul.mubr.bf16.gmra.mxu0 %v2218
    %v2257 = vpop.f32.mrf.mxu0
    %v2258 = vadd.f32 %v1708, %v2257
    %v2259 = vpop.f32.mrf.mxu0
    %v2260 = vpop.f32.mrf.mxu0
    %v2261 = vpop.f32.mrf.mxu0
    %2262 = vdwg.mxu0
    %v2263 = vsel %vm451, %v2208, -inf
    %2264 = vmax.xlane.f32.xlu0 %v2263
    %v2265 = vpop.xlane.xlu0 %2264
    %v2266 = vsel %vm451, %v2258, -inf
    %2267 = vmax.xlane.f32.xlu0 %v2266
    %v2268 = vpop.xlane.xlu0 %2267
    %v2269 = vsub.f32 %v2208, %v2265
    %v2270 = vsub.f32 %v2258, %v2268
    %v2271 = vmul.f32 %v2269, 1.442695
    %v2272 = vpow.pop %v2271
    %v2273 = vmul.f32 %v2270, 1.442695
    %v2274 = vpow.pop %v2273
    %v2275 = vsel %vm451, %v2272, 0.0
    %2276 = vadd.xlane.f32.xlu0 %v2275
    %v2277 = vpop.xlane.xlu0 %2276
    %v2278 = vsel %vm451, %v2274, 0.0
    %2279 = vadd.xlane.f32.xlu0 %v2278
    %v2280 = vpop.xlane.xlu0 %2279
    %v2281 = vrcp.pop %v2277
    %v2282 = vrcp.pop %v2280
    %v2283 = vmul.f32 %v2272, %v2281
    %v2284 = vmul.f32 %v2274, %v2282
    %v2285 = vpack.c.bf16 %v2283, %v2283
    %v2286 = vpack.c.bf16 %v2284, %v2284
    %2287 = vrot.lane.b32.xlu0 %v1697, 112
    %v2288 = vpop.permute.xlu0 %2287
    %v2290 = vsel %vm451, %v2285, 0
    %v2293 = vsel %vm571, %v2288, 0
    %2295 = vmatprep.subr.bf16.mxu0 0
    %2296 = vmatpush1.bf16.msra.mxu0 0
    %2297 = vmatprep.subr.bf16.mxu0 0
    %2298 = vmatpush1.bf16.msra.mxu0 0
    %2299 = vmatprep.subr.bf16.mxu0 0
    %2300 = vmatpush1.bf16.msra.mxu0 0
    %2301 = vmatprep.subr.bf16.mxu0 0
    %2302 = vmatpush1.bf16.msra.mxu0 0
    %2303 = vmatprep.subr.bf16.mxu0 0
    %2304 = vmatpush1.bf16.msra.mxu0 0
    %2305 = vmatprep.subr.bf16.mxu0 0
    %2306 = vmatpush1.bf16.msra.mxu0 0
    %2307 = vmatprep.subr.bf16.mxu0 0
    %2308 = vmatpush1.bf16.msra.mxu0 0
    %2309 = vmatprep.subr.bf16.mxu0 0
    %2310 = vmatpush1.bf16.msra.mxu0 %v2293
    %2311 = vmatprep.subr.bf16.mxu0 0
    %2312 = vmatpush2.bf16.msra.mxu0 0
    %2313 = vmatprep.subr.bf16.mxu0 0
    %2314 = vmatpush2.bf16.msra.mxu0 0
    %2315 = vmatprep.subr.bf16.mxu0 0
    %2316 = vmatpush2.bf16.msra.mxu0 0
    %2317 = vmatprep.subr.bf16.mxu0 0
    %2318 = vmatpush2.bf16.msra.mxu0 0
    %2319 = vmatprep.subr.bf16.mxu0 0
    %2320 = vmatpush2.bf16.msra.mxu0 0
    %2321 = vmatprep.subr.bf16.mxu0 0
    %2322 = vmatpush2.bf16.msra.mxu0 0
    %2323 = vmatprep.subr.bf16.mxu0 0
    %2324 = vmatpush2.bf16.msra.mxu0 0
    %2325 = vmatprep.subr.bf16.mxu0 0
    %2326 = vmatpush2.bf16.msra.mxu0 0
    %2327 = vmatprep.mubr.bf16.mxu0 0
    %2328 = vmatmul.mubr.bf16.gmra.mxu0 %v2290
    %v2329 = vpop.f32.mrf.mxu0
    %v2330 = vadd.f32 0.0, %v2329
    %v2331 = vpop.f32.mrf.mxu0
    %v2332 = vpop.f32.mrf.mxu0
    %v2333 = vpop.f32.mrf.mxu0
    %2334 = vdwg.mxu0
    %2335 = vrot.lane.b32.xlu0 %v1698, 112
    %v2336 = vpop.permute.xlu0 %2335
    %v2338 = vsel %vm451, %v2286, 0
    %v2341 = vsel %vm571, %v2336, 0
    %2343 = vmatprep.subr.bf16.mxu0 0
    %2344 = vmatpush1.bf16.msra.mxu0 0
    %2345 = vmatprep.subr.bf16.mxu0 0
    %2346 = vmatpush1.bf16.msra.mxu0 0
    %2347 = vmatprep.subr.bf16.mxu0 0
    %2348 = vmatpush1.bf16.msra.mxu0 0
    %2349 = vmatprep.subr.bf16.mxu0 0
    %2350 = vmatpush1.bf16.msra.mxu0 0
    %2351 = vmatprep.subr.bf16.mxu0 0
    %2352 = vmatpush1.bf16.msra.mxu0 0
    %2353 = vmatprep.subr.bf16.mxu0 0
    %2354 = vmatpush1.bf16.msra.mxu0 0
    %2355 = vmatprep.subr.bf16.mxu0 0
    %2356 = vmatpush1.bf16.msra.mxu0 0
    %2357 = vmatprep.subr.bf16.mxu0 0
    %2358 = vmatpush1.bf16.msra.mxu0 %v2341
    %2359 = vmatprep.subr.bf16.mxu0 0
    %2360 = vmatpush2.bf16.msra.mxu0 0
    %2361 = vmatprep.subr.bf16.mxu0 0
    %2362 = vmatpush2.bf16.msra.mxu0 0
    %2363 = vmatprep.subr.bf16.mxu0 0
    %2364 = vmatpush2.bf16.msra.mxu0 0
    %2365 = vmatprep.subr.bf16.mxu0 0
    %2366 = vmatpush2.bf16.msra.mxu0 0
    %2367 = vmatprep.subr.bf16.mxu0 0
    %2368 = vmatpush2.bf16.msra.mxu0 0
    %2369 = vmatprep.subr.bf16.mxu0 0
    %2370 = vmatpush2.bf16.msra.mxu0 0
    %2371 = vmatprep.subr.bf16.mxu0 0
    %2372 = vmatpush2.bf16.msra.mxu0 0
    %2373 = vmatprep.subr.bf16.mxu0 0
    %2374 = vmatpush2.bf16.msra.mxu0 0
    %2375 = vmatprep.mubr.bf16.mxu0 0
    %2376 = vmatmul.mubr.bf16.gmra.mxu0 %v2338
    %v2377 = vpop.f32.mrf.mxu0
    %v2378 = vadd.f32 0.0, %v2377
    %v2379 = vpop.f32.mrf.mxu0
    %v2380 = vpop.f32.mrf.mxu0
    %v2381 = vpop.f32.mrf.mxu0
    %2382 = vdwg.mxu0
    %v2383 = vpack.c.bf16 %v2378, %v2330
    %v2385 = vunpack.c.l.b16 %v2383
    %v2386 = vunpack.c.h.b16 %v2383
    %v2387 = vpack.c.b16 %v2385, %v2385
    %v2388 = vpack.c.b16 %v2386, %v2386
    %2389 = vrot.lane.b32.xlu0 %v2387, 16
    %v2390 = vpop.permute.xlu0 %2389
    %2391 = vrot.lane.b32.xlu0 %v2388, 16
    %v2392 = vpop.permute.xlu0 %2391
    %2395 = vst.msk [vmem:[#allocation2] sm:$0xf] %vm1139, %v2390
    %2396 = vst.msk [vmem:[#allocation2 + $0x4] sm:$0xf] %vm1139, %v2392
    %2397 = vrot.lane.b32.xlu0 %v1687, 104
    %v2398 = vpop.permute.xlu0 %2397
    %2399 = vrot.lane.b32.xlu0 %v1692, 104
    %v2400 = vpop.permute.xlu0 %2399
    %v2402 = vsel %vm451, %v2398, 0
    %v2405 = vsel %vm451, %v2400, 0
    %2407 = vmatprep.subr.bf16.mxu0 0
    %2408 = vmatpush1.bf16.xpose.msra.mxu0 0
    %2409 = vmatprep.subr.bf16.mxu0 0
    %2410 = vmatpush1.bf16.xpose.msra.mxu0 0
    %2411 = vmatprep.subr.bf16.mxu0 0
    %2412 = vmatpush1.bf16.xpose.msra.mxu0 0
    %2413 = vmatprep.subr.bf16.mxu0 0
    %2414 = vmatpush1.bf16.xpose.msra.mxu0 0
    %2415 = vmatprep.subr.bf16.mxu0 0
    %2416 = vmatpush1.bf16.xpose.msra.mxu0 0
    %2417 = vmatprep.subr.bf16.mxu0 0
    %2418 = vmatpush1.bf16.xpose.msra.mxu0 0
    %2419 = vmatprep.subr.bf16.mxu0 0
    %2420 = vmatpush1.bf16.xpose.msra.mxu0 0
    %2421 = vmatprep.subr.bf16.mxu0 0
    %2422 = vmatpush1.bf16.xpose.msra.mxu0 %v2405
    %2423 = vmatprep.subr.bf16.mxu0 0
    %2424 = vmatpush2.bf16.xpose.msra.mxu0 0
    %2425 = vmatprep.subr.bf16.mxu0 0
    %2426 = vmatpush2.bf16.xpose.msra.mxu0 0
    %2427 = vmatprep.subr.bf16.mxu0 0
    %2428 = vmatpush2.bf16.xpose.msra.mxu0 0
    %2429 = vmatprep.subr.bf16.mxu0 0
    %2430 = vmatpush2.bf16.xpose.msra.mxu0 0
    %2431 = vmatprep.subr.bf16.mxu0 0
    %2432 = vmatpush2.bf16.xpose.msra.mxu0 0
    %2433 = vmatprep.subr.bf16.mxu0 0
    %2434 = vmatpush2.bf16.xpose.msra.mxu0 0
    %2435 = vmatprep.subr.bf16.mxu0 0
    %2436 = vmatpush2.bf16.xpose.msra.mxu0 0
    %2437 = vmatprep.subr.bf16.mxu0 0
    %2438 = vmatpush2.bf16.xpose.msra.mxu0 0
    %2439 = vmatprep.mubr.bf16.mxu0 0
    %2440 = vmatmul.mubr.bf16.gmra.mxu0 %v2402
    %v2441 = vpop.f32.mrf.mxu0
    %v2442 = vadd.f32 %v1704, %v2441
    %v2443 = vpop.f32.mrf.mxu0
    %v2444 = vpop.f32.mrf.mxu0
    %v2445 = vpop.f32.mrf.mxu0
    %2446 = vdwg.mxu0
    %2447 = vrot.lane.b32.xlu0 %v1688, 104
    %v2448 = vpop.permute.xlu0 %2447
    %2449 = vrot.lane.b32.xlu0 %v1693, 104
    %v2450 = vpop.permute.xlu0 %2449
    %v2452 = vsel %vm451, %v2448, 0
    %v2455 = vsel %vm451, %v2450, 0
    %2457 = vmatprep.subr.bf16.mxu0 0
    %2458 = vmatpush1.bf16.xpose.msra.mxu0 0
    %2459 = vmatprep.subr.bf16.mxu0 0
    %2460 = vmatpush1.bf16.xpose.msra.mxu0 0
    %2461 = vmatprep.subr.bf16.mxu0 0
    %2462 = vmatpush1.bf16.xpose.msra.mxu0 0
    %2463 = vmatprep.subr.bf16.mxu0 0
    %2464 = vmatpush1.bf16.xpose.msra.mxu0 0
    %2465 = vmatprep.subr.bf16.mxu0 0
    %2466 = vmatpush1.bf16.xpose.msra.mxu0 0
    %2467 = vmatprep.subr.bf16.mxu0 0
    %2468 = vmatpush1.bf16.xpose.msra.mxu0 0
    %2469 = vmatprep.subr.bf16.mxu0 0
    %2470 = vmatpush1.bf16.xpose.msra.mxu0 0
    %2471 = vmatprep.subr.bf16.mxu0 0
    %2472 = vmatpush1.bf16.xpose.msra.mxu0 %v2455
    %2473 = vmatprep.subr.bf16.mxu0 0
    %2474 = vmatpush2.bf16.xpose.msra.mxu0 0
    %2475 = vmatprep.subr.bf16.mxu0 0
    %2476 = vmatpush2.bf16.xpose.msra.mxu0 0
    %2477 = vmatprep.subr.bf16.mxu0 0
    %2478 = vmatpush2.bf16.xpose.msra.mxu0 0
    %2479 = vmatprep.subr.bf16.mxu0 0
    %2480 = vmatpush2.bf16.xpose.msra.mxu0 0
    %2481 = vmatprep.subr.bf16.mxu0 0
    %2482 = vmatpush2.bf16.xpose.msra.mxu0 0
    %2483 = vmatprep.subr.bf16.mxu0 0
    %2484 = vmatpush2.bf16.xpose.msra.mxu0 0
    %2485 = vmatprep.subr.bf16.mxu0 0
    %2486 = vmatpush2.bf16.xpose.msra.mxu0 0
    %2487 = vmatprep.subr.bf16.mxu0 0
    %2488 = vmatpush2.bf16.xpose.msra.mxu0 0
    %2489 = vmatprep.mubr.bf16.mxu0 0
    %2490 = vmatmul.mubr.bf16.gmra.mxu0 %v2452
    %v2491 = vpop.f32.mrf.mxu0
    %v2492 = vadd.f32 %v1708, %v2491
    %v2493 = vpop.f32.mrf.mxu0
    %v2494 = vpop.f32.mrf.mxu0
    %v2495 = vpop.f32.mrf.mxu0
    %2496 = vdwg.mxu0
    %v2497 = vsel %vm451, %v2442, -inf
    %2498 = vmax.xlane.f32.xlu0 %v2497
    %v2499 = vpop.xlane.xlu0 %2498
    %v2500 = vsel %vm451, %v2492, -inf
    %2501 = vmax.xlane.f32.xlu0 %v2500
    %v2502 = vpop.xlane.xlu0 %2501
    %v2503 = vsub.f32 %v2442, %v2499
    %v2504 = vsub.f32 %v2492, %v2502
    %v2505 = vmul.f32 %v2503, 1.442695
    %v2506 = vpow.pop %v2505
    %v2507 = vmul.f32 %v2504, 1.442695
    %v2508 = vpow.pop %v2507
    %v2509 = vsel %vm451, %v2506, 0.0
    %2510 = vadd.xlane.f32.xlu0 %v2509
    %v2511 = vpop.xlane.xlu0 %2510
    %v2512 = vsel %vm451, %v2508, 0.0
    %2513 = vadd.xlane.f32.xlu0 %v2512
    %v2514 = vpop.xlane.xlu0 %2513
    %v2515 = vrcp.pop %v2511
    %v2516 = vrcp.pop %v2514
    %v2517 = vmul.f32 %v2506, %v2515
    %v2518 = vmul.f32 %v2508, %v2516
    %v2519 = vpack.c.bf16 %v2517, %v2517
    %v2520 = vpack.c.bf16 %v2518, %v2518
    %2521 = vrot.lane.b32.xlu0 %v1697, 104
    %v2522 = vpop.permute.xlu0 %2521
    %v2524 = vsel %vm451, %v2519, 0
    %v2527 = vsel %vm571, %v2522, 0
    %2529 = vmatprep.subr.bf16.mxu0 0
    %2530 = vmatpush1.bf16.msra.mxu0 0
    %2531 = vmatprep.subr.bf16.mxu0 0
    %2532 = vmatpush1.bf16.msra.mxu0 0
    %2533 = vmatprep.subr.bf16.mxu0 0
    %2534 = vmatpush1.bf16.msra.mxu0 0
    %2535 = vmatprep.subr.bf16.mxu0 0
    %2536 = vmatpush1.bf16.msra.mxu0 0
    %2537 = vmatprep.subr.bf16.mxu0 0
    %2538 = vmatpush1.bf16.msra.mxu0 0
    %2539 = vmatprep.subr.bf16.mxu0 0
    %2540 = vmatpush1.bf16.msra.mxu0 0
    %2541 = vmatprep.subr.bf16.mxu0 0
    %2542 = vmatpush1.bf16.msra.mxu0 0
    %2543 = vmatprep.subr.bf16.mxu0 0
    %2544 = vmatpush1.bf16.msra.mxu0 %v2527
    %2545 = vmatprep.subr.bf16.mxu0 0
    %2546 = vmatpush2.bf16.msra.mxu0 0
    %2547 = vmatprep.subr.bf16.mxu0 0
    %2548 = vmatpush2.bf16.msra.mxu0 0
    %2549 = vmatprep.subr.bf16.mxu0 0
    %2550 = vmatpush2.bf16.msra.mxu0 0
    %2551 = vmatprep.subr.bf16.mxu0 0
    %2552 = vmatpush2.bf16.msra.mxu0 0
    %2553 = vmatprep.subr.bf16.mxu0 0
    %2554 = vmatpush2.bf16.msra.mxu0 0
    %2555 = vmatprep.subr.bf16.mxu0 0
    %2556 = vmatpush2.bf16.msra.mxu0 0
    %2557 = vmatprep.subr.bf16.mxu0 0
    %2558 = vmatpush2.bf16.msra.mxu0 0
    %2559 = vmatprep.subr.bf16.mxu0 0
    %2560 = vmatpush2.bf16.msra.mxu0 0
    %2561 = vmatprep.mubr.bf16.mxu0 0
    %2562 = vmatmul.mubr.bf16.gmra.mxu0 %v2524
    %v2563 = vpop.f32.mrf.mxu0
    %v2564 = vadd.f32 0.0, %v2563
    %v2565 = vpop.f32.mrf.mxu0
    %v2566 = vpop.f32.mrf.mxu0
    %v2567 = vpop.f32.mrf.mxu0
    %2568 = vdwg.mxu0
    %2569 = vrot.lane.b32.xlu0 %v1698, 104
    %v2570 = vpop.permute.xlu0 %2569
    %v2572 = vsel %vm451, %v2520, 0
    %v2575 = vsel %vm571, %v2570, 0
    %2577 = vmatprep.subr.bf16.mxu0 0
    %2578 = vmatpush1.bf16.msra.mxu0 0
    %2579 = vmatprep.subr.bf16.mxu0 0
    %2580 = vmatpush1.bf16.msra.mxu0 0
    %2581 = vmatprep.subr.bf16.mxu0 0
    %2582 = vmatpush1.bf16.msra.mxu0 0
    %2583 = vmatprep.subr.bf16.mxu0 0
    %2584 = vmatpush1.bf16.msra.mxu0 0
    %2585 = vmatprep.subr.bf16.mxu0 0
    %2586 = vmatpush1.bf16.msra.mxu0 0
    %2587 = vmatprep.subr.bf16.mxu0 0
    %2588 = vmatpush1.bf16.msra.mxu0 0
    %2589 = vmatprep.subr.bf16.mxu0 0
    %2590 = vmatpush1.bf16.msra.mxu0 0
    %2591 = vmatprep.subr.bf16.mxu0 0
    %2592 = vmatpush1.bf16.msra.mxu0 %v2575
    %2593 = vmatprep.subr.bf16.mxu0 0
    %2594 = vmatpush2.bf16.msra.mxu0 0
    %2595 = vmatprep.subr.bf16.mxu0 0
    %2596 = vmatpush2.bf16.msra.mxu0 0
    %2597 = vmatprep.subr.bf16.mxu0 0
    %2598 = vmatpush2.bf16.msra.mxu0 0
    %2599 = vmatprep.subr.bf16.mxu0 0
    %2600 = vmatpush2.bf16.msra.mxu0 0
    %2601 = vmatprep.subr.bf16.mxu0 0
    %2602 = vmatpush2.bf16.msra.mxu0 0
    %2603 = vmatprep.subr.bf16.mxu0 0
    %2604 = vmatpush2.bf16.msra.mxu0 0
    %2605 = vmatprep.subr.bf16.mxu0 0
    %2606 = vmatpush2.bf16.msra.mxu0 0
    %2607 = vmatprep.subr.bf16.mxu0 0
    %2608 = vmatpush2.bf16.msra.mxu0 0
    %2609 = vmatprep.mubr.bf16.mxu0 0
    %2610 = vmatmul.mubr.bf16.gmra.mxu0 %v2572
    %v2611 = vpop.f32.mrf.mxu0
    %v2612 = vadd.f32 0.0, %v2611
    %v2613 = vpop.f32.mrf.mxu0
    %v2614 = vpop.f32.mrf.mxu0
    %v2615 = vpop.f32.mrf.mxu0
    %2616 = vdwg.mxu0
    %v2617 = vpack.c.bf16 %v2612, %v2564
    %v2619 = vunpack.c.l.b16 %v2617
    %v2620 = vunpack.c.h.b16 %v2617
    %v2621 = vpack.c.b16 %v2619, %v2619
    %v2622 = vpack.c.b16 %v2620, %v2620
    %2623 = vrot.lane.b32.xlu0 %v2621, 24
    %v2624 = vpop.permute.xlu0 %2623
    %2625 = vrot.lane.b32.xlu0 %v2622, 24
    %v2626 = vpop.permute.xlu0 %2625
    %2629 = vst.msk [vmem:[#allocation2] sm:$0xf] %vm1374, %v2624
    %2630 = vst.msk [vmem:[#allocation2 + $0x4] sm:$0xf] %vm1374, %v2626
    %v2631 = vld [vmem:[#allocation2] sm:$0xf]
    %v2632 = vld [vmem:[#allocation2 + $0x4] sm:$0xf]
    %v2633 = vld [vmem:[#allocation17] sm:$0xf]
    %v2634 = vld [vmem:[#allocation17 + $0x4] sm:$0xf]
    %v2635 = vld [vmem:[#allocation17 + $0x8] sm:$0xf]
    %v2636 = vld [vmem:[#allocation17 + $0xc] sm:$0xf]
    %v2637 = vld [vmem:[#allocation18] sm:$0x1]
    %v2639 = vlaneseq
    %v2640 = vshrl.u32 %v2639, 7
    %v2641 = vsub.s32 0, %v2640
    %v2642 = vrot.slane %v2637, %v2641
    %v2646 = vunpack.c.l.b16 %v2631
    %v2647 = vunpack.c.l.b16 %v2632
    %v2648 = vpack.c.b16 %v2647, %v2646
    %v2653 = vunpack.c.l.b16 %v2633
    %v2654 = vunpack.c.l.b16 %v2634
    %v2655 = vunpack.c.l.b16 %v2635
    %v2656 = vunpack.c.l.b16 %v2636
    %v2657 = vpack.c.b16 %v2654, %v2653
    %v2658 = vpack.c.b16 %v2656, %v2655
    %v2662 = vsel %vm274, %v2648, 0
    %2664 = vmatprep.subr.bf16.mxu0 0
    %2665 = vmatpush1.bf16.msra.mxu0 0
    %2666 = vmatprep.subr.bf16.mxu0 0
    %2667 = vmatpush1.bf16.msra.mxu0 0
    %2668 = vmatprep.subr.bf16.mxu0 0
    %2669 = vmatpush1.bf16.msra.mxu0 0
    %2670 = vmatprep.subr.bf16.mxu0 0
    %2671 = vmatpush1.bf16.msra.mxu0 0
    %2672 = vmatprep.subr.bf16.mxu0 0
    %2673 = vmatpush1.bf16.msra.mxu0 0
    %2674 = vmatprep.subr.bf16.mxu0 0
    %2675 = vmatpush1.bf16.msra.mxu0 0
    %2676 = vmatprep.subr.bf16.mxu0 0
    %2677 = vmatpush1.bf16.msra.mxu0 %v2658
    %2678 = vmatprep.subr.bf16.mxu0 0
    %2679 = vmatpush1.bf16.msra.mxu0 %v2657
    %2680 = vmatprep.subr.bf16.mxu0 0
    %2681 = vmatpush2.bf16.msra.mxu0 0
    %2682 = vmatprep.subr.bf16.mxu0 0
    %2683 = vmatpush2.bf16.msra.mxu0 0
    %2684 = vmatprep.subr.bf16.mxu0 0
    %2685 = vmatpush2.bf16.msra.mxu0 0
    %2686 = vmatprep.subr.bf16.mxu0 0
    %2687 = vmatpush2.bf16.msra.mxu0 0
    %2688 = vmatprep.subr.bf16.mxu0 0
    %2689 = vmatpush2.bf16.msra.mxu0 0
    %2690 = vmatprep.subr.bf16.mxu0 0
    %2691 = vmatpush2.bf16.msra.mxu0 0
    %2692 = vmatprep.subr.bf16.mxu0 0
    %2693 = vmatpush2.bf16.msra.mxu0 0
    %2694 = vmatprep.subr.bf16.mxu0 0
    %2695 = vmatpush2.bf16.msra.mxu0 0
    %2696 = vmatprep.mubr.bf16.mxu0 0
    %2697 = vmatmul.mubr.bf16.gmra.mxu0 %v2662
    %v2698 = vpop.f32.mrf.mxu0
    %v2699 = vadd.f32 %v2642, %v2698
    %v2700 = vpop.f32.mrf.mxu0
    %v2701 = vpop.f32.mrf.mxu0
    %v2702 = vadd.f32 %v2642, %v2701
    %v2703 = vpop.f32.mrf.mxu0
    %2704 = vdwg.mxu0
    %v2705 = vadd.f32 %v2699, %v1496
    %v2706 = vadd.f32 %v2702, %v1497
    %v2707 = vld [vmem:[#allocation20] sm:$0x1]
    %v2708 = vld [vmem:[#allocation21] sm:$0x1]
    %v2709 = vsel %vm274, %v2705, 0.0
    %2710 = vadd.xlane.f32.xlu0 %v2709
    %v2711 = vpop.xlane.xlu0 %2710
    %v2712 = vsel %vm274, %v2706, 0.0
    %2713 = vadd.xlane.f32.xlu0 %v2712
    %v2714 = vpop.xlane.xlu0 %2713
    %v2715 = vmul.f32 %v2711, %v1461
    %v2716 = vmul.f32 %v2714, %v1461
    %v2717 = vsub.f32 %v2705, %v2715
    %v2718 = vsub.f32 %v2706, %v2716
    %v2719 = vmul.f32 %v2717, %v2717
    %v2720 = vmul.f32 %v2718, %v2718
    %v2721 = vsel %vm274, %v2719, 0.0
    %2722 = vadd.xlane.f32.xlu0 %v2721
    %v2723 = vpop.xlane.xlu0 %2722
    %v2724 = vsel %vm274, %v2720, 0.0
    %2725 = vadd.xlane.f32.xlu0 %v2724
    %v2726 = vpop.xlane.xlu0 %2725
    %v2727 = vmul.f32 %v2723, %v1461
    %v2728 = vmul.f32 %v2726, %v1461
    %v2729 = vadd.f32 %v2727, 1e-05
    %v2730 = vadd.f32 %v2728, 1e-05
    %v2731 = vrsqrt.pop %v2729
    %v2732 = vrsqrt.pop %v2730
    %v2733 = vmul.f32 %v2717, %v2731
    %v2734 = vmul.f32 %v2718, %v2732
    %v2736 = vlaneseq
    %v2737 = vshrl.u32 %v2736, 7
    %v2738 = vsub.s32 0, %v2737
    %v2739 = vrot.slane %v2707, %v2738
    %v2741 = vmul.f32 %v2733, %v2739
    %v2742 = vmul.f32 %v2734, %v2739
    %v2744 = vlaneseq
    %v2745 = vshrl.u32 %v2744, 7
    %v2746 = vsub.s32 0, %v2745
    %v2747 = vrot.slane %v2708, %v2746
    %v2749 = vadd.f32 %v2741, %v2747
    %v2750 = vadd.f32 %v2742, %v2747
    %v2751 = vpack.c.bf16 %v2750, %v2749
    %v2752 = vld [vmem:[#allocation23] sm:$0xf]
    %v2753 = vld [vmem:[#allocation23 + $0x4] sm:$0xf]
    %v2754 = vld [vmem:[#allocation23 + $0x8] sm:$0xf]
    %v2755 = vld [vmem:[#allocation23 + $0xc] sm:$0xf]
    %v2756 = vld [vmem:[%s19] sm:$0x1]
    %v2758 = vlaneseq
    %v2759 = vshrl.u32 %v2758, 7
    %v2760 = vsub.s32 0, %v2759
    %v2761 = vrot.slane %v2756, %v2760
    %v2767 = vunpack.c.l.b16 %v2752
    %v2768 = vunpack.c.l.b16 %v2753
    %v2769 = vunpack.c.l.b16 %v2754
    %v2770 = vunpack.c.l.b16 %v2755
    %v2771 = vpack.c.b16 %v2768, %v2767
    %v2772 = vpack.c.b16 %v2770, %v2769
    %v2776 = vsel %vm274, %v2751, 0
    %2778 = vmatprep.subr.bf16.mxu0 0
    %2779 = vmatpush1.bf16.msra.mxu0 0
    %2780 = vmatprep.subr.bf16.mxu0 0
    %2781 = vmatpush1.bf16.msra.mxu0 0
    %2782 = vmatprep.subr.bf16.mxu0 0
    %2783 = vmatpush1.bf16.msra.mxu0 0
    %2784 = vmatprep.subr.bf16.mxu0 0
    %2785 = vmatpush1.bf16.msra.mxu0 0
    %2786 = vmatprep.subr.bf16.mxu0 0
    %2787 = vmatpush1.bf16.msra.mxu0 0
    %2788 = vmatprep.subr.bf16.mxu0 0
    %2789 = vmatpush1.bf16.msra.mxu0 0
    %2790 = vmatprep.subr.bf16.mxu0 0
    %2791 = vmatpush1.bf16.msra.mxu0 %v2772
    %2792 = vmatprep.subr.bf16.mxu0 0
    %2793 = vmatpush1.bf16.msra.mxu0 %v2771
    %2794 = vmatprep.subr.bf16.mxu0 0
    %2795 = vmatpush2.bf16.msra.mxu0 0
    %2796 = vmatprep.subr.bf16.mxu0 0
    %2797 = vmatpush2.bf16.msra.mxu0 0
    %2798 = vmatprep.subr.bf16.mxu0 0
    %2799 = vmatpush2.bf16.msra.mxu0 0
    %2800 = vmatprep.subr.bf16.mxu0 0
    %2801 = vmatpush2.bf16.msra.mxu0 0
    %2802 = vmatprep.subr.bf16.mxu0 0
    %2803 = vmatpush2.bf16.msra.mxu0 0
    %2804 = vmatprep.subr.bf16.mxu0 0
    %2805 = vmatpush2.bf16.msra.mxu0 0
    %2806 = vmatprep.subr.bf16.mxu0 0
    %2807 = vmatpush2.bf16.msra.mxu0 0
    %2808 = vmatprep.subr.bf16.mxu0 0
    %2809 = vmatpush2.bf16.msra.mxu0 0
    %2810 = vmatprep.mubr.bf16.mxu0 0
    %2811 = vmatmul.mubr.bf16.gmra.mxu0 %v2776
    %v2812 = vpop.f32.mrf.mxu0
    %v2813 = vadd.f32 %v2761, %v2812
    %v2814 = vpop.f32.mrf.mxu0
    %v2815 = vpop.f32.mrf.mxu0
    %v2816 = vadd.f32 %v2761, %v2815
    %v2817 = vpop.f32.mrf.mxu0
    %2818 = vdwg.mxu0
    %v2819 = vmax.f32 %v2813, 0.0
    %v2820 = vmax.f32 %v2816, 0.0
    %v2821 = vpack.c.bf16 %v2820, %v2819
    %v2822 = vld [vmem:[%s20] sm:$0xf]
    %v2823 = vld [vmem:[%s20 + $0x4] sm:$0xf]
    %v2824 = vld [vmem:[%s20 + $0x8] sm:$0xf]
    %v2825 = vld [vmem:[%s20 + $0xc] sm:$0xf]
    %v2826 = vld [vmem:[%s20 + $0x10] sm:$0xf]
    %v2827 = vld [vmem:[%s20 + $0x14] sm:$0xf]
    %v2828 = vld [vmem:[%s20 + $0x18] sm:$0xf]
    %v2829 = vld [vmem:[%s20 + $0x1c] sm:$0xf]
    %v2830 = vld [vmem:[%s20 + $0x20] sm:$0xf]
    %v2831 = vld [vmem:[%s20 + $0x24] sm:$0xf]
    %v2832 = vld [vmem:[%s20 + $0x28] sm:$0xf]
    %v2833 = vld [vmem:[%s20 + $0x2c] sm:$0xf]
    %v2834 = vld [vmem:[%s20 + $0x30] sm:$0xf]
    %v2835 = vld [vmem:[%s20 + $0x34] sm:$0xf]
    %v2836 = vld [vmem:[%s20 + $0x38] sm:$0xf]
    %v2837 = vld [vmem:[%s20 + $0x3c] sm:$0xf]
    %v2838 = vld [vmem:[%s21] sm:$0x1]
    %v2840 = vlaneseq
    %v2841 = vshrl.u32 %v2840, 7
    %v2842 = vsub.s32 0, %v2841
    %v2843 = vrot.slane %v2838, %v2842
    %v2861 = vunpack.c.l.b16 %v2822
    %v2862 = vunpack.c.l.b16 %v2823
    %v2863 = vunpack.c.l.b16 %v2824
    %v2864 = vunpack.c.l.b16 %v2825
    %v2865 = vunpack.c.l.b16 %v2826
    %v2866 = vunpack.c.l.b16 %v2827
    %v2867 = vunpack.c.l.b16 %v2828
    %v2868 = vunpack.c.l.b16 %v2829
    %v2869 = vunpack.c.l.b16 %v2830
    %v2870 = vunpack.c.l.b16 %v2831
    %v2871 = vunpack.c.l.b16 %v2832
    %v2872 = vunpack.c.l.b16 %v2833
    %v2873 = vunpack.c.l.b16 %v2834
    %v2874 = vunpack.c.l.b16 %v2835
    %v2875 = vunpack.c.l.b16 %v2836
    %v2876 = vunpack.c.l.b16 %v2837
    %v2877 = vpack.c.b16 %v2862, %v2861
    %v2878 = vpack.c.b16 %v2864, %v2863
    %v2879 = vpack.c.b16 %v2866, %v2865
    %v2880 = vpack.c.b16 %v2868, %v2867
    %v2881 = vpack.c.b16 %v2870, %v2869
    %v2882 = vpack.c.b16 %v2872, %v2871
    %v2883 = vpack.c.b16 %v2874, %v2873
    %v2884 = vpack.c.b16 %v2876, %v2875
    %2893 = vmatprep.subr.bf16.mxu0 0
    %2894 = vmatpush1.bf16.msra.mxu0 %v2884
    %2895 = vmatprep.subr.bf16.mxu0 0
    %2896 = vmatpush1.bf16.msra.mxu0 %v2883
    %2897 = vmatprep.subr.bf16.mxu0 0
    %2898 = vmatpush1.bf16.msra.mxu0 %v2882
    %2899 = vmatprep.subr.bf16.mxu0 0
    %2900 = vmatpush1.bf16.msra.mxu0 %v2881
    %2901 = vmatprep.subr.bf16.mxu0 0
    %2902 = vmatpush1.bf16.msra.mxu0 %v2880
    %2903 = vmatprep.subr.bf16.mxu0 0
    %2904 = vmatpush1.bf16.msra.mxu0 %v2879
    %2905 = vmatprep.subr.bf16.mxu0 0
    %2906 = vmatpush1.bf16.msra.mxu0 %v2878
    %2907 = vmatprep.subr.bf16.mxu0 0
    %2908 = vmatpush1.bf16.msra.mxu0 %v2877
    %2909 = vmatprep.subr.bf16.mxu0 0
    %2910 = vmatpush2.bf16.msra.mxu0 0
    %2911 = vmatprep.subr.bf16.mxu0 0
    %2912 = vmatpush2.bf16.msra.mxu0 0
    %2913 = vmatprep.subr.bf16.mxu0 0
    %2914 = vmatpush2.bf16.msra.mxu0 0
    %2915 = vmatprep.subr.bf16.mxu0 0
    %2916 = vmatpush2.bf16.msra.mxu0 0
    %2917 = vmatprep.subr.bf16.mxu0 0
    %2918 = vmatpush2.bf16.msra.mxu0 0
    %2919 = vmatprep.subr.bf16.mxu0 0
    %2920 = vmatpush2.bf16.msra.mxu0 0
    %2921 = vmatprep.subr.bf16.mxu0 0
    %2922 = vmatpush2.bf16.msra.mxu0 0
    %2923 = vmatprep.subr.bf16.mxu0 0
    %2924 = vmatpush2.bf16.msra.mxu0 0
    %2925 = vmatprep.mubr.bf16.mxu0 0
    %2926 = vmatmul.mubr.bf16.gmra.mxu0 %v2821
    %v2927 = vpop.f32.mrf.mxu0
    %v2928 = vadd.f32 %v2843, %v2927
    %v2929 = vpop.f32.mrf.mxu0
    %v2930 = vpop.f32.mrf.mxu0
    %v2931 = vadd.f32 %v2843, %v2930
    %v2932 = vpop.f32.mrf.mxu0
    %2933 = vdwg.mxu0
    %v2934 = vadd.f32 %v2928, %v2749
    %v2935 = vadd.f32 %v2931, %v2750
    %v2936 = vld [vmem:[%s22] sm:$0x1]
    %v2937 = vld [vmem:[%s23] sm:$0x1]
    %v2938 = vsel %vm274, %v2934, 0.0
    %2939 = vadd.xlane.f32.xlu0 %v2938
    %v2940 = vpop.xlane.xlu0 %2939
    %v2941 = vsel %vm274, %v2935, 0.0
    %2942 = vadd.xlane.f32.xlu0 %v2941
    %v2943 = vpop.xlane.xlu0 %2942
    %v2944 = vmul.f32 %v2940, %v1461
    %v2945 = vmul.f32 %v2943, %v1461
    %v2946 = vsub.f32 %v2934, %v2944
    %v2947 = vsub.f32 %v2935, %v2945
    %v2948 = vmul.f32 %v2946, %v2946
    %v2949 = vmul.f32 %v2947, %v2947
    %v2950 = vsel %vm274, %v2948, 0.0
    %2951 = vadd.xlane.f32.xlu0 %v2950
    %v2952 = vpop.xlane.xlu0 %2951
    %v2953 = vsel %vm274, %v2949, 0.0
    %2954 = vadd.xlane.f32.xlu0 %v2953
    %v2955 = vpop.xlane.xlu0 %2954
    %v2956 = vmul.f32 %v2952, %v1461
    %v2957 = vmul.f32 %v2955, %v1461
    %v2958 = vadd.f32 %v2956, 1e-05
    %v2959 = vadd.f32 %v2957, 1e-05
    %v2960 = vrsqrt.pop %v2958
    %v2961 = vrsqrt.pop %v2959
    %v2962 = vmul.f32 %v2946, %v2960
    %v2963 = vmul.f32 %v2947, %v2961
    %v2965 = vlaneseq
    %v2966 = vshrl.u32 %v2965, 7
    %v2967 = vsub.s32 0, %v2966
    %v2968 = vrot.slane %v2936, %v2967
    %v2970 = vmul.f32 %v2962, %v2968
    %v2971 = vmul.f32 %v2963, %v2968
    %v2973 = vlaneseq
    %v2974 = vshrl.u32 %v2973, 7
    %v2975 = vsub.s32 0, %v2974
    %v2976 = vrot.slane %v2937, %v2975
    %v2978 = vadd.f32 %v2970, %v2976
    %v2979 = vadd.f32 %v2971, %v2976
    %2980 = vst.msk [vmem:[#allocation24] sm:$0xff] %vm274, %v2978
    %2981 = vst.msk [vmem:[#allocation24 + $0x8] sm:$0xff] %vm274, %v2979
    // Predicated region
    $region150: #{tpu_custom_call.1} parent=1 // pred_check
      _
    $region151: #{tpu_custom_call.1} parent=1 // pred_check_branch
      %2983 = sbr.rel (0) target = $region153
    $region152: #{tpu_custom_call.1} parent=1 // pred_region
      %s2985 = ssub.s32 256, 256
      %2986 = vsyncadd [#allocation5], %s2985
      %s2987 = sshll.u32 [#allocation24], 4
      %s2988 = int_to_ptr.vmem [resolvable:$true] %s2987
      %2993 = dma.vmem_to_hbm [thread:$0]  %s2988, 256, %s24, [#allocation5], 128, 128, 8
    $region153: #{tpu_custom_call.1} parent=1 // pred_fallthru
      _
    // Predicated region
    $region154: #{tpu_custom_call.1} parent=1 // pred_check
      _
    $region155: #{tpu_custom_call.1} parent=1 // pred_check_branch
      %2995 = sbr.rel (0) target = $region157
    $region156: #{tpu_custom_call.1} parent=1 // pred_region
      %2996 = dma.done [#allocation5], 256
    $region157: #{tpu_custom_call.1} parent=1 // pred_fallthru
      _
    %2997 = vsyncpa [#allocation4], 1
    %2998 = vsyncpa [#allocation7], 1
    %2999 = vsyncpa [#allocation10], 1
    %3000 = vsyncpa [#allocation13], 1
    %3001 = vsyncpa [#allocation16], 1
    %3002 = vsyncpa [#allocation19], 1
    %3003 = vsyncpa [#allocation22], 1
    %3004 = vsyncpa [#allocation5], 1

</llo_original>
